<compile_context>
chip_gen: v7x
topology: tpu7x:2x2x1
jax: 0.10.0
libtpu: 0.0.40
codegen_flags: <defaults>
</compile_context>

<pallas_src>
import numpy as np
import jax
import jax.numpy as jnp
from jax.experimental import pallas as pl
from jax.experimental.pallas import tpu as pltpu


def _residual_block_kernel(x_ref, w1_ref, sh1_ref, w2_ref, sh2_ref, out_ref, pad_ref):
    """One batch element per grid step.

    x_ref   : (1, D*H, W*C)   f32  lane-dense input (also the skip branch)
    w*_ref  : (9, Wg*C, W*C)  bf16 banded conv weights (BN scale folded),
                                   leading index = kd*3 + kh
    sh*_ref : (1, W*C)        f32  folded BN shift (absorbs conv bias), W-tiled
    out_ref : (1, D*H, W*C)   f32
    pad_ref : (D+2, H+2, Wg*C) f32 VMEM scratch -- padded activations
    """
    Dp, Hp, KL = pad_ref.shape
    D, H = Dp - 2, Hp - 2
    _, M, WC = x_ref.shape          # M = D*H

    # Zero the entire padded scratch: d/h halo rows, the w halo lane-groups and
    # the lane-alignment pad all become zero.  Done every grid step so it stays
    # correct under megacore grid sharding (each core owns its own scratch).
    # The interior lanes [0, W*C) are overwritten just below.
    pad_ref[...] = jnp.zeros((Dp, Hp, KL), jnp.float32)

    x2 = x_ref[0]                   # (D*H, W*C) f32, lane-dense

    def conv_banded(w_ref):
        # 3x3x3 "SAME" conv as 9 MXU matmuls: per (kd, kh) tap the whole padded
        # W row (Wg*C lanes) is contracted against a banded (Wg*C, W*C) weight
        # block.  kd/kh shifts are pure row-range slices of pad_ref (no lane
        # movement); the kw shifts live inside the weight band.
        acc = jnp.zeros((M, WC), jnp.float32)
        for kd in range(3):
            for kh in range(3):
                lhs = pad_ref[kd:kd + D, kh:kh + H, :].reshape(M, KL)
                acc = acc + jnp.dot(lhs.astype(w_ref.dtype),
                                    w_ref[kd * 3 + kh],
                                    preferred_element_type=jnp.float32)
        return acc                   # (D*H, W*C) f32

    # ---- conv1 (BN1 scale folded into weights) + shift + ReLU ----------------
    pad_ref[1:1 + D, 1:1 + H, 0:WC] = x2.reshape(D, H, WC)
    out1 = jnp.maximum(conv_banded(w1_ref) + sh1_ref[...], 0.0)
    # Dropout3d(p=0.0) -> identity.

    # ---- conv2 (BN2 folded) + shift + skip connection + ReLU -----------------
    pad_ref[1:1 + D, 1:1 + H, 0:WC] = out1.reshape(D, H, WC)
    out2 = conv_banded(w2_ref) + sh2_ref[...] + x2
    out_ref[0] = jnp.maximum(out2, 0.0)


def residual_block(x, w1, b1, g1, be1, m1, v1, w2, b2, g2, be2, m2, v2, eps=1e-5):
    """ResidualBlock forward (eval-mode BN, dropout=0, skip connection).

    x: (B, D, H, W, C) float32 channels-last (transpose of PyTorch NCDHW).
    w*: (3, 3, 3, Cin, Cout) conv weights ("DHWIO"), b*: (C,) conv biases.
    g/be/m/v: BatchNorm3d weight / bias / running_mean / running_var.
    """
    B, D, H, W, C = x.shape
    WC = W * C

    # Padded-W lane groups: W + 2 halos, plus alignment groups so the K lane
    # width Wg*C is a multiple of 128 when possible (e.g. 12*32 = 384).
    extra = 0
    while ((W + 2 + extra) * C) % 128 != 0 and extra < 8:
        extra += 1
    Wg = (W + 2 + extra) if ((W + 2 + extra) * C) % 128 == 0 else (W + 2)
    KL = Wg * C

    # Fold eval-mode BN: per-Cout scale goes into the (bf16) conv weights, the
    # shift (which also absorbs the conv bias) stays in f32, pre-tiled over W so
    # the in-kernel bias add is a plain lane-dense broadcast over rows.
    s1 = g1 / jnp.sqrt(v1 + eps)
    s2 = g2 / jnp.sqrt(v2 + eps)
    sh1 = jnp.tile(be1 + (b1 - m1) * s1, W).reshape(1, WC).astype(jnp.float32)
    sh2 = jnp.tile(be2 + (b2 - m2) * s2, W).reshape(1, WC).astype(jnp.float32)

    # Banded-W selector: S[kw, j, w] = 1 iff input lane-group j holds input
    # position w + kw - 1.  Lane-group layout of the scratch rows:
    #   j = 0..W-1  -> interior input w = j       (written each step)
    #   j = W       -> right halo (input w = W)   (zero)
    #   j = W+1     -> left  halo (input w = -1)  (zero)
    #   j >= W+2    -> lane-alignment pad         (zero data, zero weight)
    S = np.zeros((3, Wg, W), np.float32)
    for kw in range(3):
        for w in range(W):
            w_in = w + kw - 1
            if 0 <= w_in < W:
                j = w_in
            elif w_in == W:
                j = W
            else:
                j = W + 1
            S[kw, j, w] = 1.0
    S = jnp.asarray(S)

    def pack(wconv, scale):
        wf = wconv * scale                                    # fold BN scale on Cout
        wp = jnp.einsum('kjw,dhkio->dhjiwo', S, wf)           # (3,3,Wg,Cin,W,Cout)
        return wp.reshape(9, KL, WC).astype(jnp.bfloat16)     # rows=(j,ci), cols=(w,co)

    w1p = pack(w1, s1)
    w2p = pack(w2, s2)

    x_flat = x.reshape(B, D * H, WC)   # lane-dense last dim (W*C)

    out = pl.pallas_call(
        _residual_block_kernel,
        out_shape=jax.ShapeDtypeStruct((B, D * H, WC), jnp.float32),
        grid_spec=pltpu.PrefetchScalarGridSpec(
            num_scalar_prefetch=0,
            grid=(B,),
            in_specs=[
                pl.BlockSpec((1, D * H, WC), lambda b: (b, 0, 0)),   # x
                pl.BlockSpec((9, KL, WC), lambda b: (0, 0, 0)),      # w1 (banded)
                pl.BlockSpec((1, WC), lambda b: (0, 0)),             # sh1
                pl.BlockSpec((9, KL, WC), lambda b: (0, 0, 0)),      # w2 (banded)
                pl.BlockSpec((1, WC), lambda b: (0, 0)),             # sh2
            ],
            out_specs=pl.BlockSpec((1, D * H, WC), lambda b: (b, 0, 0)),
            scratch_shapes=[
                pltpu.VMEM((D + 2, H + 2, KL), jnp.float32),         # padded acts
            ],
        ),
        compiler_params=pltpu.CompilerParams(
            dimension_semantics=("parallel",),
            vmem_limit_bytes=32 * 1024 * 1024,
        ),
    )(x_flat, w1p, sh1, w2p, sh2)
    return out.reshape(B, D, H, W, C)


# --------------------------- pure-JAX reference -------------------------------
def _conv3d_ref(x, w, b):
    y = jax.lax.conv_general_dilated(
        x, w, window_strides=(1, 1, 1), padding="SAME",
        dimension_numbers=("NDHWC", "DHWIO", "NDHWC"),
        precision=jax.lax.Precision.HIGHEST)
    return y + b


def _bn_ref(x, gamma, beta, mean, var, eps=1e-5):
    return (x - mean) / jnp.sqrt(var + eps) * gamma + beta


def _residual_block_ref(x, p):
    out = jax.nn.relu(_bn_ref(_conv3d_ref(x, p["w1"], p["b1"]),
                              p["g1"], p["be1"], p["m1"], p["v1"]))
    # dropout p=0.0 -> identity
    out = _bn_ref(_conv3d_ref(out, p["w2"], p["b2"]),
                  p["g2"], p["be2"], p["m2"], p["v2"])
    out = out + x
    return jax.nn.relu(out)


if __name__ == "__main__":
    B, C, S = 2, 32, 8  # batch, channels, spatial (D = H = W = S)
    eps = 1e-5

    key = jax.random.PRNGKey(0)
    keys = jax.random.split(key, 12)

    # Input (channels-last NDHWC; PyTorch equivalent is x.permute to NCDHW)
    x = jax.random.normal(keys[0], (B, S, S, S, C), dtype=jnp.float32)

    # Conv weights, layout (kd, kh, kw, Cin, Cout)
    fan_in = C * 3 * 3 * 3
    w1 = jax.random.normal(keys[1], (3, 3, 3, C, C), jnp.float32) / jnp.sqrt(fan_in)
    b1 = jax.random.normal(keys[2], (C,), jnp.float32) * 0.1
    w2 = jax.random.normal(keys[3], (3, 3, 3, C, C), jnp.float32) / jnp.sqrt(fan_in)
    b2 = jax.random.normal(keys[4], (C,), jnp.float32) * 0.1

    # BatchNorm3d parameters (eval mode, deterministic non-trivial stats)
    g1 = 1.0 + 0.1 * jax.random.normal(keys[5], (C,), jnp.float32)
    be1 = 0.1 * jax.random.normal(keys[6], (C,), jnp.float32)
    m1 = 0.1 * jax.random.normal(keys[7], (C,), jnp.float32)
    v1 = 1.0 + 0.1 * jax.random.uniform(keys[8], (C,), jnp.float32)
    g2 = 1.0 + 0.1 * jax.random.normal(keys[9], (C,), jnp.float32)
    be2 = 0.1 * jax.random.normal(keys[10], (C,), jnp.float32)
    m2 = 0.1 * jax.random.normal(keys[11], (C,), jnp.float32)
    v2 = 1.0 + 0.1 * jax.random.uniform(jax.random.PRNGKey(42), (C,), jnp.float32)

    out = residual_block(x, w1, b1, g1, be1, m1, v1, w2, b2, g2, be2, m2, v2, eps)
    out = jax.block_until_ready(out)

    ref = _residual_block_ref(
        x,
        dict(w1=w1, b1=b1, g1=g1, be1=be1, m1=m1, v1=v1,
             w2=w2, b2=b2, g2=g2, be2=be2, m2=m2, v2=v2),
    )
    ref = jax.block_until_ready(ref)

    assert out.shape == (B, S, S, S, C)
    # bf16 matmul operands with f32 accumulation (and a bf16 out1 intermediate):
    # expect ~1e-2 max abs error vs the f32 HIGHEST-precision reference.
    max_err = float(jnp.max(jnp.abs(out - ref)))
    assert max_err < 5e-2, f"mismatch vs reference: {max_err}"

    print("KERNEL_OK")
</pallas_src>

<mosaic_0001>
module attributes {stable_mosaic.version = 11 : i64} {
  func.func @_residual_block_kernel(%arg0: i32, %arg1: memref<1x64x256xf32, #tpu.memory_space<vmem>>, %arg2: memref<9x384x256xbf16, #tpu.memory_space<vmem>>, %arg3: memref<1x256xf32, #tpu.memory_space<vmem>>, %arg4: memref<9x384x256xbf16, #tpu.memory_space<vmem>>, %arg5: memref<1x256xf32, #tpu.memory_space<vmem>>, %arg6: memref<1x64x256xf32, #tpu.memory_space<vmem>>, %arg7: memref<10x10x384xf32, #tpu.memory_space<vmem>>) attributes {dimension_semantics = [#tpu.dimension_semantics<parallel>], iteration_bounds = array<i64: 2>, scalar_prefetch = 0 : i64, scratch_operands = 1 : i64, tpu.core_type = #tpu.core_type<tc>, window_params = [{transform_indices = @transform_0, window_bounds = array<i64: 1, 64, 256>}, {pipeline_mode = #tpu.pipeline_mode<synchronous>, transform_indices = @transform_1, window_bounds = array<i64: 9, 384, 256>}, {pipeline_mode = #tpu.pipeline_mode<synchronous>, transform_indices = @transform_2, window_bounds = array<i64: 1, 256>}, {pipeline_mode = #tpu.pipeline_mode<synchronous>, transform_indices = @transform_3, window_bounds = array<i64: 9, 384, 256>}, {pipeline_mode = #tpu.pipeline_mode<synchronous>, transform_indices = @transform_4, window_bounds = array<i64: 1, 256>}, {transform_indices = @transform_5, window_bounds = array<i64: 1, 64, 256>}]} {
    %cst = arith.constant 0.000000e+00 : f32
    %0 = vector.broadcast %cst : f32 to vector<10x10x384xf32>
    %c0 = arith.constant 0 : index
    %c0_0 = arith.constant 0 : index
    %c0_1 = arith.constant 0 : index
    %1 = vector.load %arg7[%c0, %c0_0, %c0_1] : memref<10x10x384xf32, #tpu.memory_space<vmem>>, vector<10x10x384xf32>
    tpu.vector_store %arg7[%c0, %c0_0, %c0_1], %0 {strides = array<i32>} : memref<10x10x384xf32, #tpu.memory_space<vmem>>, vector<10x10x384xf32>,
    %c0_2 = arith.constant 0 : index
    %c0_3 = arith.constant 0 : index
    %c0_4 = arith.constant 0 : index
    %2 = vector.load %arg1[%c0_2, %c0_3, %c0_4] : memref<1x64x256xf32, #tpu.memory_space<vmem>>, vector<1x64x256xf32>
    %3 = vector.shape_cast %2 : vector<1x64x256xf32> to vector<64x256xf32>
    %4 = vector.shape_cast %3 : vector<64x256xf32> to vector<8x8x256xf32>
    %c1 = arith.constant 1 : index
    %c1_5 = arith.constant 1 : index
    %c0_6 = arith.constant 0 : index
    %5 = vector.load %arg7[%c1, %c1_5, %c0_6] : memref<10x10x384xf32, #tpu.memory_space<vmem>>, vector<8x8x256xf32>
    tpu.vector_store %arg7[%c1, %c1_5, %c0_6], %4 {strides = array<i32>} : memref<10x10x384xf32, #tpu.memory_space<vmem>>, vector<8x8x256xf32>,
    %cst_7 = arith.constant 0.000000e+00 : f32
    %6 = vector.broadcast %cst_7 : f32 to vector<64x256xf32>
    %c0_8 = arith.constant 0 : index
    %c0_9 = arith.constant 0 : index
    %c0_10 = arith.constant 0 : index
    %7 = vector.load %arg7[%c0_8, %c0_9, %c0_10] : memref<10x10x384xf32, #tpu.memory_space<vmem>>, vector<8x8x384xf32>
    %8 = vector.shape_cast %7 : vector<8x8x384xf32> to vector<64x384xf32>
    %9 = arith.truncf %8 : vector<64x384xf32> to vector<64x384xbf16>
    %c0_11 = arith.constant 0 : index
    %c0_12 = arith.constant 0 : index
    %c0_13 = arith.constant 0 : index
    %10 = vector.load %arg2[%c0_11, %c0_12, %c0_13] : memref<9x384x256xbf16, #tpu.memory_space<vmem>>, vector<1x384x256xbf16>
    %11 = vector.shape_cast %10 : vector<1x384x256xbf16> to vector<384x256xbf16>
    %cst_14 = arith.constant dense<0.000000e+00> : vector<64x256xf32>
    %12 = tpu.matmul %9, %11, %cst_14 {dimension_numbers = #tpu.dot_dimension_numbers<[1], [0], [0], [1], [0, 0, 1, 1], [], []>} : vector<64x384xbf16>, vector<384x256xbf16>, vector<64x256xf32> -> vector<64x256xf32>
    %13 = arith.addf %6, %12 : vector<64x256xf32>
    %c0_15 = arith.constant 0 : index
    %c1_16 = arith.constant 1 : index
    %c0_17 = arith.constant 0 : index
    %14 = vector.load %arg7[%c0_15, %c1_16, %c0_17] : memref<10x10x384xf32, #tpu.memory_space<vmem>>, vector<8x8x384xf32>
    %15 = vector.shape_cast %14 : vector<8x8x384xf32> to vector<64x384xf32>
    %16 = arith.truncf %15 : vector<64x384xf32> to vector<64x384xbf16>
    %c1_18 = arith.constant 1 : index
    %c0_19 = arith.constant 0 : index
    %c0_20 = arith.constant 0 : index
    %17 = vector.load %arg2[%c1_18, %c0_19, %c0_20] : memref<9x384x256xbf16, #tpu.memory_space<vmem>>, vector<1x384x256xbf16>
    %18 = vector.shape_cast %17 : vector<1x384x256xbf16> to vector<384x256xbf16>
    %cst_21 = arith.constant dense<0.000000e+00> : vector<64x256xf32>
    %19 = tpu.matmul %16, %18, %cst_21 {dimension_numbers = #tpu.dot_dimension_numbers<[1], [0], [0], [1], [0, 0, 1, 1], [], []>} : vector<64x384xbf16>, vector<384x256xbf16>, vector<64x256xf32> -> vector<64x256xf32>
    %20 = arith.addf %13, %19 : vector<64x256xf32>
    %c0_22 = arith.constant 0 : index
    %c2 = arith.constant 2 : index
    %c0_23 = arith.constant 0 : index
    %21 = vector.load %arg7[%c0_22, %c2, %c0_23] : memref<10x10x384xf32, #tpu.memory_space<vmem>>, vector<8x8x384xf32>
    %22 = vector.shape_cast %21 : vector<8x8x384xf32> to vector<64x384xf32>
    %23 = arith.truncf %22 : vector<64x384xf32> to vector<64x384xbf16>
    %c2_24 = arith.constant 2 : index
    %c0_25 = arith.constant 0 : index
    %c0_26 = arith.constant 0 : index
    %24 = vector.load %arg2[%c2_24, %c0_25, %c0_26] : memref<9x384x256xbf16, #tpu.memory_space<vmem>>, vector<1x384x256xbf16>
    %25 = vector.shape_cast %24 : vector<1x384x256xbf16> to vector<384x256xbf16>
    %cst_27 = arith.constant dense<0.000000e+00> : vector<64x256xf32>
    %26 = tpu.matmul %23, %25, %cst_27 {dimension_numbers = #tpu.dot_dimension_numbers<[1], [0], [0], [1], [0, 0, 1, 1], [], []>} : vector<64x384xbf16>, vector<384x256xbf16>, vector<64x256xf32> -> vector<64x256xf32>
    %27 = arith.addf %20, %26 : vector<64x256xf32>
    %c1_28 = arith.constant 1 : index
    %c0_29 = arith.constant 0 : index
    %c0_30 = arith.constant 0 : index
    %28 = vector.load %arg7[%c1_28, %c0_29, %c0_30] : memref<10x10x384xf32, #tpu.memory_space<vmem>>, vector<8x8x384xf32>
    %29 = vector.shape_cast %28 : vector<8x8x384xf32> to vector<64x384xf32>
    %30 = arith.truncf %29 : vector<64x384xf32> to vector<64x384xbf16>
    %c3 = arith.constant 3 : index
    %c0_31 = arith.constant 0 : index
    %c0_32 = arith.constant 0 : index
    %31 = vector.load %arg2[%c3, %c0_31, %c0_32] : memref<9x384x256xbf16, #tpu.memory_space<vmem>>, vector<1x384x256xbf16>
    %32 = vector.shape_cast %31 : vector<1x384x256xbf16> to vector<384x256xbf16>
    %cst_33 = arith.constant dense<0.000000e+00> : vector<64x256xf32>
    %33 = tpu.matmul %30, %32, %cst_33 {dimension_numbers = #tpu.dot_dimension_numbers<[1], [0], [0], [1], [0, 0, 1, 1], [], []>} : vector<64x384xbf16>, vector<384x256xbf16>, vector<64x256xf32> -> vector<64x256xf32>
    %34 = arith.addf %27, %33 : vector<64x256xf32>
    %c1_34 = arith.constant 1 : index
    %c1_35 = arith.constant 1 : index
    %c0_36 = arith.constant 0 : index
    %35 = vector.load %arg7[%c1_34, %c1_35, %c0_36] : memref<10x10x384xf32, #tpu.memory_space<vmem>>, vector<8x8x384xf32>
    %36 = vector.shape_cast %35 : vector<8x8x384xf32> to vector<64x384xf32>
    %37 = arith.truncf %36 : vector<64x384xf32> to vector<64x384xbf16>
    %c4 = arith.constant 4 : index
    %c0_37 = arith.constant 0 : index
    %c0_38 = arith.constant 0 : index
    %38 = vector.load %arg2[%c4, %c0_37, %c0_38] : memref<9x384x256xbf16, #tpu.memory_space<vmem>>, vector<1x384x256xbf16>
    %39 = vector.shape_cast %38 : vector<1x384x256xbf16> to vector<384x256xbf16>
    %cst_39 = arith.constant dense<0.000000e+00> : vector<64x256xf32>
    %40 = tpu.matmul %37, %39, %cst_39 {dimension_numbers = #tpu.dot_dimension_numbers<[1], [0], [0], [1], [0, 0, 1, 1], [], []>} : vector<64x384xbf16>, vector<384x256xbf16>, vector<64x256xf32> -> vector<64x256xf32>
    %41 = arith.addf %34, %40 : vector<64x256xf32>
    %c1_40 = arith.constant 1 : index
    %c2_41 = arith.constant 2 : index
    %c0_42 = arith.constant 0 : index
    %42 = vector.load %arg7[%c1_40, %c2_41, %c0_42] : memref<10x10x384xf32, #tpu.memory_space<vmem>>, vector<8x8x384xf32>
    %43 = vector.shape_cast %42 : vector<8x8x384xf32> to vector<64x384xf32>
    %44 = arith.truncf %43 : vector<64x384xf32> to vector<64x384xbf16>
    %c5 = arith.constant 5 : index
    %c0_43 = arith.constant 0 : index
    %c0_44 = arith.constant 0 : index
    %45 = vector.load %arg2[%c5, %c0_43, %c0_44] : memref<9x384x256xbf16, #tpu.memory_space<vmem>>, vector<1x384x256xbf16>
    %46 = vector.shape_cast %45 : vector<1x384x256xbf16> to vector<384x256xbf16>
    %cst_45 = arith.constant dense<0.000000e+00> : vector<64x256xf32>
    %47 = tpu.matmul %44, %46, %cst_45 {dimension_numbers = #tpu.dot_dimension_numbers<[1], [0], [0], [1], [0, 0, 1, 1], [], []>} : vector<64x384xbf16>, vector<384x256xbf16>, vector<64x256xf32> -> vector<64x256xf32>
    %48 = arith.addf %41, %47 : vector<64x256xf32>
    %c2_46 = arith.constant 2 : index
    %c0_47 = arith.constant 0 : index
    %c0_48 = arith.constant 0 : index
    %49 = vector.load %arg7[%c2_46, %c0_47, %c0_48] : memref<10x10x384xf32, #tpu.memory_space<vmem>>, vector<8x8x384xf32>
    %50 = vector.shape_cast %49 : vector<8x8x384xf32> to vector<64x384xf32>
    %51 = arith.truncf %50 : vector<64x384xf32> to vector<64x384xbf16>
    %c6 = arith.constant 6 : index
    %c0_49 = arith.constant 0 : index
    %c0_50 = arith.constant 0 : index
    %52 = vector.load %arg2[%c6, %c0_49, %c0_50] : memref<9x384x256xbf16, #tpu.memory_space<vmem>>, vector<1x384x256xbf16>
    %53 = vector.shape_cast %52 : vector<1x384x256xbf16> to vector<384x256xbf16>
    %cst_51 = arith.constant dense<0.000000e+00> : vector<64x256xf32>
    %54 = tpu.matmul %51, %53, %cst_51 {dimension_numbers = #tpu.dot_dimension_numbers<[1], [0], [0], [1], [0, 0, 1, 1], [], []>} : vector<64x384xbf16>, vector<384x256xbf16>, vector<64x256xf32> -> vector<64x256xf32>
    %55 = arith.addf %48, %54 : vector<64x256xf32>
    %c2_52 = arith.constant 2 : index
    %c1_53 = arith.constant 1 : index
    %c0_54 = arith.constant 0 : index
    %56 = vector.load %arg7[%c2_52, %c1_53, %c0_54] : memref<10x10x384xf32, #tpu.memory_space<vmem>>, vector<8x8x384xf32>
    %57 = vector.shape_cast %56 : vector<8x8x384xf32> to vector<64x384xf32>
    %58 = arith.truncf %57 : vector<64x384xf32> to vector<64x384xbf16>
    %c7 = arith.constant 7 : index
    %c0_55 = arith.constant 0 : index
    %c0_56 = arith.constant 0 : index
    %59 = vector.load %arg2[%c7, %c0_55, %c0_56] : memref<9x384x256xbf16, #tpu.memory_space<vmem>>, vector<1x384x256xbf16>
    %60 = vector.shape_cast %59 : vector<1x384x256xbf16> to vector<384x256xbf16>
    %cst_57 = arith.constant dense<0.000000e+00> : vector<64x256xf32>
    %61 = tpu.matmul %58, %60, %cst_57 {dimension_numbers = #tpu.dot_dimension_numbers<[1], [0], [0], [1], [0, 0, 1, 1], [], []>} : vector<64x384xbf16>, vector<384x256xbf16>, vector<64x256xf32> -> vector<64x256xf32>
    %62 = arith.addf %55, %61 : vector<64x256xf32>
    %c2_58 = arith.constant 2 : index
    %c2_59 = arith.constant 2 : index
    %c0_60 = arith.constant 0 : index
    %63 = vector.load %arg7[%c2_58, %c2_59, %c0_60] : memref<10x10x384xf32, #tpu.memory_space<vmem>>, vector<8x8x384xf32>
    %64 = vector.shape_cast %63 : vector<8x8x384xf32> to vector<64x384xf32>
    %65 = arith.truncf %64 : vector<64x384xf32> to vector<64x384xbf16>
    %c8 = arith.constant 8 : index
    %c0_61 = arith.constant 0 : index
    %c0_62 = arith.constant 0 : index
    %66 = vector.load %arg2[%c8, %c0_61, %c0_62] : memref<9x384x256xbf16, #tpu.memory_space<vmem>>, vector<1x384x256xbf16>
    %67 = vector.shape_cast %66 : vector<1x384x256xbf16> to vector<384x256xbf16>
    %cst_63 = arith.constant dense<0.000000e+00> : vector<64x256xf32>
    %68 = tpu.matmul %65, %67, %cst_63 {dimension_numbers = #tpu.dot_dimension_numbers<[1], [0], [0], [1], [0, 0, 1, 1], [], []>} : vector<64x384xbf16>, vector<384x256xbf16>, vector<64x256xf32> -> vector<64x256xf32>
    %69 = arith.addf %62, %68 : vector<64x256xf32>
    %c0_64 = arith.constant 0 : index
    %c0_65 = arith.constant 0 : index
    %70 = vector.load %arg3[%c0_64, %c0_65] : memref<1x256xf32, #tpu.memory_space<vmem>>, vector<1x256xf32>
    %71 = vector.broadcast %70 : vector<1x256xf32> to vector<64x256xf32>
    %72 = arith.addf %69, %71 : vector<64x256xf32>
    %cst_66 = arith.constant 0.000000e+00 : f32
    %73 = vector.broadcast %cst_66 : f32 to vector<64x256xf32>
    %74 = arith.maximumf %72, %73 : vector<64x256xf32>
    %75 = vector.shape_cast %74 : vector<64x256xf32> to vector<8x8x256xf32>
    %c1_67 = arith.constant 1 : index
    %c1_68 = arith.constant 1 : index
    %c0_69 = arith.constant 0 : index
    %76 = vector.load %arg7[%c1_67, %c1_68, %c0_69] : memref<10x10x384xf32, #tpu.memory_space<vmem>>, vector<8x8x256xf32>
    tpu.vector_store %arg7[%c1_67, %c1_68, %c0_69], %75 {strides = array<i32>} : memref<10x10x384xf32, #tpu.memory_space<vmem>>, vector<8x8x256xf32>,
    %cst_70 = arith.constant 0.000000e+00 : f32
    %77 = vector.broadcast %cst_70 : f32 to vector<64x256xf32>
    %c0_71 = arith.constant 0 : index
    %c0_72 = arith.constant 0 : index
    %c0_73 = arith.constant 0 : index
    %78 = vector.load %arg7[%c0_71, %c0_72, %c0_73] : memref<10x10x384xf32, #tpu.memory_space<vmem>>, vector<8x8x384xf32>
    %79 = vector.shape_cast %78 : vector<8x8x384xf32> to vector<64x384xf32>
    %80 = arith.truncf %79 : vector<64x384xf32> to vector<64x384xbf16>
    %c0_74 = arith.constant 0 : index
    %c0_75 = arith.constant 0 : index
    %c0_76 = arith.constant 0 : index
    %81 = vector.load %arg4[%c0_74, %c0_75, %c0_76] : memref<9x384x256xbf16, #tpu.memory_space<vmem>>, vector<1x384x256xbf16>
    %82 = vector.shape_cast %81 : vector<1x384x256xbf16> to vector<384x256xbf16>
    %cst_77 = arith.constant dense<0.000000e+00> : vector<64x256xf32>
    %83 = tpu.matmul %80, %82, %cst_77 {dimension_numbers = #tpu.dot_dimension_numbers<[1], [0], [0], [1], [0, 0, 1, 1], [], []>} : vector<64x384xbf16>, vector<384x256xbf16>, vector<64x256xf32> -> vector<64x256xf32>
    %84 = arith.addf %77, %83 : vector<64x256xf32>
    %c0_78 = arith.constant 0 : index
    %c1_79 = arith.constant 1 : index
    %c0_80 = arith.constant 0 : index
    %85 = vector.load %arg7[%c0_78, %c1_79, %c0_80] : memref<10x10x384xf32, #tpu.memory_space<vmem>>, vector<8x8x384xf32>
    %86 = vector.shape_cast %85 : vector<8x8x384xf32> to vector<64x384xf32>
    %87 = arith.truncf %86 : vector<64x384xf32> to vector<64x384xbf16>
    %c1_81 = arith.constant 1 : index
    %c0_82 = arith.constant 0 : index
    %c0_83 = arith.constant 0 : index
    %88 = vector.load %arg4[%c1_81, %c0_82, %c0_83] : memref<9x384x256xbf16, #tpu.memory_space<vmem>>, vector<1x384x256xbf16>
    %89 = vector.shape_cast %88 : vector<1x384x256xbf16> to vector<384x256xbf16>
    %cst_84 = arith.constant dense<0.000000e+00> : vector<64x256xf32>
    %90 = tpu.matmul %87, %89, %cst_84 {dimension_numbers = #tpu.dot_dimension_numbers<[1], [0], [0], [1], [0, 0, 1, 1], [], []>} : vector<64x384xbf16>, vector<384x256xbf16>, vector<64x256xf32> -> vector<64x256xf32>
    %91 = arith.addf %84, %90 : vector<64x256xf32>
    %c0_85 = arith.constant 0 : index
    %c2_86 = arith.constant 2 : index
    %c0_87 = arith.constant 0 : index
    %92 = vector.load %arg7[%c0_85, %c2_86, %c0_87] : memref<10x10x384xf32, #tpu.memory_space<vmem>>, vector<8x8x384xf32>
    %93 = vector.shape_cast %92 : vector<8x8x384xf32> to vector<64x384xf32>
    %94 = arith.truncf %93 : vector<64x384xf32> to vector<64x384xbf16>
    %c2_88 = arith.constant 2 : index
    %c0_89 = arith.constant 0 : index
    %c0_90 = arith.constant 0 : index
    %95 = vector.load %arg4[%c2_88, %c0_89, %c0_90] : memref<9x384x256xbf16, #tpu.memory_space<vmem>>, vector<1x384x256xbf16>
    %96 = vector.shape_cast %95 : vector<1x384x256xbf16> to vector<384x256xbf16>
    %cst_91 = arith.constant dense<0.000000e+00> : vector<64x256xf32>
    %97 = tpu.matmul %94, %96, %cst_91 {dimension_numbers = #tpu.dot_dimension_numbers<[1], [0], [0], [1], [0, 0, 1, 1], [], []>} : vector<64x384xbf16>, vector<384x256xbf16>, vector<64x256xf32> -> vector<64x256xf32>
    %98 = arith.addf %91, %97 : vector<64x256xf32>
    %c1_92 = arith.constant 1 : index
    %c0_93 = arith.constant 0 : index
    %c0_94 = arith.constant 0 : index
    %99 = vector.load %arg7[%c1_92, %c0_93, %c0_94] : memref<10x10x384xf32, #tpu.memory_space<vmem>>, vector<8x8x384xf32>
    %100 = vector.shape_cast %99 : vector<8x8x384xf32> to vector<64x384xf32>
    %101 = arith.truncf %100 : vector<64x384xf32> to vector<64x384xbf16>
    %c3_95 = arith.constant 3 : index
    %c0_96 = arith.constant 0 : index
    %c0_97 = arith.constant 0 : index
    %102 = vector.load %arg4[%c3_95, %c0_96, %c0_97] : memref<9x384x256xbf16, #tpu.memory_space<vmem>>, vector<1x384x256xbf16>
    %103 = vector.shape_cast %102 : vector<1x384x256xbf16> to vector<384x256xbf16>
    %cst_98 = arith.constant dense<0.000000e+00> : vector<64x256xf32>
    %104 = tpu.matmul %101, %103, %cst_98 {dimension_numbers = #tpu.dot_dimension_numbers<[1], [0], [0], [1], [0, 0, 1, 1], [], []>} : vector<64x384xbf16>, vector<384x256xbf16>, vector<64x256xf32> -> vector<64x256xf32>
    %105 = arith.addf %98, %104 : vector<64x256xf32>
    %c1_99 = arith.constant 1 : index
    %c1_100 = arith.constant 1 : index
    %c0_101 = arith.constant 0 : index
    %106 = vector.load %arg7[%c1_99, %c1_100, %c0_101] : memref<10x10x384xf32, #tpu.memory_space<vmem>>, vector<8x8x384xf32>
    %107 = vector.shape_cast %106 : vector<8x8x384xf32> to vector<64x384xf32>
    %108 = arith.truncf %107 : vector<64x384xf32> to vector<64x384xbf16>
    %c4_102 = arith.constant 4 : index
    %c0_103 = arith.constant 0 : index
    %c0_104 = arith.constant 0 : index
    %109 = vector.load %arg4[%c4_102, %c0_103, %c0_104] : memref<9x384x256xbf16, #tpu.memory_space<vmem>>, vector<1x384x256xbf16>
    %110 = vector.shape_cast %109 : vector<1x384x256xbf16> to vector<384x256xbf16>
    %cst_105 = arith.constant dense<0.000000e+00> : vector<64x256xf32>
    %111 = tpu.matmul %108, %110, %cst_105 {dimension_numbers = #tpu.dot_dimension_numbers<[1], [0], [0], [1], [0, 0, 1, 1], [], []>} : vector<64x384xbf16>, vector<384x256xbf16>, vector<64x256xf32> -> vector<64x256xf32>
    %112 = arith.addf %105, %111 : vector<64x256xf32>
    %c1_106 = arith.constant 1 : index
    %c2_107 = arith.constant 2 : index
    %c0_108 = arith.constant 0 : index
    %113 = vector.load %arg7[%c1_106, %c2_107, %c0_108] : memref<10x10x384xf32, #tpu.memory_space<vmem>>, vector<8x8x384xf32>
    %114 = vector.shape_cast %113 : vector<8x8x384xf32> to vector<64x384xf32>
    %115 = arith.truncf %114 : vector<64x384xf32> to vector<64x384xbf16>
    %c5_109 = arith.constant 5 : index
    %c0_110 = arith.constant 0 : index
    %c0_111 = arith.constant 0 : index
    %116 = vector.load %arg4[%c5_109, %c0_110, %c0_111] : memref<9x384x256xbf16, #tpu.memory_space<vmem>>, vector<1x384x256xbf16>
    %117 = vector.shape_cast %116 : vector<1x384x256xbf16> to vector<384x256xbf16>
    %cst_112 = arith.constant dense<0.000000e+00> : vector<64x256xf32>
    %118 = tpu.matmul %115, %117, %cst_112 {dimension_numbers = #tpu.dot_dimension_numbers<[1], [0], [0], [1], [0, 0, 1, 1], [], []>} : vector<64x384xbf16>, vector<384x256xbf16>, vector<64x256xf32> -> vector<64x256xf32>
    %119 = arith.addf %112, %118 : vector<64x256xf32>
    %c2_113 = arith.constant 2 : index
    %c0_114 = arith.constant 0 : index
    %c0_115 = arith.constant 0 : index
    %120 = vector.load %arg7[%c2_113, %c0_114, %c0_115] : memref<10x10x384xf32, #tpu.memory_space<vmem>>, vector<8x8x384xf32>
    %121 = vector.shape_cast %120 : vector<8x8x384xf32> to vector<64x384xf32>
    %122 = arith.truncf %121 : vector<64x384xf32> to vector<64x384xbf16>
    %c6_116 = arith.constant 6 : index
    %c0_117 = arith.constant 0 : index
    %c0_118 = arith.constant 0 : index
    %123 = vector.load %arg4[%c6_116, %c0_117, %c0_118] : memref<9x384x256xbf16, #tpu.memory_space<vmem>>, vector<1x384x256xbf16>
    %124 = vector.shape_cast %123 : vector<1x384x256xbf16> to vector<384x256xbf16>
    %cst_119 = arith.constant dense<0.000000e+00> : vector<64x256xf32>
    %125 = tpu.matmul %122, %124, %cst_119 {dimension_numbers = #tpu.dot_dimension_numbers<[1], [0], [0], [1], [0, 0, 1, 1], [], []>} : vector<64x384xbf16>, vector<384x256xbf16>, vector<64x256xf32> -> vector<64x256xf32>
    %126 = arith.addf %119, %125 : vector<64x256xf32>
    %c2_120 = arith.constant 2 : index
    %c1_121 = arith.constant 1 : index
    %c0_122 = arith.constant 0 : index
    %127 = vector.load %arg7[%c2_120, %c1_121, %c0_122] : memref<10x10x384xf32, #tpu.memory_space<vmem>>, vector<8x8x384xf32>
    %128 = vector.shape_cast %127 : vector<8x8x384xf32> to vector<64x384xf32>
    %129 = arith.truncf %128 : vector<64x384xf32> to vector<64x384xbf16>
    %c7_123 = arith.constant 7 : index
    %c0_124 = arith.constant 0 : index
    %c0_125 = arith.constant 0 : index
    %130 = vector.load %arg4[%c7_123, %c0_124, %c0_125] : memref<9x384x256xbf16, #tpu.memory_space<vmem>>, vector<1x384x256xbf16>
    %131 = vector.shape_cast %130 : vector<1x384x256xbf16> to vector<384x256xbf16>
    %cst_126 = arith.constant dense<0.000000e+00> : vector<64x256xf32>
    %132 = tpu.matmul %129, %131, %cst_126 {dimension_numbers = #tpu.dot_dimension_numbers<[1], [0], [0], [1], [0, 0, 1, 1], [], []>} : vector<64x384xbf16>, vector<384x256xbf16>, vector<64x256xf32> -> vector<64x256xf32>
    %133 = arith.addf %126, %132 : vector<64x256xf32>
    %c2_127 = arith.constant 2 : index
    %c2_128 = arith.constant 2 : index
    %c0_129 = arith.constant 0 : index
    %134 = vector.load %arg7[%c2_127, %c2_128, %c0_129] : memref<10x10x384xf32, #tpu.memory_space<vmem>>, vector<8x8x384xf32>
    %135 = vector.shape_cast %134 : vector<8x8x384xf32> to vector<64x384xf32>
    %136 = arith.truncf %135 : vector<64x384xf32> to vector<64x384xbf16>
    %c8_130 = arith.constant 8 : index
    %c0_131 = arith.constant 0 : index
    %c0_132 = arith.constant 0 : index
    %137 = vector.load %arg4[%c8_130, %c0_131, %c0_132] : memref<9x384x256xbf16, #tpu.memory_space<vmem>>, vector<1x384x256xbf16>
    %138 = vector.shape_cast %137 : vector<1x384x256xbf16> to vector<384x256xbf16>
    %cst_133 = arith.constant dense<0.000000e+00> : vector<64x256xf32>
    %139 = tpu.matmul %136, %138, %cst_133 {dimension_numbers = #tpu.dot_dimension_numbers<[1], [0], [0], [1], [0, 0, 1, 1], [], []>} : vector<64x384xbf16>, vector<384x256xbf16>, vector<64x256xf32> -> vector<64x256xf32>
    %140 = arith.addf %133, %139 : vector<64x256xf32>
    %c0_134 = arith.constant 0 : index
    %c0_135 = arith.constant 0 : index
    %141 = vector.load %arg5[%c0_134, %c0_135] : memref<1x256xf32, #tpu.memory_space<vmem>>, vector<1x256xf32>
    %142 = vector.broadcast %141 : vector<1x256xf32> to vector<64x256xf32>
    %143 = arith.addf %140, %142 : vector<64x256xf32>
    %144 = arith.addf %143, %3 : vector<64x256xf32>
    %cst_136 = arith.constant 0.000000e+00 : f32
    %145 = vector.broadcast %cst_136 : f32 to vector<64x256xf32>
    %146 = arith.maximumf %144, %145 : vector<64x256xf32>
    %c0_137 = arith.constant 0 : index
    %c0_138 = arith.constant 0 : index
    %c0_139 = arith.constant 0 : index
    %147 = vector.load %arg6[%c0_137, %c0_138, %c0_139] : memref<1x64x256xf32, #tpu.memory_space<vmem>>, vector<1x64x256xf32>
    %148 = vector.shape_cast %147 : vector<1x64x256xf32> to vector<64x256xf32>
    %149 = vector.shape_cast %146 : vector<64x256xf32> to vector<1x64x256xf32>
    tpu.vector_store %arg6[%c0_137, %c0_138, %c0_139], %149 {strides = array<i32>} : memref<1x64x256xf32, #tpu.memory_space<vmem>>, vector<1x64x256xf32>,
    return
  }
  func.func @transform_0(%arg0: i32) -> (i32, i32, i32) {
    %c0_i32 = arith.constant 0 : i32
    %c0_i32_0 = arith.constant 0 : i32
    %c0_i32_1 = arith.constant 0 : i32
    return %arg0, %c0_i32, %c0_i32_0 : i32, i32, i32
  }
  func.func @transform_1(%arg0: i32) -> (i32, i32, i32) {
    %c0_i32 = arith.constant 0 : i32
    %c0_i32_0 = arith.constant 0 : i32
    %c0_i32_1 = arith.constant 0 : i32
    %c0_i32_2 = arith.constant 0 : i32
    return %c0_i32, %c0_i32_0, %c0_i32_1 : i32, i32, i32
  }
  func.func @transform_2(%arg0: i32) -> (i32, i32) {
    %c0_i32 = arith.constant 0 : i32
    %c0_i32_0 = arith.constant 0 : i32
    %c0_i32_1 = arith.constant 0 : i32
    return %c0_i32, %c0_i32_0 : i32, i32
  }
  func.func @transform_3(%arg0: i32) -> (i32, i32, i32) {
    %c0_i32 = arith.constant 0 : i32
    %c0_i32_0 = arith.constant 0 : i32
    %c0_i32_1 = arith.constant 0 : i32
    %c0_i32_2 = arith.constant 0 : i32
    return %c0_i32, %c0_i32_0, %c0_i32_1 : i32, i32, i32
  }
  func.func @transform_4(%arg0: i32) -> (i32, i32) {
    %c0_i32 = arith.constant 0 : i32
    %c0_i32_0 = arith.constant 0 : i32
    %c0_i32_1 = arith.constant 0 : i32
    return %c0_i32, %c0_i32_0 : i32, i32
  }
  func.func @transform_5(%arg0: i32) -> (i32, i32, i32) {
    %c0_i32 = arith.constant 0 : i32
    %c0_i32_0 = arith.constant 0 : i32
    %c0_i32_1 = arith.constant 0 : i32
    return %arg0, %c0_i32, %c0_i32_0 : i32, i32, i32
  }
}

</mosaic_0001>

<llo_original>
// kernel: tpu_custom_call.1
$region0: #{tpu_custom_call.1}
  #allocation0 [shape = 'u32[]', space=smem, size = 0x4, offset = 0x4, fixed_abs, tag = 'smem constant byte address 0x4 - core index']
  #allocation1 [shape = 'u32[144,128]{1,0:T(1,128)}', space=vmem, size = 0x12000, scoped, tag = 'internal scratch']
  #allocation2 [shape = 'f32[10,10,384]{2,1,0:T(8,128)}', space=vmem, size = 0x3c000, scoped, tag = 'scratch operand']
  %s0 = inlined_call_operand.hbm [shape: f32[2,64,256], index: 0, kind: input, shape index: {}]
  %s1 = inlined_call_operand.hbm [shape: bf16[9,384,256], index: 1, kind: input, shape index: {}]
  %s2 = inlined_call_operand.hbm [shape: f32[1,256], index: 2, kind: input, shape index: {}]
  %s3 = inlined_call_operand.hbm [shape: bf16[9,384,256], index: 3, kind: input, shape index: {}]
  %s4 = inlined_call_operand.hbm [shape: f32[1,256], index: 4, kind: input, shape index: {}]
  %s5 = inlined_call_operand.hbm [shape: f32[2,64,256], index: 5, kind: output, shape index: {}]
  %s6 = sld [smem:[#allocation0]]
  $region73: #{tpu_custom_call.1} parent=0
    _
  %s8 = ssub.s32 1, %s6
  %s9 = scalar_select 0, %s8, %s6
  $region1: #{tpu_custom_call.1} parent=0
    #allocation3 [shape = 'u8[131072]{0}', space=vmem, size = 0x20000, scoped, tag = 'input window, operand 0']
    #allocation4 [shape = 's32[2]{0}', space=sflag, size = 0x8, scoped, tag = 'scoped memory for tpu_custom_call.1']
    #allocation5 [shape = 's32[2]{0}', space=sflag, size = 0x8, scoped, tag = 'scoped memory for tpu_custom_call.1']
    #allocation6 [shape = 'u8[1769472]{0}', space=vmem, size = 0x1b0000, scoped, tag = 'input window, operand 1, single buffered']
    #allocation7 [shape = 's32[1]{0}', space=sflag, size = 0x4, scoped, tag = 'scoped memory for tpu_custom_call.1']
    #allocation8 [shape = 'u8[1024]{0}', space=vmem, size = 0x400, scoped, tag = 'input window, operand 2, single buffered']
    #allocation9 [shape = 'u8[1769472]{0}', space=vmem, size = 0x1b0000, scoped, tag = 'input window, operand 3, single buffered']
    #allocation10 [shape = 's32[1]{0}', space=sflag, size = 0x4, scoped, tag = 'scoped memory for tpu_custom_call.1']
    #allocation11 [shape = 'u8[1024]{0}', space=vmem, size = 0x400, scoped, tag = 'input window, operand 4, single buffered']
    #allocation12 [shape = 'u8[131072]{0}', space=vmem, size = 0x20000, scoped, tag = 'output window, operand 0']
    %10 = vsyncpa [#allocation4], 0
    %s11 = scalar_lea.sflag [#allocation4], 1
    %12 = vsyncpa %s11, 0
    %13 = vsyncpa [#allocation7], 0
    %14 = vsyncpa [#allocation10], 0
    %15 = vsyncpa [#allocation5], 0
    %s16 = scalar_lea.sflag [#allocation5], 1
    %17 = vsyncpa %s16, 0
    loop: start=0, step=1, limit=4
    $region2: #{tpu_custom_call.1} parent=1 // loop_pre_header
      _
    $region3: #{tpu_custom_call.1} parent=1 // loop_header
      %s19 = sphi 0, %s23
      %p20 = scmp.ge.s32.totalorder %s19, 4
      %s29 = sphi 0, %s31
      %s32 = sphi 0, %s29
      %s33 = sphi 0, %s32
      %s49 = sphi 0, %s33
      %s53 = sphi 0, %s53
      %s55 = sphi 0, %s53
      %s56 = sphi 0, %s55
      %s70 = sphi 0, %s56
      %s74 = sphi 0, %s74
      %s76 = sphi 0, %s74
      %s77 = sphi 0, %s76
      %s91 = sphi 0, %s77
      %s95 = sphi 0, %s95
      %s97 = sphi 0, %s95
      %s98 = sphi 0, %s97
      %s112 = sphi 0, %s98
      %s116 = sphi 0, %s116
      %s118 = sphi 0, %s116
      %s119 = sphi 0, %s118
      %s133 = sphi 0, %s119
      %s139 = sphi 0, %s141
      %s142 = sphi 0, %s139
      %s143 = sphi 0, %s142
      %s159 = sphi 0, %s143
    $region4: #{tpu_custom_call.1} parent=1 // loop_header_branch
      %22 = sbr.rel (%p20) target = $region8
    $region5: #{tpu_custom_call.1} parent=1 // loop_body
      %s24 = ssub.s32 %s19, 1
      %s25 = ssub.s32 %s19, 2
      %s26 = sadd.s32 %s19, 1
      %s27 = ssub.s32 %s19, %s26
      %p28 = scmp.eq.s32.totalorder %s27, 0
      %s30 = sadd.s32 %s29, 1
      %s31 = scalar_select %p28, %s29, %s30
      %p34 = pneg %p28
      %p35 = scmp.eq.s32.totalorder %s19, 1
      %p36 = por %p34, %p35
      %p37 = scmp.ne.s32.totalorder %s29, %s32
      %p38 = scmp.eq.s32.totalorder %s19, 0
      %p39 = por %p37, %p38
      %p40 = scmp.ne.s32.totalorder %s29, %s32
      %p41 = scmp.eq.s32.totalorder %s24, 1
      %p42 = por %p40, %p41
      %p43 = scmp.ne.s32.totalorder %s32, %s33
      %p44 = scmp.eq.s32.totalorder %s24, 0
      %p45 = por %p43, %p44
      %p46 = scmp.ne.s32.totalorder %s32, %s33
      %p47 = scmp.eq.s32.totalorder %s25, 1
      %p48 = por %p46, %p47
      %p50 = scmp.ne.s32.totalorder %s33, %s49
      %p51 = scmp.eq.s32.totalorder %s25, 0
      %p52 = por %p50, %p51
      %s54 = sadd.s32 %s53, 1
      %p57 = scmp.eq.s32.totalorder %s19, 1
      %p58 = scmp.ne.s32.totalorder %s53, %s55
      %p59 = scmp.eq.s32.totalorder %s19, 0
      %p60 = por %p58, %p59
      %p61 = scmp.ne.s32.totalorder %s53, %s55
      %p62 = scmp.eq.s32.totalorder %s24, 1
      %p63 = por %p61, %p62
      %p64 = scmp.ne.s32.totalorder %s55, %s56
      %p65 = scmp.eq.s32.totalorder %s24, 0
      %p66 = por %p64, %p65
      %p67 = scmp.ne.s32.totalorder %s55, %s56
      %p68 = scmp.eq.s32.totalorder %s25, 1
      %p69 = por %p67, %p68
      %p71 = scmp.ne.s32.totalorder %s56, %s70
      %p72 = scmp.eq.s32.totalorder %s25, 0
      %p73 = por %p71, %p72
      %s75 = sadd.s32 %s74, 1
      %p78 = scmp.eq.s32.totalorder %s19, 1
      %p79 = scmp.ne.s32.totalorder %s74, %s76
      %p80 = scmp.eq.s32.totalorder %s19, 0
      %p81 = por %p79, %p80
      %p82 = scmp.ne.s32.totalorder %s74, %s76
      %p83 = scmp.eq.s32.totalorder %s24, 1
      %p84 = por %p82, %p83
      %p85 = scmp.ne.s32.totalorder %s76, %s77
      %p86 = scmp.eq.s32.totalorder %s24, 0
      %p87 = por %p85, %p86
      %p88 = scmp.ne.s32.totalorder %s76, %s77
      %p89 = scmp.eq.s32.totalorder %s25, 1
      %p90 = por %p88, %p89
      %p92 = scmp.ne.s32.totalorder %s77, %s91
      %p93 = scmp.eq.s32.totalorder %s25, 0
      %p94 = por %p92, %p93
      %s96 = sadd.s32 %s95, 1
      %p99 = scmp.eq.s32.totalorder %s19, 1
      %p100 = scmp.ne.s32.totalorder %s95, %s97
      %p101 = scmp.eq.s32.totalorder %s19, 0
      %p102 = por %p100, %p101
      %p103 = scmp.ne.s32.totalorder %s95, %s97
      %p104 = scmp.eq.s32.totalorder %s24, 1
      %p105 = por %p103, %p104
      %p106 = scmp.ne.s32.totalorder %s97, %s98
      %p107 = scmp.eq.s32.totalorder %s24, 0
      %p108 = por %p106, %p107
      %p109 = scmp.ne.s32.totalorder %s97, %s98
      %p110 = scmp.eq.s32.totalorder %s25, 1
      %p111 = por %p109, %p110
      %p113 = scmp.ne.s32.totalorder %s98, %s112
      %p114 = scmp.eq.s32.totalorder %s25, 0
      %p115 = por %p113, %p114
      %s117 = sadd.s32 %s116, 1
      %p120 = scmp.eq.s32.totalorder %s19, 1
      %p121 = scmp.ne.s32.totalorder %s116, %s118
      %p122 = scmp.eq.s32.totalorder %s19, 0
      %p123 = por %p121, %p122
      %p124 = scmp.ne.s32.totalorder %s116, %s118
      %p125 = scmp.eq.s32.totalorder %s24, 1
      %p126 = por %p124, %p125
      %p127 = scmp.ne.s32.totalorder %s118, %s119
      %p128 = scmp.eq.s32.totalorder %s24, 0
      %p129 = por %p127, %p128
      %p130 = scmp.ne.s32.totalorder %s118, %s119
      %p131 = scmp.eq.s32.totalorder %s25, 1
      %p132 = por %p130, %p131
      %p134 = scmp.ne.s32.totalorder %s119, %s133
      %p135 = scmp.eq.s32.totalorder %s25, 0
      %p136 = por %p134, %p135
      %s137 = ssub.s32 %s19, %s26
      %p138 = scmp.eq.s32.totalorder %s137, 0
      %s140 = sadd.s32 %s139, 1
      %s141 = scalar_select %p138, %s139, %s140
      %p144 = pneg %p138
      %p145 = scmp.eq.s32.totalorder %s19, 1
      %p146 = por %p144, %p145
      %p147 = scmp.ne.s32.totalorder %s139, %s142
      %p148 = scmp.eq.s32.totalorder %s19, 0
      %p149 = por %p147, %p148
      %p150 = scmp.ne.s32.totalorder %s139, %s142
      %p151 = scmp.eq.s32.totalorder %s24, 1
      %p152 = por %p150, %p151
      %p153 = scmp.ne.s32.totalorder %s142, %s143
      %p154 = scmp.eq.s32.totalorder %s24, 0
      %p155 = por %p153, %p154
      %p156 = scmp.ne.s32.totalorder %s142, %s143
      %p157 = scmp.eq.s32.totalorder %s25, 1
      %p158 = por %p156, %p157
      %p160 = scmp.ne.s32.totalorder %s143, %s159
      %p161 = scmp.eq.s32.totalorder %s25, 0
      %p162 = por %p160, %p161
      %p163 = scmp.le.s32.totalorder 1, %s19
      %p164 = scmp.lt.s32.totalorder %s19, 3
      %p165 = pnand %p163, %p164
      %p166 = pneg %p165
      // Predicated region
      $region9: #{tpu_custom_call.1} parent=5 // pred_check
        _
      $region10: #{tpu_custom_call.1} parent=5 // pred_check_branch
        %168 = sbr.rel (%p165) target = $region12
      $region11: #{tpu_custom_call.1} parent=5 // pred_region
        %s169 = ssub.s32 %s19, 1
        // Predicated region
        $region13: #{tpu_custom_call.1} parent=11 // pred_check
          %p170 = pneg %p66
        $region14: #{tpu_custom_call.1} parent=11 // pred_check_branch
          %172 = sbr.rel (%p170) target = $region16
        $region15: #{tpu_custom_call.1} parent=11 // pred_region
          %s174 = ssub.s32 55296, 55296
          %175 = vsyncadd [#allocation7], %s174
          %s176 = sshll.u32 [#allocation6], 4
          %s177 = int_to_ptr.vmem [resolvable:$true] %s176
          %182 = dma.hbm_to_vmem [thread:$0]  %s1, 55296, %s177, [#allocation7], 128, 128, 8
        $region16: #{tpu_custom_call.1} parent=11 // pred_fallthru
          _
        // Predicated region
        $region17: #{tpu_custom_call.1} parent=11 // pred_check
          %p183 = pneg %p87
        $region18: #{tpu_custom_call.1} parent=11 // pred_check_branch
          %185 = sbr.rel (%p183) target = $region20
        $region19: #{tpu_custom_call.1} parent=11 // pred_region
          %s187 = ssub.s32 32, 32
          %188 = vsyncadd [#allocation7], %s187
          %s190 = sshll.u32 [#allocation8], 4
          %s191 = int_to_ptr.vmem [resolvable:$true] %s190
          %193 = dma.hbm_to_vmem [thread:$0]  %s2, 32, %s191, [#allocation7]
        $region20: #{tpu_custom_call.1} parent=11 // pred_fallthru
          _
        // Predicated region
        $region21: #{tpu_custom_call.1} parent=11 // pred_check
          %p194 = pneg %p108
        $region22: #{tpu_custom_call.1} parent=11 // pred_check_branch
          %196 = sbr.rel (%p194) target = $region24
        $region23: #{tpu_custom_call.1} parent=11 // pred_region
          %s198 = ssub.s32 55296, 55296
          %199 = vsyncadd [#allocation10], %s198
          %s200 = sshll.u32 [#allocation9], 4
          %s201 = int_to_ptr.vmem [resolvable:$true] %s200
          %206 = dma.hbm_to_vmem [thread:$0]  %s3, 55296, %s201, [#allocation10], 128, 128, 8
        $region24: #{tpu_custom_call.1} parent=11 // pred_fallthru
          _
        // Predicated region
        $region25: #{tpu_custom_call.1} parent=11 // pred_check
          %p207 = pneg %p129
        $region26: #{tpu_custom_call.1} parent=11 // pred_check_branch
          %209 = sbr.rel (%p207) target = $region28
        $region27: #{tpu_custom_call.1} parent=11 // pred_region
          %s211 = ssub.s32 32, 32
          %212 = vsyncadd [#allocation10], %s211
          %s214 = sshll.u32 [#allocation11], 4
          %s215 = int_to_ptr.vmem [resolvable:$true] %s214
          %217 = dma.hbm_to_vmem [thread:$0]  %s4, 32, %s215, [#allocation10]
        $region28: #{tpu_custom_call.1} parent=11 // pred_fallthru
          _
      $region12: #{tpu_custom_call.1} parent=5 // pred_fallthru
        _
      %p218 = scmp.lt.s32.totalorder %s19, 2
      // Predicated region
      $region29: #{tpu_custom_call.1} parent=5 // pred_check
        %p219 = pneg %p218
      $region30: #{tpu_custom_call.1} parent=5 // pred_check_branch
        %221 = sbr.rel (%p219) target = $region32
      $region31: #{tpu_custom_call.1} parent=5 // pred_region
        // Predicated region
        $region33: #{tpu_custom_call.1} parent=31 // pred_check
          %p222 = pneg %p39
        $region34: #{tpu_custom_call.1} parent=31 // pred_check_branch
          %224 = sbr.rel (%p222) target = $region36
        $region35: #{tpu_custom_call.1} parent=31 // pred_region
          %s225 = sand.u32 %s29, 1
          %s226 = scalar_lea.sflag [#allocation4], %s225
          %s227 = sand.u32 %s29, 1
          %s228 = smul.addr %s227, 128
          %s229 = scalar_lea.vmem [#allocation3], %s228
          %s231 = ssub.s32 2048, 2048
          %232 = vsyncadd %s226, %s231
          %s233 = smul.addr %s19, 16
          %s234 = smul.addr %s233, 128
          %s235 = scalar_lea.hbm %s0, %s234
          %s236 = sshll.u32 %s229, 4
          %s237 = int_to_ptr.vmem [resolvable:$true] %s236
          %242 = dma.hbm_to_vmem [thread:$0]  %s235, 2048, %s237, %s226, 256, 256, 16
        $region36: #{tpu_custom_call.1} parent=31 // pred_fallthru
          _
      $region32: #{tpu_custom_call.1} parent=5 // pred_fallthru
        _
      %p243 = scmp.le.s32.totalorder 1, %s19
      %p244 = scmp.lt.s32.totalorder %s19, 3
      %p245 = pnand %p243, %p244
      %p246 = pneg %p245
      // Predicated region
      $region37: #{tpu_custom_call.1} parent=5 // pred_check
        _
      $region38: #{tpu_custom_call.1} parent=5 // pred_check_branch
        %248 = sbr.rel (%p245) target = $region40
      $region39: #{tpu_custom_call.1} parent=5 // pred_region
        %s249 = ssub.s32 %s19, 1
        %s250 = sand.u32 %s32, 1
        %s251 = scalar_lea.sflag [#allocation4], %s250
        %s252 = sand.u32 %s32, 1
        %s253 = smul.addr %s252, 128
        %s254 = scalar_lea.vmem [#allocation3], %s253
        // Predicated region
        $region41: #{tpu_custom_call.1} parent=39 // pred_check
          %p255 = pneg %p45
        $region42: #{tpu_custom_call.1} parent=39 // pred_check_branch
          %257 = sbr.rel (%p255) target = $region44
        $region43: #{tpu_custom_call.1} parent=39 // pred_region
          %258 = dma.done %s251, 2048
        $region44: #{tpu_custom_call.1} parent=39 // pred_fallthru
          _
        // Predicated region
        $region45: #{tpu_custom_call.1} parent=39 // pred_check
          %p259 = pneg %p66
        $region46: #{tpu_custom_call.1} parent=39 // pred_check_branch
          %261 = sbr.rel (%p259) target = $region48
        $region47: #{tpu_custom_call.1} parent=39 // pred_region
          %262 = dma.done [#allocation7], 55296
        $region48: #{tpu_custom_call.1} parent=39 // pred_fallthru
          _
        // Predicated region
        $region49: #{tpu_custom_call.1} parent=39 // pred_check
          %p263 = pneg %p87
        $region50: #{tpu_custom_call.1} parent=39 // pred_check_branch
          %265 = sbr.rel (%p263) target = $region52
        $region51: #{tpu_custom_call.1} parent=39 // pred_region
          %266 = dma.done [#allocation7], 32
        $region52: #{tpu_custom_call.1} parent=39 // pred_fallthru
          _
        // Predicated region
        $region53: #{tpu_custom_call.1} parent=39 // pred_check
          %p267 = pneg %p108
        $region54: #{tpu_custom_call.1} parent=39 // pred_check_branch
          %269 = sbr.rel (%p267) target = $region56
        $region55: #{tpu_custom_call.1} parent=39 // pred_region
          %270 = dma.done [#allocation10], 55296
        $region56: #{tpu_custom_call.1} parent=39 // pred_fallthru
          _
        // Predicated region
        $region57: #{tpu_custom_call.1} parent=39 // pred_check
          %p271 = pneg %p129
        $region58: #{tpu_custom_call.1} parent=39 // pred_check_branch
          %273 = sbr.rel (%p271) target = $region60
        $region59: #{tpu_custom_call.1} parent=39 // pred_region
          %274 = dma.done [#allocation10], 32
        $region60: #{tpu_custom_call.1} parent=39 // pred_fallthru
          _
        %s275 = sand.u32 %s32, 1
        %s276 = scalar_lea.sflag [#allocation4], %s275
        %s277 = sand.u32 %s32, 1
        %s278 = smul.addr %s277, 128
        %s279 = scalar_lea.vmem [#allocation3], %s278
        %p280 = pneg %p45
        %p281 = pneg %p42
        %p282 = pneg %p66
        %p283 = pneg %p63
        %p284 = pneg %p87
        %p285 = pneg %p84
        %p286 = pneg %p108
        %p287 = pneg %p105
        %p288 = pneg %p129
        %p289 = pneg %p126
        %p290 = pneg %p155
        %p291 = pneg %p152
        %s292 = sand.u32 %s142, 1
        %s293 = scalar_lea.sflag [#allocation5], %s292
        %s294 = sand.u32 %s142, 1
        %s295 = smul.addr %s294, 128
        %s296 = scalar_lea.vmem [#allocation12], %s295
        %298 = vst [vmem:[#allocation2] sm:$0xff] 0.0
        %299 = vst [vmem:[#allocation2 + $0x8] sm:$0xff] 0.0
        %300 = vst [vmem:[#allocation2 + $0x10] sm:$0xff] 0.0
        %301 = vst [vmem:[#allocation2 + $0x18] sm:$0x3] 0.0
        %302 = vst [vmem:[#allocation2 + $0x20] sm:$0x3] 0.0
        %303 = vst [vmem:[#allocation2 + $0x28] sm:$0x3] 0.0
        %304 = vst [vmem:[#allocation2 + $0x30] sm:$0xff] 0.0
        %305 = vst [vmem:[#allocation2 + $0x38] sm:$0xff] 0.0
        %306 = vst [vmem:[#allocation2 + $0x40] sm:$0xff] 0.0
        %307 = vst [vmem:[#allocation2 + $0x48] sm:$0x3] 0.0
        %308 = vst [vmem:[#allocation2 + $0x50] sm:$0x3] 0.0
        %309 = vst [vmem:[#allocation2 + $0x58] sm:$0x3] 0.0
        %310 = vst [vmem:[#allocation2 + $0x60] sm:$0xff] 0.0
        %311 = vst [vmem:[#allocation2 + $0x68] sm:$0xff] 0.0
        %312 = vst [vmem:[#allocation2 + $0x70] sm:$0xff] 0.0
        %313 = vst [vmem:[#allocation2 + $0x78] sm:$0x3] 0.0
        %314 = vst [vmem:[#allocation2 + $0x80] sm:$0x3] 0.0
        %315 = vst [vmem:[#allocation2 + $0x88] sm:$0x3] 0.0
        %316 = vst [vmem:[#allocation2 + $0x90] sm:$0xff] 0.0
        %317 = vst [vmem:[#allocation2 + $0x98] sm:$0xff] 0.0
        %318 = vst [vmem:[#allocation2 + $0xa0] sm:$0xff] 0.0
        %319 = vst [vmem:[#allocation2 + $0xa8] sm:$0x3] 0.0
        %320 = vst [vmem:[#allocation2 + $0xb0] sm:$0x3] 0.0
        %321 = vst [vmem:[#allocation2 + $0xb8] sm:$0x3] 0.0
        %322 = vst [vmem:[#allocation2 + $0xc0] sm:$0xff] 0.0
        %323 = vst [vmem:[#allocation2 + $0xc8] sm:$0xff] 0.0
        %324 = vst [vmem:[#allocation2 + $0xd0] sm:$0xff] 0.0
        %325 = vst [vmem:[#allocation2 + $0xd8] sm:$0x3] 0.0
        %326 = vst [vmem:[#allocation2 + $0xe0] sm:$0x3] 0.0
        %327 = vst [vmem:[#allocation2 + $0xe8] sm:$0x3] 0.0
        %328 = vst [vmem:[#allocation2 + $0xf0] sm:$0xff] 0.0
        %329 = vst [vmem:[#allocation2 + $0xf8] sm:$0xff] 0.0
        %330 = vst [vmem:[#allocation2 + $0x100] sm:$0xff] 0.0
        %331 = vst [vmem:[#allocation2 + $0x108] sm:$0x3] 0.0
        %332 = vst [vmem:[#allocation2 + $0x110] sm:$0x3] 0.0
        %333 = vst [vmem:[#allocation2 + $0x118] sm:$0x3] 0.0
        %334 = vst [vmem:[#allocation2 + $0x120] sm:$0xff] 0.0
        %335 = vst [vmem:[#allocation2 + $0x128] sm:$0xff] 0.0
        %336 = vst [vmem:[#allocation2 + $0x130] sm:$0xff] 0.0
        %337 = vst [vmem:[#allocation2 + $0x138] sm:$0x3] 0.0
        %338 = vst [vmem:[#allocation2 + $0x140] sm:$0x3] 0.0
        %339 = vst [vmem:[#allocation2 + $0x148] sm:$0x3] 0.0
        %340 = vst [vmem:[#allocation2 + $0x150] sm:$0xff] 0.0
        %341 = vst [vmem:[#allocation2 + $0x158] sm:$0xff] 0.0
        %342 = vst [vmem:[#allocation2 + $0x160] sm:$0xff] 0.0
        %343 = vst [vmem:[#allocation2 + $0x168] sm:$0x3] 0.0
        %344 = vst [vmem:[#allocation2 + $0x170] sm:$0x3] 0.0
        %345 = vst [vmem:[#allocation2 + $0x178] sm:$0x3] 0.0
        %346 = vst [vmem:[#allocation2 + $0x180] sm:$0xff] 0.0
        %347 = vst [vmem:[#allocation2 + $0x188] sm:$0xff] 0.0
        %348 = vst [vmem:[#allocation2 + $0x190] sm:$0xff] 0.0
        %349 = vst [vmem:[#allocation2 + $0x198] sm:$0x3] 0.0
        %350 = vst [vmem:[#allocation2 + $0x1a0] sm:$0x3] 0.0
        %351 = vst [vmem:[#allocation2 + $0x1a8] sm:$0x3] 0.0
        %352 = vst [vmem:[#allocation2 + $0x1b0] sm:$0xff] 0.0
        %353 = vst [vmem:[#allocation2 + $0x1b8] sm:$0xff] 0.0
        %354 = vst [vmem:[#allocation2 + $0x1c0] sm:$0xff] 0.0
        %355 = vst [vmem:[#allocation2 + $0x1c8] sm:$0x3] 0.0
        %356 = vst [vmem:[#allocation2 + $0x1d0] sm:$0x3] 0.0
        %357 = vst [vmem:[#allocation2 + $0x1d8] sm:$0x3] 0.0
        %v358 = vld [vmem:[%s254] sm:$0xff]
        %v359 = vld [vmem:[%s254 + $0x8] sm:$0xff]
        %v360 = vld [vmem:[%s254 + $0x10] sm:$0xff]
        %v361 = vld [vmem:[%s254 + $0x18] sm:$0xff]
        %v362 = vld [vmem:[%s254 + $0x20] sm:$0xff]
        %v363 = vld [vmem:[%s254 + $0x28] sm:$0xff]
        %v364 = vld [vmem:[%s254 + $0x30] sm:$0xff]
        %v365 = vld [vmem:[%s254 + $0x38] sm:$0xff]
        %v366 = vld [vmem:[%s254 + $0x40] sm:$0xff]
        %v367 = vld [vmem:[%s254 + $0x48] sm:$0xff]
        %v368 = vld [vmem:[%s254 + $0x50] sm:$0xff]
        %v369 = vld [vmem:[%s254 + $0x58] sm:$0xff]
        %v370 = vld [vmem:[%s254 + $0x60] sm:$0xff]
        %v371 = vld [vmem:[%s254 + $0x68] sm:$0xff]
        %v372 = vld [vmem:[%s254 + $0x70] sm:$0xff]
        %v373 = vld [vmem:[%s254 + $0x78] sm:$0xff]
        %v390 = vrot.slane %v358, 7
        %v391 = vrot.slane %v359, 7
        %v392 = vrot.slane %v360, 7
        %v393 = vrot.slane %v361, 7
        %v394 = vrot.slane %v362, 7
        %v395 = vrot.slane %v363, 7
        %v396 = vrot.slane %v364, 7
        %v397 = vrot.slane %v365, 7
        %v398 = vrot.slane %v366, 7
        %v399 = vrot.slane %v367, 7
        %v400 = vrot.slane %v368, 7
        %v401 = vrot.slane %v369, 7
        %v402 = vrot.slane %v370, 7
        %v403 = vrot.slane %v371, 7
        %v404 = vrot.slane %v372, 7
        %v405 = vrot.slane %v373, 7
        %s422 = scalar_lea.vmem [#allocation2], 48
        %423 = vst [vmem:[%s422] sm:$0xfe] %v390
        %424 = vst [vmem:[%s422 + $0x8] sm:$0xfe] %v391
        %425 = vst [vmem:[%s422 + $0x18] sm:$0x1] %v390
        %426 = vst [vmem:[%s422 + $0x20] sm:$0x1] %v391
        %427 = vst [vmem:[%s422 + $0x30] sm:$0xfe] %v392
        %428 = vst [vmem:[%s422 + $0x38] sm:$0xfe] %v393
        %429 = vst [vmem:[%s422 + $0x48] sm:$0x1] %v392
        %430 = vst [vmem:[%s422 + $0x50] sm:$0x1] %v393
        %431 = vst [vmem:[%s422 + $0x60] sm:$0xfe] %v394
        %432 = vst [vmem:[%s422 + $0x68] sm:$0xfe] %v395
        %433 = vst [vmem:[%s422 + $0x78] sm:$0x1] %v394
        %434 = vst [vmem:[%s422 + $0x80] sm:$0x1] %v395
        %435 = vst [vmem:[%s422 + $0x90] sm:$0xfe] %v396
        %436 = vst [vmem:[%s422 + $0x98] sm:$0xfe] %v397
        %437 = vst [vmem:[%s422 + $0xa8] sm:$0x1] %v396
        %438 = vst [vmem:[%s422 + $0xb0] sm:$0x1] %v397
        %439 = vst [vmem:[%s422 + $0xc0] sm:$0xfe] %v398
        %440 = vst [vmem:[%s422 + $0xc8] sm:$0xfe] %v399
        %441 = vst [vmem:[%s422 + $0xd8] sm:$0x1] %v398
        %442 = vst [vmem:[%s422 + $0xe0] sm:$0x1] %v399
        %443 = vst [vmem:[%s422 + $0xf0] sm:$0xfe] %v400
        %444 = vst [vmem:[%s422 + $0xf8] sm:$0xfe] %v401
        %445 = vst [vmem:[%s422 + $0x108] sm:$0x1] %v400
        %446 = vst [vmem:[%s422 + $0x110] sm:$0x1] %v401
        %447 = vst [vmem:[%s422 + $0x120] sm:$0xfe] %v402
        %448 = vst [vmem:[%s422 + $0x128] sm:$0xfe] %v403
        %449 = vst [vmem:[%s422 + $0x138] sm:$0x1] %v402
        %450 = vst [vmem:[%s422 + $0x140] sm:$0x1] %v403
        %451 = vst [vmem:[%s422 + $0x150] sm:$0xfe] %v404
        %452 = vst [vmem:[%s422 + $0x158] sm:$0xfe] %v405
        %453 = vst [vmem:[%s422 + $0x168] sm:$0x1] %v404
        %454 = vst [vmem:[%s422 + $0x170] sm:$0x1] %v405
        %v455 = vld [vmem:[#allocation2] sm:$0xff]
        %v456 = vld [vmem:[#allocation2 + $0x8] sm:$0xff]
        %v457 = vld [vmem:[#allocation2 + $0x10] sm:$0xff]
        %v458 = vld [vmem:[#allocation2 + $0x30] sm:$0xff]
        %v459 = vld [vmem:[#allocation2 + $0x38] sm:$0xff]
        %v460 = vld [vmem:[#allocation2 + $0x40] sm:$0xff]
        %v461 = vld [vmem:[#allocation2 + $0x60] sm:$0xff]
        %v462 = vld [vmem:[#allocation2 + $0x68] sm:$0xff]
        %v463 = vld [vmem:[#allocation2 + $0x70] sm:$0xff]
        %v464 = vld [vmem:[#allocation2 + $0x90] sm:$0xff]
        %v465 = vld [vmem:[#allocation2 + $0x98] sm:$0xff]
        %v466 = vld [vmem:[#allocation2 + $0xa0] sm:$0xff]
        %v467 = vld [vmem:[#allocation2 + $0xc0] sm:$0xff]
        %v468 = vld [vmem:[#allocation2 + $0xc8] sm:$0xff]
        %v469 = vld [vmem:[#allocation2 + $0xd0] sm:$0xff]
        %v470 = vld [vmem:[#allocation2 + $0xf0] sm:$0xff]
        %v471 = vld [vmem:[#allocation2 + $0xf8] sm:$0xff]
        %v472 = vld [vmem:[#allocation2 + $0x100] sm:$0xff]
        %v473 = vld [vmem:[#allocation2 + $0x120] sm:$0xff]
        %v474 = vld [vmem:[#allocation2 + $0x128] sm:$0xff]
        %v475 = vld [vmem:[#allocation2 + $0x130] sm:$0xff]
        %v476 = vld [vmem:[#allocation2 + $0x150] sm:$0xff]
        %v477 = vld [vmem:[#allocation2 + $0x158] sm:$0xff]
        %v478 = vld [vmem:[#allocation2 + $0x160] sm:$0xff]
        %v479 = vpack.c.bf16 %v458, %v455
        %v480 = vpack.c.bf16 %v459, %v456
        %v481 = vpack.c.bf16 %v460, %v457
        %v482 = vpack.c.bf16 %v464, %v461
        %v483 = vpack.c.bf16 %v465, %v462
        %v484 = vpack.c.bf16 %v466, %v463
        %v485 = vpack.c.bf16 %v470, %v467
        %v486 = vpack.c.bf16 %v471, %v468
        %v487 = vpack.c.bf16 %v472, %v469
        %v488 = vpack.c.bf16 %v476, %v473
        %v489 = vpack.c.bf16 %v477, %v474
        %v490 = vpack.c.bf16 %v478, %v475
        %v491 = vld [vmem:[#allocation6] sm:$0xff]
        %v492 = vld [vmem:[#allocation6 + $0x8] sm:$0xff]
        %v493 = vld [vmem:[#allocation6 + $0x10] sm:$0xff]
        %v494 = vld [vmem:[#allocation6 + $0x18] sm:$0xff]
        %v495 = vld [vmem:[#allocation6 + $0x20] sm:$0xff]
        %v496 = vld [vmem:[#allocation6 + $0x28] sm:$0xff]
        %v497 = vld [vmem:[#allocation6 + $0x30] sm:$0xff]
        %v498 = vld [vmem:[#allocation6 + $0x38] sm:$0xff]
        %v499 = vld [vmem:[#allocation6 + $0x40] sm:$0xff]
        %v500 = vld [vmem:[#allocation6 + $0x48] sm:$0xff]
        %v501 = vld [vmem:[#allocation6 + $0x50] sm:$0xff]
        %v502 = vld [vmem:[#allocation6 + $0x58] sm:$0xff]
        %v503 = vld [vmem:[#allocation6 + $0x60] sm:$0xff]
        %v504 = vld [vmem:[#allocation6 + $0x68] sm:$0xff]
        %v505 = vld [vmem:[#allocation6 + $0x70] sm:$0xff]
        %v506 = vld [vmem:[#allocation6 + $0x78] sm:$0xff]
        %v507 = vld [vmem:[#allocation6 + $0x80] sm:$0xff]
        %v508 = vld [vmem:[#allocation6 + $0x88] sm:$0xff]
        %v509 = vld [vmem:[#allocation6 + $0x90] sm:$0xff]
        %v510 = vld [vmem:[#allocation6 + $0x98] sm:$0xff]
        %v511 = vld [vmem:[#allocation6 + $0xa0] sm:$0xff]
        %v512 = vld [vmem:[#allocation6 + $0xa8] sm:$0xff]
        %v513 = vld [vmem:[#allocation6 + $0xb0] sm:$0xff]
        %v514 = vld [vmem:[#allocation6 + $0xb8] sm:$0xff]
        %v515 = vld [vmem:[#allocation6 + $0xc0] sm:$0xff]
        %v516 = vld [vmem:[#allocation6 + $0xc8] sm:$0xff]
        %v517 = vld [vmem:[#allocation6 + $0xd0] sm:$0xff]
        %v518 = vld [vmem:[#allocation6 + $0xd8] sm:$0xff]
        %v519 = vld [vmem:[#allocation6 + $0xe0] sm:$0xff]
        %v520 = vld [vmem:[#allocation6 + $0xe8] sm:$0xff]
        %v521 = vld [vmem:[#allocation6 + $0xf0] sm:$0xff]
        %v522 = vld [vmem:[#allocation6 + $0xf8] sm:$0xff]
        %v523 = vld [vmem:[#allocation6 + $0x100] sm:$0xff]
        %v524 = vld [vmem:[#allocation6 + $0x108] sm:$0xff]
        %v525 = vld [vmem:[#allocation6 + $0x110] sm:$0xff]
        %v526 = vld [vmem:[#allocation6 + $0x118] sm:$0xff]
        %v527 = vld [vmem:[#allocation6 + $0x120] sm:$0xff]
        %v528 = vld [vmem:[#allocation6 + $0x128] sm:$0xff]
        %v529 = vld [vmem:[#allocation6 + $0x130] sm:$0xff]
        %v530 = vld [vmem:[#allocation6 + $0x138] sm:$0xff]
        %v531 = vld [vmem:[#allocation6 + $0x140] sm:$0xff]
        %v532 = vld [vmem:[#allocation6 + $0x148] sm:$0xff]
        %v533 = vld [vmem:[#allocation6 + $0x150] sm:$0xff]
        %v534 = vld [vmem:[#allocation6 + $0x158] sm:$0xff]
        %v535 = vld [vmem:[#allocation6 + $0x160] sm:$0xff]
        %v536 = vld [vmem:[#allocation6 + $0x168] sm:$0xff]
        %v537 = vld [vmem:[#allocation6 + $0x170] sm:$0xff]
        %v538 = vld [vmem:[#allocation6 + $0x178] sm:$0xff]
        %v539 = vld [vmem:[#allocation2] sm:$0xfe]
        %v540 = vld [vmem:[#allocation2 + $0x8] sm:$0xfe]
        %v541 = vld [vmem:[#allocation2 + $0x10] sm:$0xfe]
        %v542 = vld [vmem:[#allocation2 + $0x18] sm:$0x1]
        %v543 = vld [vmem:[#allocation2 + $0x20] sm:$0x1]
        %v544 = vld [vmem:[#allocation2 + $0x28] sm:$0x1]
        %v545 = vld [vmem:[#allocation2 + $0x30] sm:$0xfe]
        %v546 = vld [vmem:[#allocation2 + $0x38] sm:$0xfe]
        %v547 = vld [vmem:[#allocation2 + $0x40] sm:$0xfe]
        %v548 = vld [vmem:[#allocation2 + $0x48] sm:$0x1]
        %v549 = vld [vmem:[#allocation2 + $0x50] sm:$0x1]
        %v550 = vld [vmem:[#allocation2 + $0x58] sm:$0x1]
        %v551 = vld [vmem:[#allocation2 + $0x60] sm:$0xfe]
        %v552 = vld [vmem:[#allocation2 + $0x68] sm:$0xfe]
        %v553 = vld [vmem:[#allocation2 + $0x70] sm:$0xfe]
        %v554 = vld [vmem:[#allocation2 + $0x78] sm:$0x1]
        %v555 = vld [vmem:[#allocation2 + $0x80] sm:$0x1]
        %v556 = vld [vmem:[#allocation2 + $0x88] sm:$0x1]
        %v557 = vld [vmem:[#allocation2 + $0x90] sm:$0xfe]
        %v558 = vld [vmem:[#allocation2 + $0x98] sm:$0xfe]
        %v559 = vld [vmem:[#allocation2 + $0xa0] sm:$0xfe]
        %v560 = vld [vmem:[#allocation2 + $0xa8] sm:$0x1]
        %v561 = vld [vmem:[#allocation2 + $0xb0] sm:$0x1]
        %v562 = vld [vmem:[#allocation2 + $0xb8] sm:$0x1]
        %v563 = vld [vmem:[#allocation2 + $0xc0] sm:$0xfe]
        %v564 = vld [vmem:[#allocation2 + $0xc8] sm:$0xfe]
        %v565 = vld [vmem:[#allocation2 + $0xd0] sm:$0xfe]
        %v566 = vld [vmem:[#allocation2 + $0xd8] sm:$0x1]
        %v567 = vld [vmem:[#allocation2 + $0xe0] sm:$0x1]
        %v568 = vld [vmem:[#allocation2 + $0xe8] sm:$0x1]
        %v569 = vld [vmem:[#allocation2 + $0xf0] sm:$0xfe]
        %v570 = vld [vmem:[#allocation2 + $0xf8] sm:$0xfe]
        %v571 = vld [vmem:[#allocation2 + $0x100] sm:$0xfe]
        %v572 = vld [vmem:[#allocation2 + $0x108] sm:$0x1]
        %v573 = vld [vmem:[#allocation2 + $0x110] sm:$0x1]
        %v574 = vld [vmem:[#allocation2 + $0x118] sm:$0x1]
        %v575 = vld [vmem:[#allocation2 + $0x120] sm:$0xfe]
        %v576 = vld [vmem:[#allocation2 + $0x128] sm:$0xfe]
        %v577 = vld [vmem:[#allocation2 + $0x130] sm:$0xfe]
        %v578 = vld [vmem:[#allocation2 + $0x138] sm:$0x1]
        %v579 = vld [vmem:[#allocation2 + $0x140] sm:$0x1]
        %v580 = vld [vmem:[#allocation2 + $0x148] sm:$0x1]
        %v581 = vld [vmem:[#allocation2 + $0x150] sm:$0xfe]
        %v582 = vld [vmem:[#allocation2 + $0x158] sm:$0xfe]
        %v583 = vld [vmem:[#allocation2 + $0x160] sm:$0xfe]
        %v584 = vld [vmem:[#allocation2 + $0x168] sm:$0x1]
        %v585 = vld [vmem:[#allocation2 + $0x170] sm:$0x1]
        %v586 = vld [vmem:[#allocation2 + $0x178] sm:$0x1]
        %vm635 = vcmask 1046528
        %v636 = vrot.slane %v539, 1
        %v637 = vrot.slane %v542, 1
        %v638 = vsel %vm635, %v636, %v637
        %v639 = vrot.slane %v540, 1
        %v640 = vrot.slane %v543, 1
        %v641 = vsel %vm635, %v639, %v640
        %v642 = vrot.slane %v541, 1
        %v643 = vrot.slane %v544, 1
        %v644 = vsel %vm635, %v642, %v643
        %v645 = vrot.slane %v545, 1
        %v646 = vrot.slane %v548, 1
        %v647 = vsel %vm635, %v645, %v646
        %v648 = vrot.slane %v546, 1
        %v649 = vrot.slane %v549, 1
        %v650 = vsel %vm635, %v648, %v649
        %v651 = vrot.slane %v547, 1
        %v652 = vrot.slane %v550, 1
        %v653 = vsel %vm635, %v651, %v652
        %v654 = vrot.slane %v551, 1
        %v655 = vrot.slane %v554, 1
        %v656 = vsel %vm635, %v654, %v655
        %v657 = vrot.slane %v552, 1
        %v658 = vrot.slane %v555, 1
        %v659 = vsel %vm635, %v657, %v658
        %v660 = vrot.slane %v553, 1
        %v661 = vrot.slane %v556, 1
        %v662 = vsel %vm635, %v660, %v661
        %v663 = vrot.slane %v557, 1
        %v664 = vrot.slane %v560, 1
        %v665 = vsel %vm635, %v663, %v664
        %v666 = vrot.slane %v558, 1
        %v667 = vrot.slane %v561, 1
        %v668 = vsel %vm635, %v666, %v667
        %v669 = vrot.slane %v559, 1
        %v670 = vrot.slane %v562, 1
        %v671 = vsel %vm635, %v669, %v670
        %v672 = vrot.slane %v563, 1
        %v673 = vrot.slane %v566, 1
        %v674 = vsel %vm635, %v672, %v673
        %v675 = vrot.slane %v564, 1
        %v676 = vrot.slane %v567, 1
        %v677 = vsel %vm635, %v675, %v676
        %v678 = vrot.slane %v565, 1
        %v679 = vrot.slane %v568, 1
        %v680 = vsel %vm635, %v678, %v679
        %v681 = vrot.slane %v569, 1
        %v682 = vrot.slane %v572, 1
        %v683 = vsel %vm635, %v681, %v682
        %v684 = vrot.slane %v570, 1
        %v685 = vrot.slane %v573, 1
        %v686 = vsel %vm635, %v684, %v685
        %v687 = vrot.slane %v571, 1
        %v688 = vrot.slane %v574, 1
        %v689 = vsel %vm635, %v687, %v688
        %v690 = vrot.slane %v575, 1
        %v691 = vrot.slane %v578, 1
        %v692 = vsel %vm635, %v690, %v691
        %v693 = vrot.slane %v576, 1
        %v694 = vrot.slane %v579, 1
        %v695 = vsel %vm635, %v693, %v694
        %v696 = vrot.slane %v577, 1
        %v697 = vrot.slane %v580, 1
        %v698 = vsel %vm635, %v696, %v697
        %v699 = vrot.slane %v581, 1
        %v700 = vrot.slane %v584, 1
        %v701 = vsel %vm635, %v699, %v700
        %v702 = vrot.slane %v582, 1
        %v703 = vrot.slane %v585, 1
        %v704 = vsel %vm635, %v702, %v703
        %v705 = vrot.slane %v583, 1
        %v706 = vrot.slane %v586, 1
        %v707 = vsel %vm635, %v705, %v706
        %v732 = vpack.c.bf16 %v647, %v638
        %v733 = vpack.c.bf16 %v650, %v641
        %v734 = vpack.c.bf16 %v653, %v644
        %v735 = vpack.c.bf16 %v665, %v656
        %v736 = vpack.c.bf16 %v668, %v659
        %v737 = vpack.c.bf16 %v671, %v662
        %v738 = vpack.c.bf16 %v683, %v674
        %v739 = vpack.c.bf16 %v686, %v677
        %v740 = vpack.c.bf16 %v689, %v680
        %v741 = vpack.c.bf16 %v701, %v692
        %v742 = vpack.c.bf16 %v704, %v695
        %v743 = vpack.c.bf16 %v707, %v698
        %s744 = scalar_lea.vmem [#allocation6], 384
        %v745 = vld [vmem:[%s744] sm:$0xff]
        %v746 = vld [vmem:[%s744 + $0x8] sm:$0xff]
        %v747 = vld [vmem:[%s744 + $0x10] sm:$0xff]
        %v748 = vld [vmem:[%s744 + $0x18] sm:$0xff]
        %v749 = vld [vmem:[%s744 + $0x20] sm:$0xff]
        %v750 = vld [vmem:[%s744 + $0x28] sm:$0xff]
        %v751 = vld [vmem:[%s744 + $0x30] sm:$0xff]
        %v752 = vld [vmem:[%s744 + $0x38] sm:$0xff]
        %v753 = vld [vmem:[%s744 + $0x40] sm:$0xff]
        %v754 = vld [vmem:[%s744 + $0x48] sm:$0xff]
        %v755 = vld [vmem:[%s744 + $0x50] sm:$0xff]
        %v756 = vld [vmem:[%s744 + $0x58] sm:$0xff]
        %v757 = vld [vmem:[%s744 + $0x60] sm:$0xff]
        %v758 = vld [vmem:[%s744 + $0x68] sm:$0xff]
        %v759 = vld [vmem:[%s744 + $0x70] sm:$0xff]
        %v760 = vld [vmem:[%s744 + $0x78] sm:$0xff]
        %v761 = vld [vmem:[%s744 + $0x80] sm:$0xff]
        %v762 = vld [vmem:[%s744 + $0x88] sm:$0xff]
        %v763 = vld [vmem:[%s744 + $0x90] sm:$0xff]
        %v764 = vld [vmem:[%s744 + $0x98] sm:$0xff]
        %v765 = vld [vmem:[%s744 + $0xa0] sm:$0xff]
        %v766 = vld [vmem:[%s744 + $0xa8] sm:$0xff]
        %v767 = vld [vmem:[%s744 + $0xb0] sm:$0xff]
        %v768 = vld [vmem:[%s744 + $0xb8] sm:$0xff]
        %v769 = vld [vmem:[%s744 + $0xc0] sm:$0xff]
        %v770 = vld [vmem:[%s744 + $0xc8] sm:$0xff]
        %v771 = vld [vmem:[%s744 + $0xd0] sm:$0xff]
        %v772 = vld [vmem:[%s744 + $0xd8] sm:$0xff]
        %v773 = vld [vmem:[%s744 + $0xe0] sm:$0xff]
        %v774 = vld [vmem:[%s744 + $0xe8] sm:$0xff]
        %v775 = vld [vmem:[%s744 + $0xf0] sm:$0xff]
        %v776 = vld [vmem:[%s744 + $0xf8] sm:$0xff]
        %v777 = vld [vmem:[%s744 + $0x100] sm:$0xff]
        %v778 = vld [vmem:[%s744 + $0x108] sm:$0xff]
        %v779 = vld [vmem:[%s744 + $0x110] sm:$0xff]
        %v780 = vld [vmem:[%s744 + $0x118] sm:$0xff]
        %v781 = vld [vmem:[%s744 + $0x120] sm:$0xff]
        %v782 = vld [vmem:[%s744 + $0x128] sm:$0xff]
        %v783 = vld [vmem:[%s744 + $0x130] sm:$0xff]
        %v784 = vld [vmem:[%s744 + $0x138] sm:$0xff]
        %v785 = vld [vmem:[%s744 + $0x140] sm:$0xff]
        %v786 = vld [vmem:[%s744 + $0x148] sm:$0xff]
        %v787 = vld [vmem:[%s744 + $0x150] sm:$0xff]
        %v788 = vld [vmem:[%s744 + $0x158] sm:$0xff]
        %v789 = vld [vmem:[%s744 + $0x160] sm:$0xff]
        %v790 = vld [vmem:[%s744 + $0x168] sm:$0xff]
        %v791 = vld [vmem:[%s744 + $0x170] sm:$0xff]
        %v792 = vld [vmem:[%s744 + $0x178] sm:$0xff]
        %v841 = vunpack.c.l.b16 %v745
        %v842 = vunpack.c.h.b16 %v745
        %v843 = vunpack.c.l.b16 %v746
        %v844 = vunpack.c.h.b16 %v746
        %v845 = vunpack.c.l.b16 %v747
        %v846 = vunpack.c.h.b16 %v747
        %v847 = vunpack.c.l.b16 %v748
        %v848 = vunpack.c.h.b16 %v748
        %v849 = vunpack.c.l.b16 %v749
        %v850 = vunpack.c.h.b16 %v749
        %v851 = vunpack.c.l.b16 %v750
        %v852 = vunpack.c.h.b16 %v750
        %v853 = vunpack.c.l.b16 %v751
        %v854 = vunpack.c.h.b16 %v751
        %v855 = vunpack.c.l.b16 %v752
        %v856 = vunpack.c.h.b16 %v752
        %v857 = vunpack.c.l.b16 %v753
        %v858 = vunpack.c.h.b16 %v753
        %v859 = vunpack.c.l.b16 %v754
        %v860 = vunpack.c.h.b16 %v754
        %v861 = vunpack.c.l.b16 %v755
        %v862 = vunpack.c.h.b16 %v755
        %v863 = vunpack.c.l.b16 %v756
        %v864 = vunpack.c.h.b16 %v756
        %v865 = vunpack.c.l.b16 %v757
        %v866 = vunpack.c.h.b16 %v757
        %v867 = vunpack.c.l.b16 %v758
        %v868 = vunpack.c.h.b16 %v758
        %v869 = vunpack.c.l.b16 %v759
        %v870 = vunpack.c.h.b16 %v759
        %v871 = vunpack.c.l.b16 %v760
        %v872 = vunpack.c.h.b16 %v760
        %v873 = vunpack.c.l.b16 %v761
        %v874 = vunpack.c.h.b16 %v761
        %v875 = vunpack.c.l.b16 %v762
        %v876 = vunpack.c.h.b16 %v762
        %v877 = vunpack.c.l.b16 %v763
        %v878 = vunpack.c.h.b16 %v763
        %v879 = vunpack.c.l.b16 %v764
        %v880 = vunpack.c.h.b16 %v764
        %v881 = vunpack.c.l.b16 %v765
        %v882 = vunpack.c.h.b16 %v765
        %v883 = vunpack.c.l.b16 %v766
        %v884 = vunpack.c.h.b16 %v766
        %v885 = vunpack.c.l.b16 %v767
        %v886 = vunpack.c.h.b16 %v767
        %v887 = vunpack.c.l.b16 %v768
        %v888 = vunpack.c.h.b16 %v768
        %v889 = vunpack.c.l.b16 %v769
        %v890 = vunpack.c.h.b16 %v769
        %v891 = vunpack.c.l.b16 %v770
        %v892 = vunpack.c.h.b16 %v770
        %v893 = vunpack.c.l.b16 %v771
        %v894 = vunpack.c.h.b16 %v771
        %v895 = vunpack.c.l.b16 %v772
        %v896 = vunpack.c.h.b16 %v772
        %v897 = vunpack.c.l.b16 %v773
        %v898 = vunpack.c.h.b16 %v773
        %v899 = vunpack.c.l.b16 %v774
        %v900 = vunpack.c.h.b16 %v774
        %v901 = vunpack.c.l.b16 %v775
        %v902 = vunpack.c.h.b16 %v775
        %v903 = vunpack.c.l.b16 %v776
        %v904 = vunpack.c.h.b16 %v776
        %v905 = vunpack.c.l.b16 %v777
        %v906 = vunpack.c.h.b16 %v777
        %v907 = vunpack.c.l.b16 %v778
        %v908 = vunpack.c.h.b16 %v778
        %v909 = vunpack.c.l.b16 %v779
        %v910 = vunpack.c.h.b16 %v779
        %v911 = vunpack.c.l.b16 %v780
        %v912 = vunpack.c.h.b16 %v780
        %v913 = vunpack.c.l.b16 %v781
        %v914 = vunpack.c.h.b16 %v781
        %v915 = vunpack.c.l.b16 %v782
        %v916 = vunpack.c.h.b16 %v782
        %v917 = vunpack.c.l.b16 %v783
        %v918 = vunpack.c.h.b16 %v783
        %v919 = vunpack.c.l.b16 %v784
        %v920 = vunpack.c.h.b16 %v784
        %v921 = vunpack.c.l.b16 %v785
        %v922 = vunpack.c.h.b16 %v785
        %v923 = vunpack.c.l.b16 %v786
        %v924 = vunpack.c.h.b16 %v786
        %v925 = vunpack.c.l.b16 %v787
        %v926 = vunpack.c.h.b16 %v787
        %v927 = vunpack.c.l.b16 %v788
        %v928 = vunpack.c.h.b16 %v788
        %v929 = vunpack.c.l.b16 %v789
        %v930 = vunpack.c.h.b16 %v789
        %v931 = vunpack.c.l.b16 %v790
        %v932 = vunpack.c.h.b16 %v790
        %v933 = vunpack.c.l.b16 %v791
        %v934 = vunpack.c.h.b16 %v791
        %v935 = vunpack.c.l.b16 %v792
        %v936 = vunpack.c.h.b16 %v792
        %v937 = vpack.c.b16 %v843, %v841
        %v938 = vpack.c.b16 %v844, %v842
        %v939 = vpack.c.b16 %v847, %v845
        %v940 = vpack.c.b16 %v848, %v846
        %v941 = vpack.c.b16 %v851, %v849
        %v942 = vpack.c.b16 %v852, %v850
        %v943 = vpack.c.b16 %v855, %v853
        %v944 = vpack.c.b16 %v856, %v854
        %v945 = vpack.c.b16 %v859, %v857
        %v946 = vpack.c.b16 %v860, %v858
        %v947 = vpack.c.b16 %v863, %v861
        %v948 = vpack.c.b16 %v864, %v862
        %v949 = vpack.c.b16 %v867, %v865
        %v950 = vpack.c.b16 %v868, %v866
        %v951 = vpack.c.b16 %v871, %v869
        %v952 = vpack.c.b16 %v872, %v870
        %v953 = vpack.c.b16 %v875, %v873
        %v954 = vpack.c.b16 %v876, %v874
        %v955 = vpack.c.b16 %v879, %v877
        %v956 = vpack.c.b16 %v880, %v878
        %v957 = vpack.c.b16 %v883, %v881
        %v958 = vpack.c.b16 %v884, %v882
        %v959 = vpack.c.b16 %v887, %v885
        %v960 = vpack.c.b16 %v888, %v886
        %v961 = vpack.c.b16 %v891, %v889
        %v962 = vpack.c.b16 %v892, %v890
        %v963 = vpack.c.b16 %v895, %v893
        %v964 = vpack.c.b16 %v896, %v894
        %v965 = vpack.c.b16 %v899, %v897
        %v966 = vpack.c.b16 %v900, %v898
        %v967 = vpack.c.b16 %v903, %v901
        %v968 = vpack.c.b16 %v904, %v902
        %v969 = vpack.c.b16 %v907, %v905
        %v970 = vpack.c.b16 %v908, %v906
        %v971 = vpack.c.b16 %v911, %v909
        %v972 = vpack.c.b16 %v912, %v910
        %v973 = vpack.c.b16 %v915, %v913
        %v974 = vpack.c.b16 %v916, %v914
        %v975 = vpack.c.b16 %v919, %v917
        %v976 = vpack.c.b16 %v920, %v918
        %v977 = vpack.c.b16 %v923, %v921
        %v978 = vpack.c.b16 %v924, %v922
        %v979 = vpack.c.b16 %v927, %v925
        %v980 = vpack.c.b16 %v928, %v926
        %v981 = vpack.c.b16 %v931, %v929
        %v982 = vpack.c.b16 %v932, %v930
        %v983 = vpack.c.b16 %v935, %v933
        %v984 = vpack.c.b16 %v936, %v934
        %1033 = vmatprep.subr.bf16.mxu0 %v938
        %1034 = vmatpush1.bf16.msra.mxu0 %v937
        %1035 = vmatprep.subr.bf16.mxu0 %v940
        %1036 = vmatpush1.bf16.msra.mxu0 %v939
        %1037 = vmatprep.subr.bf16.mxu0 %v942
        %1038 = vmatpush1.bf16.msra.mxu0 %v941
        %1039 = vmatprep.subr.bf16.mxu0 %v944
        %1040 = vmatpush1.bf16.msra.mxu0 %v943
        %1041 = vmatprep.subr.bf16.mxu0 %v946
        %1042 = vmatpush1.bf16.msra.mxu0 %v945
        %1043 = vmatprep.subr.bf16.mxu0 %v948
        %1044 = vmatpush1.bf16.msra.mxu0 %v947
        %1045 = vmatprep.subr.bf16.mxu0 %v950
        %1046 = vmatpush1.bf16.msra.mxu0 %v949
        %1047 = vmatprep.subr.bf16.mxu0 %v952
        %1048 = vmatpush1.bf16.msra.mxu0 %v951
        %1049 = vmatprep.subr.bf16.mxu0 %v954
        %1050 = vmatpush1.bf16.msra.mxu0 %v953
        %1051 = vmatprep.subr.bf16.mxu0 %v956
        %1052 = vmatpush1.bf16.msra.mxu0 %v955
        %1053 = vmatprep.subr.bf16.mxu0 %v958
        %1054 = vmatpush1.bf16.msra.mxu0 %v957
        %1055 = vmatprep.subr.bf16.mxu0 %v960
        %1056 = vmatpush1.bf16.msra.mxu0 %v959
        %1057 = vmatprep.subr.bf16.mxu0 %v962
        %1058 = vmatpush1.bf16.msra.mxu0 %v961
        %1059 = vmatprep.subr.bf16.mxu0 %v964
        %1060 = vmatpush1.bf16.msra.mxu0 %v963
        %1061 = vmatprep.subr.bf16.mxu0 %v966
        %1062 = vmatpush1.bf16.msra.mxu0 %v965
        %1063 = vmatprep.subr.bf16.mxu0 %v968
        %1064 = vmatpush1.bf16.msra.mxu0 %v967
        %1065 = vmatprep.mubr.bf16.mxu0 %v733
        %1066 = vmatmul.mubr.bf16.gmra.mrb[0].mxu0 %v732
        %v1067 = vpop.f32.mrb[0].mxu0
        %v1068 = vadd.f32 0.0, %v1067
        %v1069 = vpop.f32.mrb[0].mxu0
        %v1070 = vadd.f32 0.0, %v1069
        %v1071 = vpop.f32.mrb[0].mxu0
        %v1072 = vadd.f32 0.0, %v1071
        %v1073 = vpop.f32.mrb[0].mxu0
        %v1074 = vadd.f32 0.0, %v1073
        %1075 = vmatprep.mubr.bf16.mxu0 %v736
        %1076 = vmatmul.mubr.bf16.gmra.mrb[0].mxu0 %v735
        %v1077 = vpop.f32.mrb[0].mxu0
        %v1078 = vadd.f32 0.0, %v1077
        %v1079 = vpop.f32.mrb[0].mxu0
        %v1080 = vadd.f32 0.0, %v1079
        %v1081 = vpop.f32.mrb[0].mxu0
        %v1082 = vadd.f32 0.0, %v1081
        %v1083 = vpop.f32.mrb[0].mxu0
        %v1084 = vadd.f32 0.0, %v1083
        %1085 = vmatprep.mubr.bf16.mxu0 %v739
        %1086 = vmatmul.mubr.bf16.gmra.mrb[0].mxu0 %v738
        %v1087 = vpop.f32.mrb[0].mxu0
        %v1088 = vadd.f32 0.0, %v1087
        %v1089 = vpop.f32.mrb[0].mxu0
        %v1090 = vadd.f32 0.0, %v1089
        %v1091 = vpop.f32.mrb[0].mxu0
        %v1092 = vadd.f32 0.0, %v1091
        %v1093 = vpop.f32.mrb[0].mxu0
        %v1094 = vadd.f32 0.0, %v1093
        %1095 = vmatprep.mubr.bf16.mxu0 %v742
        %1096 = vmatmul.mubr.bf16.gmra.mrb[0].mxu0 %v741
        %v1097 = vpop.f32.mrb[0].mxu0
        %v1098 = vadd.f32 0.0, %v1097
        %v1099 = vpop.f32.mrb[0].mxu0
        %v1100 = vadd.f32 0.0, %v1099
        %v1101 = vpop.f32.mrb[0].mxu0
        %v1102 = vadd.f32 0.0, %v1101
        %v1103 = vpop.f32.mrb[0].mxu0
        %v1104 = vadd.f32 0.0, %v1103
        %1105 = vdwg.mxu0
        %1106 = vmatprep.subr.bf16.mxu0 %v970
        %1107 = vmatpush1.bf16.msra.mxu0 %v969
        %1108 = vmatprep.subr.bf16.mxu0 %v972
        %1109 = vmatpush1.bf16.msra.mxu0 %v971
        %1110 = vmatprep.subr.bf16.mxu0 %v974
        %1111 = vmatpush1.bf16.msra.mxu0 %v973
        %1112 = vmatprep.subr.bf16.mxu0 %v976
        %1113 = vmatpush1.bf16.msra.mxu0 %v975
        %1114 = vmatprep.subr.bf16.mxu0 %v978
        %1115 = vmatpush1.bf16.msra.mxu0 %v977
        %1116 = vmatprep.subr.bf16.mxu0 %v980
        %1117 = vmatpush1.bf16.msra.mxu0 %v979
        %1118 = vmatprep.subr.bf16.mxu0 %v982
        %1119 = vmatpush1.bf16.msra.mxu0 %v981
        %1120 = vmatprep.subr.bf16.mxu0 %v984
        %1121 = vmatpush1.bf16.msra.mxu0 %v983
        %1122 = vmatprep.subr.bf16.mxu0 0
        %1123 = vmatpush1.bf16.msra.mxu0 0
        %1124 = vmatprep.subr.bf16.mxu0 0
        %1125 = vmatpush1.bf16.msra.mxu0 0
        %1126 = vmatprep.subr.bf16.mxu0 0
        %1127 = vmatpush1.bf16.msra.mxu0 0
        %1128 = vmatprep.subr.bf16.mxu0 0
        %1129 = vmatpush1.bf16.msra.mxu0 0
        %1130 = vmatprep.subr.bf16.mxu0 0
        %1131 = vmatpush1.bf16.msra.mxu0 0
        %1132 = vmatprep.subr.bf16.mxu0 0
        %1133 = vmatpush1.bf16.msra.mxu0 0
        %1134 = vmatprep.subr.bf16.mxu0 0
        %1135 = vmatpush1.bf16.msra.mxu0 0
        %1136 = vmatprep.subr.bf16.mxu0 0
        %1137 = vmatpush1.bf16.msra.mxu0 0
        %1138 = vmatprep.mubr.bf16.mxu0 0
        %1139 = vmatmul.mubr.bf16.gmra.mrb[0].mxu0 %v734
        %v1140 = vpop.f32.mrb[0].mxu0
        %v1141 = vadd.f32 %v1068, %v1140
        %v1142 = vpop.f32.mrb[0].mxu0
        %v1143 = vadd.f32 %v1070, %v1142
        %v1144 = vpop.f32.mrb[0].mxu0
        %v1145 = vadd.f32 %v1072, %v1144
        %v1146 = vpop.f32.mrb[0].mxu0
        %v1147 = vadd.f32 %v1074, %v1146
        %1148 = vmatprep.mubr.bf16.mxu0 0
        %1149 = vmatmul.mubr.bf16.gmra.mrb[0].mxu0 %v737
        %v1150 = vpop.f32.mrb[0].mxu0
        %v1151 = vadd.f32 %v1078, %v1150
        %v1152 = vpop.f32.mrb[0].mxu0
        %v1153 = vadd.f32 %v1080, %v1152
        %v1154 = vpop.f32.mrb[0].mxu0
        %v1155 = vadd.f32 %v1082, %v1154
        %v1156 = vpop.f32.mrb[0].mxu0
        %v1157 = vadd.f32 %v1084, %v1156
        %1158 = vmatprep.mubr.bf16.mxu0 0
        %1159 = vmatmul.mubr.bf16.gmra.mrb[0].mxu0 %v740
        %v1160 = vpop.f32.mrb[0].mxu0
        %v1161 = vadd.f32 %v1088, %v1160
        %v1162 = vpop.f32.mrb[0].mxu0
        %v1163 = vadd.f32 %v1090, %v1162
        %v1164 = vpop.f32.mrb[0].mxu0
        %v1165 = vadd.f32 %v1092, %v1164
        %v1166 = vpop.f32.mrb[0].mxu0
        %v1167 = vadd.f32 %v1094, %v1166
        %1168 = vmatprep.mubr.bf16.mxu0 0
        %1169 = vmatmul.mubr.bf16.gmra.mrb[0].mxu0 %v743
        %v1170 = vpop.f32.mrb[0].mxu0
        %v1171 = vadd.f32 %v1098, %v1170
        %v1172 = vpop.f32.mrb[0].mxu0
        %v1173 = vadd.f32 %v1100, %v1172
        %v1174 = vpop.f32.mrb[0].mxu0
        %v1175 = vadd.f32 %v1102, %v1174
        %v1176 = vpop.f32.mrb[0].mxu0
        %v1177 = vadd.f32 %v1104, %v1176
        %1178 = vdwg.mxu0
        %v1227 = vunpack.c.l.b16 %v491
        %v1228 = vunpack.c.h.b16 %v491
        %v1229 = vunpack.c.l.b16 %v492
        %v1230 = vunpack.c.h.b16 %v492
        %v1231 = vunpack.c.l.b16 %v493
        %v1232 = vunpack.c.h.b16 %v493
        %v1233 = vunpack.c.l.b16 %v494
        %v1234 = vunpack.c.h.b16 %v494
        %v1235 = vunpack.c.l.b16 %v495
        %v1236 = vunpack.c.h.b16 %v495
        %v1237 = vunpack.c.l.b16 %v496
        %v1238 = vunpack.c.h.b16 %v496
        %v1239 = vunpack.c.l.b16 %v497
        %v1240 = vunpack.c.h.b16 %v497
        %v1241 = vunpack.c.l.b16 %v498
        %v1242 = vunpack.c.h.b16 %v498
        %v1243 = vunpack.c.l.b16 %v499
        %v1244 = vunpack.c.h.b16 %v499
        %v1245 = vunpack.c.l.b16 %v500
        %v1246 = vunpack.c.h.b16 %v500
        %v1247 = vunpack.c.l.b16 %v501
        %v1248 = vunpack.c.h.b16 %v501
        %v1249 = vunpack.c.l.b16 %v502
        %v1250 = vunpack.c.h.b16 %v502
        %v1251 = vunpack.c.l.b16 %v503
        %v1252 = vunpack.c.h.b16 %v503
        %v1253 = vunpack.c.l.b16 %v504
        %v1254 = vunpack.c.h.b16 %v504
        %v1255 = vunpack.c.l.b16 %v505
        %v1256 = vunpack.c.h.b16 %v505
        %v1257 = vunpack.c.l.b16 %v506
        %v1258 = vunpack.c.h.b16 %v506
        %v1259 = vunpack.c.l.b16 %v507
        %v1260 = vunpack.c.h.b16 %v507
        %v1261 = vunpack.c.l.b16 %v508
        %v1262 = vunpack.c.h.b16 %v508
        %v1263 = vunpack.c.l.b16 %v509
        %v1264 = vunpack.c.h.b16 %v509
        %v1265 = vunpack.c.l.b16 %v510
        %v1266 = vunpack.c.h.b16 %v510
        %v1267 = vunpack.c.l.b16 %v511
        %v1268 = vunpack.c.h.b16 %v511
        %v1269 = vunpack.c.l.b16 %v512
        %v1270 = vunpack.c.h.b16 %v512
        %v1271 = vunpack.c.l.b16 %v513
        %v1272 = vunpack.c.h.b16 %v513
        %v1273 = vunpack.c.l.b16 %v514
        %v1274 = vunpack.c.h.b16 %v514
        %v1275 = vunpack.c.l.b16 %v515
        %v1276 = vunpack.c.h.b16 %v515
        %v1277 = vunpack.c.l.b16 %v516
        %v1278 = vunpack.c.h.b16 %v516
        %v1279 = vunpack.c.l.b16 %v517
        %v1280 = vunpack.c.h.b16 %v517
        %v1281 = vunpack.c.l.b16 %v518
        %v1282 = vunpack.c.h.b16 %v518
        %v1283 = vunpack.c.l.b16 %v519
        %v1284 = vunpack.c.h.b16 %v519
        %v1285 = vunpack.c.l.b16 %v520
        %v1286 = vunpack.c.h.b16 %v520
        %v1287 = vunpack.c.l.b16 %v521
        %v1288 = vunpack.c.h.b16 %v521
        %v1289 = vunpack.c.l.b16 %v522
        %v1290 = vunpack.c.h.b16 %v522
        %v1291 = vunpack.c.l.b16 %v523
        %v1292 = vunpack.c.h.b16 %v523
        %v1293 = vunpack.c.l.b16 %v524
        %v1294 = vunpack.c.h.b16 %v524
        %v1295 = vunpack.c.l.b16 %v525
        %v1296 = vunpack.c.h.b16 %v525
        %v1297 = vunpack.c.l.b16 %v526
        %v1298 = vunpack.c.h.b16 %v526
        %v1299 = vunpack.c.l.b16 %v527
        %v1300 = vunpack.c.h.b16 %v527
        %v1301 = vunpack.c.l.b16 %v528
        %v1302 = vunpack.c.h.b16 %v528
        %v1303 = vunpack.c.l.b16 %v529
        %v1304 = vunpack.c.h.b16 %v529
        %v1305 = vunpack.c.l.b16 %v530
        %v1306 = vunpack.c.h.b16 %v530
        %v1307 = vunpack.c.l.b16 %v531
        %v1308 = vunpack.c.h.b16 %v531
        %v1309 = vunpack.c.l.b16 %v532
        %v1310 = vunpack.c.h.b16 %v532
        %v1311 = vunpack.c.l.b16 %v533
        %v1312 = vunpack.c.h.b16 %v533
        %v1313 = vunpack.c.l.b16 %v534
        %v1314 = vunpack.c.h.b16 %v534
        %v1315 = vunpack.c.l.b16 %v535
        %v1316 = vunpack.c.h.b16 %v535
        %v1317 = vunpack.c.l.b16 %v536
        %v1318 = vunpack.c.h.b16 %v536
        %v1319 = vunpack.c.l.b16 %v537
        %v1320 = vunpack.c.h.b16 %v537
        %v1321 = vunpack.c.l.b16 %v538
        %v1322 = vunpack.c.h.b16 %v538
        %v1323 = vpack.c.b16 %v1229, %v1227
        %v1324 = vpack.c.b16 %v1230, %v1228
        %v1325 = vpack.c.b16 %v1233, %v1231
        %v1326 = vpack.c.b16 %v1234, %v1232
        %v1327 = vpack.c.b16 %v1237, %v1235
        %v1328 = vpack.c.b16 %v1238, %v1236
        %v1329 = vpack.c.b16 %v1241, %v1239
        %v1330 = vpack.c.b16 %v1242, %v1240
        %v1331 = vpack.c.b16 %v1245, %v1243
        %v1332 = vpack.c.b16 %v1246, %v1244
        %v1333 = vpack.c.b16 %v1249, %v1247
        %v1334 = vpack.c.b16 %v1250, %v1248
        %v1335 = vpack.c.b16 %v1253, %v1251
        %v1336 = vpack.c.b16 %v1254, %v1252
        %v1337 = vpack.c.b16 %v1257, %v1255
        %v1338 = vpack.c.b16 %v1258, %v1256
        %v1339 = vpack.c.b16 %v1261, %v1259
        %v1340 = vpack.c.b16 %v1262, %v1260
        %v1341 = vpack.c.b16 %v1265, %v1263
        %v1342 = vpack.c.b16 %v1266, %v1264
        %v1343 = vpack.c.b16 %v1269, %v1267
        %v1344 = vpack.c.b16 %v1270, %v1268
        %v1345 = vpack.c.b16 %v1273, %v1271
        %v1346 = vpack.c.b16 %v1274, %v1272
        %v1347 = vpack.c.b16 %v1277, %v1275
        %v1348 = vpack.c.b16 %v1278, %v1276
        %v1349 = vpack.c.b16 %v1281, %v1279
        %v1350 = vpack.c.b16 %v1282, %v1280
        %v1351 = vpack.c.b16 %v1285, %v1283
        %v1352 = vpack.c.b16 %v1286, %v1284
        %v1353 = vpack.c.b16 %v1289, %v1287
        %v1354 = vpack.c.b16 %v1290, %v1288
        %v1355 = vpack.c.b16 %v1293, %v1291
        %v1356 = vpack.c.b16 %v1294, %v1292
        %v1357 = vpack.c.b16 %v1297, %v1295
        %v1358 = vpack.c.b16 %v1298, %v1296
        %v1359 = vpack.c.b16 %v1301, %v1299
        %v1360 = vpack.c.b16 %v1302, %v1300
        %v1361 = vpack.c.b16 %v1305, %v1303
        %v1362 = vpack.c.b16 %v1306, %v1304
        %v1363 = vpack.c.b16 %v1309, %v1307
        %v1364 = vpack.c.b16 %v1310, %v1308
        %v1365 = vpack.c.b16 %v1313, %v1311
        %v1366 = vpack.c.b16 %v1314, %v1312
        %v1367 = vpack.c.b16 %v1317, %v1315
        %v1368 = vpack.c.b16 %v1318, %v1316
        %v1369 = vpack.c.b16 %v1321, %v1319
        %v1370 = vpack.c.b16 %v1322, %v1320
        %1419 = vmatprep.subr.bf16.mxu0 %v1324
        %1420 = vmatpush1.bf16.msra.mxu0 %v1323
        %1421 = vmatprep.subr.bf16.mxu0 %v1326
        %1422 = vmatpush1.bf16.msra.mxu0 %v1325
        %1423 = vmatprep.subr.bf16.mxu0 %v1328
        %1424 = vmatpush1.bf16.msra.mxu0 %v1327
        %1425 = vmatprep.subr.bf16.mxu0 %v1330
        %1426 = vmatpush1.bf16.msra.mxu0 %v1329
        %1427 = vmatprep.subr.bf16.mxu0 %v1332
        %1428 = vmatpush1.bf16.msra.mxu0 %v1331
        %1429 = vmatprep.subr.bf16.mxu0 %v1334
        %1430 = vmatpush1.bf16.msra.mxu0 %v1333
        %1431 = vmatprep.subr.bf16.mxu0 %v1336
        %1432 = vmatpush1.bf16.msra.mxu0 %v1335
        %1433 = vmatprep.subr.bf16.mxu0 %v1338
        %1434 = vmatpush1.bf16.msra.mxu0 %v1337
        %1435 = vmatprep.subr.bf16.mxu0 %v1340
        %1436 = vmatpush1.bf16.msra.mxu0 %v1339
        %1437 = vmatprep.subr.bf16.mxu0 %v1342
        %1438 = vmatpush1.bf16.msra.mxu0 %v1341
        %1439 = vmatprep.subr.bf16.mxu0 %v1344
        %1440 = vmatpush1.bf16.msra.mxu0 %v1343
        %1441 = vmatprep.subr.bf16.mxu0 %v1346
        %1442 = vmatpush1.bf16.msra.mxu0 %v1345
        %1443 = vmatprep.subr.bf16.mxu0 %v1348
        %1444 = vmatpush1.bf16.msra.mxu0 %v1347
        %1445 = vmatprep.subr.bf16.mxu0 %v1350
        %1446 = vmatpush1.bf16.msra.mxu0 %v1349
        %1447 = vmatprep.subr.bf16.mxu0 %v1352
        %1448 = vmatpush1.bf16.msra.mxu0 %v1351
        %1449 = vmatprep.subr.bf16.mxu0 %v1354
        %1450 = vmatpush1.bf16.msra.mxu0 %v1353
        %1451 = vmatprep.mubr.bf16.mxu0 %v480
        %1452 = vmatmul.mubr.bf16.gmra.mrb[0].mxu0 %v479
        %v1453 = vpop.f32.mrb[0].mxu0
        %v1454 = vadd.f32 %v1141, %v1453
        %v1455 = vpop.f32.mrb[0].mxu0
        %v1456 = vadd.f32 %v1143, %v1455
        %v1457 = vpop.f32.mrb[0].mxu0
        %v1458 = vadd.f32 %v1145, %v1457
        %v1459 = vpop.f32.mrb[0].mxu0
        %v1460 = vadd.f32 %v1147, %v1459
        %1461 = vmatprep.mubr.bf16.mxu0 %v483
        %1462 = vmatmul.mubr.bf16.gmra.mrb[0].mxu0 %v482
        %v1463 = vpop.f32.mrb[0].mxu0
        %v1464 = vadd.f32 %v1151, %v1463
        %v1465 = vpop.f32.mrb[0].mxu0
        %v1466 = vadd.f32 %v1153, %v1465
        %v1467 = vpop.f32.mrb[0].mxu0
        %v1468 = vadd.f32 %v1155, %v1467
        %v1469 = vpop.f32.mrb[0].mxu0
        %v1470 = vadd.f32 %v1157, %v1469
        %1471 = vmatprep.mubr.bf16.mxu0 %v486
        %1472 = vmatmul.mubr.bf16.gmra.mrb[0].mxu0 %v485
        %v1473 = vpop.f32.mrb[0].mxu0
        %v1474 = vadd.f32 %v1161, %v1473
        %v1475 = vpop.f32.mrb[0].mxu0
        %v1476 = vadd.f32 %v1163, %v1475
        %v1477 = vpop.f32.mrb[0].mxu0
        %v1478 = vadd.f32 %v1165, %v1477
        %v1479 = vpop.f32.mrb[0].mxu0
        %v1480 = vadd.f32 %v1167, %v1479
        %1481 = vmatprep.mubr.bf16.mxu0 %v489
        %1482 = vmatmul.mubr.bf16.gmra.mrb[0].mxu0 %v488
        %v1483 = vpop.f32.mrb[0].mxu0
        %v1484 = vadd.f32 %v1171, %v1483
        %v1485 = vpop.f32.mrb[0].mxu0
        %v1486 = vadd.f32 %v1173, %v1485
        %v1487 = vpop.f32.mrb[0].mxu0
        %v1488 = vadd.f32 %v1175, %v1487
        %v1489 = vpop.f32.mrb[0].mxu0
        %v1490 = vadd.f32 %v1177, %v1489
        %1491 = vdwg.mxu0
        %1492 = vmatprep.subr.bf16.mxu0 %v1356
        %1493 = vmatpush1.bf16.msra.mxu0 %v1355
        %1494 = vmatprep.subr.bf16.mxu0 %v1358
        %1495 = vmatpush1.bf16.msra.mxu0 %v1357
        %1496 = vmatprep.subr.bf16.mxu0 %v1360
        %1497 = vmatpush1.bf16.msra.mxu0 %v1359
        %1498 = vmatprep.subr.bf16.mxu0 %v1362
        %1499 = vmatpush1.bf16.msra.mxu0 %v1361
        %1500 = vmatprep.subr.bf16.mxu0 %v1364
        %1501 = vmatpush1.bf16.msra.mxu0 %v1363
        %1502 = vmatprep.subr.bf16.mxu0 %v1366
        %1503 = vmatpush1.bf16.msra.mxu0 %v1365
        %1504 = vmatprep.subr.bf16.mxu0 %v1368
        %1505 = vmatpush1.bf16.msra.mxu0 %v1367
        %1506 = vmatprep.subr.bf16.mxu0 %v1370
        %1507 = vmatpush1.bf16.msra.mxu0 %v1369
        %1508 = vmatprep.subr.bf16.mxu0 0
        %1509 = vmatpush1.bf16.msra.mxu0 0
        %1510 = vmatprep.subr.bf16.mxu0 0
        %1511 = vmatpush1.bf16.msra.mxu0 0
        %1512 = vmatprep.subr.bf16.mxu0 0
        %1513 = vmatpush1.bf16.msra.mxu0 0
        %1514 = vmatprep.subr.bf16.mxu0 0
        %1515 = vmatpush1.bf16.msra.mxu0 0
        %1516 = vmatprep.subr.bf16.mxu0 0
        %1517 = vmatpush1.bf16.msra.mxu0 0
        %1518 = vmatprep.subr.bf16.mxu0 0
        %1519 = vmatpush1.bf16.msra.mxu0 0
        %1520 = vmatprep.subr.bf16.mxu0 0
        %1521 = vmatpush1.bf16.msra.mxu0 0
        %1522 = vmatprep.subr.bf16.mxu0 0
        %1523 = vmatpush1.bf16.msra.mxu0 0
        %1524 = vmatprep.mubr.bf16.mxu0 0
        %1525 = vmatmul.mubr.bf16.gmra.mrb[0].mxu0 %v481
        %v1526 = vpop.f32.mrb[0].mxu0
        %v1527 = vadd.f32 %v1454, %v1526
        %v1528 = vpop.f32.mrb[0].mxu0
        %v1529 = vadd.f32 %v1456, %v1528
        %v1530 = vpop.f32.mrb[0].mxu0
        %v1531 = vadd.f32 %v1458, %v1530
        %v1532 = vpop.f32.mrb[0].mxu0
        %v1533 = vadd.f32 %v1460, %v1532
        %1534 = vmatprep.mubr.bf16.mxu0 0
        %1535 = vmatmul.mubr.bf16.gmra.mrb[0].mxu0 %v484
        %v1536 = vpop.f32.mrb[0].mxu0
        %v1537 = vadd.f32 %v1464, %v1536
        %v1538 = vpop.f32.mrb[0].mxu0
        %v1539 = vadd.f32 %v1466, %v1538
        %v1540 = vpop.f32.mrb[0].mxu0
        %v1541 = vadd.f32 %v1468, %v1540
        %v1542 = vpop.f32.mrb[0].mxu0
        %v1543 = vadd.f32 %v1470, %v1542
        %1544 = vmatprep.mubr.bf16.mxu0 0
        %1545 = vmatmul.mubr.bf16.gmra.mrb[0].mxu0 %v487
        %v1546 = vpop.f32.mrb[0].mxu0
        %v1547 = vadd.f32 %v1474, %v1546
        %v1548 = vpop.f32.mrb[0].mxu0
        %v1549 = vadd.f32 %v1476, %v1548
        %v1550 = vpop.f32.mrb[0].mxu0
        %v1551 = vadd.f32 %v1478, %v1550
        %v1552 = vpop.f32.mrb[0].mxu0
        %v1553 = vadd.f32 %v1480, %v1552
        %1554 = vmatprep.mubr.bf16.mxu0 0
        %1555 = vmatmul.mubr.bf16.gmra.mrb[0].mxu0 %v490
        %v1556 = vpop.f32.mrb[0].mxu0
        %v1557 = vadd.f32 %v1484, %v1556
        %v1558 = vpop.f32.mrb[0].mxu0
        %v1559 = vadd.f32 %v1486, %v1558
        %v1560 = vpop.f32.mrb[0].mxu0
        %v1561 = vadd.f32 %v1488, %v1560
        %v1562 = vpop.f32.mrb[0].mxu0
        %v1563 = vadd.f32 %v1490, %v1562
        %1564 = vdwg.mxu0
        %v1565 = vld [vmem:[#allocation2] sm:$0xfc]
        %v1566 = vld [vmem:[#allocation2 + $0x8] sm:$0xfc]
        %v1567 = vld [vmem:[#allocation2 + $0x10] sm:$0xfc]
        %v1568 = vld [vmem:[#allocation2 + $0x18] sm:$0x3]
        %v1569 = vld [vmem:[#allocation2 + $0x20] sm:$0x3]
        %v1570 = vld [vmem:[#allocation2 + $0x28] sm:$0x3]
        %v1571 = vld [vmem:[#allocation2 + $0x30] sm:$0xfc]
        %v1572 = vld [vmem:[#allocation2 + $0x38] sm:$0xfc]
        %v1573 = vld [vmem:[#allocation2 + $0x40] sm:$0xfc]
        %v1574 = vld [vmem:[#allocation2 + $0x48] sm:$0x3]
        %v1575 = vld [vmem:[#allocation2 + $0x50] sm:$0x3]
        %v1576 = vld [vmem:[#allocation2 + $0x58] sm:$0x3]
        %v1577 = vld [vmem:[#allocation2 + $0x60] sm:$0xfc]
        %v1578 = vld [vmem:[#allocation2 + $0x68] sm:$0xfc]
        %v1579 = vld [vmem:[#allocation2 + $0x70] sm:$0xfc]
        %v1580 = vld [vmem:[#allocation2 + $0x78] sm:$0x3]
        %v1581 = vld [vmem:[#allocation2 + $0x80] sm:$0x3]
        %v1582 = vld [vmem:[#allocation2 + $0x88] sm:$0x3]
        %v1583 = vld [vmem:[#allocation2 + $0x90] sm:$0xfc]
        %v1584 = vld [vmem:[#allocation2 + $0x98] sm:$0xfc]
        %v1585 = vld [vmem:[#allocation2 + $0xa0] sm:$0xfc]
        %v1586 = vld [vmem:[#allocation2 + $0xa8] sm:$0x3]
        %v1587 = vld [vmem:[#allocation2 + $0xb0] sm:$0x3]
        %v1588 = vld [vmem:[#allocation2 + $0xb8] sm:$0x3]
        %v1589 = vld [vmem:[#allocation2 + $0xc0] sm:$0xfc]
        %v1590 = vld [vmem:[#allocation2 + $0xc8] sm:$0xfc]
        %v1591 = vld [vmem:[#allocation2 + $0xd0] sm:$0xfc]
        %v1592 = vld [vmem:[#allocation2 + $0xd8] sm:$0x3]
        %v1593 = vld [vmem:[#allocation2 + $0xe0] sm:$0x3]
        %v1594 = vld [vmem:[#allocation2 + $0xe8] sm:$0x3]
        %v1595 = vld [vmem:[#allocation2 + $0xf0] sm:$0xfc]
        %v1596 = vld [vmem:[#allocation2 + $0xf8] sm:$0xfc]
        %v1597 = vld [vmem:[#allocation2 + $0x100] sm:$0xfc]
        %v1598 = vld [vmem:[#allocation2 + $0x108] sm:$0x3]
        %v1599 = vld [vmem:[#allocation2 + $0x110] sm:$0x3]
        %v1600 = vld [vmem:[#allocation2 + $0x118] sm:$0x3]
        %v1601 = vld [vmem:[#allocation2 + $0x120] sm:$0xfc]
        %v1602 = vld [vmem:[#allocation2 + $0x128] sm:$0xfc]
        %v1603 = vld [vmem:[#allocation2 + $0x130] sm:$0xfc]
        %v1604 = vld [vmem:[#allocation2 + $0x138] sm:$0x3]
        %v1605 = vld [vmem:[#allocation2 + $0x140] sm:$0x3]
        %v1606 = vld [vmem:[#allocation2 + $0x148] sm:$0x3]
        %v1607 = vld [vmem:[#allocation2 + $0x150] sm:$0xfc]
        %v1608 = vld [vmem:[#allocation2 + $0x158] sm:$0xfc]
        %v1609 = vld [vmem:[#allocation2 + $0x160] sm:$0xfc]
        %v1610 = vld [vmem:[#allocation2 + $0x168] sm:$0x3]
        %v1611 = vld [vmem:[#allocation2 + $0x170] sm:$0x3]
        %v1612 = vld [vmem:[#allocation2 + $0x178] sm:$0x3]
        %vm1661 = vcmask 1045504
        %v1662 = vrot.slane %v1565, 2
        %v1663 = vrot.slane %v1568, 2
        %v1664 = vsel %vm1661, %v1662, %v1663
        %v1665 = vrot.slane %v1566, 2
        %v1666 = vrot.slane %v1569, 2
        %v1667 = vsel %vm1661, %v1665, %v1666
        %v1668 = vrot.slane %v1567, 2
        %v1669 = vrot.slane %v1570, 2
        %v1670 = vsel %vm1661, %v1668, %v1669
        %v1671 = vrot.slane %v1571, 2
        %v1672 = vrot.slane %v1574, 2
        %v1673 = vsel %vm1661, %v1671, %v1672
        %v1674 = vrot.slane %v1572, 2
        %v1675 = vrot.slane %v1575, 2
        %v1676 = vsel %vm1661, %v1674, %v1675
        %v1677 = vrot.slane %v1573, 2
        %v1678 = vrot.slane %v1576, 2
        %v1679 = vsel %vm1661, %v1677, %v1678
        %v1680 = vrot.slane %v1577, 2
        %v1681 = vrot.slane %v1580, 2
        %v1682 = vsel %vm1661, %v1680, %v1681
        %v1683 = vrot.slane %v1578, 2
        %v1684 = vrot.slane %v1581, 2
        %v1685 = vsel %vm1661, %v1683, %v1684
        %v1686 = vrot.slane %v1579, 2
        %v1687 = vrot.slane %v1582, 2
        %v1688 = vsel %vm1661, %v1686, %v1687
        %v1689 = vrot.slane %v1583, 2
        %v1690 = vrot.slane %v1586, 2
        %v1691 = vsel %vm1661, %v1689, %v1690
        %v1692 = vrot.slane %v1584, 2
        %v1693 = vrot.slane %v1587, 2
        %v1694 = vsel %vm1661, %v1692, %v1693
        %v1695 = vrot.slane %v1585, 2
        %v1696 = vrot.slane %v1588, 2
        %v1697 = vsel %vm1661, %v1695, %v1696
        %v1698 = vrot.slane %v1589, 2
        %v1699 = vrot.slane %v1592, 2
        %v1700 = vsel %vm1661, %v1698, %v1699
        %v1701 = vrot.slane %v1590, 2
        %v1702 = vrot.slane %v1593, 2
        %v1703 = vsel %vm1661, %v1701, %v1702
        %v1704 = vrot.slane %v1591, 2
        %v1705 = vrot.slane %v1594, 2
        %v1706 = vsel %vm1661, %v1704, %v1705
        %v1707 = vrot.slane %v1595, 2
        %v1708 = vrot.slane %v1598, 2
        %v1709 = vsel %vm1661, %v1707, %v1708
        %v1710 = vrot.slane %v1596, 2
        %v1711 = vrot.slane %v1599, 2
        %v1712 = vsel %vm1661, %v1710, %v1711
        %v1713 = vrot.slane %v1597, 2
        %v1714 = vrot.slane %v1600, 2
        %v1715 = vsel %vm1661, %v1713, %v1714
        %v1716 = vrot.slane %v1601, 2
        %v1717 = vrot.slane %v1604, 2
        %v1718 = vsel %vm1661, %v1716, %v1717
        %v1719 = vrot.slane %v1602, 2
        %v1720 = vrot.slane %v1605, 2
        %v1721 = vsel %vm1661, %v1719, %v1720
        %v1722 = vrot.slane %v1603, 2
        %v1723 = vrot.slane %v1606, 2
        %v1724 = vsel %vm1661, %v1722, %v1723
        %v1725 = vrot.slane %v1607, 2
        %v1726 = vrot.slane %v1610, 2
        %v1727 = vsel %vm1661, %v1725, %v1726
        %v1728 = vrot.slane %v1608, 2
        %v1729 = vrot.slane %v1611, 2
        %v1730 = vsel %vm1661, %v1728, %v1729
        %v1731 = vrot.slane %v1609, 2
        %v1732 = vrot.slane %v1612, 2
        %v1733 = vsel %vm1661, %v1731, %v1732
        %v1758 = vpack.c.bf16 %v1673, %v1664
        %v1759 = vpack.c.bf16 %v1676, %v1667
        %v1760 = vpack.c.bf16 %v1679, %v1670
        %v1761 = vpack.c.bf16 %v1691, %v1682
        %v1762 = vpack.c.bf16 %v1694, %v1685
        %v1763 = vpack.c.bf16 %v1697, %v1688
        %v1764 = vpack.c.bf16 %v1709, %v1700
        %v1765 = vpack.c.bf16 %v1712, %v1703
        %v1766 = vpack.c.bf16 %v1715, %v1706
        %v1767 = vpack.c.bf16 %v1727, %v1718
        %v1768 = vpack.c.bf16 %v1730, %v1721
        %v1769 = vpack.c.bf16 %v1733, %v1724
        %s1770 = scalar_lea.vmem [#allocation6], 768
        %v1771 = vld [vmem:[%s1770] sm:$0xff]
        %v1772 = vld [vmem:[%s1770 + $0x8] sm:$0xff]
        %v1773 = vld [vmem:[%s1770 + $0x10] sm:$0xff]
        %v1774 = vld [vmem:[%s1770 + $0x18] sm:$0xff]
        %v1775 = vld [vmem:[%s1770 + $0x20] sm:$0xff]
        %v1776 = vld [vmem:[%s1770 + $0x28] sm:$0xff]
        %v1777 = vld [vmem:[%s1770 + $0x30] sm:$0xff]
        %v1778 = vld [vmem:[%s1770 + $0x38] sm:$0xff]
        %v1779 = vld [vmem:[%s1770 + $0x40] sm:$0xff]
        %v1780 = vld [vmem:[%s1770 + $0x48] sm:$0xff]
        %v1781 = vld [vmem:[%s1770 + $0x50] sm:$0xff]
        %v1782 = vld [vmem:[%s1770 + $0x58] sm:$0xff]
        %v1783 = vld [vmem:[%s1770 + $0x60] sm:$0xff]
        %v1784 = vld [vmem:[%s1770 + $0x68] sm:$0xff]
        %v1785 = vld [vmem:[%s1770 + $0x70] sm:$0xff]
        %v1786 = vld [vmem:[%s1770 + $0x78] sm:$0xff]
        %v1787 = vld [vmem:[%s1770 + $0x80] sm:$0xff]
        %v1788 = vld [vmem:[%s1770 + $0x88] sm:$0xff]
        %v1789 = vld [vmem:[%s1770 + $0x90] sm:$0xff]
        %v1790 = vld [vmem:[%s1770 + $0x98] sm:$0xff]
        %v1791 = vld [vmem:[%s1770 + $0xa0] sm:$0xff]
        %v1792 = vld [vmem:[%s1770 + $0xa8] sm:$0xff]
        %v1793 = vld [vmem:[%s1770 + $0xb0] sm:$0xff]
        %v1794 = vld [vmem:[%s1770 + $0xb8] sm:$0xff]
        %v1795 = vld [vmem:[%s1770 + $0xc0] sm:$0xff]
        %v1796 = vld [vmem:[%s1770 + $0xc8] sm:$0xff]
        %v1797 = vld [vmem:[%s1770 + $0xd0] sm:$0xff]
        %v1798 = vld [vmem:[%s1770 + $0xd8] sm:$0xff]
        %v1799 = vld [vmem:[%s1770 + $0xe0] sm:$0xff]
        %v1800 = vld [vmem:[%s1770 + $0xe8] sm:$0xff]
        %v1801 = vld [vmem:[%s1770 + $0xf0] sm:$0xff]
        %v1802 = vld [vmem:[%s1770 + $0xf8] sm:$0xff]
        %v1803 = vld [vmem:[%s1770 + $0x100] sm:$0xff]
        %v1804 = vld [vmem:[%s1770 + $0x108] sm:$0xff]
        %v1805 = vld [vmem:[%s1770 + $0x110] sm:$0xff]
        %v1806 = vld [vmem:[%s1770 + $0x118] sm:$0xff]
        %v1807 = vld [vmem:[%s1770 + $0x120] sm:$0xff]
        %v1808 = vld [vmem:[%s1770 + $0x128] sm:$0xff]
        %v1809 = vld [vmem:[%s1770 + $0x130] sm:$0xff]
        %v1810 = vld [vmem:[%s1770 + $0x138] sm:$0xff]
        %v1811 = vld [vmem:[%s1770 + $0x140] sm:$0xff]
        %v1812 = vld [vmem:[%s1770 + $0x148] sm:$0xff]
        %v1813 = vld [vmem:[%s1770 + $0x150] sm:$0xff]
        %v1814 = vld [vmem:[%s1770 + $0x158] sm:$0xff]
        %v1815 = vld [vmem:[%s1770 + $0x160] sm:$0xff]
        %v1816 = vld [vmem:[%s1770 + $0x168] sm:$0xff]
        %v1817 = vld [vmem:[%s1770 + $0x170] sm:$0xff]
        %v1818 = vld [vmem:[%s1770 + $0x178] sm:$0xff]
        %v1867 = vunpack.c.l.b16 %v1771
        %v1868 = vunpack.c.h.b16 %v1771
        %v1869 = vunpack.c.l.b16 %v1772
        %v1870 = vunpack.c.h.b16 %v1772
        %v1871 = vunpack.c.l.b16 %v1773
        %v1872 = vunpack.c.h.b16 %v1773
        %v1873 = vunpack.c.l.b16 %v1774
        %v1874 = vunpack.c.h.b16 %v1774
        %v1875 = vunpack.c.l.b16 %v1775
        %v1876 = vunpack.c.h.b16 %v1775
        %v1877 = vunpack.c.l.b16 %v1776
        %v1878 = vunpack.c.h.b16 %v1776
        %v1879 = vunpack.c.l.b16 %v1777
        %v1880 = vunpack.c.h.b16 %v1777
        %v1881 = vunpack.c.l.b16 %v1778
        %v1882 = vunpack.c.h.b16 %v1778
        %v1883 = vunpack.c.l.b16 %v1779
        %v1884 = vunpack.c.h.b16 %v1779
        %v1885 = vunpack.c.l.b16 %v1780
        %v1886 = vunpack.c.h.b16 %v1780
        %v1887 = vunpack.c.l.b16 %v1781
        %v1888 = vunpack.c.h.b16 %v1781
        %v1889 = vunpack.c.l.b16 %v1782
        %v1890 = vunpack.c.h.b16 %v1782
        %v1891 = vunpack.c.l.b16 %v1783
        %v1892 = vunpack.c.h.b16 %v1783
        %v1893 = vunpack.c.l.b16 %v1784
        %v1894 = vunpack.c.h.b16 %v1784
        %v1895 = vunpack.c.l.b16 %v1785
        %v1896 = vunpack.c.h.b16 %v1785
        %v1897 = vunpack.c.l.b16 %v1786
        %v1898 = vunpack.c.h.b16 %v1786
        %v1899 = vunpack.c.l.b16 %v1787
        %v1900 = vunpack.c.h.b16 %v1787
        %v1901 = vunpack.c.l.b16 %v1788
        %v1902 = vunpack.c.h.b16 %v1788
        %v1903 = vunpack.c.l.b16 %v1789
        %v1904 = vunpack.c.h.b16 %v1789
        %v1905 = vunpack.c.l.b16 %v1790
        %v1906 = vunpack.c.h.b16 %v1790
        %v1907 = vunpack.c.l.b16 %v1791
        %v1908 = vunpack.c.h.b16 %v1791
        %v1909 = vunpack.c.l.b16 %v1792
        %v1910 = vunpack.c.h.b16 %v1792
        %v1911 = vunpack.c.l.b16 %v1793
        %v1912 = vunpack.c.h.b16 %v1793
        %v1913 = vunpack.c.l.b16 %v1794
        %v1914 = vunpack.c.h.b16 %v1794
        %v1915 = vunpack.c.l.b16 %v1795
        %v1916 = vunpack.c.h.b16 %v1795
        %v1917 = vunpack.c.l.b16 %v1796
        %v1918 = vunpack.c.h.b16 %v1796
        %v1919 = vunpack.c.l.b16 %v1797
        %v1920 = vunpack.c.h.b16 %v1797
        %v1921 = vunpack.c.l.b16 %v1798
        %v1922 = vunpack.c.h.b16 %v1798
        %v1923 = vunpack.c.l.b16 %v1799
        %v1924 = vunpack.c.h.b16 %v1799
        %v1925 = vunpack.c.l.b16 %v1800
        %v1926 = vunpack.c.h.b16 %v1800
        %v1927 = vunpack.c.l.b16 %v1801
        %v1928 = vunpack.c.h.b16 %v1801
        %v1929 = vunpack.c.l.b16 %v1802
        %v1930 = vunpack.c.h.b16 %v1802
        %v1931 = vunpack.c.l.b16 %v1803
        %v1932 = vunpack.c.h.b16 %v1803
        %v1933 = vunpack.c.l.b16 %v1804
        %v1934 = vunpack.c.h.b16 %v1804
        %v1935 = vunpack.c.l.b16 %v1805
        %v1936 = vunpack.c.h.b16 %v1805
        %v1937 = vunpack.c.l.b16 %v1806
        %v1938 = vunpack.c.h.b16 %v1806
        %v1939 = vunpack.c.l.b16 %v1807
        %v1940 = vunpack.c.h.b16 %v1807
        %v1941 = vunpack.c.l.b16 %v1808
        %v1942 = vunpack.c.h.b16 %v1808
        %v1943 = vunpack.c.l.b16 %v1809
        %v1944 = vunpack.c.h.b16 %v1809
        %v1945 = vunpack.c.l.b16 %v1810
        %v1946 = vunpack.c.h.b16 %v1810
        %v1947 = vunpack.c.l.b16 %v1811
        %v1948 = vunpack.c.h.b16 %v1811
        %v1949 = vunpack.c.l.b16 %v1812
        %v1950 = vunpack.c.h.b16 %v1812
        %v1951 = vunpack.c.l.b16 %v1813
        %v1952 = vunpack.c.h.b16 %v1813
        %v1953 = vunpack.c.l.b16 %v1814
        %v1954 = vunpack.c.h.b16 %v1814
        %v1955 = vunpack.c.l.b16 %v1815
        %v1956 = vunpack.c.h.b16 %v1815
        %v1957 = vunpack.c.l.b16 %v1816
        %v1958 = vunpack.c.h.b16 %v1816
        %v1959 = vunpack.c.l.b16 %v1817
        %v1960 = vunpack.c.h.b16 %v1817
        %v1961 = vunpack.c.l.b16 %v1818
        %v1962 = vunpack.c.h.b16 %v1818
        %v1963 = vpack.c.b16 %v1869, %v1867
        %v1964 = vpack.c.b16 %v1870, %v1868
        %v1965 = vpack.c.b16 %v1873, %v1871
        %v1966 = vpack.c.b16 %v1874, %v1872
        %v1967 = vpack.c.b16 %v1877, %v1875
        %v1968 = vpack.c.b16 %v1878, %v1876
        %v1969 = vpack.c.b16 %v1881, %v1879
        %v1970 = vpack.c.b16 %v1882, %v1880
        %v1971 = vpack.c.b16 %v1885, %v1883
        %v1972 = vpack.c.b16 %v1886, %v1884
        %v1973 = vpack.c.b16 %v1889, %v1887
        %v1974 = vpack.c.b16 %v1890, %v1888
        %v1975 = vpack.c.b16 %v1893, %v1891
        %v1976 = vpack.c.b16 %v1894, %v1892
        %v1977 = vpack.c.b16 %v1897, %v1895
        %v1978 = vpack.c.b16 %v1898, %v1896
        %v1979 = vpack.c.b16 %v1901, %v1899
        %v1980 = vpack.c.b16 %v1902, %v1900
        %v1981 = vpack.c.b16 %v1905, %v1903
        %v1982 = vpack.c.b16 %v1906, %v1904
        %v1983 = vpack.c.b16 %v1909, %v1907
        %v1984 = vpack.c.b16 %v1910, %v1908
        %v1985 = vpack.c.b16 %v1913, %v1911
        %v1986 = vpack.c.b16 %v1914, %v1912
        %v1987 = vpack.c.b16 %v1917, %v1915
        %v1988 = vpack.c.b16 %v1918, %v1916
        %v1989 = vpack.c.b16 %v1921, %v1919
        %v1990 = vpack.c.b16 %v1922, %v1920
        %v1991 = vpack.c.b16 %v1925, %v1923
        %v1992 = vpack.c.b16 %v1926, %v1924
        %v1993 = vpack.c.b16 %v1929, %v1927
        %v1994 = vpack.c.b16 %v1930, %v1928
        %v1995 = vpack.c.b16 %v1933, %v1931
        %v1996 = vpack.c.b16 %v1934, %v1932
        %v1997 = vpack.c.b16 %v1937, %v1935
        %v1998 = vpack.c.b16 %v1938, %v1936
        %v1999 = vpack.c.b16 %v1941, %v1939
        %v2000 = vpack.c.b16 %v1942, %v1940
        %v2001 = vpack.c.b16 %v1945, %v1943
        %v2002 = vpack.c.b16 %v1946, %v1944
        %v2003 = vpack.c.b16 %v1949, %v1947
        %v2004 = vpack.c.b16 %v1950, %v1948
        %v2005 = vpack.c.b16 %v1953, %v1951
        %v2006 = vpack.c.b16 %v1954, %v1952
        %v2007 = vpack.c.b16 %v1957, %v1955
        %v2008 = vpack.c.b16 %v1958, %v1956
        %v2009 = vpack.c.b16 %v1961, %v1959
        %v2010 = vpack.c.b16 %v1962, %v1960
        %2059 = vmatprep.subr.bf16.mxu0 %v1964
        %2060 = vmatpush1.bf16.msra.mxu0 %v1963
        %2061 = vmatprep.subr.bf16.mxu0 %v1966
        %2062 = vmatpush1.bf16.msra.mxu0 %v1965
        %2063 = vmatprep.subr.bf16.mxu0 %v1968
        %2064 = vmatpush1.bf16.msra.mxu0 %v1967
        %2065 = vmatprep.subr.bf16.mxu0 %v1970
        %2066 = vmatpush1.bf16.msra.mxu0 %v1969
        %2067 = vmatprep.subr.bf16.mxu0 %v1972
        %2068 = vmatpush1.bf16.msra.mxu0 %v1971
        %2069 = vmatprep.subr.bf16.mxu0 %v1974
        %2070 = vmatpush1.bf16.msra.mxu0 %v1973
        %2071 = vmatprep.subr.bf16.mxu0 %v1976
        %2072 = vmatpush1.bf16.msra.mxu0 %v1975
        %2073 = vmatprep.subr.bf16.mxu0 %v1978
        %2074 = vmatpush1.bf16.msra.mxu0 %v1977
        %2075 = vmatprep.subr.bf16.mxu0 %v1980
        %2076 = vmatpush1.bf16.msra.mxu0 %v1979
        %2077 = vmatprep.subr.bf16.mxu0 %v1982
        %2078 = vmatpush1.bf16.msra.mxu0 %v1981
        %2079 = vmatprep.subr.bf16.mxu0 %v1984
        %2080 = vmatpush1.bf16.msra.mxu0 %v1983
        %2081 = vmatprep.subr.bf16.mxu0 %v1986
        %2082 = vmatpush1.bf16.msra.mxu0 %v1985
        %2083 = vmatprep.subr.bf16.mxu0 %v1988
        %2084 = vmatpush1.bf16.msra.mxu0 %v1987
        %2085 = vmatprep.subr.bf16.mxu0 %v1990
        %2086 = vmatpush1.bf16.msra.mxu0 %v1989
        %2087 = vmatprep.subr.bf16.mxu0 %v1992
        %2088 = vmatpush1.bf16.msra.mxu0 %v1991
        %2089 = vmatprep.subr.bf16.mxu0 %v1994
        %2090 = vmatpush1.bf16.msra.mxu0 %v1993
        %2091 = vmatprep.mubr.bf16.mxu0 %v1759
        %2092 = vmatmul.mubr.bf16.gmra.mrb[0].mxu0 %v1758
        %v2093 = vpop.f32.mrb[0].mxu0
        %v2094 = vadd.f32 0.0, %v2093
        %v2095 = vpop.f32.mrb[0].mxu0
        %v2096 = vadd.f32 0.0, %v2095
        %v2097 = vpop.f32.mrb[0].mxu0
        %v2098 = vadd.f32 0.0, %v2097
        %v2099 = vpop.f32.mrb[0].mxu0
        %v2100 = vadd.f32 0.0, %v2099
        %2101 = vmatprep.mubr.bf16.mxu0 %v1762
        %2102 = vmatmul.mubr.bf16.gmra.mrb[0].mxu0 %v1761
        %v2103 = vpop.f32.mrb[0].mxu0
        %v2104 = vadd.f32 0.0, %v2103
        %v2105 = vpop.f32.mrb[0].mxu0
        %v2106 = vadd.f32 0.0, %v2105
        %v2107 = vpop.f32.mrb[0].mxu0
        %v2108 = vadd.f32 0.0, %v2107
        %v2109 = vpop.f32.mrb[0].mxu0
        %v2110 = vadd.f32 0.0, %v2109
        %2111 = vmatprep.mubr.bf16.mxu0 %v1765
        %2112 = vmatmul.mubr.bf16.gmra.mrb[0].mxu0 %v1764
        %v2113 = vpop.f32.mrb[0].mxu0
        %v2114 = vadd.f32 0.0, %v2113
        %v2115 = vpop.f32.mrb[0].mxu0
        %v2116 = vadd.f32 0.0, %v2115
        %v2117 = vpop.f32.mrb[0].mxu0
        %v2118 = vadd.f32 0.0, %v2117
        %v2119 = vpop.f32.mrb[0].mxu0
        %v2120 = vadd.f32 0.0, %v2119
        %2121 = vmatprep.mubr.bf16.mxu0 %v1768
        %2122 = vmatmul.mubr.bf16.gmra.mrb[0].mxu0 %v1767
        %v2123 = vpop.f32.mrb[0].mxu0
        %v2124 = vadd.f32 0.0, %v2123
        %v2125 = vpop.f32.mrb[0].mxu0
        %v2126 = vadd.f32 0.0, %v2125
        %v2127 = vpop.f32.mrb[0].mxu0
        %v2128 = vadd.f32 0.0, %v2127
        %v2129 = vpop.f32.mrb[0].mxu0
        %v2130 = vadd.f32 0.0, %v2129
        %2131 = vdwg.mxu0
        %2132 = vmatprep.subr.bf16.mxu0 %v1996
        %2133 = vmatpush1.bf16.msra.mxu0 %v1995
        %2134 = vmatprep.subr.bf16.mxu0 %v1998
        %2135 = vmatpush1.bf16.msra.mxu0 %v1997
        %2136 = vmatprep.subr.bf16.mxu0 %v2000
        %2137 = vmatpush1.bf16.msra.mxu0 %v1999
        %2138 = vmatprep.subr.bf16.mxu0 %v2002
        %2139 = vmatpush1.bf16.msra.mxu0 %v2001
        %2140 = vmatprep.subr.bf16.mxu0 %v2004
        %2141 = vmatpush1.bf16.msra.mxu0 %v2003
        %2142 = vmatprep.subr.bf16.mxu0 %v2006
        %2143 = vmatpush1.bf16.msra.mxu0 %v2005
        %2144 = vmatprep.subr.bf16.mxu0 %v2008
        %2145 = vmatpush1.bf16.msra.mxu0 %v2007
        %2146 = vmatprep.subr.bf16.mxu0 %v2010
        %2147 = vmatpush1.bf16.msra.mxu0 %v2009
        %2148 = vmatprep.subr.bf16.mxu0 0
        %2149 = vmatpush1.bf16.msra.mxu0 0
        %2150 = vmatprep.subr.bf16.mxu0 0
        %2151 = vmatpush1.bf16.msra.mxu0 0
        %2152 = vmatprep.subr.bf16.mxu0 0
        %2153 = vmatpush1.bf16.msra.mxu0 0
        %2154 = vmatprep.subr.bf16.mxu0 0
        %2155 = vmatpush1.bf16.msra.mxu0 0
        %2156 = vmatprep.subr.bf16.mxu0 0
        %2157 = vmatpush1.bf16.msra.mxu0 0
        %2158 = vmatprep.subr.bf16.mxu0 0
        %2159 = vmatpush1.bf16.msra.mxu0 0
        %2160 = vmatprep.subr.bf16.mxu0 0
        %2161 = vmatpush1.bf16.msra.mxu0 0
        %2162 = vmatprep.subr.bf16.mxu0 0
        %2163 = vmatpush1.bf16.msra.mxu0 0
        %2164 = vmatprep.mubr.bf16.mxu0 0
        %2165 = vmatmul.mubr.bf16.gmra.mrb[0].mxu0 %v1760
        %v2166 = vpop.f32.mrb[0].mxu0
        %v2167 = vadd.f32 %v2094, %v2166
        %v2168 = vpop.f32.mrb[0].mxu0
        %v2169 = vadd.f32 %v2096, %v2168
        %v2170 = vpop.f32.mrb[0].mxu0
        %v2171 = vadd.f32 %v2098, %v2170
        %v2172 = vpop.f32.mrb[0].mxu0
        %v2173 = vadd.f32 %v2100, %v2172
        %2174 = vmatprep.mubr.bf16.mxu0 0
        %2175 = vmatmul.mubr.bf16.gmra.mrb[0].mxu0 %v1763
        %v2176 = vpop.f32.mrb[0].mxu0
        %v2177 = vadd.f32 %v2104, %v2176
        %v2178 = vpop.f32.mrb[0].mxu0
        %v2179 = vadd.f32 %v2106, %v2178
        %v2180 = vpop.f32.mrb[0].mxu0
        %v2181 = vadd.f32 %v2108, %v2180
        %v2182 = vpop.f32.mrb[0].mxu0
        %v2183 = vadd.f32 %v2110, %v2182
        %2184 = vmatprep.mubr.bf16.mxu0 0
        %2185 = vmatmul.mubr.bf16.gmra.mrb[0].mxu0 %v1766
        %v2186 = vpop.f32.mrb[0].mxu0
        %v2187 = vadd.f32 %v2114, %v2186
        %v2188 = vpop.f32.mrb[0].mxu0
        %v2189 = vadd.f32 %v2116, %v2188
        %v2190 = vpop.f32.mrb[0].mxu0
        %v2191 = vadd.f32 %v2118, %v2190
        %v2192 = vpop.f32.mrb[0].mxu0
        %v2193 = vadd.f32 %v2120, %v2192
        %2194 = vmatprep.mubr.bf16.mxu0 0
        %2195 = vmatmul.mubr.bf16.gmra.mrb[0].mxu0 %v1769
        %v2196 = vpop.f32.mrb[0].mxu0
        %v2197 = vadd.f32 %v2124, %v2196
        %v2198 = vpop.f32.mrb[0].mxu0
        %v2199 = vadd.f32 %v2126, %v2198
        %v2200 = vpop.f32.mrb[0].mxu0
        %v2201 = vadd.f32 %v2128, %v2200
        %v2202 = vpop.f32.mrb[0].mxu0
        %v2203 = vadd.f32 %v2130, %v2202
        %2204 = vdwg.mxu0
        %v2205 = vadd.f32 %v1527, %v2167
        %v2206 = vadd.f32 %v1529, %v2169
        %v2207 = vadd.f32 %v1531, %v2171
        %v2208 = vadd.f32 %v1533, %v2173
        %v2209 = vadd.f32 %v1537, %v2177
        %v2210 = vadd.f32 %v1539, %v2179
        %v2211 = vadd.f32 %v1541, %v2181
        %v2212 = vadd.f32 %v1543, %v2183
        %v2213 = vadd.f32 %v1547, %v2187
        %v2214 = vadd.f32 %v1549, %v2189
        %v2215 = vadd.f32 %v1551, %v2191
        %v2216 = vadd.f32 %v1553, %v2193
        %v2217 = vadd.f32 %v1557, %v2197
        %v2218 = vadd.f32 %v1559, %v2199
        %v2219 = vadd.f32 %v1561, %v2201
        %v2220 = vadd.f32 %v1563, %v2203
        %v2221 = vld [vmem:[%s422] sm:$0xff]
        %v2222 = vld [vmem:[%s422 + $0x8] sm:$0xff]
        %v2223 = vld [vmem:[%s422 + $0x10] sm:$0xff]
        %v2224 = vld [vmem:[%s422 + $0x30] sm:$0xff]
        %v2225 = vld [vmem:[%s422 + $0x38] sm:$0xff]
        %v2226 = vld [vmem:[%s422 + $0x40] sm:$0xff]
        %v2227 = vld [vmem:[%s422 + $0x60] sm:$0xff]
        %v2228 = vld [vmem:[%s422 + $0x68] sm:$0xff]
        %v2229 = vld [vmem:[%s422 + $0x70] sm:$0xff]
        %v2230 = vld [vmem:[%s422 + $0x90] sm:$0xff]
        %v2231 = vld [vmem:[%s422 + $0x98] sm:$0xff]
        %v2232 = vld [vmem:[%s422 + $0xa0] sm:$0xff]
        %v2233 = vld [vmem:[%s422 + $0xc0] sm:$0xff]
        %v2234 = vld [vmem:[%s422 + $0xc8] sm:$0xff]
        %v2235 = vld [vmem:[%s422 + $0xd0] sm:$0xff]
        %v2236 = vld [vmem:[%s422 + $0xf0] sm:$0xff]
        %v2237 = vld [vmem:[%s422 + $0xf8] sm:$0xff]
        %v2238 = vld [vmem:[%s422 + $0x100] sm:$0xff]
        %v2239 = vld [vmem:[%s422 + $0x120] sm:$0xff]
        %v2240 = vld [vmem:[%s422 + $0x128] sm:$0xff]
        %v2241 = vld [vmem:[%s422 + $0x130] sm:$0xff]
        %v2242 = vld [vmem:[%s422 + $0x150] sm:$0xff]
        %v2243 = vld [vmem:[%s422 + $0x158] sm:$0xff]
        %v2244 = vld [vmem:[%s422 + $0x160] sm:$0xff]
        %v2245 = vpack.c.bf16 %v2224, %v2221
        %v2246 = vpack.c.bf16 %v2225, %v2222
        %v2247 = vpack.c.bf16 %v2226, %v2223
        %v2248 = vpack.c.bf16 %v2230, %v2227
        %v2249 = vpack.c.bf16 %v2231, %v2228
        %v2250 = vpack.c.bf16 %v2232, %v2229
        %v2251 = vpack.c.bf16 %v2236, %v2233
        %v2252 = vpack.c.bf16 %v2237, %v2234
        %v2253 = vpack.c.bf16 %v2238, %v2235
        %v2254 = vpack.c.bf16 %v2242, %v2239
        %v2255 = vpack.c.bf16 %v2243, %v2240
        %v2256 = vpack.c.bf16 %v2244, %v2241
        %s2257 = scalar_lea.vmem [#allocation6], 1152
        %v2258 = vld [vmem:[%s2257] sm:$0xff]
        %v2259 = vld [vmem:[%s2257 + $0x8] sm:$0xff]
        %v2260 = vld [vmem:[%s2257 + $0x10] sm:$0xff]
        %v2261 = vld [vmem:[%s2257 + $0x18] sm:$0xff]
        %v2262 = vld [vmem:[%s2257 + $0x20] sm:$0xff]
        %v2263 = vld [vmem:[%s2257 + $0x28] sm:$0xff]
        %v2264 = vld [vmem:[%s2257 + $0x30] sm:$0xff]
        %v2265 = vld [vmem:[%s2257 + $0x38] sm:$0xff]
        %v2266 = vld [vmem:[%s2257 + $0x40] sm:$0xff]
        %v2267 = vld [vmem:[%s2257 + $0x48] sm:$0xff]
        %v2268 = vld [vmem:[%s2257 + $0x50] sm:$0xff]
        %v2269 = vld [vmem:[%s2257 + $0x58] sm:$0xff]
        %v2270 = vld [vmem:[%s2257 + $0x60] sm:$0xff]
        %v2271 = vld [vmem:[%s2257 + $0x68] sm:$0xff]
        %v2272 = vld [vmem:[%s2257 + $0x70] sm:$0xff]
        %v2273 = vld [vmem:[%s2257 + $0x78] sm:$0xff]
        %v2274 = vld [vmem:[%s2257 + $0x80] sm:$0xff]
        %v2275 = vld [vmem:[%s2257 + $0x88] sm:$0xff]
        %v2276 = vld [vmem:[%s2257 + $0x90] sm:$0xff]
        %v2277 = vld [vmem:[%s2257 + $0x98] sm:$0xff]
        %v2278 = vld [vmem:[%s2257 + $0xa0] sm:$0xff]
        %v2279 = vld [vmem:[%s2257 + $0xa8] sm:$0xff]
        %v2280 = vld [vmem:[%s2257 + $0xb0] sm:$0xff]
        %v2281 = vld [vmem:[%s2257 + $0xb8] sm:$0xff]
        %v2282 = vld [vmem:[%s2257 + $0xc0] sm:$0xff]
        %v2283 = vld [vmem:[%s2257 + $0xc8] sm:$0xff]
        %v2284 = vld [vmem:[%s2257 + $0xd0] sm:$0xff]
        %v2285 = vld [vmem:[%s2257 + $0xd8] sm:$0xff]
        %v2286 = vld [vmem:[%s2257 + $0xe0] sm:$0xff]
        %v2287 = vld [vmem:[%s2257 + $0xe8] sm:$0xff]
        %v2288 = vld [vmem:[%s2257 + $0xf0] sm:$0xff]
        %v2289 = vld [vmem:[%s2257 + $0xf8] sm:$0xff]
        %v2290 = vld [vmem:[%s2257 + $0x100] sm:$0xff]
        %v2291 = vld [vmem:[%s2257 + $0x108] sm:$0xff]
        %v2292 = vld [vmem:[%s2257 + $0x110] sm:$0xff]
        %v2293 = vld [vmem:[%s2257 + $0x118] sm:$0xff]
        %v2294 = vld [vmem:[%s2257 + $0x120] sm:$0xff]
        %v2295 = vld [vmem:[%s2257 + $0x128] sm:$0xff]
        %v2296 = vld [vmem:[%s2257 + $0x130] sm:$0xff]
        %v2297 = vld [vmem:[%s2257 + $0x138] sm:$0xff]
        %v2298 = vld [vmem:[%s2257 + $0x140] sm:$0xff]
        %v2299 = vld [vmem:[%s2257 + $0x148] sm:$0xff]
        %v2300 = vld [vmem:[%s2257 + $0x150] sm:$0xff]
        %v2301 = vld [vmem:[%s2257 + $0x158] sm:$0xff]
        %v2302 = vld [vmem:[%s2257 + $0x160] sm:$0xff]
        %v2303 = vld [vmem:[%s2257 + $0x168] sm:$0xff]
        %v2304 = vld [vmem:[%s2257 + $0x170] sm:$0xff]
        %v2305 = vld [vmem:[%s2257 + $0x178] sm:$0xff]
        %v2354 = vunpack.c.l.b16 %v2258
        %v2355 = vunpack.c.h.b16 %v2258
        %v2356 = vunpack.c.l.b16 %v2259
        %v2357 = vunpack.c.h.b16 %v2259
        %v2358 = vunpack.c.l.b16 %v2260
        %v2359 = vunpack.c.h.b16 %v2260
        %v2360 = vunpack.c.l.b16 %v2261
        %v2361 = vunpack.c.h.b16 %v2261
        %v2362 = vunpack.c.l.b16 %v2262
        %v2363 = vunpack.c.h.b16 %v2262
        %v2364 = vunpack.c.l.b16 %v2263
        %v2365 = vunpack.c.h.b16 %v2263
        %v2366 = vunpack.c.l.b16 %v2264
        %v2367 = vunpack.c.h.b16 %v2264
        %v2368 = vunpack.c.l.b16 %v2265
        %v2369 = vunpack.c.h.b16 %v2265
        %v2370 = vunpack.c.l.b16 %v2266
        %v2371 = vunpack.c.h.b16 %v2266
        %v2372 = vunpack.c.l.b16 %v2267
        %v2373 = vunpack.c.h.b16 %v2267
        %v2374 = vunpack.c.l.b16 %v2268
        %v2375 = vunpack.c.h.b16 %v2268
        %v2376 = vunpack.c.l.b16 %v2269
        %v2377 = vunpack.c.h.b16 %v2269
        %v2378 = vunpack.c.l.b16 %v2270
        %v2379 = vunpack.c.h.b16 %v2270
        %v2380 = vunpack.c.l.b16 %v2271
        %v2381 = vunpack.c.h.b16 %v2271
        %v2382 = vunpack.c.l.b16 %v2272
        %v2383 = vunpack.c.h.b16 %v2272
        %v2384 = vunpack.c.l.b16 %v2273
        %v2385 = vunpack.c.h.b16 %v2273
        %v2386 = vunpack.c.l.b16 %v2274
        %v2387 = vunpack.c.h.b16 %v2274
        %v2388 = vunpack.c.l.b16 %v2275
        %v2389 = vunpack.c.h.b16 %v2275
        %v2390 = vunpack.c.l.b16 %v2276
        %v2391 = vunpack.c.h.b16 %v2276
        %v2392 = vunpack.c.l.b16 %v2277
        %v2393 = vunpack.c.h.b16 %v2277
        %v2394 = vunpack.c.l.b16 %v2278
        %v2395 = vunpack.c.h.b16 %v2278
        %v2396 = vunpack.c.l.b16 %v2279
        %v2397 = vunpack.c.h.b16 %v2279
        %v2398 = vunpack.c.l.b16 %v2280
        %v2399 = vunpack.c.h.b16 %v2280
        %v2400 = vunpack.c.l.b16 %v2281
        %v2401 = vunpack.c.h.b16 %v2281
        %v2402 = vunpack.c.l.b16 %v2282
        %v2403 = vunpack.c.h.b16 %v2282
        %v2404 = vunpack.c.l.b16 %v2283
        %v2405 = vunpack.c.h.b16 %v2283
        %v2406 = vunpack.c.l.b16 %v2284
        %v2407 = vunpack.c.h.b16 %v2284
        %v2408 = vunpack.c.l.b16 %v2285
        %v2409 = vunpack.c.h.b16 %v2285
        %v2410 = vunpack.c.l.b16 %v2286
        %v2411 = vunpack.c.h.b16 %v2286
        %v2412 = vunpack.c.l.b16 %v2287
        %v2413 = vunpack.c.h.b16 %v2287
        %v2414 = vunpack.c.l.b16 %v2288
        %v2415 = vunpack.c.h.b16 %v2288
        %v2416 = vunpack.c.l.b16 %v2289
        %v2417 = vunpack.c.h.b16 %v2289
        %v2418 = vunpack.c.l.b16 %v2290
        %v2419 = vunpack.c.h.b16 %v2290
        %v2420 = vunpack.c.l.b16 %v2291
        %v2421 = vunpack.c.h.b16 %v2291
        %v2422 = vunpack.c.l.b16 %v2292
        %v2423 = vunpack.c.h.b16 %v2292
        %v2424 = vunpack.c.l.b16 %v2293
        %v2425 = vunpack.c.h.b16 %v2293
        %v2426 = vunpack.c.l.b16 %v2294
        %v2427 = vunpack.c.h.b16 %v2294
        %v2428 = vunpack.c.l.b16 %v2295
        %v2429 = vunpack.c.h.b16 %v2295
        %v2430 = vunpack.c.l.b16 %v2296
        %v2431 = vunpack.c.h.b16 %v2296
        %v2432 = vunpack.c.l.b16 %v2297
        %v2433 = vunpack.c.h.b16 %v2297
        %v2434 = vunpack.c.l.b16 %v2298
        %v2435 = vunpack.c.h.b16 %v2298
        %v2436 = vunpack.c.l.b16 %v2299
        %v2437 = vunpack.c.h.b16 %v2299
        %v2438 = vunpack.c.l.b16 %v2300
        %v2439 = vunpack.c.h.b16 %v2300
        %v2440 = vunpack.c.l.b16 %v2301
        %v2441 = vunpack.c.h.b16 %v2301
        %v2442 = vunpack.c.l.b16 %v2302
        %v2443 = vunpack.c.h.b16 %v2302
        %v2444 = vunpack.c.l.b16 %v2303
        %v2445 = vunpack.c.h.b16 %v2303
        %v2446 = vunpack.c.l.b16 %v2304
        %v2447 = vunpack.c.h.b16 %v2304
        %v2448 = vunpack.c.l.b16 %v2305
        %v2449 = vunpack.c.h.b16 %v2305
        %v2450 = vpack.c.b16 %v2356, %v2354
        %v2451 = vpack.c.b16 %v2357, %v2355
        %v2452 = vpack.c.b16 %v2360, %v2358
        %v2453 = vpack.c.b16 %v2361, %v2359
        %v2454 = vpack.c.b16 %v2364, %v2362
        %v2455 = vpack.c.b16 %v2365, %v2363
        %v2456 = vpack.c.b16 %v2368, %v2366
        %v2457 = vpack.c.b16 %v2369, %v2367
        %v2458 = vpack.c.b16 %v2372, %v2370
        %v2459 = vpack.c.b16 %v2373, %v2371
        %v2460 = vpack.c.b16 %v2376, %v2374
        %v2461 = vpack.c.b16 %v2377, %v2375
        %v2462 = vpack.c.b16 %v2380, %v2378
        %v2463 = vpack.c.b16 %v2381, %v2379
        %v2464 = vpack.c.b16 %v2384, %v2382
        %v2465 = vpack.c.b16 %v2385, %v2383
        %v2466 = vpack.c.b16 %v2388, %v2386
        %v2467 = vpack.c.b16 %v2389, %v2387
        %v2468 = vpack.c.b16 %v2392, %v2390
        %v2469 = vpack.c.b16 %v2393, %v2391
        %v2470 = vpack.c.b16 %v2396, %v2394
        %v2471 = vpack.c.b16 %v2397, %v2395
        %v2472 = vpack.c.b16 %v2400, %v2398
        %v2473 = vpack.c.b16 %v2401, %v2399
        %v2474 = vpack.c.b16 %v2404, %v2402
        %v2475 = vpack.c.b16 %v2405, %v2403
        %v2476 = vpack.c.b16 %v2408, %v2406
        %v2477 = vpack.c.b16 %v2409, %v2407
        %v2478 = vpack.c.b16 %v2412, %v2410
        %v2479 = vpack.c.b16 %v2413, %v2411
        %v2480 = vpack.c.b16 %v2416, %v2414
        %v2481 = vpack.c.b16 %v2417, %v2415
        %v2482 = vpack.c.b16 %v2420, %v2418
        %v2483 = vpack.c.b16 %v2421, %v2419
        %v2484 = vpack.c.b16 %v2424, %v2422
        %v2485 = vpack.c.b16 %v2425, %v2423
        %v2486 = vpack.c.b16 %v2428, %v2426
        %v2487 = vpack.c.b16 %v2429, %v2427
        %v2488 = vpack.c.b16 %v2432, %v2430
        %v2489 = vpack.c.b16 %v2433, %v2431
        %v2490 = vpack.c.b16 %v2436, %v2434
        %v2491 = vpack.c.b16 %v2437, %v2435
        %v2492 = vpack.c.b16 %v2440, %v2438
        %v2493 = vpack.c.b16 %v2441, %v2439
        %v2494 = vpack.c.b16 %v2444, %v2442
        %v2495 = vpack.c.b16 %v2445, %v2443
        %v2496 = vpack.c.b16 %v2448, %v2446
        %v2497 = vpack.c.b16 %v2449, %v2447
        %2546 = vmatprep.subr.bf16.mxu0 %v2451
        %2547 = vmatpush1.bf16.msra.mxu0 %v2450
        %2548 = vmatprep.subr.bf16.mxu0 %v2453
        %2549 = vmatpush1.bf16.msra.mxu0 %v2452
        %2550 = vmatprep.subr.bf16.mxu0 %v2455
        %2551 = vmatpush1.bf16.msra.mxu0 %v2454
        %2552 = vmatprep.subr.bf16.mxu0 %v2457
        %2553 = vmatpush1.bf16.msra.mxu0 %v2456
        %2554 = vmatprep.subr.bf16.mxu0 %v2459
        %2555 = vmatpush1.bf16.msra.mxu0 %v2458
        %2556 = vmatprep.subr.bf16.mxu0 %v2461
        %2557 = vmatpush1.bf16.msra.mxu0 %v2460
        %2558 = vmatprep.subr.bf16.mxu0 %v2463
        %2559 = vmatpush1.bf16.msra.mxu0 %v2462
        %2560 = vmatprep.subr.bf16.mxu0 %v2465
        %2561 = vmatpush1.bf16.msra.mxu0 %v2464
        %2562 = vmatprep.subr.bf16.mxu0 %v2467
        %2563 = vmatpush1.bf16.msra.mxu0 %v2466
        %2564 = vmatprep.subr.bf16.mxu0 %v2469
        %2565 = vmatpush1.bf16.msra.mxu0 %v2468
        %2566 = vmatprep.subr.bf16.mxu0 %v2471
        %2567 = vmatpush1.bf16.msra.mxu0 %v2470
        %2568 = vmatprep.subr.bf16.mxu0 %v2473
        %2569 = vmatpush1.bf16.msra.mxu0 %v2472
        %2570 = vmatprep.subr.bf16.mxu0 %v2475
        %2571 = vmatpush1.bf16.msra.mxu0 %v2474
        %2572 = vmatprep.subr.bf16.mxu0 %v2477
        %2573 = vmatpush1.bf16.msra.mxu0 %v2476
        %2574 = vmatprep.subr.bf16.mxu0 %v2479
        %2575 = vmatpush1.bf16.msra.mxu0 %v2478
        %2576 = vmatprep.subr.bf16.mxu0 %v2481
        %2577 = vmatpush1.bf16.msra.mxu0 %v2480
        %2578 = vmatprep.mubr.bf16.mxu0 %v2246
        %2579 = vmatmul.mubr.bf16.gmra.mrb[0].mxu0 %v2245
        %v2580 = vpop.f32.mrb[0].mxu0
        %v2581 = vadd.f32 0.0, %v2580
        %v2582 = vpop.f32.mrb[0].mxu0
        %v2583 = vadd.f32 0.0, %v2582
        %v2584 = vpop.f32.mrb[0].mxu0
        %v2585 = vadd.f32 0.0, %v2584
        %v2586 = vpop.f32.mrb[0].mxu0
        %v2587 = vadd.f32 0.0, %v2586
        %2588 = vmatprep.mubr.bf16.mxu0 %v2249
        %2589 = vmatmul.mubr.bf16.gmra.mrb[0].mxu0 %v2248
        %v2590 = vpop.f32.mrb[0].mxu0
        %v2591 = vadd.f32 0.0, %v2590
        %v2592 = vpop.f32.mrb[0].mxu0
        %v2593 = vadd.f32 0.0, %v2592
        %v2594 = vpop.f32.mrb[0].mxu0
        %v2595 = vadd.f32 0.0, %v2594
        %v2596 = vpop.f32.mrb[0].mxu0
        %v2597 = vadd.f32 0.0, %v2596
        %2598 = vmatprep.mubr.bf16.mxu0 %v2252
        %2599 = vmatmul.mubr.bf16.gmra.mrb[0].mxu0 %v2251
        %v2600 = vpop.f32.mrb[0].mxu0
        %v2601 = vadd.f32 0.0, %v2600
        %v2602 = vpop.f32.mrb[0].mxu0
        %v2603 = vadd.f32 0.0, %v2602
        %v2604 = vpop.f32.mrb[0].mxu0
        %v2605 = vadd.f32 0.0, %v2604
        %v2606 = vpop.f32.mrb[0].mxu0
        %v2607 = vadd.f32 0.0, %v2606
        %2608 = vmatprep.mubr.bf16.mxu0 %v2255
        %2609 = vmatmul.mubr.bf16.gmra.mrb[0].mxu0 %v2254
        %v2610 = vpop.f32.mrb[0].mxu0
        %v2611 = vadd.f32 0.0, %v2610
        %v2612 = vpop.f32.mrb[0].mxu0
        %v2613 = vadd.f32 0.0, %v2612
        %v2614 = vpop.f32.mrb[0].mxu0
        %v2615 = vadd.f32 0.0, %v2614
        %v2616 = vpop.f32.mrb[0].mxu0
        %v2617 = vadd.f32 0.0, %v2616
        %2618 = vdwg.mxu0
        %2619 = vmatprep.subr.bf16.mxu0 %v2483
        %2620 = vmatpush1.bf16.msra.mxu0 %v2482
        %2621 = vmatprep.subr.bf16.mxu0 %v2485
        %2622 = vmatpush1.bf16.msra.mxu0 %v2484
        %2623 = vmatprep.subr.bf16.mxu0 %v2487
        %2624 = vmatpush1.bf16.msra.mxu0 %v2486
        %2625 = vmatprep.subr.bf16.mxu0 %v2489
        %2626 = vmatpush1.bf16.msra.mxu0 %v2488
        %2627 = vmatprep.subr.bf16.mxu0 %v2491
        %2628 = vmatpush1.bf16.msra.mxu0 %v2490
        %2629 = vmatprep.subr.bf16.mxu0 %v2493
        %2630 = vmatpush1.bf16.msra.mxu0 %v2492
        %2631 = vmatprep.subr.bf16.mxu0 %v2495
        %2632 = vmatpush1.bf16.msra.mxu0 %v2494
        %2633 = vmatprep.subr.bf16.mxu0 %v2497
        %2634 = vmatpush1.bf16.msra.mxu0 %v2496
        %2635 = vmatprep.subr.bf16.mxu0 0
        %2636 = vmatpush1.bf16.msra.mxu0 0
        %2637 = vmatprep.subr.bf16.mxu0 0
        %2638 = vmatpush1.bf16.msra.mxu0 0
        %2639 = vmatprep.subr.bf16.mxu0 0
        %2640 = vmatpush1.bf16.msra.mxu0 0
        %2641 = vmatprep.subr.bf16.mxu0 0
        %2642 = vmatpush1.bf16.msra.mxu0 0
        %2643 = vmatprep.subr.bf16.mxu0 0
        %2644 = vmatpush1.bf16.msra.mxu0 0
        %2645 = vmatprep.subr.bf16.mxu0 0
        %2646 = vmatpush1.bf16.msra.mxu0 0
        %2647 = vmatprep.subr.bf16.mxu0 0
        %2648 = vmatpush1.bf16.msra.mxu0 0
        %2649 = vmatprep.subr.bf16.mxu0 0
        %2650 = vmatpush1.bf16.msra.mxu0 0
        %2651 = vmatprep.mubr.bf16.mxu0 0
        %2652 = vmatmul.mubr.bf16.gmra.mrb[0].mxu0 %v2247
        %v2653 = vpop.f32.mrb[0].mxu0
        %v2654 = vadd.f32 %v2581, %v2653
        %v2655 = vpop.f32.mrb[0].mxu0
        %v2656 = vadd.f32 %v2583, %v2655
        %v2657 = vpop.f32.mrb[0].mxu0
        %v2658 = vadd.f32 %v2585, %v2657
        %v2659 = vpop.f32.mrb[0].mxu0
        %v2660 = vadd.f32 %v2587, %v2659
        %2661 = vmatprep.mubr.bf16.mxu0 0
        %2662 = vmatmul.mubr.bf16.gmra.mrb[0].mxu0 %v2250
        %v2663 = vpop.f32.mrb[0].mxu0
        %v2664 = vadd.f32 %v2591, %v2663
        %v2665 = vpop.f32.mrb[0].mxu0
        %v2666 = vadd.f32 %v2593, %v2665
        %v2667 = vpop.f32.mrb[0].mxu0
        %v2668 = vadd.f32 %v2595, %v2667
        %v2669 = vpop.f32.mrb[0].mxu0
        %v2670 = vadd.f32 %v2597, %v2669
        %2671 = vmatprep.mubr.bf16.mxu0 0
        %2672 = vmatmul.mubr.bf16.gmra.mrb[0].mxu0 %v2253
        %v2673 = vpop.f32.mrb[0].mxu0
        %v2674 = vadd.f32 %v2601, %v2673
        %v2675 = vpop.f32.mrb[0].mxu0
        %v2676 = vadd.f32 %v2603, %v2675
        %v2677 = vpop.f32.mrb[0].mxu0
        %v2678 = vadd.f32 %v2605, %v2677
        %v2679 = vpop.f32.mrb[0].mxu0
        %v2680 = vadd.f32 %v2607, %v2679
        %2681 = vmatprep.mubr.bf16.mxu0 0
        %2682 = vmatmul.mubr.bf16.gmra.mrb[0].mxu0 %v2256
        %v2683 = vpop.f32.mrb[0].mxu0
        %v2684 = vadd.f32 %v2611, %v2683
        %v2685 = vpop.f32.mrb[0].mxu0
        %v2686 = vadd.f32 %v2613, %v2685
        %v2687 = vpop.f32.mrb[0].mxu0
        %v2688 = vadd.f32 %v2615, %v2687
        %v2689 = vpop.f32.mrb[0].mxu0
        %v2690 = vadd.f32 %v2617, %v2689
        %2691 = vdwg.mxu0
        %v2692 = vadd.f32 %v2205, %v2654
        %v2693 = vadd.f32 %v2206, %v2656
        %v2694 = vadd.f32 %v2207, %v2658
        %v2695 = vadd.f32 %v2208, %v2660
        %v2696 = vadd.f32 %v2209, %v2664
        %v2697 = vadd.f32 %v2210, %v2666
        %v2698 = vadd.f32 %v2211, %v2668
        %v2699 = vadd.f32 %v2212, %v2670
        %v2700 = vadd.f32 %v2213, %v2674
        %v2701 = vadd.f32 %v2214, %v2676
        %v2702 = vadd.f32 %v2215, %v2678
        %v2703 = vadd.f32 %v2216, %v2680
        %v2704 = vadd.f32 %v2217, %v2684
        %v2705 = vadd.f32 %v2218, %v2686
        %v2706 = vadd.f32 %v2219, %v2688
        %v2707 = vadd.f32 %v2220, %v2690
        %v2708 = vld [vmem:[%s422] sm:$0xfe]
        %v2709 = vld [vmem:[%s422 + $0x8] sm:$0xfe]
        %v2710 = vld [vmem:[%s422 + $0x10] sm:$0xfe]
        %v2711 = vld [vmem:[%s422 + $0x18] sm:$0x1]
        %v2712 = vld [vmem:[%s422 + $0x20] sm:$0x1]
        %v2713 = vld [vmem:[%s422 + $0x28] sm:$0x1]
        %v2714 = vld [vmem:[%s422 + $0x30] sm:$0xfe]
        %v2715 = vld [vmem:[%s422 + $0x38] sm:$0xfe]
        %v2716 = vld [vmem:[%s422 + $0x40] sm:$0xfe]
        %v2717 = vld [vmem:[%s422 + $0x48] sm:$0x1]
        %v2718 = vld [vmem:[%s422 + $0x50] sm:$0x1]
        %v2719 = vld [vmem:[%s422 + $0x58] sm:$0x1]
        %v2720 = vld [vmem:[%s422 + $0x60] sm:$0xfe]
        %v2721 = vld [vmem:[%s422 + $0x68] sm:$0xfe]
        %v2722 = vld [vmem:[%s422 + $0x70] sm:$0xfe]
        %v2723 = vld [vmem:[%s422 + $0x78] sm:$0x1]
        %v2724 = vld [vmem:[%s422 + $0x80] sm:$0x1]
        %v2725 = vld [vmem:[%s422 + $0x88] sm:$0x1]
        %v2726 = vld [vmem:[%s422 + $0x90] sm:$0xfe]
        %v2727 = vld [vmem:[%s422 + $0x98] sm:$0xfe]
        %v2728 = vld [vmem:[%s422 + $0xa0] sm:$0xfe]
        %v2729 = vld [vmem:[%s422 + $0xa8] sm:$0x1]
        %v2730 = vld [vmem:[%s422 + $0xb0] sm:$0x1]
        %v2731 = vld [vmem:[%s422 + $0xb8] sm:$0x1]
        %v2732 = vld [vmem:[%s422 + $0xc0] sm:$0xfe]
        %v2733 = vld [vmem:[%s422 + $0xc8] sm:$0xfe]
        %v2734 = vld [vmem:[%s422 + $0xd0] sm:$0xfe]
        %v2735 = vld [vmem:[%s422 + $0xd8] sm:$0x1]
        %v2736 = vld [vmem:[%s422 + $0xe0] sm:$0x1]
        %v2737 = vld [vmem:[%s422 + $0xe8] sm:$0x1]
        %v2738 = vld [vmem:[%s422 + $0xf0] sm:$0xfe]
        %v2739 = vld [vmem:[%s422 + $0xf8] sm:$0xfe]
        %v2740 = vld [vmem:[%s422 + $0x100] sm:$0xfe]
        %v2741 = vld [vmem:[%s422 + $0x108] sm:$0x1]
        %v2742 = vld [vmem:[%s422 + $0x110] sm:$0x1]
        %v2743 = vld [vmem:[%s422 + $0x118] sm:$0x1]
        %v2744 = vld [vmem:[%s422 + $0x120] sm:$0xfe]
        %v2745 = vld [vmem:[%s422 + $0x128] sm:$0xfe]
        %v2746 = vld [vmem:[%s422 + $0x130] sm:$0xfe]
        %v2747 = vld [vmem:[%s422 + $0x138] sm:$0x1]
        %v2748 = vld [vmem:[%s422 + $0x140] sm:$0x1]
        %v2749 = vld [vmem:[%s422 + $0x148] sm:$0x1]
        %v2750 = vld [vmem:[%s422 + $0x150] sm:$0xfe]
        %v2751 = vld [vmem:[%s422 + $0x158] sm:$0xfe]
        %v2752 = vld [vmem:[%s422 + $0x160] sm:$0xfe]
        %v2753 = vld [vmem:[%s422 + $0x168] sm:$0x1]
        %v2754 = vld [vmem:[%s422 + $0x170] sm:$0x1]
        %v2755 = vld [vmem:[%s422 + $0x178] sm:$0x1]
        %v2804 = vrot.slane %v2708, 1
        %v2805 = vrot.slane %v2711, 1
        %v2806 = vsel %vm635, %v2804, %v2805
        %v2807 = vrot.slane %v2709, 1
        %v2808 = vrot.slane %v2712, 1
        %v2809 = vsel %vm635, %v2807, %v2808
        %v2810 = vrot.slane %v2710, 1
        %v2811 = vrot.slane %v2713, 1
        %v2812 = vsel %vm635, %v2810, %v2811
        %v2813 = vrot.slane %v2714, 1
        %v2814 = vrot.slane %v2717, 1
        %v2815 = vsel %vm635, %v2813, %v2814
        %v2816 = vrot.slane %v2715, 1
        %v2817 = vrot.slane %v2718, 1
        %v2818 = vsel %vm635, %v2816, %v2817
        %v2819 = vrot.slane %v2716, 1
        %v2820 = vrot.slane %v2719, 1
        %v2821 = vsel %vm635, %v2819, %v2820
        %v2822 = vrot.slane %v2720, 1
        %v2823 = vrot.slane %v2723, 1
        %v2824 = vsel %vm635, %v2822, %v2823
        %v2825 = vrot.slane %v2721, 1
        %v2826 = vrot.slane %v2724, 1
        %v2827 = vsel %vm635, %v2825, %v2826
        %v2828 = vrot.slane %v2722, 1
        %v2829 = vrot.slane %v2725, 1
        %v2830 = vsel %vm635, %v2828, %v2829
        %v2831 = vrot.slane %v2726, 1
        %v2832 = vrot.slane %v2729, 1
        %v2833 = vsel %vm635, %v2831, %v2832
        %v2834 = vrot.slane %v2727, 1
        %v2835 = vrot.slane %v2730, 1
        %v2836 = vsel %vm635, %v2834, %v2835
        %v2837 = vrot.slane %v2728, 1
        %v2838 = vrot.slane %v2731, 1
        %v2839 = vsel %vm635, %v2837, %v2838
        %v2840 = vrot.slane %v2732, 1
        %v2841 = vrot.slane %v2735, 1
        %v2842 = vsel %vm635, %v2840, %v2841
        %v2843 = vrot.slane %v2733, 1
        %v2844 = vrot.slane %v2736, 1
        %v2845 = vsel %vm635, %v2843, %v2844
        %v2846 = vrot.slane %v2734, 1
        %v2847 = vrot.slane %v2737, 1
        %v2848 = vsel %vm635, %v2846, %v2847
        %v2849 = vrot.slane %v2738, 1
        %v2850 = vrot.slane %v2741, 1
        %v2851 = vsel %vm635, %v2849, %v2850
        %v2852 = vrot.slane %v2739, 1
        %v2853 = vrot.slane %v2742, 1
        %v2854 = vsel %vm635, %v2852, %v2853
        %v2855 = vrot.slane %v2740, 1
        %v2856 = vrot.slane %v2743, 1
        %v2857 = vsel %vm635, %v2855, %v2856
        %v2858 = vrot.slane %v2744, 1
        %v2859 = vrot.slane %v2747, 1
        %v2860 = vsel %vm635, %v2858, %v2859
        %v2861 = vrot.slane %v2745, 1
        %v2862 = vrot.slane %v2748, 1
        %v2863 = vsel %vm635, %v2861, %v2862
        %v2864 = vrot.slane %v2746, 1
        %v2865 = vrot.slane %v2749, 1
        %v2866 = vsel %vm635, %v2864, %v2865
        %v2867 = vrot.slane %v2750, 1
        %v2868 = vrot.slane %v2753, 1
        %v2869 = vsel %vm635, %v2867, %v2868
        %v2870 = vrot.slane %v2751, 1
        %v2871 = vrot.slane %v2754, 1
        %v2872 = vsel %vm635, %v2870, %v2871
        %v2873 = vrot.slane %v2752, 1
        %v2874 = vrot.slane %v2755, 1
        %v2875 = vsel %vm635, %v2873, %v2874
        %v2900 = vpack.c.bf16 %v2815, %v2806
        %v2901 = vpack.c.bf16 %v2818, %v2809
        %v2902 = vpack.c.bf16 %v2821, %v2812
        %v2903 = vpack.c.bf16 %v2833, %v2824
        %v2904 = vpack.c.bf16 %v2836, %v2827
        %v2905 = vpack.c.bf16 %v2839, %v2830
        %v2906 = vpack.c.bf16 %v2851, %v2842
        %v2907 = vpack.c.bf16 %v2854, %v2845
        %v2908 = vpack.c.bf16 %v2857, %v2848
        %v2909 = vpack.c.bf16 %v2869, %v2860
        %v2910 = vpack.c.bf16 %v2872, %v2863
        %v2911 = vpack.c.bf16 %v2875, %v2866
        %s2912 = scalar_lea.vmem [#allocation6], 1536
        %v2913 = vld [vmem:[%s2912] sm:$0xff]
        %v2914 = vld [vmem:[%s2912 + $0x8] sm:$0xff]
        %v2915 = vld [vmem:[%s2912 + $0x10] sm:$0xff]
        %v2916 = vld [vmem:[%s2912 + $0x18] sm:$0xff]
        %v2917 = vld [vmem:[%s2912 + $0x20] sm:$0xff]
        %v2918 = vld [vmem:[%s2912 + $0x28] sm:$0xff]
        %v2919 = vld [vmem:[%s2912 + $0x30] sm:$0xff]
        %v2920 = vld [vmem:[%s2912 + $0x38] sm:$0xff]
        %v2921 = vld [vmem:[%s2912 + $0x40] sm:$0xff]
        %v2922 = vld [vmem:[%s2912 + $0x48] sm:$0xff]
        %v2923 = vld [vmem:[%s2912 + $0x50] sm:$0xff]
        %v2924 = vld [vmem:[%s2912 + $0x58] sm:$0xff]
        %v2925 = vld [vmem:[%s2912 + $0x60] sm:$0xff]
        %v2926 = vld [vmem:[%s2912 + $0x68] sm:$0xff]
        %v2927 = vld [vmem:[%s2912 + $0x70] sm:$0xff]
        %v2928 = vld [vmem:[%s2912 + $0x78] sm:$0xff]
        %v2929 = vld [vmem:[%s2912 + $0x80] sm:$0xff]
        %v2930 = vld [vmem:[%s2912 + $0x88] sm:$0xff]
        %v2931 = vld [vmem:[%s2912 + $0x90] sm:$0xff]
        %v2932 = vld [vmem:[%s2912 + $0x98] sm:$0xff]
        %v2933 = vld [vmem:[%s2912 + $0xa0] sm:$0xff]
        %v2934 = vld [vmem:[%s2912 + $0xa8] sm:$0xff]
        %v2935 = vld [vmem:[%s2912 + $0xb0] sm:$0xff]
        %v2936 = vld [vmem:[%s2912 + $0xb8] sm:$0xff]
        %v2937 = vld [vmem:[%s2912 + $0xc0] sm:$0xff]
        %v2938 = vld [vmem:[%s2912 + $0xc8] sm:$0xff]
        %v2939 = vld [vmem:[%s2912 + $0xd0] sm:$0xff]
        %v2940 = vld [vmem:[%s2912 + $0xd8] sm:$0xff]
        %v2941 = vld [vmem:[%s2912 + $0xe0] sm:$0xff]
        %v2942 = vld [vmem:[%s2912 + $0xe8] sm:$0xff]
        %v2943 = vld [vmem:[%s2912 + $0xf0] sm:$0xff]
        %v2944 = vld [vmem:[%s2912 + $0xf8] sm:$0xff]
        %v2945 = vld [vmem:[%s2912 + $0x100] sm:$0xff]
        %v2946 = vld [vmem:[%s2912 + $0x108] sm:$0xff]
        %v2947 = vld [vmem:[%s2912 + $0x110] sm:$0xff]
        %v2948 = vld [vmem:[%s2912 + $0x118] sm:$0xff]
        %v2949 = vld [vmem:[%s2912 + $0x120] sm:$0xff]
        %v2950 = vld [vmem:[%s2912 + $0x128] sm:$0xff]
        %v2951 = vld [vmem:[%s2912 + $0x130] sm:$0xff]
        %v2952 = vld [vmem:[%s2912 + $0x138] sm:$0xff]
        %v2953 = vld [vmem:[%s2912 + $0x140] sm:$0xff]
        %v2954 = vld [vmem:[%s2912 + $0x148] sm:$0xff]
        %v2955 = vld [vmem:[%s2912 + $0x150] sm:$0xff]
        %v2956 = vld [vmem:[%s2912 + $0x158] sm:$0xff]
        %v2957 = vld [vmem:[%s2912 + $0x160] sm:$0xff]
        %v2958 = vld [vmem:[%s2912 + $0x168] sm:$0xff]
        %v2959 = vld [vmem:[%s2912 + $0x170] sm:$0xff]
        %v2960 = vld [vmem:[%s2912 + $0x178] sm:$0xff]
        %v3009 = vunpack.c.l.b16 %v2913
        %v3010 = vunpack.c.h.b16 %v2913
        %v3011 = vunpack.c.l.b16 %v2914
        %v3012 = vunpack.c.h.b16 %v2914
        %v3013 = vunpack.c.l.b16 %v2915
        %v3014 = vunpack.c.h.b16 %v2915
        %v3015 = vunpack.c.l.b16 %v2916
        %v3016 = vunpack.c.h.b16 %v2916
        %v3017 = vunpack.c.l.b16 %v2917
        %v3018 = vunpack.c.h.b16 %v2917
        %v3019 = vunpack.c.l.b16 %v2918
        %v3020 = vunpack.c.h.b16 %v2918
        %v3021 = vunpack.c.l.b16 %v2919
        %v3022 = vunpack.c.h.b16 %v2919
        %v3023 = vunpack.c.l.b16 %v2920
        %v3024 = vunpack.c.h.b16 %v2920
        %v3025 = vunpack.c.l.b16 %v2921
        %v3026 = vunpack.c.h.b16 %v2921
        %v3027 = vunpack.c.l.b16 %v2922
        %v3028 = vunpack.c.h.b16 %v2922
        %v3029 = vunpack.c.l.b16 %v2923
        %v3030 = vunpack.c.h.b16 %v2923
        %v3031 = vunpack.c.l.b16 %v2924
        %v3032 = vunpack.c.h.b16 %v2924
        %v3033 = vunpack.c.l.b16 %v2925
        %v3034 = vunpack.c.h.b16 %v2925
        %v3035 = vunpack.c.l.b16 %v2926
        %v3036 = vunpack.c.h.b16 %v2926
        %v3037 = vunpack.c.l.b16 %v2927
        %v3038 = vunpack.c.h.b16 %v2927
        %v3039 = vunpack.c.l.b16 %v2928
        %v3040 = vunpack.c.h.b16 %v2928
        %v3041 = vunpack.c.l.b16 %v2929
        %v3042 = vunpack.c.h.b16 %v2929
        %v3043 = vunpack.c.l.b16 %v2930
        %v3044 = vunpack.c.h.b16 %v2930
        %v3045 = vunpack.c.l.b16 %v2931
        %v3046 = vunpack.c.h.b16 %v2931
        %v3047 = vunpack.c.l.b16 %v2932
        %v3048 = vunpack.c.h.b16 %v2932
        %v3049 = vunpack.c.l.b16 %v2933
        %v3050 = vunpack.c.h.b16 %v2933
        %v3051 = vunpack.c.l.b16 %v2934
        %v3052 = vunpack.c.h.b16 %v2934
        %v3053 = vunpack.c.l.b16 %v2935
        %v3054 = vunpack.c.h.b16 %v2935
        %v3055 = vunpack.c.l.b16 %v2936
        %v3056 = vunpack.c.h.b16 %v2936
        %v3057 = vunpack.c.l.b16 %v2937
        %v3058 = vunpack.c.h.b16 %v2937
        %v3059 = vunpack.c.l.b16 %v2938
        %v3060 = vunpack.c.h.b16 %v2938
        %v3061 = vunpack.c.l.b16 %v2939
        %v3062 = vunpack.c.h.b16 %v2939
        %v3063 = vunpack.c.l.b16 %v2940
        %v3064 = vunpack.c.h.b16 %v2940
        %v3065 = vunpack.c.l.b16 %v2941
        %v3066 = vunpack.c.h.b16 %v2941
        %v3067 = vunpack.c.l.b16 %v2942
        %v3068 = vunpack.c.h.b16 %v2942
        %v3069 = vunpack.c.l.b16 %v2943
        %v3070 = vunpack.c.h.b16 %v2943
        %v3071 = vunpack.c.l.b16 %v2944
        %v3072 = vunpack.c.h.b16 %v2944
        %v3073 = vunpack.c.l.b16 %v2945
        %v3074 = vunpack.c.h.b16 %v2945
        %v3075 = vunpack.c.l.b16 %v2946
        %v3076 = vunpack.c.h.b16 %v2946
        %v3077 = vunpack.c.l.b16 %v2947
        %v3078 = vunpack.c.h.b16 %v2947
        %v3079 = vunpack.c.l.b16 %v2948
        %v3080 = vunpack.c.h.b16 %v2948
        %v3081 = vunpack.c.l.b16 %v2949
        %v3082 = vunpack.c.h.b16 %v2949
        %v3083 = vunpack.c.l.b16 %v2950
        %v3084 = vunpack.c.h.b16 %v2950
        %v3085 = vunpack.c.l.b16 %v2951
        %v3086 = vunpack.c.h.b16 %v2951
        %v3087 = vunpack.c.l.b16 %v2952
        %v3088 = vunpack.c.h.b16 %v2952
        %v3089 = vunpack.c.l.b16 %v2953
        %v3090 = vunpack.c.h.b16 %v2953
        %v3091 = vunpack.c.l.b16 %v2954
        %v3092 = vunpack.c.h.b16 %v2954
        %v3093 = vunpack.c.l.b16 %v2955
        %v3094 = vunpack.c.h.b16 %v2955
        %v3095 = vunpack.c.l.b16 %v2956
        %v3096 = vunpack.c.h.b16 %v2956
        %v3097 = vunpack.c.l.b16 %v2957
        %v3098 = vunpack.c.h.b16 %v2957
        %v3099 = vunpack.c.l.b16 %v2958
        %v3100 = vunpack.c.h.b16 %v2958
        %v3101 = vunpack.c.l.b16 %v2959
        %v3102 = vunpack.c.h.b16 %v2959
        %v3103 = vunpack.c.l.b16 %v2960
        %v3104 = vunpack.c.h.b16 %v2960
        %v3105 = vpack.c.b16 %v3011, %v3009
        %v3106 = vpack.c.b16 %v3012, %v3010
        %v3107 = vpack.c.b16 %v3015, %v3013
        %v3108 = vpack.c.b16 %v3016, %v3014
        %v3109 = vpack.c.b16 %v3019, %v3017
        %v3110 = vpack.c.b16 %v3020, %v3018
        %v3111 = vpack.c.b16 %v3023, %v3021
        %v3112 = vpack.c.b16 %v3024, %v3022
        %v3113 = vpack.c.b16 %v3027, %v3025
        %v3114 = vpack.c.b16 %v3028, %v3026
        %v3115 = vpack.c.b16 %v3031, %v3029
        %v3116 = vpack.c.b16 %v3032, %v3030
        %v3117 = vpack.c.b16 %v3035, %v3033
        %v3118 = vpack.c.b16 %v3036, %v3034
        %v3119 = vpack.c.b16 %v3039, %v3037
        %v3120 = vpack.c.b16 %v3040, %v3038
        %v3121 = vpack.c.b16 %v3043, %v3041
        %v3122 = vpack.c.b16 %v3044, %v3042
        %v3123 = vpack.c.b16 %v3047, %v3045
        %v3124 = vpack.c.b16 %v3048, %v3046
        %v3125 = vpack.c.b16 %v3051, %v3049
        %v3126 = vpack.c.b16 %v3052, %v3050
        %v3127 = vpack.c.b16 %v3055, %v3053
        %v3128 = vpack.c.b16 %v3056, %v3054
        %v3129 = vpack.c.b16 %v3059, %v3057
        %v3130 = vpack.c.b16 %v3060, %v3058
        %v3131 = vpack.c.b16 %v3063, %v3061
        %v3132 = vpack.c.b16 %v3064, %v3062
        %v3133 = vpack.c.b16 %v3067, %v3065
        %v3134 = vpack.c.b16 %v3068, %v3066
        %v3135 = vpack.c.b16 %v3071, %v3069
        %v3136 = vpack.c.b16 %v3072, %v3070
        %v3137 = vpack.c.b16 %v3075, %v3073
        %v3138 = vpack.c.b16 %v3076, %v3074
        %v3139 = vpack.c.b16 %v3079, %v3077
        %v3140 = vpack.c.b16 %v3080, %v3078
        %v3141 = vpack.c.b16 %v3083, %v3081
        %v3142 = vpack.c.b16 %v3084, %v3082
        %v3143 = vpack.c.b16 %v3087, %v3085
        %v3144 = vpack.c.b16 %v3088, %v3086
        %v3145 = vpack.c.b16 %v3091, %v3089
        %v3146 = vpack.c.b16 %v3092, %v3090
        %v3147 = vpack.c.b16 %v3095, %v3093
        %v3148 = vpack.c.b16 %v3096, %v3094
        %v3149 = vpack.c.b16 %v3099, %v3097
        %v3150 = vpack.c.b16 %v3100, %v3098
        %v3151 = vpack.c.b16 %v3103, %v3101
        %v3152 = vpack.c.b16 %v3104, %v3102
        %3201 = vmatprep.subr.bf16.mxu0 %v3106
        %3202 = vmatpush1.bf16.msra.mxu0 %v3105
        %3203 = vmatprep.subr.bf16.mxu0 %v3108
        %3204 = vmatpush1.bf16.msra.mxu0 %v3107
        %3205 = vmatprep.subr.bf16.mxu0 %v3110
        %3206 = vmatpush1.bf16.msra.mxu0 %v3109
        %3207 = vmatprep.subr.bf16.mxu0 %v3112
        %3208 = vmatpush1.bf16.msra.mxu0 %v3111
        %3209 = vmatprep.subr.bf16.mxu0 %v3114
        %3210 = vmatpush1.bf16.msra.mxu0 %v3113
        %3211 = vmatprep.subr.bf16.mxu0 %v3116
        %3212 = vmatpush1.bf16.msra.mxu0 %v3115
        %3213 = vmatprep.subr.bf16.mxu0 %v3118
        %3214 = vmatpush1.bf16.msra.mxu0 %v3117
        %3215 = vmatprep.subr.bf16.mxu0 %v3120
        %3216 = vmatpush1.bf16.msra.mxu0 %v3119
        %3217 = vmatprep.subr.bf16.mxu0 %v3122
        %3218 = vmatpush1.bf16.msra.mxu0 %v3121
        %3219 = vmatprep.subr.bf16.mxu0 %v3124
        %3220 = vmatpush1.bf16.msra.mxu0 %v3123
        %3221 = vmatprep.subr.bf16.mxu0 %v3126
        %3222 = vmatpush1.bf16.msra.mxu0 %v3125
        %3223 = vmatprep.subr.bf16.mxu0 %v3128
        %3224 = vmatpush1.bf16.msra.mxu0 %v3127
        %3225 = vmatprep.subr.bf16.mxu0 %v3130
        %3226 = vmatpush1.bf16.msra.mxu0 %v3129
        %3227 = vmatprep.subr.bf16.mxu0 %v3132
        %3228 = vmatpush1.bf16.msra.mxu0 %v3131
        %3229 = vmatprep.subr.bf16.mxu0 %v3134
        %3230 = vmatpush1.bf16.msra.mxu0 %v3133
        %3231 = vmatprep.subr.bf16.mxu0 %v3136
        %3232 = vmatpush1.bf16.msra.mxu0 %v3135
        %3233 = vmatprep.mubr.bf16.mxu0 %v2901
        %3234 = vmatmul.mubr.bf16.gmra.mrb[0].mxu0 %v2900
        %v3235 = vpop.f32.mrb[0].mxu0
        %v3236 = vadd.f32 0.0, %v3235
        %v3237 = vpop.f32.mrb[0].mxu0
        %v3238 = vadd.f32 0.0, %v3237
        %v3239 = vpop.f32.mrb[0].mxu0
        %v3240 = vadd.f32 0.0, %v3239
        %v3241 = vpop.f32.mrb[0].mxu0
        %v3242 = vadd.f32 0.0, %v3241
        %3243 = vmatprep.mubr.bf16.mxu0 %v2904
        %3244 = vmatmul.mubr.bf16.gmra.mrb[0].mxu0 %v2903
        %v3245 = vpop.f32.mrb[0].mxu0
        %v3246 = vadd.f32 0.0, %v3245
        %v3247 = vpop.f32.mrb[0].mxu0
        %v3248 = vadd.f32 0.0, %v3247
        %v3249 = vpop.f32.mrb[0].mxu0
        %v3250 = vadd.f32 0.0, %v3249
        %v3251 = vpop.f32.mrb[0].mxu0
        %v3252 = vadd.f32 0.0, %v3251
        %3253 = vmatprep.mubr.bf16.mxu0 %v2907
        %3254 = vmatmul.mubr.bf16.gmra.mrb[0].mxu0 %v2906
        %v3255 = vpop.f32.mrb[0].mxu0
        %v3256 = vadd.f32 0.0, %v3255
        %v3257 = vpop.f32.mrb[0].mxu0
        %v3258 = vadd.f32 0.0, %v3257
        %v3259 = vpop.f32.mrb[0].mxu0
        %v3260 = vadd.f32 0.0, %v3259
        %v3261 = vpop.f32.mrb[0].mxu0
        %v3262 = vadd.f32 0.0, %v3261
        %3263 = vmatprep.mubr.bf16.mxu0 %v2910
        %3264 = vmatmul.mubr.bf16.gmra.mrb[0].mxu0 %v2909
        %v3265 = vpop.f32.mrb[0].mxu0
        %v3266 = vadd.f32 0.0, %v3265
        %v3267 = vpop.f32.mrb[0].mxu0
        %v3268 = vadd.f32 0.0, %v3267
        %v3269 = vpop.f32.mrb[0].mxu0
        %v3270 = vadd.f32 0.0, %v3269
        %v3271 = vpop.f32.mrb[0].mxu0
        %v3272 = vadd.f32 0.0, %v3271
        %3273 = vdwg.mxu0
        %3274 = vmatprep.subr.bf16.mxu0 %v3138
        %3275 = vmatpush1.bf16.msra.mxu0 %v3137
        %3276 = vmatprep.subr.bf16.mxu0 %v3140
        %3277 = vmatpush1.bf16.msra.mxu0 %v3139
        %3278 = vmatprep.subr.bf16.mxu0 %v3142
        %3279 = vmatpush1.bf16.msra.mxu0 %v3141
        %3280 = vmatprep.subr.bf16.mxu0 %v3144
        %3281 = vmatpush1.bf16.msra.mxu0 %v3143
        %3282 = vmatprep.subr.bf16.mxu0 %v3146
        %3283 = vmatpush1.bf16.msra.mxu0 %v3145
        %3284 = vmatprep.subr.bf16.mxu0 %v3148
        %3285 = vmatpush1.bf16.msra.mxu0 %v3147
        %3286 = vmatprep.subr.bf16.mxu0 %v3150
        %3287 = vmatpush1.bf16.msra.mxu0 %v3149
        %3288 = vmatprep.subr.bf16.mxu0 %v3152
        %3289 = vmatpush1.bf16.msra.mxu0 %v3151
        %3290 = vmatprep.subr.bf16.mxu0 0
        %3291 = vmatpush1.bf16.msra.mxu0 0
        %3292 = vmatprep.subr.bf16.mxu0 0
        %3293 = vmatpush1.bf16.msra.mxu0 0
        %3294 = vmatprep.subr.bf16.mxu0 0
        %3295 = vmatpush1.bf16.msra.mxu0 0
        %3296 = vmatprep.subr.bf16.mxu0 0
        %3297 = vmatpush1.bf16.msra.mxu0 0
        %3298 = vmatprep.subr.bf16.mxu0 0
        %3299 = vmatpush1.bf16.msra.mxu0 0
        %3300 = vmatprep.subr.bf16.mxu0 0
        %3301 = vmatpush1.bf16.msra.mxu0 0
        %3302 = vmatprep.subr.bf16.mxu0 0
        %3303 = vmatpush1.bf16.msra.mxu0 0
        %3304 = vmatprep.subr.bf16.mxu0 0
        %3305 = vmatpush1.bf16.msra.mxu0 0
        %3306 = vmatprep.mubr.bf16.mxu0 0
        %3307 = vmatmul.mubr.bf16.gmra.mrb[0].mxu0 %v2902
        %v3308 = vpop.f32.mrb[0].mxu0
        %v3309 = vadd.f32 %v3236, %v3308
        %v3310 = vpop.f32.mrb[0].mxu0
        %v3311 = vadd.f32 %v3238, %v3310
        %v3312 = vpop.f32.mrb[0].mxu0
        %v3313 = vadd.f32 %v3240, %v3312
        %v3314 = vpop.f32.mrb[0].mxu0
        %v3315 = vadd.f32 %v3242, %v3314
        %3316 = vmatprep.mubr.bf16.mxu0 0
        %3317 = vmatmul.mubr.bf16.gmra.mrb[0].mxu0 %v2905
        %v3318 = vpop.f32.mrb[0].mxu0
        %v3319 = vadd.f32 %v3246, %v3318
        %v3320 = vpop.f32.mrb[0].mxu0
        %v3321 = vadd.f32 %v3248, %v3320
        %v3322 = vpop.f32.mrb[0].mxu0
        %v3323 = vadd.f32 %v3250, %v3322
        %v3324 = vpop.f32.mrb[0].mxu0
        %v3325 = vadd.f32 %v3252, %v3324
        %3326 = vmatprep.mubr.bf16.mxu0 0
        %3327 = vmatmul.mubr.bf16.gmra.mrb[0].mxu0 %v2908
        %v3328 = vpop.f32.mrb[0].mxu0
        %v3329 = vadd.f32 %v3256, %v3328
        %v3330 = vpop.f32.mrb[0].mxu0
        %v3331 = vadd.f32 %v3258, %v3330
        %v3332 = vpop.f32.mrb[0].mxu0
        %v3333 = vadd.f32 %v3260, %v3332
        %v3334 = vpop.f32.mrb[0].mxu0
        %v3335 = vadd.f32 %v3262, %v3334
        %3336 = vmatprep.mubr.bf16.mxu0 0
        %3337 = vmatmul.mubr.bf16.gmra.mrb[0].mxu0 %v2911
        %v3338 = vpop.f32.mrb[0].mxu0
        %v3339 = vadd.f32 %v3266, %v3338
        %v3340 = vpop.f32.mrb[0].mxu0
        %v3341 = vadd.f32 %v3268, %v3340
        %v3342 = vpop.f32.mrb[0].mxu0
        %v3343 = vadd.f32 %v3270, %v3342
        %v3344 = vpop.f32.mrb[0].mxu0
        %v3345 = vadd.f32 %v3272, %v3344
        %3346 = vdwg.mxu0
        %v3347 = vadd.f32 %v2692, %v3309
        %v3348 = vadd.f32 %v2693, %v3311
        %v3349 = vadd.f32 %v2694, %v3313
        %v3350 = vadd.f32 %v2695, %v3315
        %v3351 = vadd.f32 %v2696, %v3319
        %v3352 = vadd.f32 %v2697, %v3321
        %v3353 = vadd.f32 %v2698, %v3323
        %v3354 = vadd.f32 %v2699, %v3325
        %v3355 = vadd.f32 %v2700, %v3329
        %v3356 = vadd.f32 %v2701, %v3331
        %v3357 = vadd.f32 %v2702, %v3333
        %v3358 = vadd.f32 %v2703, %v3335
        %v3359 = vadd.f32 %v2704, %v3339
        %v3360 = vadd.f32 %v2705, %v3341
        %v3361 = vadd.f32 %v2706, %v3343
        %v3362 = vadd.f32 %v2707, %v3345
        %v3363 = vld [vmem:[%s422] sm:$0xfc]
        %v3364 = vld [vmem:[%s422 + $0x8] sm:$0xfc]
        %v3365 = vld [vmem:[%s422 + $0x10] sm:$0xfc]
        %v3366 = vld [vmem:[%s422 + $0x18] sm:$0x3]
        %v3367 = vld [vmem:[%s422 + $0x20] sm:$0x3]
        %v3368 = vld [vmem:[%s422 + $0x28] sm:$0x3]
        %v3369 = vld [vmem:[%s422 + $0x30] sm:$0xfc]
        %v3370 = vld [vmem:[%s422 + $0x38] sm:$0xfc]
        %v3371 = vld [vmem:[%s422 + $0x40] sm:$0xfc]
        %v3372 = vld [vmem:[%s422 + $0x48] sm:$0x3]
        %v3373 = vld [vmem:[%s422 + $0x50] sm:$0x3]
        %v3374 = vld [vmem:[%s422 + $0x58] sm:$0x3]
        %v3375 = vld [vmem:[%s422 + $0x60] sm:$0xfc]
        %v3376 = vld [vmem:[%s422 + $0x68] sm:$0xfc]
        %v3377 = vld [vmem:[%s422 + $0x70] sm:$0xfc]
        %v3378 = vld [vmem:[%s422 + $0x78] sm:$0x3]
        %v3379 = vld [vmem:[%s422 + $0x80] sm:$0x3]
        %v3380 = vld [vmem:[%s422 + $0x88] sm:$0x3]
        %v3381 = vld [vmem:[%s422 + $0x90] sm:$0xfc]
        %v3382 = vld [vmem:[%s422 + $0x98] sm:$0xfc]
        %v3383 = vld [vmem:[%s422 + $0xa0] sm:$0xfc]
        %v3384 = vld [vmem:[%s422 + $0xa8] sm:$0x3]
        %v3385 = vld [vmem:[%s422 + $0xb0] sm:$0x3]
        %v3386 = vld [vmem:[%s422 + $0xb8] sm:$0x3]
        %v3387 = vld [vmem:[%s422 + $0xc0] sm:$0xfc]
        %v3388 = vld [vmem:[%s422 + $0xc8] sm:$0xfc]
        %v3389 = vld [vmem:[%s422 + $0xd0] sm:$0xfc]
        %v3390 = vld [vmem:[%s422 + $0xd8] sm:$0x3]
        %v3391 = vld [vmem:[%s422 + $0xe0] sm:$0x3]
        %v3392 = vld [vmem:[%s422 + $0xe8] sm:$0x3]
        %v3393 = vld [vmem:[%s422 + $0xf0] sm:$0xfc]
        %v3394 = vld [vmem:[%s422 + $0xf8] sm:$0xfc]
        %v3395 = vld [vmem:[%s422 + $0x100] sm:$0xfc]
        %v3396 = vld [vmem:[%s422 + $0x108] sm:$0x3]
        %v3397 = vld [vmem:[%s422 + $0x110] sm:$0x3]
        %v3398 = vld [vmem:[%s422 + $0x118] sm:$0x3]
        %v3399 = vld [vmem:[%s422 + $0x120] sm:$0xfc]
        %v3400 = vld [vmem:[%s422 + $0x128] sm:$0xfc]
        %v3401 = vld [vmem:[%s422 + $0x130] sm:$0xfc]
        %v3402 = vld [vmem:[%s422 + $0x138] sm:$0x3]
        %v3403 = vld [vmem:[%s422 + $0x140] sm:$0x3]
        %v3404 = vld [vmem:[%s422 + $0x148] sm:$0x3]
        %v3405 = vld [vmem:[%s422 + $0x150] sm:$0xfc]
        %v3406 = vld [vmem:[%s422 + $0x158] sm:$0xfc]
        %v3407 = vld [vmem:[%s422 + $0x160] sm:$0xfc]
        %v3408 = vld [vmem:[%s422 + $0x168] sm:$0x3]
        %v3409 = vld [vmem:[%s422 + $0x170] sm:$0x3]
        %v3410 = vld [vmem:[%s422 + $0x178] sm:$0x3]
        %v3459 = vrot.slane %v3363, 2
        %v3460 = vrot.slane %v3366, 2
        %v3461 = vsel %vm1661, %v3459, %v3460
        %v3462 = vrot.slane %v3364, 2
        %v3463 = vrot.slane %v3367, 2
        %v3464 = vsel %vm1661, %v3462, %v3463
        %v3465 = vrot.slane %v3365, 2
        %v3466 = vrot.slane %v3368, 2
        %v3467 = vsel %vm1661, %v3465, %v3466
        %v3468 = vrot.slane %v3369, 2
        %v3469 = vrot.slane %v3372, 2
        %v3470 = vsel %vm1661, %v3468, %v3469
        %v3471 = vrot.slane %v3370, 2
        %v3472 = vrot.slane %v3373, 2
        %v3473 = vsel %vm1661, %v3471, %v3472
        %v3474 = vrot.slane %v3371, 2
        %v3475 = vrot.slane %v3374, 2
        %v3476 = vsel %vm1661, %v3474, %v3475
        %v3477 = vrot.slane %v3375, 2
        %v3478 = vrot.slane %v3378, 2
        %v3479 = vsel %vm1661, %v3477, %v3478
        %v3480 = vrot.slane %v3376, 2
        %v3481 = vrot.slane %v3379, 2
        %v3482 = vsel %vm1661, %v3480, %v3481
        %v3483 = vrot.slane %v3377, 2
        %v3484 = vrot.slane %v3380, 2
        %v3485 = vsel %vm1661, %v3483, %v3484
        %v3486 = vrot.slane %v3381, 2
        %v3487 = vrot.slane %v3384, 2
        %v3488 = vsel %vm1661, %v3486, %v3487
        %v3489 = vrot.slane %v3382, 2
        %v3490 = vrot.slane %v3385, 2
        %v3491 = vsel %vm1661, %v3489, %v3490
        %v3492 = vrot.slane %v3383, 2
        %v3493 = vrot.slane %v3386, 2
        %v3494 = vsel %vm1661, %v3492, %v3493
        %v3495 = vrot.slane %v3387, 2
        %v3496 = vrot.slane %v3390, 2
        %v3497 = vsel %vm1661, %v3495, %v3496
        %v3498 = vrot.slane %v3388, 2
        %v3499 = vrot.slane %v3391, 2
        %v3500 = vsel %vm1661, %v3498, %v3499
        %v3501 = vrot.slane %v3389, 2
        %v3502 = vrot.slane %v3392, 2
        %v3503 = vsel %vm1661, %v3501, %v3502
        %v3504 = vrot.slane %v3393, 2
        %v3505 = vrot.slane %v3396, 2
        %v3506 = vsel %vm1661, %v3504, %v3505
        %v3507 = vrot.slane %v3394, 2
        %v3508 = vrot.slane %v3397, 2
        %v3509 = vsel %vm1661, %v3507, %v3508
        %v3510 = vrot.slane %v3395, 2
        %v3511 = vrot.slane %v3398, 2
        %v3512 = vsel %vm1661, %v3510, %v3511
        %v3513 = vrot.slane %v3399, 2
        %v3514 = vrot.slane %v3402, 2
        %v3515 = vsel %vm1661, %v3513, %v3514
        %v3516 = vrot.slane %v3400, 2
        %v3517 = vrot.slane %v3403, 2
        %v3518 = vsel %vm1661, %v3516, %v3517
        %v3519 = vrot.slane %v3401, 2
        %v3520 = vrot.slane %v3404, 2
        %v3521 = vsel %vm1661, %v3519, %v3520
        %v3522 = vrot.slane %v3405, 2
        %v3523 = vrot.slane %v3408, 2
        %v3524 = vsel %vm1661, %v3522, %v3523
        %v3525 = vrot.slane %v3406, 2
        %v3526 = vrot.slane %v3409, 2
        %v3527 = vsel %vm1661, %v3525, %v3526
        %v3528 = vrot.slane %v3407, 2
        %v3529 = vrot.slane %v3410, 2
        %v3530 = vsel %vm1661, %v3528, %v3529
        %v3555 = vpack.c.bf16 %v3470, %v3461
        %v3556 = vpack.c.bf16 %v3473, %v3464
        %v3557 = vpack.c.bf16 %v3476, %v3467
        %v3558 = vpack.c.bf16 %v3488, %v3479
        %v3559 = vpack.c.bf16 %v3491, %v3482
        %v3560 = vpack.c.bf16 %v3494, %v3485
        %v3561 = vpack.c.bf16 %v3506, %v3497
        %v3562 = vpack.c.bf16 %v3509, %v3500
        %v3563 = vpack.c.bf16 %v3512, %v3503
        %v3564 = vpack.c.bf16 %v3524, %v3515
        %v3565 = vpack.c.bf16 %v3527, %v3518
        %v3566 = vpack.c.bf16 %v3530, %v3521
        %s3567 = scalar_lea.vmem [#allocation6], 1920
        %v3568 = vld [vmem:[%s3567] sm:$0xff]
        %v3569 = vld [vmem:[%s3567 + $0x8] sm:$0xff]
        %v3570 = vld [vmem:[%s3567 + $0x10] sm:$0xff]
        %v3571 = vld [vmem:[%s3567 + $0x18] sm:$0xff]
        %v3572 = vld [vmem:[%s3567 + $0x20] sm:$0xff]
        %v3573 = vld [vmem:[%s3567 + $0x28] sm:$0xff]
        %v3574 = vld [vmem:[%s3567 + $0x30] sm:$0xff]
        %v3575 = vld [vmem:[%s3567 + $0x38] sm:$0xff]
        %v3576 = vld [vmem:[%s3567 + $0x40] sm:$0xff]
        %v3577 = vld [vmem:[%s3567 + $0x48] sm:$0xff]
        %v3578 = vld [vmem:[%s3567 + $0x50] sm:$0xff]
        %v3579 = vld [vmem:[%s3567 + $0x58] sm:$0xff]
        %v3580 = vld [vmem:[%s3567 + $0x60] sm:$0xff]
        %v3581 = vld [vmem:[%s3567 + $0x68] sm:$0xff]
        %v3582 = vld [vmem:[%s3567 + $0x70] sm:$0xff]
        %v3583 = vld [vmem:[%s3567 + $0x78] sm:$0xff]
        %v3584 = vld [vmem:[%s3567 + $0x80] sm:$0xff]
        %v3585 = vld [vmem:[%s3567 + $0x88] sm:$0xff]
        %v3586 = vld [vmem:[%s3567 + $0x90] sm:$0xff]
        %v3587 = vld [vmem:[%s3567 + $0x98] sm:$0xff]
        %v3588 = vld [vmem:[%s3567 + $0xa0] sm:$0xff]
        %v3589 = vld [vmem:[%s3567 + $0xa8] sm:$0xff]
        %v3590 = vld [vmem:[%s3567 + $0xb0] sm:$0xff]
        %v3591 = vld [vmem:[%s3567 + $0xb8] sm:$0xff]
        %v3592 = vld [vmem:[%s3567 + $0xc0] sm:$0xff]
        %v3593 = vld [vmem:[%s3567 + $0xc8] sm:$0xff]
        %v3594 = vld [vmem:[%s3567 + $0xd0] sm:$0xff]
        %v3595 = vld [vmem:[%s3567 + $0xd8] sm:$0xff]
        %v3596 = vld [vmem:[%s3567 + $0xe0] sm:$0xff]
        %v3597 = vld [vmem:[%s3567 + $0xe8] sm:$0xff]
        %v3598 = vld [vmem:[%s3567 + $0xf0] sm:$0xff]
        %v3599 = vld [vmem:[%s3567 + $0xf8] sm:$0xff]
        %v3600 = vld [vmem:[%s3567 + $0x100] sm:$0xff]
        %v3601 = vld [vmem:[%s3567 + $0x108] sm:$0xff]
        %v3602 = vld [vmem:[%s3567 + $0x110] sm:$0xff]
        %v3603 = vld [vmem:[%s3567 + $0x118] sm:$0xff]
        %v3604 = vld [vmem:[%s3567 + $0x120] sm:$0xff]
        %v3605 = vld [vmem:[%s3567 + $0x128] sm:$0xff]
        %v3606 = vld [vmem:[%s3567 + $0x130] sm:$0xff]
        %v3607 = vld [vmem:[%s3567 + $0x138] sm:$0xff]
        %v3608 = vld [vmem:[%s3567 + $0x140] sm:$0xff]
        %v3609 = vld [vmem:[%s3567 + $0x148] sm:$0xff]
        %v3610 = vld [vmem:[%s3567 + $0x150] sm:$0xff]
        %v3611 = vld [vmem:[%s3567 + $0x158] sm:$0xff]
        %v3612 = vld [vmem:[%s3567 + $0x160] sm:$0xff]
        %v3613 = vld [vmem:[%s3567 + $0x168] sm:$0xff]
        %v3614 = vld [vmem:[%s3567 + $0x170] sm:$0xff]
        %v3615 = vld [vmem:[%s3567 + $0x178] sm:$0xff]
        %v3664 = vunpack.c.l.b16 %v3568
        %v3665 = vunpack.c.h.b16 %v3568
        %v3666 = vunpack.c.l.b16 %v3569
        %v3667 = vunpack.c.h.b16 %v3569
        %v3668 = vunpack.c.l.b16 %v3570
        %v3669 = vunpack.c.h.b16 %v3570
        %v3670 = vunpack.c.l.b16 %v3571
        %v3671 = vunpack.c.h.b16 %v3571
        %v3672 = vunpack.c.l.b16 %v3572
        %v3673 = vunpack.c.h.b16 %v3572
        %v3674 = vunpack.c.l.b16 %v3573
        %v3675 = vunpack.c.h.b16 %v3573
        %v3676 = vunpack.c.l.b16 %v3574
        %v3677 = vunpack.c.h.b16 %v3574
        %v3678 = vunpack.c.l.b16 %v3575
        %v3679 = vunpack.c.h.b16 %v3575
        %v3680 = vunpack.c.l.b16 %v3576
        %v3681 = vunpack.c.h.b16 %v3576
        %v3682 = vunpack.c.l.b16 %v3577
        %v3683 = vunpack.c.h.b16 %v3577
        %v3684 = vunpack.c.l.b16 %v3578
        %v3685 = vunpack.c.h.b16 %v3578
        %v3686 = vunpack.c.l.b16 %v3579
        %v3687 = vunpack.c.h.b16 %v3579
        %v3688 = vunpack.c.l.b16 %v3580
        %v3689 = vunpack.c.h.b16 %v3580
        %v3690 = vunpack.c.l.b16 %v3581
        %v3691 = vunpack.c.h.b16 %v3581
        %v3692 = vunpack.c.l.b16 %v3582
        %v3693 = vunpack.c.h.b16 %v3582
        %v3694 = vunpack.c.l.b16 %v3583
        %v3695 = vunpack.c.h.b16 %v3583
        %v3696 = vunpack.c.l.b16 %v3584
        %v3697 = vunpack.c.h.b16 %v3584
        %v3698 = vunpack.c.l.b16 %v3585
        %v3699 = vunpack.c.h.b16 %v3585
        %v3700 = vunpack.c.l.b16 %v3586
        %v3701 = vunpack.c.h.b16 %v3586
        %v3702 = vunpack.c.l.b16 %v3587
        %v3703 = vunpack.c.h.b16 %v3587
        %v3704 = vunpack.c.l.b16 %v3588
        %v3705 = vunpack.c.h.b16 %v3588
        %v3706 = vunpack.c.l.b16 %v3589
        %v3707 = vunpack.c.h.b16 %v3589
        %v3708 = vunpack.c.l.b16 %v3590
        %v3709 = vunpack.c.h.b16 %v3590
        %v3710 = vunpack.c.l.b16 %v3591
        %v3711 = vunpack.c.h.b16 %v3591
        %v3712 = vunpack.c.l.b16 %v3592
        %v3713 = vunpack.c.h.b16 %v3592
        %v3714 = vunpack.c.l.b16 %v3593
        %v3715 = vunpack.c.h.b16 %v3593
        %v3716 = vunpack.c.l.b16 %v3594
        %v3717 = vunpack.c.h.b16 %v3594
        %v3718 = vunpack.c.l.b16 %v3595
        %v3719 = vunpack.c.h.b16 %v3595
        %v3720 = vunpack.c.l.b16 %v3596
        %v3721 = vunpack.c.h.b16 %v3596
        %v3722 = vunpack.c.l.b16 %v3597
        %v3723 = vunpack.c.h.b16 %v3597
        %v3724 = vunpack.c.l.b16 %v3598
        %v3725 = vunpack.c.h.b16 %v3598
        %v3726 = vunpack.c.l.b16 %v3599
        %v3727 = vunpack.c.h.b16 %v3599
        %v3728 = vunpack.c.l.b16 %v3600
        %v3729 = vunpack.c.h.b16 %v3600
        %v3730 = vunpack.c.l.b16 %v3601
        %v3731 = vunpack.c.h.b16 %v3601
        %v3732 = vunpack.c.l.b16 %v3602
        %v3733 = vunpack.c.h.b16 %v3602
        %v3734 = vunpack.c.l.b16 %v3603
        %v3735 = vunpack.c.h.b16 %v3603
        %v3736 = vunpack.c.l.b16 %v3604
        %v3737 = vunpack.c.h.b16 %v3604
        %v3738 = vunpack.c.l.b16 %v3605
        %v3739 = vunpack.c.h.b16 %v3605
        %v3740 = vunpack.c.l.b16 %v3606
        %v3741 = vunpack.c.h.b16 %v3606
        %v3742 = vunpack.c.l.b16 %v3607
        %v3743 = vunpack.c.h.b16 %v3607
        %v3744 = vunpack.c.l.b16 %v3608
        %v3745 = vunpack.c.h.b16 %v3608
        %v3746 = vunpack.c.l.b16 %v3609
        %v3747 = vunpack.c.h.b16 %v3609
        %v3748 = vunpack.c.l.b16 %v3610
        %v3749 = vunpack.c.h.b16 %v3610
        %v3750 = vunpack.c.l.b16 %v3611
        %v3751 = vunpack.c.h.b16 %v3611
        %v3752 = vunpack.c.l.b16 %v3612
        %v3753 = vunpack.c.h.b16 %v3612
        %v3754 = vunpack.c.l.b16 %v3613
        %v3755 = vunpack.c.h.b16 %v3613
        %v3756 = vunpack.c.l.b16 %v3614
        %v3757 = vunpack.c.h.b16 %v3614
        %v3758 = vunpack.c.l.b16 %v3615
        %v3759 = vunpack.c.h.b16 %v3615
        %v3760 = vpack.c.b16 %v3666, %v3664
        %v3761 = vpack.c.b16 %v3667, %v3665
        %v3762 = vpack.c.b16 %v3670, %v3668
        %v3763 = vpack.c.b16 %v3671, %v3669
        %v3764 = vpack.c.b16 %v3674, %v3672
        %v3765 = vpack.c.b16 %v3675, %v3673
        %v3766 = vpack.c.b16 %v3678, %v3676
        %v3767 = vpack.c.b16 %v3679, %v3677
        %v3768 = vpack.c.b16 %v3682, %v3680
        %v3769 = vpack.c.b16 %v3683, %v3681
        %v3770 = vpack.c.b16 %v3686, %v3684
        %v3771 = vpack.c.b16 %v3687, %v3685
        %v3772 = vpack.c.b16 %v3690, %v3688
        %v3773 = vpack.c.b16 %v3691, %v3689
        %v3774 = vpack.c.b16 %v3694, %v3692
        %v3775 = vpack.c.b16 %v3695, %v3693
        %v3776 = vpack.c.b16 %v3698, %v3696
        %v3777 = vpack.c.b16 %v3699, %v3697
        %v3778 = vpack.c.b16 %v3702, %v3700
        %v3779 = vpack.c.b16 %v3703, %v3701
        %v3780 = vpack.c.b16 %v3706, %v3704
        %v3781 = vpack.c.b16 %v3707, %v3705
        %v3782 = vpack.c.b16 %v3710, %v3708
        %v3783 = vpack.c.b16 %v3711, %v3709
        %v3784 = vpack.c.b16 %v3714, %v3712
        %v3785 = vpack.c.b16 %v3715, %v3713
        %v3786 = vpack.c.b16 %v3718, %v3716
        %v3787 = vpack.c.b16 %v3719, %v3717
        %v3788 = vpack.c.b16 %v3722, %v3720
        %v3789 = vpack.c.b16 %v3723, %v3721
        %v3790 = vpack.c.b16 %v3726, %v3724
        %v3791 = vpack.c.b16 %v3727, %v3725
        %v3792 = vpack.c.b16 %v3730, %v3728
        %v3793 = vpack.c.b16 %v3731, %v3729
        %v3794 = vpack.c.b16 %v3734, %v3732
        %v3795 = vpack.c.b16 %v3735, %v3733
        %v3796 = vpack.c.b16 %v3738, %v3736
        %v3797 = vpack.c.b16 %v3739, %v3737
        %v3798 = vpack.c.b16 %v3742, %v3740
        %v3799 = vpack.c.b16 %v3743, %v3741
        %v3800 = vpack.c.b16 %v3746, %v3744
        %v3801 = vpack.c.b16 %v3747, %v3745
        %v3802 = vpack.c.b16 %v3750, %v3748
        %v3803 = vpack.c.b16 %v3751, %v3749
        %v3804 = vpack.c.b16 %v3754, %v3752
        %v3805 = vpack.c.b16 %v3755, %v3753
        %v3806 = vpack.c.b16 %v3758, %v3756
        %v3807 = vpack.c.b16 %v3759, %v3757
        %3856 = vmatprep.subr.bf16.mxu0 %v3761
        %3857 = vmatpush1.bf16.msra.mxu0 %v3760
        %3858 = vmatprep.subr.bf16.mxu0 %v3763
        %3859 = vmatpush1.bf16.msra.mxu0 %v3762
        %3860 = vmatprep.subr.bf16.mxu0 %v3765
        %3861 = vmatpush1.bf16.msra.mxu0 %v3764
        %3862 = vmatprep.subr.bf16.mxu0 %v3767
        %3863 = vmatpush1.bf16.msra.mxu0 %v3766
        %3864 = vmatprep.subr.bf16.mxu0 %v3769
        %3865 = vmatpush1.bf16.msra.mxu0 %v3768
        %3866 = vmatprep.subr.bf16.mxu0 %v3771
        %3867 = vmatpush1.bf16.msra.mxu0 %v3770
        %3868 = vmatprep.subr.bf16.mxu0 %v3773
        %3869 = vmatpush1.bf16.msra.mxu0 %v3772
        %3870 = vmatprep.subr.bf16.mxu0 %v3775
        %3871 = vmatpush1.bf16.msra.mxu0 %v3774
        %3872 = vmatprep.subr.bf16.mxu0 %v3777
        %3873 = vmatpush1.bf16.msra.mxu0 %v3776
        %3874 = vmatprep.subr.bf16.mxu0 %v3779
        %3875 = vmatpush1.bf16.msra.mxu0 %v3778
        %3876 = vmatprep.subr.bf16.mxu0 %v3781
        %3877 = vmatpush1.bf16.msra.mxu0 %v3780
        %3878 = vmatprep.subr.bf16.mxu0 %v3783
        %3879 = vmatpush1.bf16.msra.mxu0 %v3782
        %3880 = vmatprep.subr.bf16.mxu0 %v3785
        %3881 = vmatpush1.bf16.msra.mxu0 %v3784
        %3882 = vmatprep.subr.bf16.mxu0 %v3787
        %3883 = vmatpush1.bf16.msra.mxu0 %v3786
        %3884 = vmatprep.subr.bf16.mxu0 %v3789
        %3885 = vmatpush1.bf16.msra.mxu0 %v3788
        %3886 = vmatprep.subr.bf16.mxu0 %v3791
        %3887 = vmatpush1.bf16.msra.mxu0 %v3790
        %3888 = vmatprep.mubr.bf16.mxu0 %v3556
        %3889 = vmatmul.mubr.bf16.gmra.mrb[0].mxu0 %v3555
        %v3890 = vpop.f32.mrb[0].mxu0
        %v3891 = vadd.f32 0.0, %v3890
        %v3892 = vpop.f32.mrb[0].mxu0
        %v3893 = vadd.f32 0.0, %v3892
        %v3894 = vpop.f32.mrb[0].mxu0
        %v3895 = vadd.f32 0.0, %v3894
        %v3896 = vpop.f32.mrb[0].mxu0
        %v3897 = vadd.f32 0.0, %v3896
        %3898 = vmatprep.mubr.bf16.mxu0 %v3559
        %3899 = vmatmul.mubr.bf16.gmra.mrb[0].mxu0 %v3558
        %v3900 = vpop.f32.mrb[0].mxu0
        %v3901 = vadd.f32 0.0, %v3900
        %v3902 = vpop.f32.mrb[0].mxu0
        %v3903 = vadd.f32 0.0, %v3902
        %v3904 = vpop.f32.mrb[0].mxu0
        %v3905 = vadd.f32 0.0, %v3904
        %v3906 = vpop.f32.mrb[0].mxu0
        %v3907 = vadd.f32 0.0, %v3906
        %3908 = vmatprep.mubr.bf16.mxu0 %v3562
        %3909 = vmatmul.mubr.bf16.gmra.mrb[0].mxu0 %v3561
        %v3910 = vpop.f32.mrb[0].mxu0
        %v3911 = vadd.f32 0.0, %v3910
        %v3912 = vpop.f32.mrb[0].mxu0
        %v3913 = vadd.f32 0.0, %v3912
        %v3914 = vpop.f32.mrb[0].mxu0
        %v3915 = vadd.f32 0.0, %v3914
        %v3916 = vpop.f32.mrb[0].mxu0
        %v3917 = vadd.f32 0.0, %v3916
        %3918 = vmatprep.mubr.bf16.mxu0 %v3565
        %3919 = vmatmul.mubr.bf16.gmra.mrb[0].mxu0 %v3564
        %v3920 = vpop.f32.mrb[0].mxu0
        %v3921 = vadd.f32 0.0, %v3920
        %v3922 = vpop.f32.mrb[0].mxu0
        %v3923 = vadd.f32 0.0, %v3922
        %v3924 = vpop.f32.mrb[0].mxu0
        %v3925 = vadd.f32 0.0, %v3924
        %v3926 = vpop.f32.mrb[0].mxu0
        %v3927 = vadd.f32 0.0, %v3926
        %3928 = vdwg.mxu0
        %3929 = vmatprep.subr.bf16.mxu0 %v3793
        %3930 = vmatpush1.bf16.msra.mxu0 %v3792
        %3931 = vmatprep.subr.bf16.mxu0 %v3795
        %3932 = vmatpush1.bf16.msra.mxu0 %v3794
        %3933 = vmatprep.subr.bf16.mxu0 %v3797
        %3934 = vmatpush1.bf16.msra.mxu0 %v3796
        %3935 = vmatprep.subr.bf16.mxu0 %v3799
        %3936 = vmatpush1.bf16.msra.mxu0 %v3798
        %3937 = vmatprep.subr.bf16.mxu0 %v3801
        %3938 = vmatpush1.bf16.msra.mxu0 %v3800
        %3939 = vmatprep.subr.bf16.mxu0 %v3803
        %3940 = vmatpush1.bf16.msra.mxu0 %v3802
        %3941 = vmatprep.subr.bf16.mxu0 %v3805
        %3942 = vmatpush1.bf16.msra.mxu0 %v3804
        %3943 = vmatprep.subr.bf16.mxu0 %v3807
        %3944 = vmatpush1.bf16.msra.mxu0 %v3806
        %3945 = vmatprep.subr.bf16.mxu0 0
        %3946 = vmatpush1.bf16.msra.mxu0 0
        %3947 = vmatprep.subr.bf16.mxu0 0
        %3948 = vmatpush1.bf16.msra.mxu0 0
        %3949 = vmatprep.subr.bf16.mxu0 0
        %3950 = vmatpush1.bf16.msra.mxu0 0
        %3951 = vmatprep.subr.bf16.mxu0 0
        %3952 = vmatpush1.bf16.msra.mxu0 0
        %3953 = vmatprep.subr.bf16.mxu0 0
        %3954 = vmatpush1.bf16.msra.mxu0 0
        %3955 = vmatprep.subr.bf16.mxu0 0
        %3956 = vmatpush1.bf16.msra.mxu0 0
        %3957 = vmatprep.subr.bf16.mxu0 0
        %3958 = vmatpush1.bf16.msra.mxu0 0
        %3959 = vmatprep.subr.bf16.mxu0 0
        %3960 = vmatpush1.bf16.msra.mxu0 0
        %3961 = vmatprep.mubr.bf16.mxu0 0
        %3962 = vmatmul.mubr.bf16.gmra.mrb[0].mxu0 %v3557
        %v3963 = vpop.f32.mrb[0].mxu0
        %v3964 = vadd.f32 %v3891, %v3963
        %v3965 = vpop.f32.mrb[0].mxu0
        %v3966 = vadd.f32 %v3893, %v3965
        %v3967 = vpop.f32.mrb[0].mxu0
        %v3968 = vadd.f32 %v3895, %v3967
        %v3969 = vpop.f32.mrb[0].mxu0
        %v3970 = vadd.f32 %v3897, %v3969
        %3971 = vmatprep.mubr.bf16.mxu0 0
        %3972 = vmatmul.mubr.bf16.gmra.mrb[0].mxu0 %v3560
        %v3973 = vpop.f32.mrb[0].mxu0
        %v3974 = vadd.f32 %v3901, %v3973
        %v3975 = vpop.f32.mrb[0].mxu0
        %v3976 = vadd.f32 %v3903, %v3975
        %v3977 = vpop.f32.mrb[0].mxu0
        %v3978 = vadd.f32 %v3905, %v3977
        %v3979 = vpop.f32.mrb[0].mxu0
        %v3980 = vadd.f32 %v3907, %v3979
        %3981 = vmatprep.mubr.bf16.mxu0 0
        %3982 = vmatmul.mubr.bf16.gmra.mrb[0].mxu0 %v3563
        %v3983 = vpop.f32.mrb[0].mxu0
        %v3984 = vadd.f32 %v3911, %v3983
        %v3985 = vpop.f32.mrb[0].mxu0
        %v3986 = vadd.f32 %v3913, %v3985
        %v3987 = vpop.f32.mrb[0].mxu0
        %v3988 = vadd.f32 %v3915, %v3987
        %v3989 = vpop.f32.mrb[0].mxu0
        %v3990 = vadd.f32 %v3917, %v3989
        %3991 = vmatprep.mubr.bf16.mxu0 0
        %3992 = vmatmul.mubr.bf16.gmra.mrb[0].mxu0 %v3566
        %v3993 = vpop.f32.mrb[0].mxu0
        %v3994 = vadd.f32 %v3921, %v3993
        %v3995 = vpop.f32.mrb[0].mxu0
        %v3996 = vadd.f32 %v3923, %v3995
        %v3997 = vpop.f32.mrb[0].mxu0
        %v3998 = vadd.f32 %v3925, %v3997
        %v3999 = vpop.f32.mrb[0].mxu0
        %v4000 = vadd.f32 %v3927, %v3999
        %4001 = vdwg.mxu0
        %v4002 = vadd.f32 %v3347, %v3964
        %v4003 = vadd.f32 %v3348, %v3966
        %v4004 = vadd.f32 %v3349, %v3968
        %v4005 = vadd.f32 %v3350, %v3970
        %v4006 = vadd.f32 %v3351, %v3974
        %v4007 = vadd.f32 %v3352, %v3976
        %v4008 = vadd.f32 %v3353, %v3978
        %v4009 = vadd.f32 %v3354, %v3980
        %v4010 = vadd.f32 %v3355, %v3984
        %v4011 = vadd.f32 %v3356, %v3986
        %v4012 = vadd.f32 %v3357, %v3988
        %v4013 = vadd.f32 %v3358, %v3990
        %v4014 = vadd.f32 %v3359, %v3994
        %v4015 = vadd.f32 %v3360, %v3996
        %v4016 = vadd.f32 %v3361, %v3998
        %v4017 = vadd.f32 %v3362, %v4000
        %s4018 = scalar_lea.vmem [#allocation2], 96
        %v4019 = vld [vmem:[%s4018] sm:$0xff]
        %v4020 = vld [vmem:[%s4018 + $0x8] sm:$0xff]
        %v4021 = vld [vmem:[%s4018 + $0x10] sm:$0xff]
        %v4022 = vld [vmem:[%s4018 + $0x30] sm:$0xff]
        %v4023 = vld [vmem:[%s4018 + $0x38] sm:$0xff]
        %v4024 = vld [vmem:[%s4018 + $0x40] sm:$0xff]
        %v4025 = vld [vmem:[%s4018 + $0x60] sm:$0xff]
        %v4026 = vld [vmem:[%s4018 + $0x68] sm:$0xff]
        %v4027 = vld [vmem:[%s4018 + $0x70] sm:$0xff]
        %v4028 = vld [vmem:[%s4018 + $0x90] sm:$0xff]
        %v4029 = vld [vmem:[%s4018 + $0x98] sm:$0xff]
        %v4030 = vld [vmem:[%s4018 + $0xa0] sm:$0xff]
        %v4031 = vld [vmem:[%s4018 + $0xc0] sm:$0xff]
        %v4032 = vld [vmem:[%s4018 + $0xc8] sm:$0xff]
        %v4033 = vld [vmem:[%s4018 + $0xd0] sm:$0xff]
        %v4034 = vld [vmem:[%s4018 + $0xf0] sm:$0xff]
        %v4035 = vld [vmem:[%s4018 + $0xf8] sm:$0xff]
        %v4036 = vld [vmem:[%s4018 + $0x100] sm:$0xff]
        %v4037 = vld [vmem:[%s4018 + $0x120] sm:$0xff]
        %v4038 = vld [vmem:[%s4018 + $0x128] sm:$0xff]
        %v4039 = vld [vmem:[%s4018 + $0x130] sm:$0xff]
        %v4040 = vld [vmem:[%s4018 + $0x150] sm:$0xff]
        %v4041 = vld [vmem:[%s4018 + $0x158] sm:$0xff]
        %v4042 = vld [vmem:[%s4018 + $0x160] sm:$0xff]
        %v4043 = vpack.c.bf16 %v4022, %v4019
        %v4044 = vpack.c.bf16 %v4023, %v4020
        %v4045 = vpack.c.bf16 %v4024, %v4021
        %v4046 = vpack.c.bf16 %v4028, %v4025
        %v4047 = vpack.c.bf16 %v4029, %v4026
        %v4048 = vpack.c.bf16 %v4030, %v4027
        %v4049 = vpack.c.bf16 %v4034, %v4031
        %v4050 = vpack.c.bf16 %v4035, %v4032
        %v4051 = vpack.c.bf16 %v4036, %v4033
        %v4052 = vpack.c.bf16 %v4040, %v4037
        %v4053 = vpack.c.bf16 %v4041, %v4038
        %v4054 = vpack.c.bf16 %v4042, %v4039
        %s4055 = scalar_lea.vmem [#allocation6], 2304
        %v4056 = vld [vmem:[%s4055] sm:$0xff]
        %v4057 = vld [vmem:[%s4055 + $0x8] sm:$0xff]
        %v4058 = vld [vmem:[%s4055 + $0x10] sm:$0xff]
        %v4059 = vld [vmem:[%s4055 + $0x18] sm:$0xff]
        %v4060 = vld [vmem:[%s4055 + $0x20] sm:$0xff]
        %v4061 = vld [vmem:[%s4055 + $0x28] sm:$0xff]
        %v4062 = vld [vmem:[%s4055 + $0x30] sm:$0xff]
        %v4063 = vld [vmem:[%s4055 + $0x38] sm:$0xff]
        %v4064 = vld [vmem:[%s4055 + $0x40] sm:$0xff]
        %v4065 = vld [vmem:[%s4055 + $0x48] sm:$0xff]
        %v4066 = vld [vmem:[%s4055 + $0x50] sm:$0xff]
        %v4067 = vld [vmem:[%s4055 + $0x58] sm:$0xff]
        %v4068 = vld [vmem:[%s4055 + $0x60] sm:$0xff]
        %v4069 = vld [vmem:[%s4055 + $0x68] sm:$0xff]
        %v4070 = vld [vmem:[%s4055 + $0x70] sm:$0xff]
        %v4071 = vld [vmem:[%s4055 + $0x78] sm:$0xff]
        %v4072 = vld [vmem:[%s4055 + $0x80] sm:$0xff]
        %v4073 = vld [vmem:[%s4055 + $0x88] sm:$0xff]
        %v4074 = vld [vmem:[%s4055 + $0x90] sm:$0xff]
        %v4075 = vld [vmem:[%s4055 + $0x98] sm:$0xff]
        %v4076 = vld [vmem:[%s4055 + $0xa0] sm:$0xff]
        %v4077 = vld [vmem:[%s4055 + $0xa8] sm:$0xff]
        %v4078 = vld [vmem:[%s4055 + $0xb0] sm:$0xff]
        %v4079 = vld [vmem:[%s4055 + $0xb8] sm:$0xff]
        %v4080 = vld [vmem:[%s4055 + $0xc0] sm:$0xff]
        %v4081 = vld [vmem:[%s4055 + $0xc8] sm:$0xff]
        %v4082 = vld [vmem:[%s4055 + $0xd0] sm:$0xff]
        %v4083 = vld [vmem:[%s4055 + $0xd8] sm:$0xff]
        %v4084 = vld [vmem:[%s4055 + $0xe0] sm:$0xff]
        %v4085 = vld [vmem:[%s4055 + $0xe8] sm:$0xff]
        %v4086 = vld [vmem:[%s4055 + $0xf0] sm:$0xff]
        %v4087 = vld [vmem:[%s4055 + $0xf8] sm:$0xff]
        %v4088 = vld [vmem:[%s4055 + $0x100] sm:$0xff]
        %v4089 = vld [vmem:[%s4055 + $0x108] sm:$0xff]
        %v4090 = vld [vmem:[%s4055 + $0x110] sm:$0xff]
        %v4091 = vld [vmem:[%s4055 + $0x118] sm:$0xff]
        %v4092 = vld [vmem:[%s4055 + $0x120] sm:$0xff]
        %v4093 = vld [vmem:[%s4055 + $0x128] sm:$0xff]
        %v4094 = vld [vmem:[%s4055 + $0x130] sm:$0xff]
        %v4095 = vld [vmem:[%s4055 + $0x138] sm:$0xff]
        %v4096 = vld [vmem:[%s4055 + $0x140] sm:$0xff]
        %v4097 = vld [vmem:[%s4055 + $0x148] sm:$0xff]
        %v4098 = vld [vmem:[%s4055 + $0x150] sm:$0xff]
        %v4099 = vld [vmem:[%s4055 + $0x158] sm:$0xff]
        %v4100 = vld [vmem:[%s4055 + $0x160] sm:$0xff]
        %v4101 = vld [vmem:[%s4055 + $0x168] sm:$0xff]
        %v4102 = vld [vmem:[%s4055 + $0x170] sm:$0xff]
        %v4103 = vld [vmem:[%s4055 + $0x178] sm:$0xff]
        %v4152 = vunpack.c.l.b16 %v4056
        %v4153 = vunpack.c.h.b16 %v4056
        %v4154 = vunpack.c.l.b16 %v4057
        %v4155 = vunpack.c.h.b16 %v4057
        %v4156 = vunpack.c.l.b16 %v4058
        %v4157 = vunpack.c.h.b16 %v4058
        %v4158 = vunpack.c.l.b16 %v4059
        %v4159 = vunpack.c.h.b16 %v4059
        %v4160 = vunpack.c.l.b16 %v4060
        %v4161 = vunpack.c.h.b16 %v4060
        %v4162 = vunpack.c.l.b16 %v4061
        %v4163 = vunpack.c.h.b16 %v4061
        %v4164 = vunpack.c.l.b16 %v4062
        %v4165 = vunpack.c.h.b16 %v4062
        %v4166 = vunpack.c.l.b16 %v4063
        %v4167 = vunpack.c.h.b16 %v4063
        %v4168 = vunpack.c.l.b16 %v4064
        %v4169 = vunpack.c.h.b16 %v4064
        %v4170 = vunpack.c.l.b16 %v4065
        %v4171 = vunpack.c.h.b16 %v4065
        %v4172 = vunpack.c.l.b16 %v4066
        %v4173 = vunpack.c.h.b16 %v4066
        %v4174 = vunpack.c.l.b16 %v4067
        %v4175 = vunpack.c.h.b16 %v4067
        %v4176 = vunpack.c.l.b16 %v4068
        %v4177 = vunpack.c.h.b16 %v4068
        %v4178 = vunpack.c.l.b16 %v4069
        %v4179 = vunpack.c.h.b16 %v4069
        %v4180 = vunpack.c.l.b16 %v4070
        %v4181 = vunpack.c.h.b16 %v4070
        %v4182 = vunpack.c.l.b16 %v4071
        %v4183 = vunpack.c.h.b16 %v4071
        %v4184 = vunpack.c.l.b16 %v4072
        %v4185 = vunpack.c.h.b16 %v4072
        %v4186 = vunpack.c.l.b16 %v4073
        %v4187 = vunpack.c.h.b16 %v4073
        %v4188 = vunpack.c.l.b16 %v4074
        %v4189 = vunpack.c.h.b16 %v4074
        %v4190 = vunpack.c.l.b16 %v4075
        %v4191 = vunpack.c.h.b16 %v4075
        %v4192 = vunpack.c.l.b16 %v4076
        %v4193 = vunpack.c.h.b16 %v4076
        %v4194 = vunpack.c.l.b16 %v4077
        %v4195 = vunpack.c.h.b16 %v4077
        %v4196 = vunpack.c.l.b16 %v4078
        %v4197 = vunpack.c.h.b16 %v4078
        %v4198 = vunpack.c.l.b16 %v4079
        %v4199 = vunpack.c.h.b16 %v4079
        %v4200 = vunpack.c.l.b16 %v4080
        %v4201 = vunpack.c.h.b16 %v4080
        %v4202 = vunpack.c.l.b16 %v4081
        %v4203 = vunpack.c.h.b16 %v4081
        %v4204 = vunpack.c.l.b16 %v4082
        %v4205 = vunpack.c.h.b16 %v4082
        %v4206 = vunpack.c.l.b16 %v4083
        %v4207 = vunpack.c.h.b16 %v4083
        %v4208 = vunpack.c.l.b16 %v4084
        %v4209 = vunpack.c.h.b16 %v4084
        %v4210 = vunpack.c.l.b16 %v4085
        %v4211 = vunpack.c.h.b16 %v4085
        %v4212 = vunpack.c.l.b16 %v4086
        %v4213 = vunpack.c.h.b16 %v4086
        %v4214 = vunpack.c.l.b16 %v4087
        %v4215 = vunpack.c.h.b16 %v4087
        %v4216 = vunpack.c.l.b16 %v4088
        %v4217 = vunpack.c.h.b16 %v4088
        %v4218 = vunpack.c.l.b16 %v4089
        %v4219 = vunpack.c.h.b16 %v4089
        %v4220 = vunpack.c.l.b16 %v4090
        %v4221 = vunpack.c.h.b16 %v4090
        %v4222 = vunpack.c.l.b16 %v4091
        %v4223 = vunpack.c.h.b16 %v4091
        %v4224 = vunpack.c.l.b16 %v4092
        %v4225 = vunpack.c.h.b16 %v4092
        %v4226 = vunpack.c.l.b16 %v4093
        %v4227 = vunpack.c.h.b16 %v4093
        %v4228 = vunpack.c.l.b16 %v4094
        %v4229 = vunpack.c.h.b16 %v4094
        %v4230 = vunpack.c.l.b16 %v4095
        %v4231 = vunpack.c.h.b16 %v4095
        %v4232 = vunpack.c.l.b16 %v4096
        %v4233 = vunpack.c.h.b16 %v4096
        %v4234 = vunpack.c.l.b16 %v4097
        %v4235 = vunpack.c.h.b16 %v4097
        %v4236 = vunpack.c.l.b16 %v4098
        %v4237 = vunpack.c.h.b16 %v4098
        %v4238 = vunpack.c.l.b16 %v4099
        %v4239 = vunpack.c.h.b16 %v4099
        %v4240 = vunpack.c.l.b16 %v4100
        %v4241 = vunpack.c.h.b16 %v4100
        %v4242 = vunpack.c.l.b16 %v4101
        %v4243 = vunpack.c.h.b16 %v4101
        %v4244 = vunpack.c.l.b16 %v4102
        %v4245 = vunpack.c.h.b16 %v4102
        %v4246 = vunpack.c.l.b16 %v4103
        %v4247 = vunpack.c.h.b16 %v4103
        %v4248 = vpack.c.b16 %v4154, %v4152
        %v4249 = vpack.c.b16 %v4155, %v4153
        %v4250 = vpack.c.b16 %v4158, %v4156
        %v4251 = vpack.c.b16 %v4159, %v4157
        %v4252 = vpack.c.b16 %v4162, %v4160
        %v4253 = vpack.c.b16 %v4163, %v4161
        %v4254 = vpack.c.b16 %v4166, %v4164
        %v4255 = vpack.c.b16 %v4167, %v4165
        %v4256 = vpack.c.b16 %v4170, %v4168
        %v4257 = vpack.c.b16 %v4171, %v4169
        %v4258 = vpack.c.b16 %v4174, %v4172
        %v4259 = vpack.c.b16 %v4175, %v4173
        %v4260 = vpack.c.b16 %v4178, %v4176
        %v4261 = vpack.c.b16 %v4179, %v4177
        %v4262 = vpack.c.b16 %v4182, %v4180
        %v4263 = vpack.c.b16 %v4183, %v4181
        %v4264 = vpack.c.b16 %v4186, %v4184
        %v4265 = vpack.c.b16 %v4187, %v4185
        %v4266 = vpack.c.b16 %v4190, %v4188
        %v4267 = vpack.c.b16 %v4191, %v4189
        %v4268 = vpack.c.b16 %v4194, %v4192
        %v4269 = vpack.c.b16 %v4195, %v4193
        %v4270 = vpack.c.b16 %v4198, %v4196
        %v4271 = vpack.c.b16 %v4199, %v4197
        %v4272 = vpack.c.b16 %v4202, %v4200
        %v4273 = vpack.c.b16 %v4203, %v4201
        %v4274 = vpack.c.b16 %v4206, %v4204
        %v4275 = vpack.c.b16 %v4207, %v4205
        %v4276 = vpack.c.b16 %v4210, %v4208
        %v4277 = vpack.c.b16 %v4211, %v4209
        %v4278 = vpack.c.b16 %v4214, %v4212
        %v4279 = vpack.c.b16 %v4215, %v4213
        %v4280 = vpack.c.b16 %v4218, %v4216
        %v4281 = vpack.c.b16 %v4219, %v4217
        %v4282 = vpack.c.b16 %v4222, %v4220
        %v4283 = vpack.c.b16 %v4223, %v4221
        %v4284 = vpack.c.b16 %v4226, %v4224
        %v4285 = vpack.c.b16 %v4227, %v4225
        %v4286 = vpack.c.b16 %v4230, %v4228
        %v4287 = vpack.c.b16 %v4231, %v4229
        %v4288 = vpack.c.b16 %v4234, %v4232
        %v4289 = vpack.c.b16 %v4235, %v4233
        %v4290 = vpack.c.b16 %v4238, %v4236
        %v4291 = vpack.c.b16 %v4239, %v4237
        %v4292 = vpack.c.b16 %v4242, %v4240
        %v4293 = vpack.c.b16 %v4243, %v4241
        %v4294 = vpack.c.b16 %v4246, %v4244
        %v4295 = vpack.c.b16 %v4247, %v4245
        %4344 = vmatprep.subr.bf16.mxu0 %v4249
        %4345 = vmatpush1.bf16.msra.mxu0 %v4248
        %4346 = vmatprep.subr.bf16.mxu0 %v4251
        %4347 = vmatpush1.bf16.msra.mxu0 %v4250
        %4348 = vmatprep.subr.bf16.mxu0 %v4253
        %4349 = vmatpush1.bf16.msra.mxu0 %v4252
        %4350 = vmatprep.subr.bf16.mxu0 %v4255
        %4351 = vmatpush1.bf16.msra.mxu0 %v4254
        %4352 = vmatprep.subr.bf16.mxu0 %v4257
        %4353 = vmatpush1.bf16.msra.mxu0 %v4256
        %4354 = vmatprep.subr.bf16.mxu0 %v4259
        %4355 = vmatpush1.bf16.msra.mxu0 %v4258
        %4356 = vmatprep.subr.bf16.mxu0 %v4261
        %4357 = vmatpush1.bf16.msra.mxu0 %v4260
        %4358 = vmatprep.subr.bf16.mxu0 %v4263
        %4359 = vmatpush1.bf16.msra.mxu0 %v4262
        %4360 = vmatprep.subr.bf16.mxu0 %v4265
        %4361 = vmatpush1.bf16.msra.mxu0 %v4264
        %4362 = vmatprep.subr.bf16.mxu0 %v4267
        %4363 = vmatpush1.bf16.msra.mxu0 %v4266
        %4364 = vmatprep.subr.bf16.mxu0 %v4269
        %4365 = vmatpush1.bf16.msra.mxu0 %v4268
        %4366 = vmatprep.subr.bf16.mxu0 %v4271
        %4367 = vmatpush1.bf16.msra.mxu0 %v4270
        %4368 = vmatprep.subr.bf16.mxu0 %v4273
        %4369 = vmatpush1.bf16.msra.mxu0 %v4272
        %4370 = vmatprep.subr.bf16.mxu0 %v4275
        %4371 = vmatpush1.bf16.msra.mxu0 %v4274
        %4372 = vmatprep.subr.bf16.mxu0 %v4277
        %4373 = vmatpush1.bf16.msra.mxu0 %v4276
        %4374 = vmatprep.subr.bf16.mxu0 %v4279
        %4375 = vmatpush1.bf16.msra.mxu0 %v4278
        %4376 = vmatprep.mubr.bf16.mxu0 %v4044
        %4377 = vmatmul.mubr.bf16.gmra.mrb[0].mxu0 %v4043
        %v4378 = vpop.f32.mrb[0].mxu0
        %v4379 = vadd.f32 0.0, %v4378
        %v4380 = vpop.f32.mrb[0].mxu0
        %v4381 = vadd.f32 0.0, %v4380
        %v4382 = vpop.f32.mrb[0].mxu0
        %v4383 = vadd.f32 0.0, %v4382
        %v4384 = vpop.f32.mrb[0].mxu0
        %v4385 = vadd.f32 0.0, %v4384
        %4386 = vmatprep.mubr.bf16.mxu0 %v4047
        %4387 = vmatmul.mubr.bf16.gmra.mrb[0].mxu0 %v4046
        %v4388 = vpop.f32.mrb[0].mxu0
        %v4389 = vadd.f32 0.0, %v4388
        %v4390 = vpop.f32.mrb[0].mxu0
        %v4391 = vadd.f32 0.0, %v4390
        %v4392 = vpop.f32.mrb[0].mxu0
        %v4393 = vadd.f32 0.0, %v4392
        %v4394 = vpop.f32.mrb[0].mxu0
        %v4395 = vadd.f32 0.0, %v4394
        %4396 = vmatprep.mubr.bf16.mxu0 %v4050
        %4397 = vmatmul.mubr.bf16.gmra.mrb[0].mxu0 %v4049
        %v4398 = vpop.f32.mrb[0].mxu0
        %v4399 = vadd.f32 0.0, %v4398
        %v4400 = vpop.f32.mrb[0].mxu0
        %v4401 = vadd.f32 0.0, %v4400
        %v4402 = vpop.f32.mrb[0].mxu0
        %v4403 = vadd.f32 0.0, %v4402
        %v4404 = vpop.f32.mrb[0].mxu0
        %v4405 = vadd.f32 0.0, %v4404
        %4406 = vmatprep.mubr.bf16.mxu0 %v4053
        %4407 = vmatmul.mubr.bf16.gmra.mrb[0].mxu0 %v4052
        %v4408 = vpop.f32.mrb[0].mxu0
        %v4409 = vadd.f32 0.0, %v4408
        %v4410 = vpop.f32.mrb[0].mxu0
        %v4411 = vadd.f32 0.0, %v4410
        %v4412 = vpop.f32.mrb[0].mxu0
        %v4413 = vadd.f32 0.0, %v4412
        %v4414 = vpop.f32.mrb[0].mxu0
        %v4415 = vadd.f32 0.0, %v4414
        %4416 = vdwg.mxu0
        %4417 = vmatprep.subr.bf16.mxu0 %v4281
        %4418 = vmatpush1.bf16.msra.mxu0 %v4280
        %4419 = vmatprep.subr.bf16.mxu0 %v4283
        %4420 = vmatpush1.bf16.msra.mxu0 %v4282
        %4421 = vmatprep.subr.bf16.mxu0 %v4285
        %4422 = vmatpush1.bf16.msra.mxu0 %v4284
        %4423 = vmatprep.subr.bf16.mxu0 %v4287
        %4424 = vmatpush1.bf16.msra.mxu0 %v4286
        %4425 = vmatprep.subr.bf16.mxu0 %v4289
        %4426 = vmatpush1.bf16.msra.mxu0 %v4288
        %4427 = vmatprep.subr.bf16.mxu0 %v4291
        %4428 = vmatpush1.bf16.msra.mxu0 %v4290
        %4429 = vmatprep.subr.bf16.mxu0 %v4293
        %4430 = vmatpush1.bf16.msra.mxu0 %v4292
        %4431 = vmatprep.subr.bf16.mxu0 %v4295
        %4432 = vmatpush1.bf16.msra.mxu0 %v4294
        %4433 = vmatprep.subr.bf16.mxu0 0
        %4434 = vmatpush1.bf16.msra.mxu0 0
        %4435 = vmatprep.subr.bf16.mxu0 0
        %4436 = vmatpush1.bf16.msra.mxu0 0
        %4437 = vmatprep.subr.bf16.mxu0 0
        %4438 = vmatpush1.bf16.msra.mxu0 0
        %4439 = vmatprep.subr.bf16.mxu0 0
        %4440 = vmatpush1.bf16.msra.mxu0 0
        %4441 = vmatprep.subr.bf16.mxu0 0
        %4442 = vmatpush1.bf16.msra.mxu0 0
        %4443 = vmatprep.subr.bf16.mxu0 0
        %4444 = vmatpush1.bf16.msra.mxu0 0
        %4445 = vmatprep.subr.bf16.mxu0 0
        %4446 = vmatpush1.bf16.msra.mxu0 0
        %4447 = vmatprep.subr.bf16.mxu0 0
        %4448 = vmatpush1.bf16.msra.mxu0 0
        %4449 = vmatprep.mubr.bf16.mxu0 0
        %4450 = vmatmul.mubr.bf16.gmra.mrb[0].mxu0 %v4045
        %v4451 = vpop.f32.mrb[0].mxu0
        %v4452 = vadd.f32 %v4379, %v4451
        %v4453 = vpop.f32.mrb[0].mxu0
        %v4454 = vadd.f32 %v4381, %v4453
        %v4455 = vpop.f32.mrb[0].mxu0
        %v4456 = vadd.f32 %v4383, %v4455
        %v4457 = vpop.f32.mrb[0].mxu0
        %v4458 = vadd.f32 %v4385, %v4457
        %4459 = vmatprep.mubr.bf16.mxu0 0
        %4460 = vmatmul.mubr.bf16.gmra.mrb[0].mxu0 %v4048
        %v4461 = vpop.f32.mrb[0].mxu0
        %v4462 = vadd.f32 %v4389, %v4461
        %v4463 = vpop.f32.mrb[0].mxu0
        %v4464 = vadd.f32 %v4391, %v4463
        %v4465 = vpop.f32.mrb[0].mxu0
        %v4466 = vadd.f32 %v4393, %v4465
        %v4467 = vpop.f32.mrb[0].mxu0
        %v4468 = vadd.f32 %v4395, %v4467
        %4469 = vmatprep.mubr.bf16.mxu0 0
        %4470 = vmatmul.mubr.bf16.gmra.mrb[0].mxu0 %v4051
        %v4471 = vpop.f32.mrb[0].mxu0
        %v4472 = vadd.f32 %v4399, %v4471
        %v4473 = vpop.f32.mrb[0].mxu0
        %v4474 = vadd.f32 %v4401, %v4473
        %v4475 = vpop.f32.mrb[0].mxu0
        %v4476 = vadd.f32 %v4403, %v4475
        %v4477 = vpop.f32.mrb[0].mxu0
        %v4478 = vadd.f32 %v4405, %v4477
        %4479 = vmatprep.mubr.bf16.mxu0 0
        %4480 = vmatmul.mubr.bf16.gmra.mrb[0].mxu0 %v4054
        %v4481 = vpop.f32.mrb[0].mxu0
        %v4482 = vadd.f32 %v4409, %v4481
        %v4483 = vpop.f32.mrb[0].mxu0
        %v4484 = vadd.f32 %v4411, %v4483
        %v4485 = vpop.f32.mrb[0].mxu0
        %v4486 = vadd.f32 %v4413, %v4485
        %v4487 = vpop.f32.mrb[0].mxu0
        %v4488 = vadd.f32 %v4415, %v4487
        %4489 = vdwg.mxu0
        %v4490 = vadd.f32 %v4002, %v4452
        %v4491 = vadd.f32 %v4003, %v4454
        %v4492 = vadd.f32 %v4004, %v4456
        %v4493 = vadd.f32 %v4005, %v4458
        %v4494 = vadd.f32 %v4006, %v4462
        %v4495 = vadd.f32 %v4007, %v4464
        %v4496 = vadd.f32 %v4008, %v4466
        %v4497 = vadd.f32 %v4009, %v4468
        %v4498 = vadd.f32 %v4010, %v4472
        %v4499 = vadd.f32 %v4011, %v4474
        %v4500 = vadd.f32 %v4012, %v4476
        %v4501 = vadd.f32 %v4013, %v4478
        %v4502 = vadd.f32 %v4014, %v4482
        %v4503 = vadd.f32 %v4015, %v4484
        %v4504 = vadd.f32 %v4016, %v4486
        %v4505 = vadd.f32 %v4017, %v4488
        %v4506 = vld [vmem:[%s4018] sm:$0xfe]
        %v4507 = vld [vmem:[%s4018 + $0x8] sm:$0xfe]
        %v4508 = vld [vmem:[%s4018 + $0x10] sm:$0xfe]
        %v4509 = vld [vmem:[%s4018 + $0x18] sm:$0x1]
        %v4510 = vld [vmem:[%s4018 + $0x20] sm:$0x1]
        %v4511 = vld [vmem:[%s4018 + $0x28] sm:$0x1]
        %v4512 = vld [vmem:[%s4018 + $0x30] sm:$0xfe]
        %v4513 = vld [vmem:[%s4018 + $0x38] sm:$0xfe]
        %v4514 = vld [vmem:[%s4018 + $0x40] sm:$0xfe]
        %v4515 = vld [vmem:[%s4018 + $0x48] sm:$0x1]
        %v4516 = vld [vmem:[%s4018 + $0x50] sm:$0x1]
        %v4517 = vld [vmem:[%s4018 + $0x58] sm:$0x1]
        %v4518 = vld [vmem:[%s4018 + $0x60] sm:$0xfe]
        %v4519 = vld [vmem:[%s4018 + $0x68] sm:$0xfe]
        %v4520 = vld [vmem:[%s4018 + $0x70] sm:$0xfe]
        %v4521 = vld [vmem:[%s4018 + $0x78] sm:$0x1]
        %v4522 = vld [vmem:[%s4018 + $0x80] sm:$0x1]
        %v4523 = vld [vmem:[%s4018 + $0x88] sm:$0x1]
        %v4524 = vld [vmem:[%s4018 + $0x90] sm:$0xfe]
        %v4525 = vld [vmem:[%s4018 + $0x98] sm:$0xfe]
        %v4526 = vld [vmem:[%s4018 + $0xa0] sm:$0xfe]
        %v4527 = vld [vmem:[%s4018 + $0xa8] sm:$0x1]
        %v4528 = vld [vmem:[%s4018 + $0xb0] sm:$0x1]
        %v4529 = vld [vmem:[%s4018 + $0xb8] sm:$0x1]
        %v4530 = vld [vmem:[%s4018 + $0xc0] sm:$0xfe]
        %v4531 = vld [vmem:[%s4018 + $0xc8] sm:$0xfe]
        %v4532 = vld [vmem:[%s4018 + $0xd0] sm:$0xfe]
        %v4533 = vld [vmem:[%s4018 + $0xd8] sm:$0x1]
        %v4534 = vld [vmem:[%s4018 + $0xe0] sm:$0x1]
        %v4535 = vld [vmem:[%s4018 + $0xe8] sm:$0x1]
        %v4536 = vld [vmem:[%s4018 + $0xf0] sm:$0xfe]
        %v4537 = vld [vmem:[%s4018 + $0xf8] sm:$0xfe]
        %v4538 = vld [vmem:[%s4018 + $0x100] sm:$0xfe]
        %v4539 = vld [vmem:[%s4018 + $0x108] sm:$0x1]
        %v4540 = vld [vmem:[%s4018 + $0x110] sm:$0x1]
        %v4541 = vld [vmem:[%s4018 + $0x118] sm:$0x1]
        %v4542 = vld [vmem:[%s4018 + $0x120] sm:$0xfe]
        %v4543 = vld [vmem:[%s4018 + $0x128] sm:$0xfe]
        %v4544 = vld [vmem:[%s4018 + $0x130] sm:$0xfe]
        %v4545 = vld [vmem:[%s4018 + $0x138] sm:$0x1]
        %v4546 = vld [vmem:[%s4018 + $0x140] sm:$0x1]
        %v4547 = vld [vmem:[%s4018 + $0x148] sm:$0x1]
        %v4548 = vld [vmem:[%s4018 + $0x150] sm:$0xfe]
        %v4549 = vld [vmem:[%s4018 + $0x158] sm:$0xfe]
        %v4550 = vld [vmem:[%s4018 + $0x160] sm:$0xfe]
        %v4551 = vld [vmem:[%s4018 + $0x168] sm:$0x1]
        %v4552 = vld [vmem:[%s4018 + $0x170] sm:$0x1]
        %v4553 = vld [vmem:[%s4018 + $0x178] sm:$0x1]
        %v4602 = vrot.slane %v4506, 1
        %v4603 = vrot.slane %v4509, 1
        %v4604 = vsel %vm635, %v4602, %v4603
        %v4605 = vrot.slane %v4507, 1
        %v4606 = vrot.slane %v4510, 1
        %v4607 = vsel %vm635, %v4605, %v4606
        %v4608 = vrot.slane %v4508, 1
        %v4609 = vrot.slane %v4511, 1
        %v4610 = vsel %vm635, %v4608, %v4609
        %v4611 = vrot.slane %v4512, 1
        %v4612 = vrot.slane %v4515, 1
        %v4613 = vsel %vm635, %v4611, %v4612
        %v4614 = vrot.slane %v4513, 1
        %v4615 = vrot.slane %v4516, 1
        %v4616 = vsel %vm635, %v4614, %v4615
        %v4617 = vrot.slane %v4514, 1
        %v4618 = vrot.slane %v4517, 1
        %v4619 = vsel %vm635, %v4617, %v4618
        %v4620 = vrot.slane %v4518, 1
        %v4621 = vrot.slane %v4521, 1
        %v4622 = vsel %vm635, %v4620, %v4621
        %v4623 = vrot.slane %v4519, 1
        %v4624 = vrot.slane %v4522, 1
        %v4625 = vsel %vm635, %v4623, %v4624
        %v4626 = vrot.slane %v4520, 1
        %v4627 = vrot.slane %v4523, 1
        %v4628 = vsel %vm635, %v4626, %v4627
        %v4629 = vrot.slane %v4524, 1
        %v4630 = vrot.slane %v4527, 1
        %v4631 = vsel %vm635, %v4629, %v4630
        %v4632 = vrot.slane %v4525, 1
        %v4633 = vrot.slane %v4528, 1
        %v4634 = vsel %vm635, %v4632, %v4633
        %v4635 = vrot.slane %v4526, 1
        %v4636 = vrot.slane %v4529, 1
        %v4637 = vsel %vm635, %v4635, %v4636
        %v4638 = vrot.slane %v4530, 1
        %v4639 = vrot.slane %v4533, 1
        %v4640 = vsel %vm635, %v4638, %v4639
        %v4641 = vrot.slane %v4531, 1
        %v4642 = vrot.slane %v4534, 1
        %v4643 = vsel %vm635, %v4641, %v4642
        %v4644 = vrot.slane %v4532, 1
        %v4645 = vrot.slane %v4535, 1
        %v4646 = vsel %vm635, %v4644, %v4645
        %v4647 = vrot.slane %v4536, 1
        %v4648 = vrot.slane %v4539, 1
        %v4649 = vsel %vm635, %v4647, %v4648
        %v4650 = vrot.slane %v4537, 1
        %v4651 = vrot.slane %v4540, 1
        %v4652 = vsel %vm635, %v4650, %v4651
        %v4653 = vrot.slane %v4538, 1
        %v4654 = vrot.slane %v4541, 1
        %v4655 = vsel %vm635, %v4653, %v4654
        %v4656 = vrot.slane %v4542, 1
        %v4657 = vrot.slane %v4545, 1
        %v4658 = vsel %vm635, %v4656, %v4657
        %v4659 = vrot.slane %v4543, 1
        %v4660 = vrot.slane %v4546, 1
        %v4661 = vsel %vm635, %v4659, %v4660
        %v4662 = vrot.slane %v4544, 1
        %v4663 = vrot.slane %v4547, 1
        %v4664 = vsel %vm635, %v4662, %v4663
        %v4665 = vrot.slane %v4548, 1
        %v4666 = vrot.slane %v4551, 1
        %v4667 = vsel %vm635, %v4665, %v4666
        %v4668 = vrot.slane %v4549, 1
        %v4669 = vrot.slane %v4552, 1
        %v4670 = vsel %vm635, %v4668, %v4669
        %v4671 = vrot.slane %v4550, 1
        %v4672 = vrot.slane %v4553, 1
        %v4673 = vsel %vm635, %v4671, %v4672
        %v4698 = vpack.c.bf16 %v4613, %v4604
        %v4699 = vpack.c.bf16 %v4616, %v4607
        %v4700 = vpack.c.bf16 %v4619, %v4610
        %v4701 = vpack.c.bf16 %v4631, %v4622
        %v4702 = vpack.c.bf16 %v4634, %v4625
        %v4703 = vpack.c.bf16 %v4637, %v4628
        %v4704 = vpack.c.bf16 %v4649, %v4640
        %v4705 = vpack.c.bf16 %v4652, %v4643
        %v4706 = vpack.c.bf16 %v4655, %v4646
        %v4707 = vpack.c.bf16 %v4667, %v4658
        %v4708 = vpack.c.bf16 %v4670, %v4661
        %v4709 = vpack.c.bf16 %v4673, %v4664
        %s4710 = scalar_lea.vmem [#allocation6], 2688
        %v4711 = vld [vmem:[%s4710] sm:$0xff]
        %v4712 = vld [vmem:[%s4710 + $0x8] sm:$0xff]
        %v4713 = vld [vmem:[%s4710 + $0x10] sm:$0xff]
        %v4714 = vld [vmem:[%s4710 + $0x18] sm:$0xff]
        %v4715 = vld [vmem:[%s4710 + $0x20] sm:$0xff]
        %v4716 = vld [vmem:[%s4710 + $0x28] sm:$0xff]
        %v4717 = vld [vmem:[%s4710 + $0x30] sm:$0xff]
        %v4718 = vld [vmem:[%s4710 + $0x38] sm:$0xff]
        %v4719 = vld [vmem:[%s4710 + $0x40] sm:$0xff]
        %v4720 = vld [vmem:[%s4710 + $0x48] sm:$0xff]
        %v4721 = vld [vmem:[%s4710 + $0x50] sm:$0xff]
        %v4722 = vld [vmem:[%s4710 + $0x58] sm:$0xff]
        %v4723 = vld [vmem:[%s4710 + $0x60] sm:$0xff]
        %v4724 = vld [vmem:[%s4710 + $0x68] sm:$0xff]
        %v4725 = vld [vmem:[%s4710 + $0x70] sm:$0xff]
        %v4726 = vld [vmem:[%s4710 + $0x78] sm:$0xff]
        %v4727 = vld [vmem:[%s4710 + $0x80] sm:$0xff]
        %v4728 = vld [vmem:[%s4710 + $0x88] sm:$0xff]
        %v4729 = vld [vmem:[%s4710 + $0x90] sm:$0xff]
        %v4730 = vld [vmem:[%s4710 + $0x98] sm:$0xff]
        %v4731 = vld [vmem:[%s4710 + $0xa0] sm:$0xff]
        %v4732 = vld [vmem:[%s4710 + $0xa8] sm:$0xff]
        %v4733 = vld [vmem:[%s4710 + $0xb0] sm:$0xff]
        %v4734 = vld [vmem:[%s4710 + $0xb8] sm:$0xff]
        %v4735 = vld [vmem:[%s4710 + $0xc0] sm:$0xff]
        %v4736 = vld [vmem:[%s4710 + $0xc8] sm:$0xff]
        %v4737 = vld [vmem:[%s4710 + $0xd0] sm:$0xff]
        %v4738 = vld [vmem:[%s4710 + $0xd8] sm:$0xff]
        %v4739 = vld [vmem:[%s4710 + $0xe0] sm:$0xff]
        %v4740 = vld [vmem:[%s4710 + $0xe8] sm:$0xff]
        %v4741 = vld [vmem:[%s4710 + $0xf0] sm:$0xff]
        %v4742 = vld [vmem:[%s4710 + $0xf8] sm:$0xff]
        %v4743 = vld [vmem:[%s4710 + $0x100] sm:$0xff]
        %v4744 = vld [vmem:[%s4710 + $0x108] sm:$0xff]
        %v4745 = vld [vmem:[%s4710 + $0x110] sm:$0xff]
        %v4746 = vld [vmem:[%s4710 + $0x118] sm:$0xff]
        %v4747 = vld [vmem:[%s4710 + $0x120] sm:$0xff]
        %v4748 = vld [vmem:[%s4710 + $0x128] sm:$0xff]
        %v4749 = vld [vmem:[%s4710 + $0x130] sm:$0xff]
        %v4750 = vld [vmem:[%s4710 + $0x138] sm:$0xff]
        %v4751 = vld [vmem:[%s4710 + $0x140] sm:$0xff]
        %v4752 = vld [vmem:[%s4710 + $0x148] sm:$0xff]
        %v4753 = vld [vmem:[%s4710 + $0x150] sm:$0xff]
        %v4754 = vld [vmem:[%s4710 + $0x158] sm:$0xff]
        %v4755 = vld [vmem:[%s4710 + $0x160] sm:$0xff]
        %v4756 = vld [vmem:[%s4710 + $0x168] sm:$0xff]
        %v4757 = vld [vmem:[%s4710 + $0x170] sm:$0xff]
        %v4758 = vld [vmem:[%s4710 + $0x178] sm:$0xff]
        %v4807 = vunpack.c.l.b16 %v4711
        %v4808 = vunpack.c.h.b16 %v4711
        %v4809 = vunpack.c.l.b16 %v4712
        %v4810 = vunpack.c.h.b16 %v4712
        %v4811 = vunpack.c.l.b16 %v4713
        %v4812 = vunpack.c.h.b16 %v4713
        %v4813 = vunpack.c.l.b16 %v4714
        %v4814 = vunpack.c.h.b16 %v4714
        %v4815 = vunpack.c.l.b16 %v4715
        %v4816 = vunpack.c.h.b16 %v4715
        %v4817 = vunpack.c.l.b16 %v4716
        %v4818 = vunpack.c.h.b16 %v4716
        %v4819 = vunpack.c.l.b16 %v4717
        %v4820 = vunpack.c.h.b16 %v4717
        %v4821 = vunpack.c.l.b16 %v4718
        %v4822 = vunpack.c.h.b16 %v4718
        %v4823 = vunpack.c.l.b16 %v4719
        %v4824 = vunpack.c.h.b16 %v4719
        %v4825 = vunpack.c.l.b16 %v4720
        %v4826 = vunpack.c.h.b16 %v4720
        %v4827 = vunpack.c.l.b16 %v4721
        %v4828 = vunpack.c.h.b16 %v4721
        %v4829 = vunpack.c.l.b16 %v4722
        %v4830 = vunpack.c.h.b16 %v4722
        %v4831 = vunpack.c.l.b16 %v4723
        %v4832 = vunpack.c.h.b16 %v4723
        %v4833 = vunpack.c.l.b16 %v4724
        %v4834 = vunpack.c.h.b16 %v4724
        %v4835 = vunpack.c.l.b16 %v4725
        %v4836 = vunpack.c.h.b16 %v4725
        %v4837 = vunpack.c.l.b16 %v4726
        %v4838 = vunpack.c.h.b16 %v4726
        %v4839 = vunpack.c.l.b16 %v4727
        %v4840 = vunpack.c.h.b16 %v4727
        %v4841 = vunpack.c.l.b16 %v4728
        %v4842 = vunpack.c.h.b16 %v4728
        %v4843 = vunpack.c.l.b16 %v4729
        %v4844 = vunpack.c.h.b16 %v4729
        %v4845 = vunpack.c.l.b16 %v4730
        %v4846 = vunpack.c.h.b16 %v4730
        %v4847 = vunpack.c.l.b16 %v4731
        %v4848 = vunpack.c.h.b16 %v4731
        %v4849 = vunpack.c.l.b16 %v4732
        %v4850 = vunpack.c.h.b16 %v4732
        %v4851 = vunpack.c.l.b16 %v4733
        %v4852 = vunpack.c.h.b16 %v4733
        %v4853 = vunpack.c.l.b16 %v4734
        %v4854 = vunpack.c.h.b16 %v4734
        %v4855 = vunpack.c.l.b16 %v4735
        %v4856 = vunpack.c.h.b16 %v4735
        %v4857 = vunpack.c.l.b16 %v4736
        %v4858 = vunpack.c.h.b16 %v4736
        %v4859 = vunpack.c.l.b16 %v4737
        %v4860 = vunpack.c.h.b16 %v4737
        %v4861 = vunpack.c.l.b16 %v4738
        %v4862 = vunpack.c.h.b16 %v4738
        %v4863 = vunpack.c.l.b16 %v4739
        %v4864 = vunpack.c.h.b16 %v4739
        %v4865 = vunpack.c.l.b16 %v4740
        %v4866 = vunpack.c.h.b16 %v4740
        %v4867 = vunpack.c.l.b16 %v4741
        %v4868 = vunpack.c.h.b16 %v4741
        %v4869 = vunpack.c.l.b16 %v4742
        %v4870 = vunpack.c.h.b16 %v4742
        %v4871 = vunpack.c.l.b16 %v4743
        %v4872 = vunpack.c.h.b16 %v4743
        %v4873 = vunpack.c.l.b16 %v4744
        %v4874 = vunpack.c.h.b16 %v4744
        %v4875 = vunpack.c.l.b16 %v4745
        %v4876 = vunpack.c.h.b16 %v4745
        %v4877 = vunpack.c.l.b16 %v4746
        %v4878 = vunpack.c.h.b16 %v4746
        %v4879 = vunpack.c.l.b16 %v4747
        %v4880 = vunpack.c.h.b16 %v4747
        %v4881 = vunpack.c.l.b16 %v4748
        %v4882 = vunpack.c.h.b16 %v4748
        %v4883 = vunpack.c.l.b16 %v4749
        %v4884 = vunpack.c.h.b16 %v4749
        %v4885 = vunpack.c.l.b16 %v4750
        %v4886 = vunpack.c.h.b16 %v4750
        %v4887 = vunpack.c.l.b16 %v4751
        %v4888 = vunpack.c.h.b16 %v4751
        %v4889 = vunpack.c.l.b16 %v4752
        %v4890 = vunpack.c.h.b16 %v4752
        %v4891 = vunpack.c.l.b16 %v4753
        %v4892 = vunpack.c.h.b16 %v4753
        %v4893 = vunpack.c.l.b16 %v4754
        %v4894 = vunpack.c.h.b16 %v4754
        %v4895 = vunpack.c.l.b16 %v4755
        %v4896 = vunpack.c.h.b16 %v4755
        %v4897 = vunpack.c.l.b16 %v4756
        %v4898 = vunpack.c.h.b16 %v4756
        %v4899 = vunpack.c.l.b16 %v4757
        %v4900 = vunpack.c.h.b16 %v4757
        %v4901 = vunpack.c.l.b16 %v4758
        %v4902 = vunpack.c.h.b16 %v4758
        %v4903 = vpack.c.b16 %v4809, %v4807
        %v4904 = vpack.c.b16 %v4810, %v4808
        %v4905 = vpack.c.b16 %v4813, %v4811
        %v4906 = vpack.c.b16 %v4814, %v4812
        %v4907 = vpack.c.b16 %v4817, %v4815
        %v4908 = vpack.c.b16 %v4818, %v4816
        %v4909 = vpack.c.b16 %v4821, %v4819
        %v4910 = vpack.c.b16 %v4822, %v4820
        %v4911 = vpack.c.b16 %v4825, %v4823
        %v4912 = vpack.c.b16 %v4826, %v4824
        %v4913 = vpack.c.b16 %v4829, %v4827
        %v4914 = vpack.c.b16 %v4830, %v4828
        %v4915 = vpack.c.b16 %v4833, %v4831
        %v4916 = vpack.c.b16 %v4834, %v4832
        %v4917 = vpack.c.b16 %v4837, %v4835
        %v4918 = vpack.c.b16 %v4838, %v4836
        %v4919 = vpack.c.b16 %v4841, %v4839
        %v4920 = vpack.c.b16 %v4842, %v4840
        %v4921 = vpack.c.b16 %v4845, %v4843
        %v4922 = vpack.c.b16 %v4846, %v4844
        %v4923 = vpack.c.b16 %v4849, %v4847
        %v4924 = vpack.c.b16 %v4850, %v4848
        %v4925 = vpack.c.b16 %v4853, %v4851
        %v4926 = vpack.c.b16 %v4854, %v4852
        %v4927 = vpack.c.b16 %v4857, %v4855
        %v4928 = vpack.c.b16 %v4858, %v4856
        %v4929 = vpack.c.b16 %v4861, %v4859
        %v4930 = vpack.c.b16 %v4862, %v4860
        %v4931 = vpack.c.b16 %v4865, %v4863
        %v4932 = vpack.c.b16 %v4866, %v4864
        %v4933 = vpack.c.b16 %v4869, %v4867
        %v4934 = vpack.c.b16 %v4870, %v4868
        %v4935 = vpack.c.b16 %v4873, %v4871
        %v4936 = vpack.c.b16 %v4874, %v4872
        %v4937 = vpack.c.b16 %v4877, %v4875
        %v4938 = vpack.c.b16 %v4878, %v4876
        %v4939 = vpack.c.b16 %v4881, %v4879
        %v4940 = vpack.c.b16 %v4882, %v4880
        %v4941 = vpack.c.b16 %v4885, %v4883
        %v4942 = vpack.c.b16 %v4886, %v4884
        %v4943 = vpack.c.b16 %v4889, %v4887
        %v4944 = vpack.c.b16 %v4890, %v4888
        %v4945 = vpack.c.b16 %v4893, %v4891
        %v4946 = vpack.c.b16 %v4894, %v4892
        %v4947 = vpack.c.b16 %v4897, %v4895
        %v4948 = vpack.c.b16 %v4898, %v4896
        %v4949 = vpack.c.b16 %v4901, %v4899
        %v4950 = vpack.c.b16 %v4902, %v4900
        %4999 = vmatprep.subr.bf16.mxu0 %v4904
        %5000 = vmatpush1.bf16.msra.mxu0 %v4903
        %5001 = vmatprep.subr.bf16.mxu0 %v4906
        %5002 = vmatpush1.bf16.msra.mxu0 %v4905
        %5003 = vmatprep.subr.bf16.mxu0 %v4908
        %5004 = vmatpush1.bf16.msra.mxu0 %v4907
        %5005 = vmatprep.subr.bf16.mxu0 %v4910
        %5006 = vmatpush1.bf16.msra.mxu0 %v4909
        %5007 = vmatprep.subr.bf16.mxu0 %v4912
        %5008 = vmatpush1.bf16.msra.mxu0 %v4911
        %5009 = vmatprep.subr.bf16.mxu0 %v4914
        %5010 = vmatpush1.bf16.msra.mxu0 %v4913
        %5011 = vmatprep.subr.bf16.mxu0 %v4916
        %5012 = vmatpush1.bf16.msra.mxu0 %v4915
        %5013 = vmatprep.subr.bf16.mxu0 %v4918
        %5014 = vmatpush1.bf16.msra.mxu0 %v4917
        %5015 = vmatprep.subr.bf16.mxu0 %v4920
        %5016 = vmatpush1.bf16.msra.mxu0 %v4919
        %5017 = vmatprep.subr.bf16.mxu0 %v4922
        %5018 = vmatpush1.bf16.msra.mxu0 %v4921
        %5019 = vmatprep.subr.bf16.mxu0 %v4924
        %5020 = vmatpush1.bf16.msra.mxu0 %v4923
        %5021 = vmatprep.subr.bf16.mxu0 %v4926
        %5022 = vmatpush1.bf16.msra.mxu0 %v4925
        %5023 = vmatprep.subr.bf16.mxu0 %v4928
        %5024 = vmatpush1.bf16.msra.mxu0 %v4927
        %5025 = vmatprep.subr.bf16.mxu0 %v4930
        %5026 = vmatpush1.bf16.msra.mxu0 %v4929
        %5027 = vmatprep.subr.bf16.mxu0 %v4932
        %5028 = vmatpush1.bf16.msra.mxu0 %v4931
        %5029 = vmatprep.subr.bf16.mxu0 %v4934
        %5030 = vmatpush1.bf16.msra.mxu0 %v4933
        %5031 = vmatprep.mubr.bf16.mxu0 %v4699
        %5032 = vmatmul.mubr.bf16.gmra.mrb[0].mxu0 %v4698
        %v5033 = vpop.f32.mrb[0].mxu0
        %v5034 = vadd.f32 0.0, %v5033
        %v5035 = vpop.f32.mrb[0].mxu0
        %v5036 = vadd.f32 0.0, %v5035
        %v5037 = vpop.f32.mrb[0].mxu0
        %v5038 = vadd.f32 0.0, %v5037
        %v5039 = vpop.f32.mrb[0].mxu0
        %v5040 = vadd.f32 0.0, %v5039
        %5041 = vmatprep.mubr.bf16.mxu0 %v4702
        %5042 = vmatmul.mubr.bf16.gmra.mrb[0].mxu0 %v4701
        %v5043 = vpop.f32.mrb[0].mxu0
        %v5044 = vadd.f32 0.0, %v5043
        %v5045 = vpop.f32.mrb[0].mxu0
        %v5046 = vadd.f32 0.0, %v5045
        %v5047 = vpop.f32.mrb[0].mxu0
        %v5048 = vadd.f32 0.0, %v5047
        %v5049 = vpop.f32.mrb[0].mxu0
        %v5050 = vadd.f32 0.0, %v5049
        %5051 = vmatprep.mubr.bf16.mxu0 %v4705
        %5052 = vmatmul.mubr.bf16.gmra.mrb[0].mxu0 %v4704
        %v5053 = vpop.f32.mrb[0].mxu0
        %v5054 = vadd.f32 0.0, %v5053
        %v5055 = vpop.f32.mrb[0].mxu0
        %v5056 = vadd.f32 0.0, %v5055
        %v5057 = vpop.f32.mrb[0].mxu0
        %v5058 = vadd.f32 0.0, %v5057
        %v5059 = vpop.f32.mrb[0].mxu0
        %v5060 = vadd.f32 0.0, %v5059
        %5061 = vmatprep.mubr.bf16.mxu0 %v4708
        %5062 = vmatmul.mubr.bf16.gmra.mrb[0].mxu0 %v4707
        %v5063 = vpop.f32.mrb[0].mxu0
        %v5064 = vadd.f32 0.0, %v5063
        %v5065 = vpop.f32.mrb[0].mxu0
        %v5066 = vadd.f32 0.0, %v5065
        %v5067 = vpop.f32.mrb[0].mxu0
        %v5068 = vadd.f32 0.0, %v5067
        %v5069 = vpop.f32.mrb[0].mxu0
        %v5070 = vadd.f32 0.0, %v5069
        %5071 = vdwg.mxu0
        %5072 = vmatprep.subr.bf16.mxu0 %v4936
        %5073 = vmatpush1.bf16.msra.mxu0 %v4935
        %5074 = vmatprep.subr.bf16.mxu0 %v4938
        %5075 = vmatpush1.bf16.msra.mxu0 %v4937
        %5076 = vmatprep.subr.bf16.mxu0 %v4940
        %5077 = vmatpush1.bf16.msra.mxu0 %v4939
        %5078 = vmatprep.subr.bf16.mxu0 %v4942
        %5079 = vmatpush1.bf16.msra.mxu0 %v4941
        %5080 = vmatprep.subr.bf16.mxu0 %v4944
        %5081 = vmatpush1.bf16.msra.mxu0 %v4943
        %5082 = vmatprep.subr.bf16.mxu0 %v4946
        %5083 = vmatpush1.bf16.msra.mxu0 %v4945
        %5084 = vmatprep.subr.bf16.mxu0 %v4948
        %5085 = vmatpush1.bf16.msra.mxu0 %v4947
        %5086 = vmatprep.subr.bf16.mxu0 %v4950
        %5087 = vmatpush1.bf16.msra.mxu0 %v4949
        %5088 = vmatprep.subr.bf16.mxu0 0
        %5089 = vmatpush1.bf16.msra.mxu0 0
        %5090 = vmatprep.subr.bf16.mxu0 0
        %5091 = vmatpush1.bf16.msra.mxu0 0
        %5092 = vmatprep.subr.bf16.mxu0 0
        %5093 = vmatpush1.bf16.msra.mxu0 0
        %5094 = vmatprep.subr.bf16.mxu0 0
        %5095 = vmatpush1.bf16.msra.mxu0 0
        %5096 = vmatprep.subr.bf16.mxu0 0
        %5097 = vmatpush1.bf16.msra.mxu0 0
        %5098 = vmatprep.subr.bf16.mxu0 0
        %5099 = vmatpush1.bf16.msra.mxu0 0
        %5100 = vmatprep.subr.bf16.mxu0 0
        %5101 = vmatpush1.bf16.msra.mxu0 0
        %5102 = vmatprep.subr.bf16.mxu0 0
        %5103 = vmatpush1.bf16.msra.mxu0 0
        %5104 = vmatprep.mubr.bf16.mxu0 0
        %5105 = vmatmul.mubr.bf16.gmra.mrb[0].mxu0 %v4700
        %v5106 = vpop.f32.mrb[0].mxu0
        %v5107 = vadd.f32 %v5034, %v5106
        %v5108 = vpop.f32.mrb[0].mxu0
        %v5109 = vadd.f32 %v5036, %v5108
        %v5110 = vpop.f32.mrb[0].mxu0
        %v5111 = vadd.f32 %v5038, %v5110
        %v5112 = vpop.f32.mrb[0].mxu0
        %v5113 = vadd.f32 %v5040, %v5112
        %5114 = vmatprep.mubr.bf16.mxu0 0
        %5115 = vmatmul.mubr.bf16.gmra.mrb[0].mxu0 %v4703
        %v5116 = vpop.f32.mrb[0].mxu0
        %v5117 = vadd.f32 %v5044, %v5116
        %v5118 = vpop.f32.mrb[0].mxu0
        %v5119 = vadd.f32 %v5046, %v5118
        %v5120 = vpop.f32.mrb[0].mxu0
        %v5121 = vadd.f32 %v5048, %v5120
        %v5122 = vpop.f32.mrb[0].mxu0
        %v5123 = vadd.f32 %v5050, %v5122
        %5124 = vmatprep.mubr.bf16.mxu0 0
        %5125 = vmatmul.mubr.bf16.gmra.mrb[0].mxu0 %v4706
        %v5126 = vpop.f32.mrb[0].mxu0
        %v5127 = vadd.f32 %v5054, %v5126
        %v5128 = vpop.f32.mrb[0].mxu0
        %v5129 = vadd.f32 %v5056, %v5128
        %v5130 = vpop.f32.mrb[0].mxu0
        %v5131 = vadd.f32 %v5058, %v5130
        %v5132 = vpop.f32.mrb[0].mxu0
        %v5133 = vadd.f32 %v5060, %v5132
        %5134 = vmatprep.mubr.bf16.mxu0 0
        %5135 = vmatmul.mubr.bf16.gmra.mrb[0].mxu0 %v4709
        %v5136 = vpop.f32.mrb[0].mxu0
        %v5137 = vadd.f32 %v5064, %v5136
        %v5138 = vpop.f32.mrb[0].mxu0
        %v5139 = vadd.f32 %v5066, %v5138
        %v5140 = vpop.f32.mrb[0].mxu0
        %v5141 = vadd.f32 %v5068, %v5140
        %v5142 = vpop.f32.mrb[0].mxu0
        %v5143 = vadd.f32 %v5070, %v5142
        %5144 = vdwg.mxu0
        %v5145 = vadd.f32 %v4490, %v5107
        %v5146 = vadd.f32 %v4491, %v5109
        %v5147 = vadd.f32 %v4492, %v5111
        %v5148 = vadd.f32 %v4493, %v5113
        %v5149 = vadd.f32 %v4494, %v5117
        %v5150 = vadd.f32 %v4495, %v5119
        %v5151 = vadd.f32 %v4496, %v5121
        %v5152 = vadd.f32 %v4497, %v5123
        %v5153 = vadd.f32 %v4498, %v5127
        %v5154 = vadd.f32 %v4499, %v5129
        %v5155 = vadd.f32 %v4500, %v5131
        %v5156 = vadd.f32 %v4501, %v5133
        %v5157 = vadd.f32 %v4502, %v5137
        %v5158 = vadd.f32 %v4503, %v5139
        %v5159 = vadd.f32 %v4504, %v5141
        %v5160 = vadd.f32 %v4505, %v5143
        %v5161 = vld [vmem:[%s4018] sm:$0xfc]
        %v5162 = vld [vmem:[%s4018 + $0x8] sm:$0xfc]
        %v5163 = vld [vmem:[%s4018 + $0x10] sm:$0xfc]
        %v5164 = vld [vmem:[%s4018 + $0x18] sm:$0x3]
        %v5165 = vld [vmem:[%s4018 + $0x20] sm:$0x3]
        %v5166 = vld [vmem:[%s4018 + $0x28] sm:$0x3]
        %v5167 = vld [vmem:[%s4018 + $0x30] sm:$0xfc]
        %v5168 = vld [vmem:[%s4018 + $0x38] sm:$0xfc]
        %v5169 = vld [vmem:[%s4018 + $0x40] sm:$0xfc]
        %v5170 = vld [vmem:[%s4018 + $0x48] sm:$0x3]
        %v5171 = vld [vmem:[%s4018 + $0x50] sm:$0x3]
        %v5172 = vld [vmem:[%s4018 + $0x58] sm:$0x3]
        %v5173 = vld [vmem:[%s4018 + $0x60] sm:$0xfc]
        %v5174 = vld [vmem:[%s4018 + $0x68] sm:$0xfc]
        %v5175 = vld [vmem:[%s4018 + $0x70] sm:$0xfc]
        %v5176 = vld [vmem:[%s4018 + $0x78] sm:$0x3]
        %v5177 = vld [vmem:[%s4018 + $0x80] sm:$0x3]
        %v5178 = vld [vmem:[%s4018 + $0x88] sm:$0x3]
        %v5179 = vld [vmem:[%s4018 + $0x90] sm:$0xfc]
        %v5180 = vld [vmem:[%s4018 + $0x98] sm:$0xfc]
        %v5181 = vld [vmem:[%s4018 + $0xa0] sm:$0xfc]
        %v5182 = vld [vmem:[%s4018 + $0xa8] sm:$0x3]
        %v5183 = vld [vmem:[%s4018 + $0xb0] sm:$0x3]
        %v5184 = vld [vmem:[%s4018 + $0xb8] sm:$0x3]
        %v5185 = vld [vmem:[%s4018 + $0xc0] sm:$0xfc]
        %v5186 = vld [vmem:[%s4018 + $0xc8] sm:$0xfc]
        %v5187 = vld [vmem:[%s4018 + $0xd0] sm:$0xfc]
        %v5188 = vld [vmem:[%s4018 + $0xd8] sm:$0x3]
        %v5189 = vld [vmem:[%s4018 + $0xe0] sm:$0x3]
        %v5190 = vld [vmem:[%s4018 + $0xe8] sm:$0x3]
        %v5191 = vld [vmem:[%s4018 + $0xf0] sm:$0xfc]
        %v5192 = vld [vmem:[%s4018 + $0xf8] sm:$0xfc]
        %v5193 = vld [vmem:[%s4018 + $0x100] sm:$0xfc]
        %v5194 = vld [vmem:[%s4018 + $0x108] sm:$0x3]
        %v5195 = vld [vmem:[%s4018 + $0x110] sm:$0x3]
        %v5196 = vld [vmem:[%s4018 + $0x118] sm:$0x3]
        %v5197 = vld [vmem:[%s4018 + $0x120] sm:$0xfc]
        %v5198 = vld [vmem:[%s4018 + $0x128] sm:$0xfc]
        %v5199 = vld [vmem:[%s4018 + $0x130] sm:$0xfc]
        %v5200 = vld [vmem:[%s4018 + $0x138] sm:$0x3]
        %v5201 = vld [vmem:[%s4018 + $0x140] sm:$0x3]
        %v5202 = vld [vmem:[%s4018 + $0x148] sm:$0x3]
        %v5203 = vld [vmem:[%s4018 + $0x150] sm:$0xfc]
        %v5204 = vld [vmem:[%s4018 + $0x158] sm:$0xfc]
        %v5205 = vld [vmem:[%s4018 + $0x160] sm:$0xfc]
        %v5206 = vld [vmem:[%s4018 + $0x168] sm:$0x3]
        %v5207 = vld [vmem:[%s4018 + $0x170] sm:$0x3]
        %v5208 = vld [vmem:[%s4018 + $0x178] sm:$0x3]
        %v5257 = vrot.slane %v5161, 2
        %v5258 = vrot.slane %v5164, 2
        %v5259 = vsel %vm1661, %v5257, %v5258
        %v5260 = vrot.slane %v5162, 2
        %v5261 = vrot.slane %v5165, 2
        %v5262 = vsel %vm1661, %v5260, %v5261
        %v5263 = vrot.slane %v5163, 2
        %v5264 = vrot.slane %v5166, 2
        %v5265 = vsel %vm1661, %v5263, %v5264
        %v5266 = vrot.slane %v5167, 2
        %v5267 = vrot.slane %v5170, 2
        %v5268 = vsel %vm1661, %v5266, %v5267
        %v5269 = vrot.slane %v5168, 2
        %v5270 = vrot.slane %v5171, 2
        %v5271 = vsel %vm1661, %v5269, %v5270
        %v5272 = vrot.slane %v5169, 2
        %v5273 = vrot.slane %v5172, 2
        %v5274 = vsel %vm1661, %v5272, %v5273
        %v5275 = vrot.slane %v5173, 2
        %v5276 = vrot.slane %v5176, 2
        %v5277 = vsel %vm1661, %v5275, %v5276
        %v5278 = vrot.slane %v5174, 2
        %v5279 = vrot.slane %v5177, 2
        %v5280 = vsel %vm1661, %v5278, %v5279
        %v5281 = vrot.slane %v5175, 2
        %v5282 = vrot.slane %v5178, 2
        %v5283 = vsel %vm1661, %v5281, %v5282
        %v5284 = vrot.slane %v5179, 2
        %v5285 = vrot.slane %v5182, 2
        %v5286 = vsel %vm1661, %v5284, %v5285
        %v5287 = vrot.slane %v5180, 2
        %v5288 = vrot.slane %v5183, 2
        %v5289 = vsel %vm1661, %v5287, %v5288
        %v5290 = vrot.slane %v5181, 2
        %v5291 = vrot.slane %v5184, 2
        %v5292 = vsel %vm1661, %v5290, %v5291
        %v5293 = vrot.slane %v5185, 2
        %v5294 = vrot.slane %v5188, 2
        %v5295 = vsel %vm1661, %v5293, %v5294
        %v5296 = vrot.slane %v5186, 2
        %v5297 = vrot.slane %v5189, 2
        %v5298 = vsel %vm1661, %v5296, %v5297
        %v5299 = vrot.slane %v5187, 2
        %v5300 = vrot.slane %v5190, 2
        %v5301 = vsel %vm1661, %v5299, %v5300
        %v5302 = vrot.slane %v5191, 2
        %v5303 = vrot.slane %v5194, 2
        %v5304 = vsel %vm1661, %v5302, %v5303
        %v5305 = vrot.slane %v5192, 2
        %v5306 = vrot.slane %v5195, 2
        %v5307 = vsel %vm1661, %v5305, %v5306
        %v5308 = vrot.slane %v5193, 2
        %v5309 = vrot.slane %v5196, 2
        %v5310 = vsel %vm1661, %v5308, %v5309
        %v5311 = vrot.slane %v5197, 2
        %v5312 = vrot.slane %v5200, 2
        %v5313 = vsel %vm1661, %v5311, %v5312
        %v5314 = vrot.slane %v5198, 2
        %v5315 = vrot.slane %v5201, 2
        %v5316 = vsel %vm1661, %v5314, %v5315
        %v5317 = vrot.slane %v5199, 2
        %v5318 = vrot.slane %v5202, 2
        %v5319 = vsel %vm1661, %v5317, %v5318
        %v5320 = vrot.slane %v5203, 2
        %v5321 = vrot.slane %v5206, 2
        %v5322 = vsel %vm1661, %v5320, %v5321
        %v5323 = vrot.slane %v5204, 2
        %v5324 = vrot.slane %v5207, 2
        %v5325 = vsel %vm1661, %v5323, %v5324
        %v5326 = vrot.slane %v5205, 2
        %v5327 = vrot.slane %v5208, 2
        %v5328 = vsel %vm1661, %v5326, %v5327
        %v5353 = vpack.c.bf16 %v5268, %v5259
        %v5354 = vpack.c.bf16 %v5271, %v5262
        %v5355 = vpack.c.bf16 %v5274, %v5265
        %v5356 = vpack.c.bf16 %v5286, %v5277
        %v5357 = vpack.c.bf16 %v5289, %v5280
        %v5358 = vpack.c.bf16 %v5292, %v5283
        %v5359 = vpack.c.bf16 %v5304, %v5295
        %v5360 = vpack.c.bf16 %v5307, %v5298
        %v5361 = vpack.c.bf16 %v5310, %v5301
        %v5362 = vpack.c.bf16 %v5322, %v5313
        %v5363 = vpack.c.bf16 %v5325, %v5316
        %v5364 = vpack.c.bf16 %v5328, %v5319
        %s5365 = scalar_lea.vmem [#allocation6], 3072
        %v5366 = vld [vmem:[%s5365] sm:$0xff]
        %v5367 = vld [vmem:[%s5365 + $0x8] sm:$0xff]
        %v5368 = vld [vmem:[%s5365 + $0x10] sm:$0xff]
        %v5369 = vld [vmem:[%s5365 + $0x18] sm:$0xff]
        %v5370 = vld [vmem:[%s5365 + $0x20] sm:$0xff]
        %v5371 = vld [vmem:[%s5365 + $0x28] sm:$0xff]
        %v5372 = vld [vmem:[%s5365 + $0x30] sm:$0xff]
        %v5373 = vld [vmem:[%s5365 + $0x38] sm:$0xff]
        %v5374 = vld [vmem:[%s5365 + $0x40] sm:$0xff]
        %v5375 = vld [vmem:[%s5365 + $0x48] sm:$0xff]
        %v5376 = vld [vmem:[%s5365 + $0x50] sm:$0xff]
        %v5377 = vld [vmem:[%s5365 + $0x58] sm:$0xff]
        %v5378 = vld [vmem:[%s5365 + $0x60] sm:$0xff]
        %v5379 = vld [vmem:[%s5365 + $0x68] sm:$0xff]
        %v5380 = vld [vmem:[%s5365 + $0x70] sm:$0xff]
        %v5381 = vld [vmem:[%s5365 + $0x78] sm:$0xff]
        %v5382 = vld [vmem:[%s5365 + $0x80] sm:$0xff]
        %v5383 = vld [vmem:[%s5365 + $0x88] sm:$0xff]
        %v5384 = vld [vmem:[%s5365 + $0x90] sm:$0xff]
        %v5385 = vld [vmem:[%s5365 + $0x98] sm:$0xff]
        %v5386 = vld [vmem:[%s5365 + $0xa0] sm:$0xff]
        %v5387 = vld [vmem:[%s5365 + $0xa8] sm:$0xff]
        %v5388 = vld [vmem:[%s5365 + $0xb0] sm:$0xff]
        %v5389 = vld [vmem:[%s5365 + $0xb8] sm:$0xff]
        %v5390 = vld [vmem:[%s5365 + $0xc0] sm:$0xff]
        %v5391 = vld [vmem:[%s5365 + $0xc8] sm:$0xff]
        %v5392 = vld [vmem:[%s5365 + $0xd0] sm:$0xff]
        %v5393 = vld [vmem:[%s5365 + $0xd8] sm:$0xff]
        %v5394 = vld [vmem:[%s5365 + $0xe0] sm:$0xff]
        %v5395 = vld [vmem:[%s5365 + $0xe8] sm:$0xff]
        %v5396 = vld [vmem:[%s5365 + $0xf0] sm:$0xff]
        %v5397 = vld [vmem:[%s5365 + $0xf8] sm:$0xff]
        %v5398 = vld [vmem:[%s5365 + $0x100] sm:$0xff]
        %v5399 = vld [vmem:[%s5365 + $0x108] sm:$0xff]
        %v5400 = vld [vmem:[%s5365 + $0x110] sm:$0xff]
        %v5401 = vld [vmem:[%s5365 + $0x118] sm:$0xff]
        %v5402 = vld [vmem:[%s5365 + $0x120] sm:$0xff]
        %v5403 = vld [vmem:[%s5365 + $0x128] sm:$0xff]
        %v5404 = vld [vmem:[%s5365 + $0x130] sm:$0xff]
        %v5405 = vld [vmem:[%s5365 + $0x138] sm:$0xff]
        %v5406 = vld [vmem:[%s5365 + $0x140] sm:$0xff]
        %v5407 = vld [vmem:[%s5365 + $0x148] sm:$0xff]
        %v5408 = vld [vmem:[%s5365 + $0x150] sm:$0xff]
        %v5409 = vld [vmem:[%s5365 + $0x158] sm:$0xff]
        %v5410 = vld [vmem:[%s5365 + $0x160] sm:$0xff]
        %v5411 = vld [vmem:[%s5365 + $0x168] sm:$0xff]
        %v5412 = vld [vmem:[%s5365 + $0x170] sm:$0xff]
        %v5413 = vld [vmem:[%s5365 + $0x178] sm:$0xff]
        %v5462 = vunpack.c.l.b16 %v5366
        %v5463 = vunpack.c.h.b16 %v5366
        %v5464 = vunpack.c.l.b16 %v5367
        %v5465 = vunpack.c.h.b16 %v5367
        %v5466 = vunpack.c.l.b16 %v5368
        %v5467 = vunpack.c.h.b16 %v5368
        %v5468 = vunpack.c.l.b16 %v5369
        %v5469 = vunpack.c.h.b16 %v5369
        %v5470 = vunpack.c.l.b16 %v5370
        %v5471 = vunpack.c.h.b16 %v5370
        %v5472 = vunpack.c.l.b16 %v5371
        %v5473 = vunpack.c.h.b16 %v5371
        %v5474 = vunpack.c.l.b16 %v5372
        %v5475 = vunpack.c.h.b16 %v5372
        %v5476 = vunpack.c.l.b16 %v5373
        %v5477 = vunpack.c.h.b16 %v5373
        %v5478 = vunpack.c.l.b16 %v5374
        %v5479 = vunpack.c.h.b16 %v5374
        %v5480 = vunpack.c.l.b16 %v5375
        %v5481 = vunpack.c.h.b16 %v5375
        %v5482 = vunpack.c.l.b16 %v5376
        %v5483 = vunpack.c.h.b16 %v5376
        %v5484 = vunpack.c.l.b16 %v5377
        %v5485 = vunpack.c.h.b16 %v5377
        %v5486 = vunpack.c.l.b16 %v5378
        %v5487 = vunpack.c.h.b16 %v5378
        %v5488 = vunpack.c.l.b16 %v5379
        %v5489 = vunpack.c.h.b16 %v5379
        %v5490 = vunpack.c.l.b16 %v5380
        %v5491 = vunpack.c.h.b16 %v5380
        %v5492 = vunpack.c.l.b16 %v5381
        %v5493 = vunpack.c.h.b16 %v5381
        %v5494 = vunpack.c.l.b16 %v5382
        %v5495 = vunpack.c.h.b16 %v5382
        %v5496 = vunpack.c.l.b16 %v5383
        %v5497 = vunpack.c.h.b16 %v5383
        %v5498 = vunpack.c.l.b16 %v5384
        %v5499 = vunpack.c.h.b16 %v5384
        %v5500 = vunpack.c.l.b16 %v5385
        %v5501 = vunpack.c.h.b16 %v5385
        %v5502 = vunpack.c.l.b16 %v5386
        %v5503 = vunpack.c.h.b16 %v5386
        %v5504 = vunpack.c.l.b16 %v5387
        %v5505 = vunpack.c.h.b16 %v5387
        %v5506 = vunpack.c.l.b16 %v5388
        %v5507 = vunpack.c.h.b16 %v5388
        %v5508 = vunpack.c.l.b16 %v5389
        %v5509 = vunpack.c.h.b16 %v5389
        %v5510 = vunpack.c.l.b16 %v5390
        %v5511 = vunpack.c.h.b16 %v5390
        %v5512 = vunpack.c.l.b16 %v5391
        %v5513 = vunpack.c.h.b16 %v5391
        %v5514 = vunpack.c.l.b16 %v5392
        %v5515 = vunpack.c.h.b16 %v5392
        %v5516 = vunpack.c.l.b16 %v5393
        %v5517 = vunpack.c.h.b16 %v5393
        %v5518 = vunpack.c.l.b16 %v5394
        %v5519 = vunpack.c.h.b16 %v5394
        %v5520 = vunpack.c.l.b16 %v5395
        %v5521 = vunpack.c.h.b16 %v5395
        %v5522 = vunpack.c.l.b16 %v5396
        %v5523 = vunpack.c.h.b16 %v5396
        %v5524 = vunpack.c.l.b16 %v5397
        %v5525 = vunpack.c.h.b16 %v5397
        %v5526 = vunpack.c.l.b16 %v5398
        %v5527 = vunpack.c.h.b16 %v5398
        %v5528 = vunpack.c.l.b16 %v5399
        %v5529 = vunpack.c.h.b16 %v5399
        %v5530 = vunpack.c.l.b16 %v5400
        %v5531 = vunpack.c.h.b16 %v5400
        %v5532 = vunpack.c.l.b16 %v5401
        %v5533 = vunpack.c.h.b16 %v5401
        %v5534 = vunpack.c.l.b16 %v5402
        %v5535 = vunpack.c.h.b16 %v5402
        %v5536 = vunpack.c.l.b16 %v5403
        %v5537 = vunpack.c.h.b16 %v5403
        %v5538 = vunpack.c.l.b16 %v5404
        %v5539 = vunpack.c.h.b16 %v5404
        %v5540 = vunpack.c.l.b16 %v5405
        %v5541 = vunpack.c.h.b16 %v5405
        %v5542 = vunpack.c.l.b16 %v5406
        %v5543 = vunpack.c.h.b16 %v5406
        %v5544 = vunpack.c.l.b16 %v5407
        %v5545 = vunpack.c.h.b16 %v5407
        %v5546 = vunpack.c.l.b16 %v5408
        %v5547 = vunpack.c.h.b16 %v5408
        %v5548 = vunpack.c.l.b16 %v5409
        %v5549 = vunpack.c.h.b16 %v5409
        %v5550 = vunpack.c.l.b16 %v5410
        %v5551 = vunpack.c.h.b16 %v5410
        %v5552 = vunpack.c.l.b16 %v5411
        %v5553 = vunpack.c.h.b16 %v5411
        %v5554 = vunpack.c.l.b16 %v5412
        %v5555 = vunpack.c.h.b16 %v5412
        %v5556 = vunpack.c.l.b16 %v5413
        %v5557 = vunpack.c.h.b16 %v5413
        %v5558 = vpack.c.b16 %v5464, %v5462
        %v5559 = vpack.c.b16 %v5465, %v5463
        %v5560 = vpack.c.b16 %v5468, %v5466
        %v5561 = vpack.c.b16 %v5469, %v5467
        %v5562 = vpack.c.b16 %v5472, %v5470
        %v5563 = vpack.c.b16 %v5473, %v5471
        %v5564 = vpack.c.b16 %v5476, %v5474
        %v5565 = vpack.c.b16 %v5477, %v5475
        %v5566 = vpack.c.b16 %v5480, %v5478
        %v5567 = vpack.c.b16 %v5481, %v5479
        %v5568 = vpack.c.b16 %v5484, %v5482
        %v5569 = vpack.c.b16 %v5485, %v5483
        %v5570 = vpack.c.b16 %v5488, %v5486
        %v5571 = vpack.c.b16 %v5489, %v5487
        %v5572 = vpack.c.b16 %v5492, %v5490
        %v5573 = vpack.c.b16 %v5493, %v5491
        %v5574 = vpack.c.b16 %v5496, %v5494
        %v5575 = vpack.c.b16 %v5497, %v5495
        %v5576 = vpack.c.b16 %v5500, %v5498
        %v5577 = vpack.c.b16 %v5501, %v5499
        %v5578 = vpack.c.b16 %v5504, %v5502
        %v5579 = vpack.c.b16 %v5505, %v5503
        %v5580 = vpack.c.b16 %v5508, %v5506
        %v5581 = vpack.c.b16 %v5509, %v5507
        %v5582 = vpack.c.b16 %v5512, %v5510
        %v5583 = vpack.c.b16 %v5513, %v5511
        %v5584 = vpack.c.b16 %v5516, %v5514
        %v5585 = vpack.c.b16 %v5517, %v5515
        %v5586 = vpack.c.b16 %v5520, %v5518
        %v5587 = vpack.c.b16 %v5521, %v5519
        %v5588 = vpack.c.b16 %v5524, %v5522
        %v5589 = vpack.c.b16 %v5525, %v5523
        %v5590 = vpack.c.b16 %v5528, %v5526
        %v5591 = vpack.c.b16 %v5529, %v5527
        %v5592 = vpack.c.b16 %v5532, %v5530
        %v5593 = vpack.c.b16 %v5533, %v5531
        %v5594 = vpack.c.b16 %v5536, %v5534
        %v5595 = vpack.c.b16 %v5537, %v5535
        %v5596 = vpack.c.b16 %v5540, %v5538
        %v5597 = vpack.c.b16 %v5541, %v5539
        %v5598 = vpack.c.b16 %v5544, %v5542
        %v5599 = vpack.c.b16 %v5545, %v5543
        %v5600 = vpack.c.b16 %v5548, %v5546
        %v5601 = vpack.c.b16 %v5549, %v5547
        %v5602 = vpack.c.b16 %v5552, %v5550
        %v5603 = vpack.c.b16 %v5553, %v5551
        %v5604 = vpack.c.b16 %v5556, %v5554
        %v5605 = vpack.c.b16 %v5557, %v5555
        %5654 = vmatprep.subr.bf16.mxu0 %v5559
        %5655 = vmatpush1.bf16.msra.mxu0 %v5558
        %5656 = vmatprep.subr.bf16.mxu0 %v5561
        %5657 = vmatpush1.bf16.msra.mxu0 %v5560
        %5658 = vmatprep.subr.bf16.mxu0 %v5563
        %5659 = vmatpush1.bf16.msra.mxu0 %v5562
        %5660 = vmatprep.subr.bf16.mxu0 %v5565
        %5661 = vmatpush1.bf16.msra.mxu0 %v5564
        %5662 = vmatprep.subr.bf16.mxu0 %v5567
        %5663 = vmatpush1.bf16.msra.mxu0 %v5566
        %5664 = vmatprep.subr.bf16.mxu0 %v5569
        %5665 = vmatpush1.bf16.msra.mxu0 %v5568
        %5666 = vmatprep.subr.bf16.mxu0 %v5571
        %5667 = vmatpush1.bf16.msra.mxu0 %v5570
        %5668 = vmatprep.subr.bf16.mxu0 %v5573
        %5669 = vmatpush1.bf16.msra.mxu0 %v5572
        %5670 = vmatprep.subr.bf16.mxu0 %v5575
        %5671 = vmatpush1.bf16.msra.mxu0 %v5574
        %5672 = vmatprep.subr.bf16.mxu0 %v5577
        %5673 = vmatpush1.bf16.msra.mxu0 %v5576
        %5674 = vmatprep.subr.bf16.mxu0 %v5579
        %5675 = vmatpush1.bf16.msra.mxu0 %v5578
        %5676 = vmatprep.subr.bf16.mxu0 %v5581
        %5677 = vmatpush1.bf16.msra.mxu0 %v5580
        %5678 = vmatprep.subr.bf16.mxu0 %v5583
        %5679 = vmatpush1.bf16.msra.mxu0 %v5582
        %5680 = vmatprep.subr.bf16.mxu0 %v5585
        %5681 = vmatpush1.bf16.msra.mxu0 %v5584
        %5682 = vmatprep.subr.bf16.mxu0 %v5587
        %5683 = vmatpush1.bf16.msra.mxu0 %v5586
        %5684 = vmatprep.subr.bf16.mxu0 %v5589
        %5685 = vmatpush1.bf16.msra.mxu0 %v5588
        %5686 = vmatprep.mubr.bf16.mxu0 %v5354
        %5687 = vmatmul.mubr.bf16.gmra.mrb[0].mxu0 %v5353
        %v5688 = vpop.f32.mrb[0].mxu0
        %v5689 = vadd.f32 0.0, %v5688
        %v5690 = vpop.f32.mrb[0].mxu0
        %v5691 = vadd.f32 0.0, %v5690
        %v5692 = vpop.f32.mrb[0].mxu0
        %v5693 = vadd.f32 0.0, %v5692
        %v5694 = vpop.f32.mrb[0].mxu0
        %v5695 = vadd.f32 0.0, %v5694
        %5696 = vmatprep.mubr.bf16.mxu0 %v5357
        %5697 = vmatmul.mubr.bf16.gmra.mrb[0].mxu0 %v5356
        %v5698 = vpop.f32.mrb[0].mxu0
        %v5699 = vadd.f32 0.0, %v5698
        %v5700 = vpop.f32.mrb[0].mxu0
        %v5701 = vadd.f32 0.0, %v5700
        %v5702 = vpop.f32.mrb[0].mxu0
        %v5703 = vadd.f32 0.0, %v5702
        %v5704 = vpop.f32.mrb[0].mxu0
        %v5705 = vadd.f32 0.0, %v5704
        %5706 = vmatprep.mubr.bf16.mxu0 %v5360
        %5707 = vmatmul.mubr.bf16.gmra.mrb[0].mxu0 %v5359
        %v5708 = vpop.f32.mrb[0].mxu0
        %v5709 = vadd.f32 0.0, %v5708
        %v5710 = vpop.f32.mrb[0].mxu0
        %v5711 = vadd.f32 0.0, %v5710
        %v5712 = vpop.f32.mrb[0].mxu0
        %v5713 = vadd.f32 0.0, %v5712
        %v5714 = vpop.f32.mrb[0].mxu0
        %v5715 = vadd.f32 0.0, %v5714
        %5716 = vmatprep.mubr.bf16.mxu0 %v5363
        %5717 = vmatmul.mubr.bf16.gmra.mrb[0].mxu0 %v5362
        %v5718 = vpop.f32.mrb[0].mxu0
        %v5719 = vadd.f32 0.0, %v5718
        %v5720 = vpop.f32.mrb[0].mxu0
        %v5721 = vadd.f32 0.0, %v5720
        %v5722 = vpop.f32.mrb[0].mxu0
        %v5723 = vadd.f32 0.0, %v5722
        %v5724 = vpop.f32.mrb[0].mxu0
        %v5725 = vadd.f32 0.0, %v5724
        %5726 = vdwg.mxu0
        %5727 = vmatprep.subr.bf16.mxu0 %v5591
        %5728 = vmatpush1.bf16.msra.mxu0 %v5590
        %5729 = vmatprep.subr.bf16.mxu0 %v5593
        %5730 = vmatpush1.bf16.msra.mxu0 %v5592
        %5731 = vmatprep.subr.bf16.mxu0 %v5595
        %5732 = vmatpush1.bf16.msra.mxu0 %v5594
        %5733 = vmatprep.subr.bf16.mxu0 %v5597
        %5734 = vmatpush1.bf16.msra.mxu0 %v5596
        %5735 = vmatprep.subr.bf16.mxu0 %v5599
        %5736 = vmatpush1.bf16.msra.mxu0 %v5598
        %5737 = vmatprep.subr.bf16.mxu0 %v5601
        %5738 = vmatpush1.bf16.msra.mxu0 %v5600
        %5739 = vmatprep.subr.bf16.mxu0 %v5603
        %5740 = vmatpush1.bf16.msra.mxu0 %v5602
        %5741 = vmatprep.subr.bf16.mxu0 %v5605
        %5742 = vmatpush1.bf16.msra.mxu0 %v5604
        %5743 = vmatprep.subr.bf16.mxu0 0
        %5744 = vmatpush1.bf16.msra.mxu0 0
        %5745 = vmatprep.subr.bf16.mxu0 0
        %5746 = vmatpush1.bf16.msra.mxu0 0
        %5747 = vmatprep.subr.bf16.mxu0 0
        %5748 = vmatpush1.bf16.msra.mxu0 0
        %5749 = vmatprep.subr.bf16.mxu0 0
        %5750 = vmatpush1.bf16.msra.mxu0 0
        %5751 = vmatprep.subr.bf16.mxu0 0
        %5752 = vmatpush1.bf16.msra.mxu0 0
        %5753 = vmatprep.subr.bf16.mxu0 0
        %5754 = vmatpush1.bf16.msra.mxu0 0
        %5755 = vmatprep.subr.bf16.mxu0 0
        %5756 = vmatpush1.bf16.msra.mxu0 0
        %5757 = vmatprep.subr.bf16.mxu0 0
        %5758 = vmatpush1.bf16.msra.mxu0 0
        %5759 = vmatprep.mubr.bf16.mxu0 0
        %5760 = vmatmul.mubr.bf16.gmra.mrb[0].mxu0 %v5355
        %v5761 = vpop.f32.mrb[0].mxu0
        %v5762 = vadd.f32 %v5689, %v5761
        %v5763 = vpop.f32.mrb[0].mxu0
        %v5764 = vadd.f32 %v5691, %v5763
        %v5765 = vpop.f32.mrb[0].mxu0
        %v5766 = vadd.f32 %v5693, %v5765
        %v5767 = vpop.f32.mrb[0].mxu0
        %v5768 = vadd.f32 %v5695, %v5767
        %5769 = vmatprep.mubr.bf16.mxu0 0
        %5770 = vmatmul.mubr.bf16.gmra.mrb[0].mxu0 %v5358
        %v5771 = vpop.f32.mrb[0].mxu0
        %v5772 = vadd.f32 %v5699, %v5771
        %v5773 = vpop.f32.mrb[0].mxu0
        %v5774 = vadd.f32 %v5701, %v5773
        %v5775 = vpop.f32.mrb[0].mxu0
        %v5776 = vadd.f32 %v5703, %v5775
        %v5777 = vpop.f32.mrb[0].mxu0
        %v5778 = vadd.f32 %v5705, %v5777
        %5779 = vmatprep.mubr.bf16.mxu0 0
        %5780 = vmatmul.mubr.bf16.gmra.mrb[0].mxu0 %v5361
        %v5781 = vpop.f32.mrb[0].mxu0
        %v5782 = vadd.f32 %v5709, %v5781
        %v5783 = vpop.f32.mrb[0].mxu0
        %v5784 = vadd.f32 %v5711, %v5783
        %v5785 = vpop.f32.mrb[0].mxu0
        %v5786 = vadd.f32 %v5713, %v5785
        %v5787 = vpop.f32.mrb[0].mxu0
        %v5788 = vadd.f32 %v5715, %v5787
        %5789 = vmatprep.mubr.bf16.mxu0 0
        %5790 = vmatmul.mubr.bf16.gmra.mrb[0].mxu0 %v5364
        %v5791 = vpop.f32.mrb[0].mxu0
        %v5792 = vadd.f32 %v5719, %v5791
        %v5793 = vpop.f32.mrb[0].mxu0
        %v5794 = vadd.f32 %v5721, %v5793
        %v5795 = vpop.f32.mrb[0].mxu0
        %v5796 = vadd.f32 %v5723, %v5795
        %v5797 = vpop.f32.mrb[0].mxu0
        %v5798 = vadd.f32 %v5725, %v5797
        %5799 = vdwg.mxu0
        %v5800 = vadd.f32 %v5145, %v5762
        %v5801 = vadd.f32 %v5146, %v5764
        %v5802 = vadd.f32 %v5147, %v5766
        %v5803 = vadd.f32 %v5148, %v5768
        %v5804 = vadd.f32 %v5149, %v5772
        %v5805 = vadd.f32 %v5150, %v5774
        %v5806 = vadd.f32 %v5151, %v5776
        %v5807 = vadd.f32 %v5152, %v5778
        %v5808 = vadd.f32 %v5153, %v5782
        %v5809 = vadd.f32 %v5154, %v5784
        %v5810 = vadd.f32 %v5155, %v5786
        %v5811 = vadd.f32 %v5156, %v5788
        %v5812 = vadd.f32 %v5157, %v5792
        %v5813 = vadd.f32 %v5158, %v5794
        %v5814 = vadd.f32 %v5159, %v5796
        %v5815 = vadd.f32 %v5160, %v5798
        %v5816 = vld [vmem:[#allocation8] sm:$0x3]
        %v5818 = vlaneseq
        %v5819 = vshrl.u32 %v5818, 7
        %v5820 = vsub.s32 0, %v5819
        %v5821 = vrot.slane %v5816, %v5820
        %v5822 = vlaneseq
        %v5823 = vshrl.u32 %v5822, 7
        %v5824 = vsub.s32 1, %v5823
        %v5825 = vrot.slane %v5816, %v5824
        %v5828 = vadd.f32 %v5800, %v5821
        %v5829 = vadd.f32 %v5801, %v5825
        %v5830 = vadd.f32 %v5802, %v5821
        %v5831 = vadd.f32 %v5803, %v5825
        %v5832 = vadd.f32 %v5804, %v5821
        %v5833 = vadd.f32 %v5805, %v5825
        %v5834 = vadd.f32 %v5806, %v5821
        %v5835 = vadd.f32 %v5807, %v5825
        %v5836 = vadd.f32 %v5808, %v5821
        %v5837 = vadd.f32 %v5809, %v5825
        %v5838 = vadd.f32 %v5810, %v5821
        %v5839 = vadd.f32 %v5811, %v5825
        %v5840 = vadd.f32 %v5812, %v5821
        %v5841 = vadd.f32 %v5813, %v5825
        %v5842 = vadd.f32 %v5814, %v5821
        %v5843 = vadd.f32 %v5815, %v5825
        %v5844 = vmax.f32 %v5828, 0.0
        %v5845 = vmax.f32 %v5829, 0.0
        %v5846 = vmax.f32 %v5830, 0.0
        %v5847 = vmax.f32 %v5831, 0.0
        %v5848 = vmax.f32 %v5832, 0.0
        %v5849 = vmax.f32 %v5833, 0.0
        %v5850 = vmax.f32 %v5834, 0.0
        %v5851 = vmax.f32 %v5835, 0.0
        %v5852 = vmax.f32 %v5836, 0.0
        %v5853 = vmax.f32 %v5837, 0.0
        %v5854 = vmax.f32 %v5838, 0.0
        %v5855 = vmax.f32 %v5839, 0.0
        %v5856 = vmax.f32 %v5840, 0.0
        %v5857 = vmax.f32 %v5841, 0.0
        %v5858 = vmax.f32 %v5842, 0.0
        %v5859 = vmax.f32 %v5843, 0.0
        %v5876 = vrot.slane %v5844, 7
        %v5877 = vrot.slane %v5845, 7
        %v5878 = vrot.slane %v5846, 7
        %v5879 = vrot.slane %v5847, 7
        %v5880 = vrot.slane %v5848, 7
        %v5881 = vrot.slane %v5849, 7
        %v5882 = vrot.slane %v5850, 7
        %v5883 = vrot.slane %v5851, 7
        %v5884 = vrot.slane %v5852, 7
        %v5885 = vrot.slane %v5853, 7
        %v5886 = vrot.slane %v5854, 7
        %v5887 = vrot.slane %v5855, 7
        %v5888 = vrot.slane %v5856, 7
        %v5889 = vrot.slane %v5857, 7
        %v5890 = vrot.slane %v5858, 7
        %v5891 = vrot.slane %v5859, 7
        %5908 = vst [vmem:[%s422] sm:$0xfe] %v5876
        %5909 = vst [vmem:[%s422 + $0x8] sm:$0xfe] %v5877
        %5910 = vst [vmem:[%s422 + $0x18] sm:$0x1] %v5876
        %5911 = vst [vmem:[%s422 + $0x20] sm:$0x1] %v5877
        %5912 = vst [vmem:[%s422 + $0x30] sm:$0xfe] %v5878
        %5913 = vst [vmem:[%s422 + $0x38] sm:$0xfe] %v5879
        %5914 = vst [vmem:[%s422 + $0x48] sm:$0x1] %v5878
        %5915 = vst [vmem:[%s422 + $0x50] sm:$0x1] %v5879
        %5916 = vst [vmem:[%s422 + $0x60] sm:$0xfe] %v5880
        %5917 = vst [vmem:[%s422 + $0x68] sm:$0xfe] %v5881
        %5918 = vst [vmem:[%s422 + $0x78] sm:$0x1] %v5880
        %5919 = vst [vmem:[%s422 + $0x80] sm:$0x1] %v5881
        %5920 = vst [vmem:[%s422 + $0x90] sm:$0xfe] %v5882
        %5921 = vst [vmem:[%s422 + $0x98] sm:$0xfe] %v5883
        %5922 = vst [vmem:[%s422 + $0xa8] sm:$0x1] %v5882
        %5923 = vst [vmem:[%s422 + $0xb0] sm:$0x1] %v5883
        %5924 = vst [vmem:[%s422 + $0xc0] sm:$0xfe] %v5884
        %5925 = vst [vmem:[%s422 + $0xc8] sm:$0xfe] %v5885
        %5926 = vst [vmem:[%s422 + $0xd8] sm:$0x1] %v5884
        %5927 = vst [vmem:[%s422 + $0xe0] sm:$0x1] %v5885
        %5928 = vst [vmem:[%s422 + $0xf0] sm:$0xfe] %v5886
        %5929 = vst [vmem:[%s422 + $0xf8] sm:$0xfe] %v5887
        %5930 = vst [vmem:[%s422 + $0x108] sm:$0x1] %v5886
        %5931 = vst [vmem:[%s422 + $0x110] sm:$0x1] %v5887
        %5932 = vst [vmem:[%s422 + $0x120] sm:$0xfe] %v5888
        %5933 = vst [vmem:[%s422 + $0x128] sm:$0xfe] %v5889
        %5934 = vst [vmem:[%s422 + $0x138] sm:$0x1] %v5888
        %5935 = vst [vmem:[%s422 + $0x140] sm:$0x1] %v5889
        %5936 = vst [vmem:[%s422 + $0x150] sm:$0xfe] %v5890
        %5937 = vst [vmem:[%s422 + $0x158] sm:$0xfe] %v5891
        %5938 = vst [vmem:[%s422 + $0x168] sm:$0x1] %v5890
        %5939 = vst [vmem:[%s422 + $0x170] sm:$0x1] %v5891
        %v5940 = vld [vmem:[#allocation2] sm:$0xff]
        %v5941 = vld [vmem:[#allocation2 + $0x8] sm:$0xff]
        %v5942 = vld [vmem:[#allocation2 + $0x10] sm:$0xff]
        %v5943 = vld [vmem:[#allocation2 + $0x30] sm:$0xff]
        %v5944 = vld [vmem:[#allocation2 + $0x38] sm:$0xff]
        %v5945 = vld [vmem:[#allocation2 + $0x40] sm:$0xff]
        %v5946 = vld [vmem:[#allocation2 + $0x60] sm:$0xff]
        %v5947 = vld [vmem:[#allocation2 + $0x68] sm:$0xff]
        %v5948 = vld [vmem:[#allocation2 + $0x70] sm:$0xff]
        %v5949 = vld [vmem:[#allocation2 + $0x90] sm:$0xff]
        %v5950 = vld [vmem:[#allocation2 + $0x98] sm:$0xff]
        %v5951 = vld [vmem:[#allocation2 + $0xa0] sm:$0xff]
        %v5952 = vld [vmem:[#allocation2 + $0xc0] sm:$0xff]
        %v5953 = vld [vmem:[#allocation2 + $0xc8] sm:$0xff]
        %v5954 = vld [vmem:[#allocation2 + $0xd0] sm:$0xff]
        %v5955 = vld [vmem:[#allocation2 + $0xf0] sm:$0xff]
        %v5956 = vld [vmem:[#allocation2 + $0xf8] sm:$0xff]
        %v5957 = vld [vmem:[#allocation2 + $0x100] sm:$0xff]
        %v5958 = vld [vmem:[#allocation2 + $0x120] sm:$0xff]
        %v5959 = vld [vmem:[#allocation2 + $0x128] sm:$0xff]
        %v5960 = vld [vmem:[#allocation2 + $0x130] sm:$0xff]
        %v5961 = vld [vmem:[#allocation2 + $0x150] sm:$0xff]
        %v5962 = vld [vmem:[#allocation2 + $0x158] sm:$0xff]
        %v5963 = vld [vmem:[#allocation2 + $0x160] sm:$0xff]
        %v5964 = vpack.c.bf16 %v5943, %v5940
        %v5965 = vpack.c.bf16 %v5944, %v5941
        %v5966 = vpack.c.bf16 %v5945, %v5942
        %v5967 = vpack.c.bf16 %v5949, %v5946
        %v5968 = vpack.c.bf16 %v5950, %v5947
        %v5969 = vpack.c.bf16 %v5951, %v5948
        %v5970 = vpack.c.bf16 %v5955, %v5952
        %v5971 = vpack.c.bf16 %v5956, %v5953
        %v5972 = vpack.c.bf16 %v5957, %v5954
        %v5973 = vpack.c.bf16 %v5961, %v5958
        %v5974 = vpack.c.bf16 %v5962, %v5959
        %v5975 = vpack.c.bf16 %v5963, %v5960
        %v5976 = vld [vmem:[#allocation9] sm:$0xff]
        %v5977 = vld [vmem:[#allocation9 + $0x8] sm:$0xff]
        %v5978 = vld [vmem:[#allocation9 + $0x10] sm:$0xff]
        %v5979 = vld [vmem:[#allocation9 + $0x18] sm:$0xff]
        %v5980 = vld [vmem:[#allocation9 + $0x20] sm:$0xff]
        %v5981 = vld [vmem:[#allocation9 + $0x28] sm:$0xff]
        %v5982 = vld [vmem:[#allocation9 + $0x30] sm:$0xff]
        %v5983 = vld [vmem:[#allocation9 + $0x38] sm:$0xff]
        %v5984 = vld [vmem:[#allocation9 + $0x40] sm:$0xff]
        %v5985 = vld [vmem:[#allocation9 + $0x48] sm:$0xff]
        %v5986 = vld [vmem:[#allocation9 + $0x50] sm:$0xff]
        %v5987 = vld [vmem:[#allocation9 + $0x58] sm:$0xff]
        %v5988 = vld [vmem:[#allocation9 + $0x60] sm:$0xff]
        %v5989 = vld [vmem:[#allocation9 + $0x68] sm:$0xff]
        %v5990 = vld [vmem:[#allocation9 + $0x70] sm:$0xff]
        %v5991 = vld [vmem:[#allocation9 + $0x78] sm:$0xff]
        %v5992 = vld [vmem:[#allocation9 + $0x80] sm:$0xff]
        %v5993 = vld [vmem:[#allocation9 + $0x88] sm:$0xff]
        %v5994 = vld [vmem:[#allocation9 + $0x90] sm:$0xff]
        %v5995 = vld [vmem:[#allocation9 + $0x98] sm:$0xff]
        %v5996 = vld [vmem:[#allocation9 + $0xa0] sm:$0xff]
        %v5997 = vld [vmem:[#allocation9 + $0xa8] sm:$0xff]
        %v5998 = vld [vmem:[#allocation9 + $0xb0] sm:$0xff]
        %v5999 = vld [vmem:[#allocation9 + $0xb8] sm:$0xff]
        %v6000 = vld [vmem:[#allocation9 + $0xc0] sm:$0xff]
        %v6001 = vld [vmem:[#allocation9 + $0xc8] sm:$0xff]
        %v6002 = vld [vmem:[#allocation9 + $0xd0] sm:$0xff]
        %v6003 = vld [vmem:[#allocation9 + $0xd8] sm:$0xff]
        %v6004 = vld [vmem:[#allocation9 + $0xe0] sm:$0xff]
        %v6005 = vld [vmem:[#allocation9 + $0xe8] sm:$0xff]
        %v6006 = vld [vmem:[#allocation9 + $0xf0] sm:$0xff]
        %v6007 = vld [vmem:[#allocation9 + $0xf8] sm:$0xff]
        %v6008 = vld [vmem:[#allocation9 + $0x100] sm:$0xff]
        %v6009 = vld [vmem:[#allocation9 + $0x108] sm:$0xff]
        %v6010 = vld [vmem:[#allocation9 + $0x110] sm:$0xff]
        %v6011 = vld [vmem:[#allocation9 + $0x118] sm:$0xff]
        %v6012 = vld [vmem:[#allocation9 + $0x120] sm:$0xff]
        %v6013 = vld [vmem:[#allocation9 + $0x128] sm:$0xff]
        %v6014 = vld [vmem:[#allocation9 + $0x130] sm:$0xff]
        %v6015 = vld [vmem:[#allocation9 + $0x138] sm:$0xff]
        %v6016 = vld [vmem:[#allocation9 + $0x140] sm:$0xff]
        %v6017 = vld [vmem:[#allocation9 + $0x148] sm:$0xff]
        %v6018 = vld [vmem:[#allocation9 + $0x150] sm:$0xff]
        %v6019 = vld [vmem:[#allocation9 + $0x158] sm:$0xff]
        %v6020 = vld [vmem:[#allocation9 + $0x160] sm:$0xff]
        %v6021 = vld [vmem:[#allocation9 + $0x168] sm:$0xff]
        %v6022 = vld [vmem:[#allocation9 + $0x170] sm:$0xff]
        %v6023 = vld [vmem:[#allocation9 + $0x178] sm:$0xff]
        %v6024 = vld [vmem:[#allocation2] sm:$0xfe]
        %v6025 = vld [vmem:[#allocation2 + $0x8] sm:$0xfe]
        %v6026 = vld [vmem:[#allocation2 + $0x10] sm:$0xfe]
        %v6027 = vld [vmem:[#allocation2 + $0x18] sm:$0x1]
        %v6028 = vld [vmem:[#allocation2 + $0x20] sm:$0x1]
        %v6029 = vld [vmem:[#allocation2 + $0x28] sm:$0x1]
        %v6030 = vld [vmem:[#allocation2 + $0x30] sm:$0xfe]
        %v6031 = vld [vmem:[#allocation2 + $0x38] sm:$0xfe]
        %v6032 = vld [vmem:[#allocation2 + $0x40] sm:$0xfe]
        %v6033 = vld [vmem:[#allocation2 + $0x48] sm:$0x1]
        %v6034 = vld [vmem:[#allocation2 + $0x50] sm:$0x1]
        %v6035 = vld [vmem:[#allocation2 + $0x58] sm:$0x1]
        %v6036 = vld [vmem:[#allocation2 + $0x60] sm:$0xfe]
        %v6037 = vld [vmem:[#allocation2 + $0x68] sm:$0xfe]
        %v6038 = vld [vmem:[#allocation2 + $0x70] sm:$0xfe]
        %v6039 = vld [vmem:[#allocation2 + $0x78] sm:$0x1]
        %v6040 = vld [vmem:[#allocation2 + $0x80] sm:$0x1]
        %v6041 = vld [vmem:[#allocation2 + $0x88] sm:$0x1]
        %v6042 = vld [vmem:[#allocation2 + $0x90] sm:$0xfe]
        %v6043 = vld [vmem:[#allocation2 + $0x98] sm:$0xfe]
        %v6044 = vld [vmem:[#allocation2 + $0xa0] sm:$0xfe]
        %v6045 = vld [vmem:[#allocation2 + $0xa8] sm:$0x1]
        %v6046 = vld [vmem:[#allocation2 + $0xb0] sm:$0x1]
        %v6047 = vld [vmem:[#allocation2 + $0xb8] sm:$0x1]
        %v6048 = vld [vmem:[#allocation2 + $0xc0] sm:$0xfe]
        %v6049 = vld [vmem:[#allocation2 + $0xc8] sm:$0xfe]
        %v6050 = vld [vmem:[#allocation2 + $0xd0] sm:$0xfe]
        %v6051 = vld [vmem:[#allocation2 + $0xd8] sm:$0x1]
        %v6052 = vld [vmem:[#allocation2 + $0xe0] sm:$0x1]
        %v6053 = vld [vmem:[#allocation2 + $0xe8] sm:$0x1]
        %v6054 = vld [vmem:[#allocation2 + $0xf0] sm:$0xfe]
        %v6055 = vld [vmem:[#allocation2 + $0xf8] sm:$0xfe]
        %v6056 = vld [vmem:[#allocation2 + $0x100] sm:$0xfe]
        %v6057 = vld [vmem:[#allocation2 + $0x108] sm:$0x1]
        %v6058 = vld [vmem:[#allocation2 + $0x110] sm:$0x1]
        %v6059 = vld [vmem:[#allocation2 + $0x118] sm:$0x1]
        %v6060 = vld [vmem:[#allocation2 + $0x120] sm:$0xfe]
        %v6061 = vld [vmem:[#allocation2 + $0x128] sm:$0xfe]
        %v6062 = vld [vmem:[#allocation2 + $0x130] sm:$0xfe]
        %v6063 = vld [vmem:[#allocation2 + $0x138] sm:$0x1]
        %v6064 = vld [vmem:[#allocation2 + $0x140] sm:$0x1]
        %v6065 = vld [vmem:[#allocation2 + $0x148] sm:$0x1]
        %v6066 = vld [vmem:[#allocation2 + $0x150] sm:$0xfe]
        %v6067 = vld [vmem:[#allocation2 + $0x158] sm:$0xfe]
        %v6068 = vld [vmem:[#allocation2 + $0x160] sm:$0xfe]
        %v6069 = vld [vmem:[#allocation2 + $0x168] sm:$0x1]
        %v6070 = vld [vmem:[#allocation2 + $0x170] sm:$0x1]
        %v6071 = vld [vmem:[#allocation2 + $0x178] sm:$0x1]
        %v6120 = vrot.slane %v6024, 1
        %v6121 = vrot.slane %v6027, 1
        %v6122 = vsel %vm635, %v6120, %v6121
        %v6123 = vrot.slane %v6025, 1
        %v6124 = vrot.slane %v6028, 1
        %v6125 = vsel %vm635, %v6123, %v6124
        %v6126 = vrot.slane %v6026, 1
        %v6127 = vrot.slane %v6029, 1
        %v6128 = vsel %vm635, %v6126, %v6127
        %v6129 = vrot.slane %v6030, 1
        %v6130 = vrot.slane %v6033, 1
        %v6131 = vsel %vm635, %v6129, %v6130
        %v6132 = vrot.slane %v6031, 1
        %v6133 = vrot.slane %v6034, 1
        %v6134 = vsel %vm635, %v6132, %v6133
        %v6135 = vrot.slane %v6032, 1
        %v6136 = vrot.slane %v6035, 1
        %v6137 = vsel %vm635, %v6135, %v6136
        %v6138 = vrot.slane %v6036, 1
        %v6139 = vrot.slane %v6039, 1
        %v6140 = vsel %vm635, %v6138, %v6139
        %v6141 = vrot.slane %v6037, 1
        %v6142 = vrot.slane %v6040, 1
        %v6143 = vsel %vm635, %v6141, %v6142
        %v6144 = vrot.slane %v6038, 1
        %v6145 = vrot.slane %v6041, 1
        %v6146 = vsel %vm635, %v6144, %v6145
        %v6147 = vrot.slane %v6042, 1
        %v6148 = vrot.slane %v6045, 1
        %v6149 = vsel %vm635, %v6147, %v6148
        %v6150 = vrot.slane %v6043, 1
        %v6151 = vrot.slane %v6046, 1
        %v6152 = vsel %vm635, %v6150, %v6151
        %v6153 = vrot.slane %v6044, 1
        %v6154 = vrot.slane %v6047, 1
        %v6155 = vsel %vm635, %v6153, %v6154
        %v6156 = vrot.slane %v6048, 1
        %v6157 = vrot.slane %v6051, 1
        %v6158 = vsel %vm635, %v6156, %v6157
        %v6159 = vrot.slane %v6049, 1
        %v6160 = vrot.slane %v6052, 1
        %v6161 = vsel %vm635, %v6159, %v6160
        %v6162 = vrot.slane %v6050, 1
        %v6163 = vrot.slane %v6053, 1
        %v6164 = vsel %vm635, %v6162, %v6163
        %v6165 = vrot.slane %v6054, 1
        %v6166 = vrot.slane %v6057, 1
        %v6167 = vsel %vm635, %v6165, %v6166
        %v6168 = vrot.slane %v6055, 1
        %v6169 = vrot.slane %v6058, 1
        %v6170 = vsel %vm635, %v6168, %v6169
        %v6171 = vrot.slane %v6056, 1
        %v6172 = vrot.slane %v6059, 1
        %v6173 = vsel %vm635, %v6171, %v6172
        %v6174 = vrot.slane %v6060, 1
        %v6175 = vrot.slane %v6063, 1
        %v6176 = vsel %vm635, %v6174, %v6175
        %v6177 = vrot.slane %v6061, 1
        %v6178 = vrot.slane %v6064, 1
        %v6179 = vsel %vm635, %v6177, %v6178
        %v6180 = vrot.slane %v6062, 1
        %v6181 = vrot.slane %v6065, 1
        %v6182 = vsel %vm635, %v6180, %v6181
        %v6183 = vrot.slane %v6066, 1
        %v6184 = vrot.slane %v6069, 1
        %v6185 = vsel %vm635, %v6183, %v6184
        %v6186 = vrot.slane %v6067, 1
        %v6187 = vrot.slane %v6070, 1
        %v6188 = vsel %vm635, %v6186, %v6187
        %v6189 = vrot.slane %v6068, 1
        %v6190 = vrot.slane %v6071, 1
        %v6191 = vsel %vm635, %v6189, %v6190
        %v6216 = vpack.c.bf16 %v6131, %v6122
        %v6217 = vpack.c.bf16 %v6134, %v6125
        %v6218 = vpack.c.bf16 %v6137, %v6128
        %v6219 = vpack.c.bf16 %v6149, %v6140
        %v6220 = vpack.c.bf16 %v6152, %v6143
        %v6221 = vpack.c.bf16 %v6155, %v6146
        %v6222 = vpack.c.bf16 %v6167, %v6158
        %v6223 = vpack.c.bf16 %v6170, %v6161
        %v6224 = vpack.c.bf16 %v6173, %v6164
        %v6225 = vpack.c.bf16 %v6185, %v6176
        %v6226 = vpack.c.bf16 %v6188, %v6179
        %v6227 = vpack.c.bf16 %v6191, %v6182
        %s6228 = scalar_lea.vmem [#allocation9], 384
        %v6229 = vld [vmem:[%s6228] sm:$0xff]
        %v6230 = vld [vmem:[%s6228 + $0x8] sm:$0xff]
        %v6231 = vld [vmem:[%s6228 + $0x10] sm:$0xff]
        %v6232 = vld [vmem:[%s6228 + $0x18] sm:$0xff]
        %v6233 = vld [vmem:[%s6228 + $0x20] sm:$0xff]
        %v6234 = vld [vmem:[%s6228 + $0x28] sm:$0xff]
        %v6235 = vld [vmem:[%s6228 + $0x30] sm:$0xff]
        %v6236 = vld [vmem:[%s6228 + $0x38] sm:$0xff]
        %v6237 = vld [vmem:[%s6228 + $0x40] sm:$0xff]
        %v6238 = vld [vmem:[%s6228 + $0x48] sm:$0xff]
        %v6239 = vld [vmem:[%s6228 + $0x50] sm:$0xff]
        %v6240 = vld [vmem:[%s6228 + $0x58] sm:$0xff]
        %v6241 = vld [vmem:[%s6228 + $0x60] sm:$0xff]
        %v6242 = vld [vmem:[%s6228 + $0x68] sm:$0xff]
        %v6243 = vld [vmem:[%s6228 + $0x70] sm:$0xff]
        %v6244 = vld [vmem:[%s6228 + $0x78] sm:$0xff]
        %v6245 = vld [vmem:[%s6228 + $0x80] sm:$0xff]
        %v6246 = vld [vmem:[%s6228 + $0x88] sm:$0xff]
        %v6247 = vld [vmem:[%s6228 + $0x90] sm:$0xff]
        %v6248 = vld [vmem:[%s6228 + $0x98] sm:$0xff]
        %v6249 = vld [vmem:[%s6228 + $0xa0] sm:$0xff]
        %v6250 = vld [vmem:[%s6228 + $0xa8] sm:$0xff]
        %v6251 = vld [vmem:[%s6228 + $0xb0] sm:$0xff]
        %v6252 = vld [vmem:[%s6228 + $0xb8] sm:$0xff]
        %v6253 = vld [vmem:[%s6228 + $0xc0] sm:$0xff]
        %v6254 = vld [vmem:[%s6228 + $0xc8] sm:$0xff]
        %v6255 = vld [vmem:[%s6228 + $0xd0] sm:$0xff]
        %v6256 = vld [vmem:[%s6228 + $0xd8] sm:$0xff]
        %v6257 = vld [vmem:[%s6228 + $0xe0] sm:$0xff]
        %v6258 = vld [vmem:[%s6228 + $0xe8] sm:$0xff]
        %v6259 = vld [vmem:[%s6228 + $0xf0] sm:$0xff]
        %v6260 = vld [vmem:[%s6228 + $0xf8] sm:$0xff]
        %v6261 = vld [vmem:[%s6228 + $0x100] sm:$0xff]
        %v6262 = vld [vmem:[%s6228 + $0x108] sm:$0xff]
        %v6263 = vld [vmem:[%s6228 + $0x110] sm:$0xff]
        %v6264 = vld [vmem:[%s6228 + $0x118] sm:$0xff]
        %v6265 = vld [vmem:[%s6228 + $0x120] sm:$0xff]
        %v6266 = vld [vmem:[%s6228 + $0x128] sm:$0xff]
        %v6267 = vld [vmem:[%s6228 + $0x130] sm:$0xff]
        %v6268 = vld [vmem:[%s6228 + $0x138] sm:$0xff]
        %v6269 = vld [vmem:[%s6228 + $0x140] sm:$0xff]
        %v6270 = vld [vmem:[%s6228 + $0x148] sm:$0xff]
        %v6271 = vld [vmem:[%s6228 + $0x150] sm:$0xff]
        %v6272 = vld [vmem:[%s6228 + $0x158] sm:$0xff]
        %v6273 = vld [vmem:[%s6228 + $0x160] sm:$0xff]
        %v6274 = vld [vmem:[%s6228 + $0x168] sm:$0xff]
        %v6275 = vld [vmem:[%s6228 + $0x170] sm:$0xff]
        %v6276 = vld [vmem:[%s6228 + $0x178] sm:$0xff]
        %v6325 = vunpack.c.l.b16 %v6229
        %v6326 = vunpack.c.h.b16 %v6229
        %v6327 = vunpack.c.l.b16 %v6230
        %v6328 = vunpack.c.h.b16 %v6230
        %v6329 = vunpack.c.l.b16 %v6231
        %v6330 = vunpack.c.h.b16 %v6231
        %v6331 = vunpack.c.l.b16 %v6232
        %v6332 = vunpack.c.h.b16 %v6232
        %v6333 = vunpack.c.l.b16 %v6233
        %v6334 = vunpack.c.h.b16 %v6233
        %v6335 = vunpack.c.l.b16 %v6234
        %v6336 = vunpack.c.h.b16 %v6234
        %v6337 = vunpack.c.l.b16 %v6235
        %v6338 = vunpack.c.h.b16 %v6235
        %v6339 = vunpack.c.l.b16 %v6236
        %v6340 = vunpack.c.h.b16 %v6236
        %v6341 = vunpack.c.l.b16 %v6237
        %v6342 = vunpack.c.h.b16 %v6237
        %v6343 = vunpack.c.l.b16 %v6238
        %v6344 = vunpack.c.h.b16 %v6238
        %v6345 = vunpack.c.l.b16 %v6239
        %v6346 = vunpack.c.h.b16 %v6239
        %v6347 = vunpack.c.l.b16 %v6240
        %v6348 = vunpack.c.h.b16 %v6240
        %v6349 = vunpack.c.l.b16 %v6241
        %v6350 = vunpack.c.h.b16 %v6241
        %v6351 = vunpack.c.l.b16 %v6242
        %v6352 = vunpack.c.h.b16 %v6242
        %v6353 = vunpack.c.l.b16 %v6243
        %v6354 = vunpack.c.h.b16 %v6243
        %v6355 = vunpack.c.l.b16 %v6244
        %v6356 = vunpack.c.h.b16 %v6244
        %v6357 = vunpack.c.l.b16 %v6245
        %v6358 = vunpack.c.h.b16 %v6245
        %v6359 = vunpack.c.l.b16 %v6246
        %v6360 = vunpack.c.h.b16 %v6246
        %v6361 = vunpack.c.l.b16 %v6247
        %v6362 = vunpack.c.h.b16 %v6247
        %v6363 = vunpack.c.l.b16 %v6248
        %v6364 = vunpack.c.h.b16 %v6248
        %v6365 = vunpack.c.l.b16 %v6249
        %v6366 = vunpack.c.h.b16 %v6249
        %v6367 = vunpack.c.l.b16 %v6250
        %v6368 = vunpack.c.h.b16 %v6250
        %v6369 = vunpack.c.l.b16 %v6251
        %v6370 = vunpack.c.h.b16 %v6251
        %v6371 = vunpack.c.l.b16 %v6252
        %v6372 = vunpack.c.h.b16 %v6252
        %v6373 = vunpack.c.l.b16 %v6253
        %v6374 = vunpack.c.h.b16 %v6253
        %v6375 = vunpack.c.l.b16 %v6254
        %v6376 = vunpack.c.h.b16 %v6254
        %v6377 = vunpack.c.l.b16 %v6255
        %v6378 = vunpack.c.h.b16 %v6255
        %v6379 = vunpack.c.l.b16 %v6256
        %v6380 = vunpack.c.h.b16 %v6256
        %v6381 = vunpack.c.l.b16 %v6257
        %v6382 = vunpack.c.h.b16 %v6257
        %v6383 = vunpack.c.l.b16 %v6258
        %v6384 = vunpack.c.h.b16 %v6258
        %v6385 = vunpack.c.l.b16 %v6259
        %v6386 = vunpack.c.h.b16 %v6259
        %v6387 = vunpack.c.l.b16 %v6260
        %v6388 = vunpack.c.h.b16 %v6260
        %v6389 = vunpack.c.l.b16 %v6261
        %v6390 = vunpack.c.h.b16 %v6261
        %v6391 = vunpack.c.l.b16 %v6262
        %v6392 = vunpack.c.h.b16 %v6262
        %v6393 = vunpack.c.l.b16 %v6263
        %v6394 = vunpack.c.h.b16 %v6263
        %v6395 = vunpack.c.l.b16 %v6264
        %v6396 = vunpack.c.h.b16 %v6264
        %v6397 = vunpack.c.l.b16 %v6265
        %v6398 = vunpack.c.h.b16 %v6265
        %v6399 = vunpack.c.l.b16 %v6266
        %v6400 = vunpack.c.h.b16 %v6266
        %v6401 = vunpack.c.l.b16 %v6267
        %v6402 = vunpack.c.h.b16 %v6267
        %v6403 = vunpack.c.l.b16 %v6268
        %v6404 = vunpack.c.h.b16 %v6268
        %v6405 = vunpack.c.l.b16 %v6269
        %v6406 = vunpack.c.h.b16 %v6269
        %v6407 = vunpack.c.l.b16 %v6270
        %v6408 = vunpack.c.h.b16 %v6270
        %v6409 = vunpack.c.l.b16 %v6271
        %v6410 = vunpack.c.h.b16 %v6271
        %v6411 = vunpack.c.l.b16 %v6272
        %v6412 = vunpack.c.h.b16 %v6272
        %v6413 = vunpack.c.l.b16 %v6273
        %v6414 = vunpack.c.h.b16 %v6273
        %v6415 = vunpack.c.l.b16 %v6274
        %v6416 = vunpack.c.h.b16 %v6274
        %v6417 = vunpack.c.l.b16 %v6275
        %v6418 = vunpack.c.h.b16 %v6275
        %v6419 = vunpack.c.l.b16 %v6276
        %v6420 = vunpack.c.h.b16 %v6276
        %v6421 = vpack.c.b16 %v6327, %v6325
        %v6422 = vpack.c.b16 %v6328, %v6326
        %v6423 = vpack.c.b16 %v6331, %v6329
        %v6424 = vpack.c.b16 %v6332, %v6330
        %v6425 = vpack.c.b16 %v6335, %v6333
        %v6426 = vpack.c.b16 %v6336, %v6334
        %v6427 = vpack.c.b16 %v6339, %v6337
        %v6428 = vpack.c.b16 %v6340, %v6338
        %v6429 = vpack.c.b16 %v6343, %v6341
        %v6430 = vpack.c.b16 %v6344, %v6342
        %v6431 = vpack.c.b16 %v6347, %v6345
        %v6432 = vpack.c.b16 %v6348, %v6346
        %v6433 = vpack.c.b16 %v6351, %v6349
        %v6434 = vpack.c.b16 %v6352, %v6350
        %v6435 = vpack.c.b16 %v6355, %v6353
        %v6436 = vpack.c.b16 %v6356, %v6354
        %v6437 = vpack.c.b16 %v6359, %v6357
        %v6438 = vpack.c.b16 %v6360, %v6358
        %v6439 = vpack.c.b16 %v6363, %v6361
        %v6440 = vpack.c.b16 %v6364, %v6362
        %v6441 = vpack.c.b16 %v6367, %v6365
        %v6442 = vpack.c.b16 %v6368, %v6366
        %v6443 = vpack.c.b16 %v6371, %v6369
        %v6444 = vpack.c.b16 %v6372, %v6370
        %v6445 = vpack.c.b16 %v6375, %v6373
        %v6446 = vpack.c.b16 %v6376, %v6374
        %v6447 = vpack.c.b16 %v6379, %v6377
        %v6448 = vpack.c.b16 %v6380, %v6378
        %v6449 = vpack.c.b16 %v6383, %v6381
        %v6450 = vpack.c.b16 %v6384, %v6382
        %v6451 = vpack.c.b16 %v6387, %v6385
        %v6452 = vpack.c.b16 %v6388, %v6386
        %v6453 = vpack.c.b16 %v6391, %v6389
        %v6454 = vpack.c.b16 %v6392, %v6390
        %v6455 = vpack.c.b16 %v6395, %v6393
        %v6456 = vpack.c.b16 %v6396, %v6394
        %v6457 = vpack.c.b16 %v6399, %v6397
        %v6458 = vpack.c.b16 %v6400, %v6398
        %v6459 = vpack.c.b16 %v6403, %v6401
        %v6460 = vpack.c.b16 %v6404, %v6402
        %v6461 = vpack.c.b16 %v6407, %v6405
        %v6462 = vpack.c.b16 %v6408, %v6406
        %v6463 = vpack.c.b16 %v6411, %v6409
        %v6464 = vpack.c.b16 %v6412, %v6410
        %v6465 = vpack.c.b16 %v6415, %v6413
        %v6466 = vpack.c.b16 %v6416, %v6414
        %v6467 = vpack.c.b16 %v6419, %v6417
        %v6468 = vpack.c.b16 %v6420, %v6418
        %6517 = vmatprep.subr.bf16.mxu0 %v6422
        %6518 = vmatpush1.bf16.msra.mxu0 %v6421
        %6519 = vmatprep.subr.bf16.mxu0 %v6424
        %6520 = vmatpush1.bf16.msra.mxu0 %v6423
        %6521 = vmatprep.subr.bf16.mxu0 %v6426
        %6522 = vmatpush1.bf16.msra.mxu0 %v6425
        %6523 = vmatprep.subr.bf16.mxu0 %v6428
        %6524 = vmatpush1.bf16.msra.mxu0 %v6427
        %6525 = vmatprep.subr.bf16.mxu0 %v6430
        %6526 = vmatpush1.bf16.msra.mxu0 %v6429
        %6527 = vmatprep.subr.bf16.mxu0 %v6432
        %6528 = vmatpush1.bf16.msra.mxu0 %v6431
        %6529 = vmatprep.subr.bf16.mxu0 %v6434
        %6530 = vmatpush1.bf16.msra.mxu0 %v6433
        %6531 = vmatprep.subr.bf16.mxu0 %v6436
        %6532 = vmatpush1.bf16.msra.mxu0 %v6435
        %6533 = vmatprep.subr.bf16.mxu0 %v6438
        %6534 = vmatpush1.bf16.msra.mxu0 %v6437
        %6535 = vmatprep.subr.bf16.mxu0 %v6440
        %6536 = vmatpush1.bf16.msra.mxu0 %v6439
        %6537 = vmatprep.subr.bf16.mxu0 %v6442
        %6538 = vmatpush1.bf16.msra.mxu0 %v6441
        %6539 = vmatprep.subr.bf16.mxu0 %v6444
        %6540 = vmatpush1.bf16.msra.mxu0 %v6443
        %6541 = vmatprep.subr.bf16.mxu0 %v6446
        %6542 = vmatpush1.bf16.msra.mxu0 %v6445
        %6543 = vmatprep.subr.bf16.mxu0 %v6448
        %6544 = vmatpush1.bf16.msra.mxu0 %v6447
        %6545 = vmatprep.subr.bf16.mxu0 %v6450
        %6546 = vmatpush1.bf16.msra.mxu0 %v6449
        %6547 = vmatprep.subr.bf16.mxu0 %v6452
        %6548 = vmatpush1.bf16.msra.mxu0 %v6451
        %6549 = vmatprep.mubr.bf16.mxu0 %v6217
        %6550 = vmatmul.mubr.bf16.gmra.mrb[0].mxu0 %v6216
        %v6551 = vpop.f32.mrb[0].mxu0
        %v6552 = vadd.f32 0.0, %v6551
        %v6553 = vpop.f32.mrb[0].mxu0
        %v6554 = vadd.f32 0.0, %v6553
        %v6555 = vpop.f32.mrb[0].mxu0
        %v6556 = vadd.f32 0.0, %v6555
        %v6557 = vpop.f32.mrb[0].mxu0
        %v6558 = vadd.f32 0.0, %v6557
        %6559 = vmatprep.mubr.bf16.mxu0 %v6220
        %6560 = vmatmul.mubr.bf16.gmra.mrb[0].mxu0 %v6219
        %v6561 = vpop.f32.mrb[0].mxu0
        %v6562 = vadd.f32 0.0, %v6561
        %v6563 = vpop.f32.mrb[0].mxu0
        %v6564 = vadd.f32 0.0, %v6563
        %v6565 = vpop.f32.mrb[0].mxu0
        %v6566 = vadd.f32 0.0, %v6565
        %v6567 = vpop.f32.mrb[0].mxu0
        %v6568 = vadd.f32 0.0, %v6567
        %6569 = vmatprep.mubr.bf16.mxu0 %v6223
        %6570 = vmatmul.mubr.bf16.gmra.mrb[0].mxu0 %v6222
        %v6571 = vpop.f32.mrb[0].mxu0
        %v6572 = vadd.f32 0.0, %v6571
        %v6573 = vpop.f32.mrb[0].mxu0
        %v6574 = vadd.f32 0.0, %v6573
        %v6575 = vpop.f32.mrb[0].mxu0
        %v6576 = vadd.f32 0.0, %v6575
        %v6577 = vpop.f32.mrb[0].mxu0
        %v6578 = vadd.f32 0.0, %v6577
        %6579 = vmatprep.mubr.bf16.mxu0 %v6226
        %6580 = vmatmul.mubr.bf16.gmra.mrb[0].mxu0 %v6225
        %v6581 = vpop.f32.mrb[0].mxu0
        %v6582 = vadd.f32 0.0, %v6581
        %v6583 = vpop.f32.mrb[0].mxu0
        %v6584 = vadd.f32 0.0, %v6583
        %v6585 = vpop.f32.mrb[0].mxu0
        %v6586 = vadd.f32 0.0, %v6585
        %v6587 = vpop.f32.mrb[0].mxu0
        %v6588 = vadd.f32 0.0, %v6587
        %6589 = vdwg.mxu0
        %6590 = vmatprep.subr.bf16.mxu0 %v6454
        %6591 = vmatpush1.bf16.msra.mxu0 %v6453
        %6592 = vmatprep.subr.bf16.mxu0 %v6456
        %6593 = vmatpush1.bf16.msra.mxu0 %v6455
        %6594 = vmatprep.subr.bf16.mxu0 %v6458
        %6595 = vmatpush1.bf16.msra.mxu0 %v6457
        %6596 = vmatprep.subr.bf16.mxu0 %v6460
        %6597 = vmatpush1.bf16.msra.mxu0 %v6459
        %6598 = vmatprep.subr.bf16.mxu0 %v6462
        %6599 = vmatpush1.bf16.msra.mxu0 %v6461
        %6600 = vmatprep.subr.bf16.mxu0 %v6464
        %6601 = vmatpush1.bf16.msra.mxu0 %v6463
        %6602 = vmatprep.subr.bf16.mxu0 %v6466
        %6603 = vmatpush1.bf16.msra.mxu0 %v6465
        %6604 = vmatprep.subr.bf16.mxu0 %v6468
        %6605 = vmatpush1.bf16.msra.mxu0 %v6467
        %6606 = vmatprep.subr.bf16.mxu0 0
        %6607 = vmatpush1.bf16.msra.mxu0 0
        %6608 = vmatprep.subr.bf16.mxu0 0
        %6609 = vmatpush1.bf16.msra.mxu0 0
        %6610 = vmatprep.subr.bf16.mxu0 0
        %6611 = vmatpush1.bf16.msra.mxu0 0
        %6612 = vmatprep.subr.bf16.mxu0 0
        %6613 = vmatpush1.bf16.msra.mxu0 0
        %6614 = vmatprep.subr.bf16.mxu0 0
        %6615 = vmatpush1.bf16.msra.mxu0 0
        %6616 = vmatprep.subr.bf16.mxu0 0
        %6617 = vmatpush1.bf16.msra.mxu0 0
        %6618 = vmatprep.subr.bf16.mxu0 0
        %6619 = vmatpush1.bf16.msra.mxu0 0
        %6620 = vmatprep.subr.bf16.mxu0 0
        %6621 = vmatpush1.bf16.msra.mxu0 0
        %6622 = vmatprep.mubr.bf16.mxu0 0
        %6623 = vmatmul.mubr.bf16.gmra.mrb[0].mxu0 %v6218
        %v6624 = vpop.f32.mrb[0].mxu0
        %v6625 = vadd.f32 %v6552, %v6624
        %v6626 = vpop.f32.mrb[0].mxu0
        %v6627 = vadd.f32 %v6554, %v6626
        %v6628 = vpop.f32.mrb[0].mxu0
        %v6629 = vadd.f32 %v6556, %v6628
        %v6630 = vpop.f32.mrb[0].mxu0
        %v6631 = vadd.f32 %v6558, %v6630
        %6632 = vmatprep.mubr.bf16.mxu0 0
        %6633 = vmatmul.mubr.bf16.gmra.mrb[0].mxu0 %v6221
        %v6634 = vpop.f32.mrb[0].mxu0
        %v6635 = vadd.f32 %v6562, %v6634
        %v6636 = vpop.f32.mrb[0].mxu0
        %v6637 = vadd.f32 %v6564, %v6636
        %v6638 = vpop.f32.mrb[0].mxu0
        %v6639 = vadd.f32 %v6566, %v6638
        %v6640 = vpop.f32.mrb[0].mxu0
        %v6641 = vadd.f32 %v6568, %v6640
        %6642 = vmatprep.mubr.bf16.mxu0 0
        %6643 = vmatmul.mubr.bf16.gmra.mrb[0].mxu0 %v6224
        %v6644 = vpop.f32.mrb[0].mxu0
        %v6645 = vadd.f32 %v6572, %v6644
        %v6646 = vpop.f32.mrb[0].mxu0
        %v6647 = vadd.f32 %v6574, %v6646
        %v6648 = vpop.f32.mrb[0].mxu0
        %v6649 = vadd.f32 %v6576, %v6648
        %v6650 = vpop.f32.mrb[0].mxu0
        %v6651 = vadd.f32 %v6578, %v6650
        %6652 = vmatprep.mubr.bf16.mxu0 0
        %6653 = vmatmul.mubr.bf16.gmra.mrb[0].mxu0 %v6227
        %v6654 = vpop.f32.mrb[0].mxu0
        %v6655 = vadd.f32 %v6582, %v6654
        %v6656 = vpop.f32.mrb[0].mxu0
        %v6657 = vadd.f32 %v6584, %v6656
        %v6658 = vpop.f32.mrb[0].mxu0
        %v6659 = vadd.f32 %v6586, %v6658
        %v6660 = vpop.f32.mrb[0].mxu0
        %v6661 = vadd.f32 %v6588, %v6660
        %6662 = vdwg.mxu0
        %v6711 = vunpack.c.l.b16 %v5976
        %v6712 = vunpack.c.h.b16 %v5976
        %v6713 = vunpack.c.l.b16 %v5977
        %v6714 = vunpack.c.h.b16 %v5977
        %v6715 = vunpack.c.l.b16 %v5978
        %v6716 = vunpack.c.h.b16 %v5978
        %v6717 = vunpack.c.l.b16 %v5979
        %v6718 = vunpack.c.h.b16 %v5979
        %v6719 = vunpack.c.l.b16 %v5980
        %v6720 = vunpack.c.h.b16 %v5980
        %v6721 = vunpack.c.l.b16 %v5981
        %v6722 = vunpack.c.h.b16 %v5981
        %v6723 = vunpack.c.l.b16 %v5982
        %v6724 = vunpack.c.h.b16 %v5982
        %v6725 = vunpack.c.l.b16 %v5983
        %v6726 = vunpack.c.h.b16 %v5983
        %v6727 = vunpack.c.l.b16 %v5984
        %v6728 = vunpack.c.h.b16 %v5984
        %v6729 = vunpack.c.l.b16 %v5985
        %v6730 = vunpack.c.h.b16 %v5985
        %v6731 = vunpack.c.l.b16 %v5986
        %v6732 = vunpack.c.h.b16 %v5986
        %v6733 = vunpack.c.l.b16 %v5987
        %v6734 = vunpack.c.h.b16 %v5987
        %v6735 = vunpack.c.l.b16 %v5988
        %v6736 = vunpack.c.h.b16 %v5988
        %v6737 = vunpack.c.l.b16 %v5989
        %v6738 = vunpack.c.h.b16 %v5989
        %v6739 = vunpack.c.l.b16 %v5990
        %v6740 = vunpack.c.h.b16 %v5990
        %v6741 = vunpack.c.l.b16 %v5991
        %v6742 = vunpack.c.h.b16 %v5991
        %v6743 = vunpack.c.l.b16 %v5992
        %v6744 = vunpack.c.h.b16 %v5992
        %v6745 = vunpack.c.l.b16 %v5993
        %v6746 = vunpack.c.h.b16 %v5993
        %v6747 = vunpack.c.l.b16 %v5994
        %v6748 = vunpack.c.h.b16 %v5994
        %v6749 = vunpack.c.l.b16 %v5995
        %v6750 = vunpack.c.h.b16 %v5995
        %v6751 = vunpack.c.l.b16 %v5996
        %v6752 = vunpack.c.h.b16 %v5996
        %v6753 = vunpack.c.l.b16 %v5997
        %v6754 = vunpack.c.h.b16 %v5997
        %v6755 = vunpack.c.l.b16 %v5998
        %v6756 = vunpack.c.h.b16 %v5998
        %v6757 = vunpack.c.l.b16 %v5999
        %v6758 = vunpack.c.h.b16 %v5999
        %v6759 = vunpack.c.l.b16 %v6000
        %v6760 = vunpack.c.h.b16 %v6000
        %v6761 = vunpack.c.l.b16 %v6001
        %v6762 = vunpack.c.h.b16 %v6001
        %v6763 = vunpack.c.l.b16 %v6002
        %v6764 = vunpack.c.h.b16 %v6002
        %v6765 = vunpack.c.l.b16 %v6003
        %v6766 = vunpack.c.h.b16 %v6003
        %v6767 = vunpack.c.l.b16 %v6004
        %v6768 = vunpack.c.h.b16 %v6004
        %v6769 = vunpack.c.l.b16 %v6005
        %v6770 = vunpack.c.h.b16 %v6005
        %v6771 = vunpack.c.l.b16 %v6006
        %v6772 = vunpack.c.h.b16 %v6006
        %v6773 = vunpack.c.l.b16 %v6007
        %v6774 = vunpack.c.h.b16 %v6007
        %v6775 = vunpack.c.l.b16 %v6008
        %v6776 = vunpack.c.h.b16 %v6008
        %v6777 = vunpack.c.l.b16 %v6009
        %v6778 = vunpack.c.h.b16 %v6009
        %v6779 = vunpack.c.l.b16 %v6010
        %v6780 = vunpack.c.h.b16 %v6010
        %v6781 = vunpack.c.l.b16 %v6011
        %v6782 = vunpack.c.h.b16 %v6011
        %v6783 = vunpack.c.l.b16 %v6012
        %v6784 = vunpack.c.h.b16 %v6012
        %v6785 = vunpack.c.l.b16 %v6013
        %v6786 = vunpack.c.h.b16 %v6013
        %v6787 = vunpack.c.l.b16 %v6014
        %v6788 = vunpack.c.h.b16 %v6014
        %v6789 = vunpack.c.l.b16 %v6015
        %v6790 = vunpack.c.h.b16 %v6015
        %v6791 = vunpack.c.l.b16 %v6016
        %v6792 = vunpack.c.h.b16 %v6016
        %v6793 = vunpack.c.l.b16 %v6017
        %v6794 = vunpack.c.h.b16 %v6017
        %v6795 = vunpack.c.l.b16 %v6018
        %v6796 = vunpack.c.h.b16 %v6018
        %v6797 = vunpack.c.l.b16 %v6019
        %v6798 = vunpack.c.h.b16 %v6019
        %v6799 = vunpack.c.l.b16 %v6020
        %v6800 = vunpack.c.h.b16 %v6020
        %v6801 = vunpack.c.l.b16 %v6021
        %v6802 = vunpack.c.h.b16 %v6021
        %v6803 = vunpack.c.l.b16 %v6022
        %v6804 = vunpack.c.h.b16 %v6022
        %v6805 = vunpack.c.l.b16 %v6023
        %v6806 = vunpack.c.h.b16 %v6023
        %v6807 = vpack.c.b16 %v6713, %v6711
        %v6808 = vpack.c.b16 %v6714, %v6712
        %v6809 = vpack.c.b16 %v6717, %v6715
        %v6810 = vpack.c.b16 %v6718, %v6716
        %v6811 = vpack.c.b16 %v6721, %v6719
        %v6812 = vpack.c.b16 %v6722, %v6720
        %v6813 = vpack.c.b16 %v6725, %v6723
        %v6814 = vpack.c.b16 %v6726, %v6724
        %v6815 = vpack.c.b16 %v6729, %v6727
        %v6816 = vpack.c.b16 %v6730, %v6728
        %v6817 = vpack.c.b16 %v6733, %v6731
        %v6818 = vpack.c.b16 %v6734, %v6732
        %v6819 = vpack.c.b16 %v6737, %v6735
        %v6820 = vpack.c.b16 %v6738, %v6736
        %v6821 = vpack.c.b16 %v6741, %v6739
        %v6822 = vpack.c.b16 %v6742, %v6740
        %v6823 = vpack.c.b16 %v6745, %v6743
        %v6824 = vpack.c.b16 %v6746, %v6744
        %v6825 = vpack.c.b16 %v6749, %v6747
        %v6826 = vpack.c.b16 %v6750, %v6748
        %v6827 = vpack.c.b16 %v6753, %v6751
        %v6828 = vpack.c.b16 %v6754, %v6752
        %v6829 = vpack.c.b16 %v6757, %v6755
        %v6830 = vpack.c.b16 %v6758, %v6756
        %v6831 = vpack.c.b16 %v6761, %v6759
        %v6832 = vpack.c.b16 %v6762, %v6760
        %v6833 = vpack.c.b16 %v6765, %v6763
        %v6834 = vpack.c.b16 %v6766, %v6764
        %v6835 = vpack.c.b16 %v6769, %v6767
        %v6836 = vpack.c.b16 %v6770, %v6768
        %v6837 = vpack.c.b16 %v6773, %v6771
        %v6838 = vpack.c.b16 %v6774, %v6772
        %v6839 = vpack.c.b16 %v6777, %v6775
        %v6840 = vpack.c.b16 %v6778, %v6776
        %v6841 = vpack.c.b16 %v6781, %v6779
        %v6842 = vpack.c.b16 %v6782, %v6780
        %v6843 = vpack.c.b16 %v6785, %v6783
        %v6844 = vpack.c.b16 %v6786, %v6784
        %v6845 = vpack.c.b16 %v6789, %v6787
        %v6846 = vpack.c.b16 %v6790, %v6788
        %v6847 = vpack.c.b16 %v6793, %v6791
        %v6848 = vpack.c.b16 %v6794, %v6792
        %v6849 = vpack.c.b16 %v6797, %v6795
        %v6850 = vpack.c.b16 %v6798, %v6796
        %v6851 = vpack.c.b16 %v6801, %v6799
        %v6852 = vpack.c.b16 %v6802, %v6800
        %v6853 = vpack.c.b16 %v6805, %v6803
        %v6854 = vpack.c.b16 %v6806, %v6804
        %6903 = vmatprep.subr.bf16.mxu0 %v6808
        %6904 = vmatpush1.bf16.msra.mxu0 %v6807
        %6905 = vmatprep.subr.bf16.mxu0 %v6810
        %6906 = vmatpush1.bf16.msra.mxu0 %v6809
        %6907 = vmatprep.subr.bf16.mxu0 %v6812
        %6908 = vmatpush1.bf16.msra.mxu0 %v6811
        %6909 = vmatprep.subr.bf16.mxu0 %v6814
        %6910 = vmatpush1.bf16.msra.mxu0 %v6813
        %6911 = vmatprep.subr.bf16.mxu0 %v6816
        %6912 = vmatpush1.bf16.msra.mxu0 %v6815
        %6913 = vmatprep.subr.bf16.mxu0 %v6818
        %6914 = vmatpush1.bf16.msra.mxu0 %v6817
        %6915 = vmatprep.subr.bf16.mxu0 %v6820
        %6916 = vmatpush1.bf16.msra.mxu0 %v6819
        %6917 = vmatprep.subr.bf16.mxu0 %v6822
        %6918 = vmatpush1.bf16.msra.mxu0 %v6821
        %6919 = vmatprep.subr.bf16.mxu0 %v6824
        %6920 = vmatpush1.bf16.msra.mxu0 %v6823
        %6921 = vmatprep.subr.bf16.mxu0 %v6826
        %6922 = vmatpush1.bf16.msra.mxu0 %v6825
        %6923 = vmatprep.subr.bf16.mxu0 %v6828
        %6924 = vmatpush1.bf16.msra.mxu0 %v6827
        %6925 = vmatprep.subr.bf16.mxu0 %v6830
        %6926 = vmatpush1.bf16.msra.mxu0 %v6829
        %6927 = vmatprep.subr.bf16.mxu0 %v6832
        %6928 = vmatpush1.bf16.msra.mxu0 %v6831
        %6929 = vmatprep.subr.bf16.mxu0 %v6834
        %6930 = vmatpush1.bf16.msra.mxu0 %v6833
        %6931 = vmatprep.subr.bf16.mxu0 %v6836
        %6932 = vmatpush1.bf16.msra.mxu0 %v6835
        %6933 = vmatprep.subr.bf16.mxu0 %v6838
        %6934 = vmatpush1.bf16.msra.mxu0 %v6837
        %6935 = vmatprep.mubr.bf16.mxu0 %v5965
        %6936 = vmatmul.mubr.bf16.gmra.mrb[0].mxu0 %v5964
        %v6937 = vpop.f32.mrb[0].mxu0
        %v6938 = vadd.f32 %v6625, %v6937
        %v6939 = vpop.f32.mrb[0].mxu0
        %v6940 = vadd.f32 %v6627, %v6939
        %v6941 = vpop.f32.mrb[0].mxu0
        %v6942 = vadd.f32 %v6629, %v6941
        %v6943 = vpop.f32.mrb[0].mxu0
        %v6944 = vadd.f32 %v6631, %v6943
        %6945 = vmatprep.mubr.bf16.mxu0 %v5968
        %6946 = vmatmul.mubr.bf16.gmra.mrb[0].mxu0 %v5967
        %v6947 = vpop.f32.mrb[0].mxu0
        %v6948 = vadd.f32 %v6635, %v6947
        %v6949 = vpop.f32.mrb[0].mxu0
        %v6950 = vadd.f32 %v6637, %v6949
        %v6951 = vpop.f32.mrb[0].mxu0
        %v6952 = vadd.f32 %v6639, %v6951
        %v6953 = vpop.f32.mrb[0].mxu0
        %v6954 = vadd.f32 %v6641, %v6953
        %6955 = vmatprep.mubr.bf16.mxu0 %v5971
        %6956 = vmatmul.mubr.bf16.gmra.mrb[0].mxu0 %v5970
        %v6957 = vpop.f32.mrb[0].mxu0
        %v6958 = vadd.f32 %v6645, %v6957
        %v6959 = vpop.f32.mrb[0].mxu0
        %v6960 = vadd.f32 %v6647, %v6959
        %v6961 = vpop.f32.mrb[0].mxu0
        %v6962 = vadd.f32 %v6649, %v6961
        %v6963 = vpop.f32.mrb[0].mxu0
        %v6964 = vadd.f32 %v6651, %v6963
        %6965 = vmatprep.mubr.bf16.mxu0 %v5974
        %6966 = vmatmul.mubr.bf16.gmra.mrb[0].mxu0 %v5973
        %v6967 = vpop.f32.mrb[0].mxu0
        %v6968 = vadd.f32 %v6655, %v6967
        %v6969 = vpop.f32.mrb[0].mxu0
        %v6970 = vadd.f32 %v6657, %v6969
        %v6971 = vpop.f32.mrb[0].mxu0
        %v6972 = vadd.f32 %v6659, %v6971
        %v6973 = vpop.f32.mrb[0].mxu0
        %v6974 = vadd.f32 %v6661, %v6973
        %6975 = vdwg.mxu0
        %6976 = vmatprep.subr.bf16.mxu0 %v6840
        %6977 = vmatpush1.bf16.msra.mxu0 %v6839
        %6978 = vmatprep.subr.bf16.mxu0 %v6842
        %6979 = vmatpush1.bf16.msra.mxu0 %v6841
        %6980 = vmatprep.subr.bf16.mxu0 %v6844
        %6981 = vmatpush1.bf16.msra.mxu0 %v6843
        %6982 = vmatprep.subr.bf16.mxu0 %v6846
        %6983 = vmatpush1.bf16.msra.mxu0 %v6845
        %6984 = vmatprep.subr.bf16.mxu0 %v6848
        %6985 = vmatpush1.bf16.msra.mxu0 %v6847
        %6986 = vmatprep.subr.bf16.mxu0 %v6850
        %6987 = vmatpush1.bf16.msra.mxu0 %v6849
        %6988 = vmatprep.subr.bf16.mxu0 %v6852
        %6989 = vmatpush1.bf16.msra.mxu0 %v6851
        %6990 = vmatprep.subr.bf16.mxu0 %v6854
        %6991 = vmatpush1.bf16.msra.mxu0 %v6853
        %6992 = vmatprep.subr.bf16.mxu0 0
        %6993 = vmatpush1.bf16.msra.mxu0 0
        %6994 = vmatprep.subr.bf16.mxu0 0
        %6995 = vmatpush1.bf16.msra.mxu0 0
        %6996 = vmatprep.subr.bf16.mxu0 0
        %6997 = vmatpush1.bf16.msra.mxu0 0
        %6998 = vmatprep.subr.bf16.mxu0 0
        %6999 = vmatpush1.bf16.msra.mxu0 0
        %7000 = vmatprep.subr.bf16.mxu0 0
        %7001 = vmatpush1.bf16.msra.mxu0 0
        %7002 = vmatprep.subr.bf16.mxu0 0
        %7003 = vmatpush1.bf16.msra.mxu0 0
        %7004 = vmatprep.subr.bf16.mxu0 0
        %7005 = vmatpush1.bf16.msra.mxu0 0
        %7006 = vmatprep.subr.bf16.mxu0 0
        %7007 = vmatpush1.bf16.msra.mxu0 0
        %7008 = vmatprep.mubr.bf16.mxu0 0
        %7009 = vmatmul.mubr.bf16.gmra.mrb[0].mxu0 %v5966
        %v7010 = vpop.f32.mrb[0].mxu0
        %v7011 = vadd.f32 %v6938, %v7010
        %v7012 = vpop.f32.mrb[0].mxu0
        %v7013 = vadd.f32 %v6940, %v7012
        %v7014 = vpop.f32.mrb[0].mxu0
        %v7015 = vadd.f32 %v6942, %v7014
        %v7016 = vpop.f32.mrb[0].mxu0
        %v7017 = vadd.f32 %v6944, %v7016
        %7018 = vmatprep.mubr.bf16.mxu0 0
        %7019 = vmatmul.mubr.bf16.gmra.mrb[0].mxu0 %v5969
        %v7020 = vpop.f32.mrb[0].mxu0
        %v7021 = vadd.f32 %v6948, %v7020
        %v7022 = vpop.f32.mrb[0].mxu0
        %v7023 = vadd.f32 %v6950, %v7022
        %v7024 = vpop.f32.mrb[0].mxu0
        %v7025 = vadd.f32 %v6952, %v7024
        %v7026 = vpop.f32.mrb[0].mxu0
        %v7027 = vadd.f32 %v6954, %v7026
        %7028 = vmatprep.mubr.bf16.mxu0 0
        %7029 = vmatmul.mubr.bf16.gmra.mrb[0].mxu0 %v5972
        %v7030 = vpop.f32.mrb[0].mxu0
        %v7031 = vadd.f32 %v6958, %v7030
        %v7032 = vpop.f32.mrb[0].mxu0
        %v7033 = vadd.f32 %v6960, %v7032
        %v7034 = vpop.f32.mrb[0].mxu0
        %v7035 = vadd.f32 %v6962, %v7034
        %v7036 = vpop.f32.mrb[0].mxu0
        %v7037 = vadd.f32 %v6964, %v7036
        %7038 = vmatprep.mubr.bf16.mxu0 0
        %7039 = vmatmul.mubr.bf16.gmra.mrb[0].mxu0 %v5975
        %v7040 = vpop.f32.mrb[0].mxu0
        %v7041 = vadd.f32 %v6968, %v7040
        %v7042 = vpop.f32.mrb[0].mxu0
        %v7043 = vadd.f32 %v6970, %v7042
        %v7044 = vpop.f32.mrb[0].mxu0
        %v7045 = vadd.f32 %v6972, %v7044
        %v7046 = vpop.f32.mrb[0].mxu0
        %v7047 = vadd.f32 %v6974, %v7046
        %7048 = vdwg.mxu0
        %v7049 = vld [vmem:[#allocation2] sm:$0xfc]
        %v7050 = vld [vmem:[#allocation2 + $0x8] sm:$0xfc]
        %v7051 = vld [vmem:[#allocation2 + $0x10] sm:$0xfc]
        %v7052 = vld [vmem:[#allocation2 + $0x18] sm:$0x3]
        %v7053 = vld [vmem:[#allocation2 + $0x20] sm:$0x3]
        %v7054 = vld [vmem:[#allocation2 + $0x28] sm:$0x3]
        %v7055 = vld [vmem:[#allocation2 + $0x30] sm:$0xfc]
        %v7056 = vld [vmem:[#allocation2 + $0x38] sm:$0xfc]
        %v7057 = vld [vmem:[#allocation2 + $0x40] sm:$0xfc]
        %v7058 = vld [vmem:[#allocation2 + $0x48] sm:$0x3]
        %v7059 = vld [vmem:[#allocation2 + $0x50] sm:$0x3]
        %v7060 = vld [vmem:[#allocation2 + $0x58] sm:$0x3]
        %v7061 = vld [vmem:[#allocation2 + $0x60] sm:$0xfc]
        %v7062 = vld [vmem:[#allocation2 + $0x68] sm:$0xfc]
        %v7063 = vld [vmem:[#allocation2 + $0x70] sm:$0xfc]
        %v7064 = vld [vmem:[#allocation2 + $0x78] sm:$0x3]
        %v7065 = vld [vmem:[#allocation2 + $0x80] sm:$0x3]
        %v7066 = vld [vmem:[#allocation2 + $0x88] sm:$0x3]
        %v7067 = vld [vmem:[#allocation2 + $0x90] sm:$0xfc]
        %v7068 = vld [vmem:[#allocation2 + $0x98] sm:$0xfc]
        %v7069 = vld [vmem:[#allocation2 + $0xa0] sm:$0xfc]
        %v7070 = vld [vmem:[#allocation2 + $0xa8] sm:$0x3]
        %v7071 = vld [vmem:[#allocation2 + $0xb0] sm:$0x3]
        %v7072 = vld [vmem:[#allocation2 + $0xb8] sm:$0x3]
        %v7073 = vld [vmem:[#allocation2 + $0xc0] sm:$0xfc]
        %v7074 = vld [vmem:[#allocation2 + $0xc8] sm:$0xfc]
        %v7075 = vld [vmem:[#allocation2 + $0xd0] sm:$0xfc]
        %v7076 = vld [vmem:[#allocation2 + $0xd8] sm:$0x3]
        %v7077 = vld [vmem:[#allocation2 + $0xe0] sm:$0x3]
        %v7078 = vld [vmem:[#allocation2 + $0xe8] sm:$0x3]
        %v7079 = vld [vmem:[#allocation2 + $0xf0] sm:$0xfc]
        %v7080 = vld [vmem:[#allocation2 + $0xf8] sm:$0xfc]
        %v7081 = vld [vmem:[#allocation2 + $0x100] sm:$0xfc]
        %v7082 = vld [vmem:[#allocation2 + $0x108] sm:$0x3]
        %v7083 = vld [vmem:[#allocation2 + $0x110] sm:$0x3]
        %v7084 = vld [vmem:[#allocation2 + $0x118] sm:$0x3]
        %v7085 = vld [vmem:[#allocation2 + $0x120] sm:$0xfc]
        %v7086 = vld [vmem:[#allocation2 + $0x128] sm:$0xfc]
        %v7087 = vld [vmem:[#allocation2 + $0x130] sm:$0xfc]
        %v7088 = vld [vmem:[#allocation2 + $0x138] sm:$0x3]
        %v7089 = vld [vmem:[#allocation2 + $0x140] sm:$0x3]
        %v7090 = vld [vmem:[#allocation2 + $0x148] sm:$0x3]
        %v7091 = vld [vmem:[#allocation2 + $0x150] sm:$0xfc]
        %v7092 = vld [vmem:[#allocation2 + $0x158] sm:$0xfc]
        %v7093 = vld [vmem:[#allocation2 + $0x160] sm:$0xfc]
        %v7094 = vld [vmem:[#allocation2 + $0x168] sm:$0x3]
        %v7095 = vld [vmem:[#allocation2 + $0x170] sm:$0x3]
        %v7096 = vld [vmem:[#allocation2 + $0x178] sm:$0x3]
        %v7145 = vrot.slane %v7049, 2
        %v7146 = vrot.slane %v7052, 2
        %v7147 = vsel %vm1661, %v7145, %v7146
        %v7148 = vrot.slane %v7050, 2
        %v7149 = vrot.slane %v7053, 2
        %v7150 = vsel %vm1661, %v7148, %v7149
        %v7151 = vrot.slane %v7051, 2
        %v7152 = vrot.slane %v7054, 2
        %v7153 = vsel %vm1661, %v7151, %v7152
        %v7154 = vrot.slane %v7055, 2
        %v7155 = vrot.slane %v7058, 2
        %v7156 = vsel %vm1661, %v7154, %v7155
        %v7157 = vrot.slane %v7056, 2
        %v7158 = vrot.slane %v7059, 2
        %v7159 = vsel %vm1661, %v7157, %v7158
        %v7160 = vrot.slane %v7057, 2
        %v7161 = vrot.slane %v7060, 2
        %v7162 = vsel %vm1661, %v7160, %v7161
        %v7163 = vrot.slane %v7061, 2
        %v7164 = vrot.slane %v7064, 2
        %v7165 = vsel %vm1661, %v7163, %v7164
        %v7166 = vrot.slane %v7062, 2
        %v7167 = vrot.slane %v7065, 2
        %v7168 = vsel %vm1661, %v7166, %v7167
        %v7169 = vrot.slane %v7063, 2
        %v7170 = vrot.slane %v7066, 2
        %v7171 = vsel %vm1661, %v7169, %v7170
        %v7172 = vrot.slane %v7067, 2
        %v7173 = vrot.slane %v7070, 2
        %v7174 = vsel %vm1661, %v7172, %v7173
        %v7175 = vrot.slane %v7068, 2
        %v7176 = vrot.slane %v7071, 2
        %v7177 = vsel %vm1661, %v7175, %v7176
        %v7178 = vrot.slane %v7069, 2
        %v7179 = vrot.slane %v7072, 2
        %v7180 = vsel %vm1661, %v7178, %v7179
        %v7181 = vrot.slane %v7073, 2
        %v7182 = vrot.slane %v7076, 2
        %v7183 = vsel %vm1661, %v7181, %v7182
        %v7184 = vrot.slane %v7074, 2
        %v7185 = vrot.slane %v7077, 2
        %v7186 = vsel %vm1661, %v7184, %v7185
        %v7187 = vrot.slane %v7075, 2
        %v7188 = vrot.slane %v7078, 2
        %v7189 = vsel %vm1661, %v7187, %v7188
        %v7190 = vrot.slane %v7079, 2
        %v7191 = vrot.slane %v7082, 2
        %v7192 = vsel %vm1661, %v7190, %v7191
        %v7193 = vrot.slane %v7080, 2
        %v7194 = vrot.slane %v7083, 2
        %v7195 = vsel %vm1661, %v7193, %v7194
        %v7196 = vrot.slane %v7081, 2
        %v7197 = vrot.slane %v7084, 2
        %v7198 = vsel %vm1661, %v7196, %v7197
        %v7199 = vrot.slane %v7085, 2
        %v7200 = vrot.slane %v7088, 2
        %v7201 = vsel %vm1661, %v7199, %v7200
        %v7202 = vrot.slane %v7086, 2
        %v7203 = vrot.slane %v7089, 2
        %v7204 = vsel %vm1661, %v7202, %v7203
        %v7205 = vrot.slane %v7087, 2
        %v7206 = vrot.slane %v7090, 2
        %v7207 = vsel %vm1661, %v7205, %v7206
        %v7208 = vrot.slane %v7091, 2
        %v7209 = vrot.slane %v7094, 2
        %v7210 = vsel %vm1661, %v7208, %v7209
        %v7211 = vrot.slane %v7092, 2
        %v7212 = vrot.slane %v7095, 2
        %v7213 = vsel %vm1661, %v7211, %v7212
        %v7214 = vrot.slane %v7093, 2
        %v7215 = vrot.slane %v7096, 2
        %v7216 = vsel %vm1661, %v7214, %v7215
        %v7241 = vpack.c.bf16 %v7156, %v7147
        %v7242 = vpack.c.bf16 %v7159, %v7150
        %v7243 = vpack.c.bf16 %v7162, %v7153
        %v7244 = vpack.c.bf16 %v7174, %v7165
        %v7245 = vpack.c.bf16 %v7177, %v7168
        %v7246 = vpack.c.bf16 %v7180, %v7171
        %v7247 = vpack.c.bf16 %v7192, %v7183
        %v7248 = vpack.c.bf16 %v7195, %v7186
        %v7249 = vpack.c.bf16 %v7198, %v7189
        %v7250 = vpack.c.bf16 %v7210, %v7201
        %v7251 = vpack.c.bf16 %v7213, %v7204
        %v7252 = vpack.c.bf16 %v7216, %v7207
        %s7253 = scalar_lea.vmem [#allocation9], 768
        %v7254 = vld [vmem:[%s7253] sm:$0xff]
        %v7255 = vld [vmem:[%s7253 + $0x8] sm:$0xff]
        %v7256 = vld [vmem:[%s7253 + $0x10] sm:$0xff]
        %v7257 = vld [vmem:[%s7253 + $0x18] sm:$0xff]
        %v7258 = vld [vmem:[%s7253 + $0x20] sm:$0xff]
        %v7259 = vld [vmem:[%s7253 + $0x28] sm:$0xff]
        %v7260 = vld [vmem:[%s7253 + $0x30] sm:$0xff]
        %v7261 = vld [vmem:[%s7253 + $0x38] sm:$0xff]
        %v7262 = vld [vmem:[%s7253 + $0x40] sm:$0xff]
        %v7263 = vld [vmem:[%s7253 + $0x48] sm:$0xff]
        %v7264 = vld [vmem:[%s7253 + $0x50] sm:$0xff]
        %v7265 = vld [vmem:[%s7253 + $0x58] sm:$0xff]
        %v7266 = vld [vmem:[%s7253 + $0x60] sm:$0xff]
        %v7267 = vld [vmem:[%s7253 + $0x68] sm:$0xff]
        %v7268 = vld [vmem:[%s7253 + $0x70] sm:$0xff]
        %v7269 = vld [vmem:[%s7253 + $0x78] sm:$0xff]
        %v7270 = vld [vmem:[%s7253 + $0x80] sm:$0xff]
        %v7271 = vld [vmem:[%s7253 + $0x88] sm:$0xff]
        %v7272 = vld [vmem:[%s7253 + $0x90] sm:$0xff]
        %v7273 = vld [vmem:[%s7253 + $0x98] sm:$0xff]
        %v7274 = vld [vmem:[%s7253 + $0xa0] sm:$0xff]
        %v7275 = vld [vmem:[%s7253 + $0xa8] sm:$0xff]
        %v7276 = vld [vmem:[%s7253 + $0xb0] sm:$0xff]
        %v7277 = vld [vmem:[%s7253 + $0xb8] sm:$0xff]
        %v7278 = vld [vmem:[%s7253 + $0xc0] sm:$0xff]
        %v7279 = vld [vmem:[%s7253 + $0xc8] sm:$0xff]
        %v7280 = vld [vmem:[%s7253 + $0xd0] sm:$0xff]
        %v7281 = vld [vmem:[%s7253 + $0xd8] sm:$0xff]
        %v7282 = vld [vmem:[%s7253 + $0xe0] sm:$0xff]
        %v7283 = vld [vmem:[%s7253 + $0xe8] sm:$0xff]
        %v7284 = vld [vmem:[%s7253 + $0xf0] sm:$0xff]
        %v7285 = vld [vmem:[%s7253 + $0xf8] sm:$0xff]
        %v7286 = vld [vmem:[%s7253 + $0x100] sm:$0xff]
        %v7287 = vld [vmem:[%s7253 + $0x108] sm:$0xff]
        %v7288 = vld [vmem:[%s7253 + $0x110] sm:$0xff]
        %v7289 = vld [vmem:[%s7253 + $0x118] sm:$0xff]
        %v7290 = vld [vmem:[%s7253 + $0x120] sm:$0xff]
        %v7291 = vld [vmem:[%s7253 + $0x128] sm:$0xff]
        %v7292 = vld [vmem:[%s7253 + $0x130] sm:$0xff]
        %v7293 = vld [vmem:[%s7253 + $0x138] sm:$0xff]
        %v7294 = vld [vmem:[%s7253 + $0x140] sm:$0xff]
        %v7295 = vld [vmem:[%s7253 + $0x148] sm:$0xff]
        %v7296 = vld [vmem:[%s7253 + $0x150] sm:$0xff]
        %v7297 = vld [vmem:[%s7253 + $0x158] sm:$0xff]
        %v7298 = vld [vmem:[%s7253 + $0x160] sm:$0xff]
        %v7299 = vld [vmem:[%s7253 + $0x168] sm:$0xff]
        %v7300 = vld [vmem:[%s7253 + $0x170] sm:$0xff]
        %v7301 = vld [vmem:[%s7253 + $0x178] sm:$0xff]
        %v7350 = vunpack.c.l.b16 %v7254
        %v7351 = vunpack.c.h.b16 %v7254
        %v7352 = vunpack.c.l.b16 %v7255
        %v7353 = vunpack.c.h.b16 %v7255
        %v7354 = vunpack.c.l.b16 %v7256
        %v7355 = vunpack.c.h.b16 %v7256
        %v7356 = vunpack.c.l.b16 %v7257
        %v7357 = vunpack.c.h.b16 %v7257
        %v7358 = vunpack.c.l.b16 %v7258
        %v7359 = vunpack.c.h.b16 %v7258
        %v7360 = vunpack.c.l.b16 %v7259
        %v7361 = vunpack.c.h.b16 %v7259
        %v7362 = vunpack.c.l.b16 %v7260
        %v7363 = vunpack.c.h.b16 %v7260
        %v7364 = vunpack.c.l.b16 %v7261
        %v7365 = vunpack.c.h.b16 %v7261
        %v7366 = vunpack.c.l.b16 %v7262
        %v7367 = vunpack.c.h.b16 %v7262
        %v7368 = vunpack.c.l.b16 %v7263
        %v7369 = vunpack.c.h.b16 %v7263
        %v7370 = vunpack.c.l.b16 %v7264
        %v7371 = vunpack.c.h.b16 %v7264
        %v7372 = vunpack.c.l.b16 %v7265
        %v7373 = vunpack.c.h.b16 %v7265
        %v7374 = vunpack.c.l.b16 %v7266
        %v7375 = vunpack.c.h.b16 %v7266
        %v7376 = vunpack.c.l.b16 %v7267
        %v7377 = vunpack.c.h.b16 %v7267
        %v7378 = vunpack.c.l.b16 %v7268
        %v7379 = vunpack.c.h.b16 %v7268
        %v7380 = vunpack.c.l.b16 %v7269
        %v7381 = vunpack.c.h.b16 %v7269
        %v7382 = vunpack.c.l.b16 %v7270
        %v7383 = vunpack.c.h.b16 %v7270
        %v7384 = vunpack.c.l.b16 %v7271
        %v7385 = vunpack.c.h.b16 %v7271
        %v7386 = vunpack.c.l.b16 %v7272
        %v7387 = vunpack.c.h.b16 %v7272
        %v7388 = vunpack.c.l.b16 %v7273
        %v7389 = vunpack.c.h.b16 %v7273
        %v7390 = vunpack.c.l.b16 %v7274
        %v7391 = vunpack.c.h.b16 %v7274
        %v7392 = vunpack.c.l.b16 %v7275
        %v7393 = vunpack.c.h.b16 %v7275
        %v7394 = vunpack.c.l.b16 %v7276
        %v7395 = vunpack.c.h.b16 %v7276
        %v7396 = vunpack.c.l.b16 %v7277
        %v7397 = vunpack.c.h.b16 %v7277
        %v7398 = vunpack.c.l.b16 %v7278
        %v7399 = vunpack.c.h.b16 %v7278
        %v7400 = vunpack.c.l.b16 %v7279
        %v7401 = vunpack.c.h.b16 %v7279
        %v7402 = vunpack.c.l.b16 %v7280
        %v7403 = vunpack.c.h.b16 %v7280
        %v7404 = vunpack.c.l.b16 %v7281
        %v7405 = vunpack.c.h.b16 %v7281
        %v7406 = vunpack.c.l.b16 %v7282
        %v7407 = vunpack.c.h.b16 %v7282
        %v7408 = vunpack.c.l.b16 %v7283
        %v7409 = vunpack.c.h.b16 %v7283
        %v7410 = vunpack.c.l.b16 %v7284
        %v7411 = vunpack.c.h.b16 %v7284
        %v7412 = vunpack.c.l.b16 %v7285
        %v7413 = vunpack.c.h.b16 %v7285
        %v7414 = vunpack.c.l.b16 %v7286
        %v7415 = vunpack.c.h.b16 %v7286
        %v7416 = vunpack.c.l.b16 %v7287
        %v7417 = vunpack.c.h.b16 %v7287
        %v7418 = vunpack.c.l.b16 %v7288
        %v7419 = vunpack.c.h.b16 %v7288
        %v7420 = vunpack.c.l.b16 %v7289
        %v7421 = vunpack.c.h.b16 %v7289
        %v7422 = vunpack.c.l.b16 %v7290
        %v7423 = vunpack.c.h.b16 %v7290
        %v7424 = vunpack.c.l.b16 %v7291
        %v7425 = vunpack.c.h.b16 %v7291
        %v7426 = vunpack.c.l.b16 %v7292
        %v7427 = vunpack.c.h.b16 %v7292
        %v7428 = vunpack.c.l.b16 %v7293
        %v7429 = vunpack.c.h.b16 %v7293
        %v7430 = vunpack.c.l.b16 %v7294
        %v7431 = vunpack.c.h.b16 %v7294
        %v7432 = vunpack.c.l.b16 %v7295
        %v7433 = vunpack.c.h.b16 %v7295
        %v7434 = vunpack.c.l.b16 %v7296
        %v7435 = vunpack.c.h.b16 %v7296
        %v7436 = vunpack.c.l.b16 %v7297
        %v7437 = vunpack.c.h.b16 %v7297
        %v7438 = vunpack.c.l.b16 %v7298
        %v7439 = vunpack.c.h.b16 %v7298
        %v7440 = vunpack.c.l.b16 %v7299
        %v7441 = vunpack.c.h.b16 %v7299
        %v7442 = vunpack.c.l.b16 %v7300
        %v7443 = vunpack.c.h.b16 %v7300
        %v7444 = vunpack.c.l.b16 %v7301
        %v7445 = vunpack.c.h.b16 %v7301
        %v7446 = vpack.c.b16 %v7352, %v7350
        %v7447 = vpack.c.b16 %v7353, %v7351
        %v7448 = vpack.c.b16 %v7356, %v7354
        %v7449 = vpack.c.b16 %v7357, %v7355
        %v7450 = vpack.c.b16 %v7360, %v7358
        %v7451 = vpack.c.b16 %v7361, %v7359
        %v7452 = vpack.c.b16 %v7364, %v7362
        %v7453 = vpack.c.b16 %v7365, %v7363
        %v7454 = vpack.c.b16 %v7368, %v7366
        %v7455 = vpack.c.b16 %v7369, %v7367
        %v7456 = vpack.c.b16 %v7372, %v7370
        %v7457 = vpack.c.b16 %v7373, %v7371
        %v7458 = vpack.c.b16 %v7376, %v7374
        %v7459 = vpack.c.b16 %v7377, %v7375
        %v7460 = vpack.c.b16 %v7380, %v7378
        %v7461 = vpack.c.b16 %v7381, %v7379
        %v7462 = vpack.c.b16 %v7384, %v7382
        %v7463 = vpack.c.b16 %v7385, %v7383
        %v7464 = vpack.c.b16 %v7388, %v7386
        %v7465 = vpack.c.b16 %v7389, %v7387
        %v7466 = vpack.c.b16 %v7392, %v7390
        %v7467 = vpack.c.b16 %v7393, %v7391
        %v7468 = vpack.c.b16 %v7396, %v7394
        %v7469 = vpack.c.b16 %v7397, %v7395
        %v7470 = vpack.c.b16 %v7400, %v7398
        %v7471 = vpack.c.b16 %v7401, %v7399
        %v7472 = vpack.c.b16 %v7404, %v7402
        %v7473 = vpack.c.b16 %v7405, %v7403
        %v7474 = vpack.c.b16 %v7408, %v7406
        %v7475 = vpack.c.b16 %v7409, %v7407
        %v7476 = vpack.c.b16 %v7412, %v7410
        %v7477 = vpack.c.b16 %v7413, %v7411
        %v7478 = vpack.c.b16 %v7416, %v7414
        %v7479 = vpack.c.b16 %v7417, %v7415
        %v7480 = vpack.c.b16 %v7420, %v7418
        %v7481 = vpack.c.b16 %v7421, %v7419
        %v7482 = vpack.c.b16 %v7424, %v7422
        %v7483 = vpack.c.b16 %v7425, %v7423
        %v7484 = vpack.c.b16 %v7428, %v7426
        %v7485 = vpack.c.b16 %v7429, %v7427
        %v7486 = vpack.c.b16 %v7432, %v7430
        %v7487 = vpack.c.b16 %v7433, %v7431
        %v7488 = vpack.c.b16 %v7436, %v7434
        %v7489 = vpack.c.b16 %v7437, %v7435
        %v7490 = vpack.c.b16 %v7440, %v7438
        %v7491 = vpack.c.b16 %v7441, %v7439
        %v7492 = vpack.c.b16 %v7444, %v7442
        %v7493 = vpack.c.b16 %v7445, %v7443
        %7542 = vmatprep.subr.bf16.mxu0 %v7447
        %7543 = vmatpush1.bf16.msra.mxu0 %v7446
        %7544 = vmatprep.subr.bf16.mxu0 %v7449
        %7545 = vmatpush1.bf16.msra.mxu0 %v7448
        %7546 = vmatprep.subr.bf16.mxu0 %v7451
        %7547 = vmatpush1.bf16.msra.mxu0 %v7450
        %7548 = vmatprep.subr.bf16.mxu0 %v7453
        %7549 = vmatpush1.bf16.msra.mxu0 %v7452
        %7550 = vmatprep.subr.bf16.mxu0 %v7455
        %7551 = vmatpush1.bf16.msra.mxu0 %v7454
        %7552 = vmatprep.subr.bf16.mxu0 %v7457
        %7553 = vmatpush1.bf16.msra.mxu0 %v7456
        %7554 = vmatprep.subr.bf16.mxu0 %v7459
        %7555 = vmatpush1.bf16.msra.mxu0 %v7458
        %7556 = vmatprep.subr.bf16.mxu0 %v7461
        %7557 = vmatpush1.bf16.msra.mxu0 %v7460
        %7558 = vmatprep.subr.bf16.mxu0 %v7463
        %7559 = vmatpush1.bf16.msra.mxu0 %v7462
        %7560 = vmatprep.subr.bf16.mxu0 %v7465
        %7561 = vmatpush1.bf16.msra.mxu0 %v7464
        %7562 = vmatprep.subr.bf16.mxu0 %v7467
        %7563 = vmatpush1.bf16.msra.mxu0 %v7466
        %7564 = vmatprep.subr.bf16.mxu0 %v7469
        %7565 = vmatpush1.bf16.msra.mxu0 %v7468
        %7566 = vmatprep.subr.bf16.mxu0 %v7471
        %7567 = vmatpush1.bf16.msra.mxu0 %v7470
        %7568 = vmatprep.subr.bf16.mxu0 %v7473
        %7569 = vmatpush1.bf16.msra.mxu0 %v7472
        %7570 = vmatprep.subr.bf16.mxu0 %v7475
        %7571 = vmatpush1.bf16.msra.mxu0 %v7474
        %7572 = vmatprep.subr.bf16.mxu0 %v7477
        %7573 = vmatpush1.bf16.msra.mxu0 %v7476
        %7574 = vmatprep.mubr.bf16.mxu0 %v7242
        %7575 = vmatmul.mubr.bf16.gmra.mrb[0].mxu0 %v7241
        %v7576 = vpop.f32.mrb[0].mxu0
        %v7577 = vadd.f32 0.0, %v7576
        %v7578 = vpop.f32.mrb[0].mxu0
        %v7579 = vadd.f32 0.0, %v7578
        %v7580 = vpop.f32.mrb[0].mxu0
        %v7581 = vadd.f32 0.0, %v7580
        %v7582 = vpop.f32.mrb[0].mxu0
        %v7583 = vadd.f32 0.0, %v7582
        %7584 = vmatprep.mubr.bf16.mxu0 %v7245
        %7585 = vmatmul.mubr.bf16.gmra.mrb[0].mxu0 %v7244
        %v7586 = vpop.f32.mrb[0].mxu0
        %v7587 = vadd.f32 0.0, %v7586
        %v7588 = vpop.f32.mrb[0].mxu0
        %v7589 = vadd.f32 0.0, %v7588
        %v7590 = vpop.f32.mrb[0].mxu0
        %v7591 = vadd.f32 0.0, %v7590
        %v7592 = vpop.f32.mrb[0].mxu0
        %v7593 = vadd.f32 0.0, %v7592
        %7594 = vmatprep.mubr.bf16.mxu0 %v7248
        %7595 = vmatmul.mubr.bf16.gmra.mrb[0].mxu0 %v7247
        %v7596 = vpop.f32.mrb[0].mxu0
        %v7597 = vadd.f32 0.0, %v7596
        %v7598 = vpop.f32.mrb[0].mxu0
        %v7599 = vadd.f32 0.0, %v7598
        %v7600 = vpop.f32.mrb[0].mxu0
        %v7601 = vadd.f32 0.0, %v7600
        %v7602 = vpop.f32.mrb[0].mxu0
        %v7603 = vadd.f32 0.0, %v7602
        %7604 = vmatprep.mubr.bf16.mxu0 %v7251
        %7605 = vmatmul.mubr.bf16.gmra.mrb[0].mxu0 %v7250
        %v7606 = vpop.f32.mrb[0].mxu0
        %v7607 = vadd.f32 0.0, %v7606
        %v7608 = vpop.f32.mrb[0].mxu0
        %v7609 = vadd.f32 0.0, %v7608
        %v7610 = vpop.f32.mrb[0].mxu0
        %v7611 = vadd.f32 0.0, %v7610
        %v7612 = vpop.f32.mrb[0].mxu0
        %v7613 = vadd.f32 0.0, %v7612
        %7614 = vdwg.mxu0
        %7615 = vmatprep.subr.bf16.mxu0 %v7479
        %7616 = vmatpush1.bf16.msra.mxu0 %v7478
        %7617 = vmatprep.subr.bf16.mxu0 %v7481
        %7618 = vmatpush1.bf16.msra.mxu0 %v7480
        %7619 = vmatprep.subr.bf16.mxu0 %v7483
        %7620 = vmatpush1.bf16.msra.mxu0 %v7482
        %7621 = vmatprep.subr.bf16.mxu0 %v7485
        %7622 = vmatpush1.bf16.msra.mxu0 %v7484
        %7623 = vmatprep.subr.bf16.mxu0 %v7487
        %7624 = vmatpush1.bf16.msra.mxu0 %v7486
        %7625 = vmatprep.subr.bf16.mxu0 %v7489
        %7626 = vmatpush1.bf16.msra.mxu0 %v7488
        %7627 = vmatprep.subr.bf16.mxu0 %v7491
        %7628 = vmatpush1.bf16.msra.mxu0 %v7490
        %7629 = vmatprep.subr.bf16.mxu0 %v7493
        %7630 = vmatpush1.bf16.msra.mxu0 %v7492
        %7631 = vmatprep.subr.bf16.mxu0 0
        %7632 = vmatpush1.bf16.msra.mxu0 0
        %7633 = vmatprep.subr.bf16.mxu0 0
        %7634 = vmatpush1.bf16.msra.mxu0 0
        %7635 = vmatprep.subr.bf16.mxu0 0
        %7636 = vmatpush1.bf16.msra.mxu0 0
        %7637 = vmatprep.subr.bf16.mxu0 0
        %7638 = vmatpush1.bf16.msra.mxu0 0
        %7639 = vmatprep.subr.bf16.mxu0 0
        %7640 = vmatpush1.bf16.msra.mxu0 0
        %7641 = vmatprep.subr.bf16.mxu0 0
        %7642 = vmatpush1.bf16.msra.mxu0 0
        %7643 = vmatprep.subr.bf16.mxu0 0
        %7644 = vmatpush1.bf16.msra.mxu0 0
        %7645 = vmatprep.subr.bf16.mxu0 0
        %7646 = vmatpush1.bf16.msra.mxu0 0
        %7647 = vmatprep.mubr.bf16.mxu0 0
        %7648 = vmatmul.mubr.bf16.gmra.mrb[0].mxu0 %v7243
        %v7649 = vpop.f32.mrb[0].mxu0
        %v7650 = vadd.f32 %v7577, %v7649
        %v7651 = vpop.f32.mrb[0].mxu0
        %v7652 = vadd.f32 %v7579, %v7651
        %v7653 = vpop.f32.mrb[0].mxu0
        %v7654 = vadd.f32 %v7581, %v7653
        %v7655 = vpop.f32.mrb[0].mxu0
        %v7656 = vadd.f32 %v7583, %v7655
        %7657 = vmatprep.mubr.bf16.mxu0 0
        %7658 = vmatmul.mubr.bf16.gmra.mrb[0].mxu0 %v7246
        %v7659 = vpop.f32.mrb[0].mxu0
        %v7660 = vadd.f32 %v7587, %v7659
        %v7661 = vpop.f32.mrb[0].mxu0
        %v7662 = vadd.f32 %v7589, %v7661
        %v7663 = vpop.f32.mrb[0].mxu0
        %v7664 = vadd.f32 %v7591, %v7663
        %v7665 = vpop.f32.mrb[0].mxu0
        %v7666 = vadd.f32 %v7593, %v7665
        %7667 = vmatprep.mubr.bf16.mxu0 0
        %7668 = vmatmul.mubr.bf16.gmra.mrb[0].mxu0 %v7249
        %v7669 = vpop.f32.mrb[0].mxu0
        %v7670 = vadd.f32 %v7597, %v7669
        %v7671 = vpop.f32.mrb[0].mxu0
        %v7672 = vadd.f32 %v7599, %v7671
        %v7673 = vpop.f32.mrb[0].mxu0
        %v7674 = vadd.f32 %v7601, %v7673
        %v7675 = vpop.f32.mrb[0].mxu0
        %v7676 = vadd.f32 %v7603, %v7675
        %7677 = vmatprep.mubr.bf16.mxu0 0
        %7678 = vmatmul.mubr.bf16.gmra.mrb[0].mxu0 %v7252
        %v7679 = vpop.f32.mrb[0].mxu0
        %v7680 = vadd.f32 %v7607, %v7679
        %v7681 = vpop.f32.mrb[0].mxu0
        %v7682 = vadd.f32 %v7609, %v7681
        %v7683 = vpop.f32.mrb[0].mxu0
        %v7684 = vadd.f32 %v7611, %v7683
        %v7685 = vpop.f32.mrb[0].mxu0
        %v7686 = vadd.f32 %v7613, %v7685
        %7687 = vdwg.mxu0
        %v7688 = vadd.f32 %v7011, %v7650
        %v7689 = vadd.f32 %v7013, %v7652
        %v7690 = vadd.f32 %v7015, %v7654
        %v7691 = vadd.f32 %v7017, %v7656
        %v7692 = vadd.f32 %v7021, %v7660
        %v7693 = vadd.f32 %v7023, %v7662
        %v7694 = vadd.f32 %v7025, %v7664
        %v7695 = vadd.f32 %v7027, %v7666
        %v7696 = vadd.f32 %v7031, %v7670
        %v7697 = vadd.f32 %v7033, %v7672
        %v7698 = vadd.f32 %v7035, %v7674
        %v7699 = vadd.f32 %v7037, %v7676
        %v7700 = vadd.f32 %v7041, %v7680
        %v7701 = vadd.f32 %v7043, %v7682
        %v7702 = vadd.f32 %v7045, %v7684
        %v7703 = vadd.f32 %v7047, %v7686
        %v7704 = vld [vmem:[%s422] sm:$0xff]
        %v7705 = vld [vmem:[%s422 + $0x8] sm:$0xff]
        %v7706 = vld [vmem:[%s422 + $0x10] sm:$0xff]
        %v7707 = vld [vmem:[%s422 + $0x30] sm:$0xff]
        %v7708 = vld [vmem:[%s422 + $0x38] sm:$0xff]
        %v7709 = vld [vmem:[%s422 + $0x40] sm:$0xff]
        %v7710 = vld [vmem:[%s422 + $0x60] sm:$0xff]
        %v7711 = vld [vmem:[%s422 + $0x68] sm:$0xff]
        %v7712 = vld [vmem:[%s422 + $0x70] sm:$0xff]
        %v7713 = vld [vmem:[%s422 + $0x90] sm:$0xff]
        %v7714 = vld [vmem:[%s422 + $0x98] sm:$0xff]
        %v7715 = vld [vmem:[%s422 + $0xa0] sm:$0xff]
        %v7716 = vld [vmem:[%s422 + $0xc0] sm:$0xff]
        %v7717 = vld [vmem:[%s422 + $0xc8] sm:$0xff]
        %v7718 = vld [vmem:[%s422 + $0xd0] sm:$0xff]
        %v7719 = vld [vmem:[%s422 + $0xf0] sm:$0xff]
        %v7720 = vld [vmem:[%s422 + $0xf8] sm:$0xff]
        %v7721 = vld [vmem:[%s422 + $0x100] sm:$0xff]
        %v7722 = vld [vmem:[%s422 + $0x120] sm:$0xff]
        %v7723 = vld [vmem:[%s422 + $0x128] sm:$0xff]
        %v7724 = vld [vmem:[%s422 + $0x130] sm:$0xff]
        %v7725 = vld [vmem:[%s422 + $0x150] sm:$0xff]
        %v7726 = vld [vmem:[%s422 + $0x158] sm:$0xff]
        %v7727 = vld [vmem:[%s422 + $0x160] sm:$0xff]
        %v7728 = vpack.c.bf16 %v7707, %v7704
        %v7729 = vpack.c.bf16 %v7708, %v7705
        %v7730 = vpack.c.bf16 %v7709, %v7706
        %v7731 = vpack.c.bf16 %v7713, %v7710
        %v7732 = vpack.c.bf16 %v7714, %v7711
        %v7733 = vpack.c.bf16 %v7715, %v7712
        %v7734 = vpack.c.bf16 %v7719, %v7716
        %v7735 = vpack.c.bf16 %v7720, %v7717
        %v7736 = vpack.c.bf16 %v7721, %v7718
        %v7737 = vpack.c.bf16 %v7725, %v7722
        %v7738 = vpack.c.bf16 %v7726, %v7723
        %v7739 = vpack.c.bf16 %v7727, %v7724
        %s7740 = scalar_lea.vmem [#allocation9], 1152
        %v7741 = vld [vmem:[%s7740] sm:$0xff]
        %v7742 = vld [vmem:[%s7740 + $0x8] sm:$0xff]
        %v7743 = vld [vmem:[%s7740 + $0x10] sm:$0xff]
        %v7744 = vld [vmem:[%s7740 + $0x18] sm:$0xff]
        %v7745 = vld [vmem:[%s7740 + $0x20] sm:$0xff]
        %v7746 = vld [vmem:[%s7740 + $0x28] sm:$0xff]
        %v7747 = vld [vmem:[%s7740 + $0x30] sm:$0xff]
        %v7748 = vld [vmem:[%s7740 + $0x38] sm:$0xff]
        %v7749 = vld [vmem:[%s7740 + $0x40] sm:$0xff]
        %v7750 = vld [vmem:[%s7740 + $0x48] sm:$0xff]
        %v7751 = vld [vmem:[%s7740 + $0x50] sm:$0xff]
        %v7752 = vld [vmem:[%s7740 + $0x58] sm:$0xff]
        %v7753 = vld [vmem:[%s7740 + $0x60] sm:$0xff]
        %v7754 = vld [vmem:[%s7740 + $0x68] sm:$0xff]
        %v7755 = vld [vmem:[%s7740 + $0x70] sm:$0xff]
        %v7756 = vld [vmem:[%s7740 + $0x78] sm:$0xff]
        %v7757 = vld [vmem:[%s7740 + $0x80] sm:$0xff]
        %v7758 = vld [vmem:[%s7740 + $0x88] sm:$0xff]
        %v7759 = vld [vmem:[%s7740 + $0x90] sm:$0xff]
        %v7760 = vld [vmem:[%s7740 + $0x98] sm:$0xff]
        %v7761 = vld [vmem:[%s7740 + $0xa0] sm:$0xff]
        %v7762 = vld [vmem:[%s7740 + $0xa8] sm:$0xff]
        %v7763 = vld [vmem:[%s7740 + $0xb0] sm:$0xff]
        %v7764 = vld [vmem:[%s7740 + $0xb8] sm:$0xff]
        %v7765 = vld [vmem:[%s7740 + $0xc0] sm:$0xff]
        %v7766 = vld [vmem:[%s7740 + $0xc8] sm:$0xff]
        %v7767 = vld [vmem:[%s7740 + $0xd0] sm:$0xff]
        %v7768 = vld [vmem:[%s7740 + $0xd8] sm:$0xff]
        %v7769 = vld [vmem:[%s7740 + $0xe0] sm:$0xff]
        %v7770 = vld [vmem:[%s7740 + $0xe8] sm:$0xff]
        %v7771 = vld [vmem:[%s7740 + $0xf0] sm:$0xff]
        %v7772 = vld [vmem:[%s7740 + $0xf8] sm:$0xff]
        %v7773 = vld [vmem:[%s7740 + $0x100] sm:$0xff]
        %v7774 = vld [vmem:[%s7740 + $0x108] sm:$0xff]
        %v7775 = vld [vmem:[%s7740 + $0x110] sm:$0xff]
        %v7776 = vld [vmem:[%s7740 + $0x118] sm:$0xff]
        %v7777 = vld [vmem:[%s7740 + $0x120] sm:$0xff]
        %v7778 = vld [vmem:[%s7740 + $0x128] sm:$0xff]
        %v7779 = vld [vmem:[%s7740 + $0x130] sm:$0xff]
        %v7780 = vld [vmem:[%s7740 + $0x138] sm:$0xff]
        %v7781 = vld [vmem:[%s7740 + $0x140] sm:$0xff]
        %v7782 = vld [vmem:[%s7740 + $0x148] sm:$0xff]
        %v7783 = vld [vmem:[%s7740 + $0x150] sm:$0xff]
        %v7784 = vld [vmem:[%s7740 + $0x158] sm:$0xff]
        %v7785 = vld [vmem:[%s7740 + $0x160] sm:$0xff]
        %v7786 = vld [vmem:[%s7740 + $0x168] sm:$0xff]
        %v7787 = vld [vmem:[%s7740 + $0x170] sm:$0xff]
        %v7788 = vld [vmem:[%s7740 + $0x178] sm:$0xff]
        %v7837 = vunpack.c.l.b16 %v7741
        %v7838 = vunpack.c.h.b16 %v7741
        %v7839 = vunpack.c.l.b16 %v7742
        %v7840 = vunpack.c.h.b16 %v7742
        %v7841 = vunpack.c.l.b16 %v7743
        %v7842 = vunpack.c.h.b16 %v7743
        %v7843 = vunpack.c.l.b16 %v7744
        %v7844 = vunpack.c.h.b16 %v7744
        %v7845 = vunpack.c.l.b16 %v7745
        %v7846 = vunpack.c.h.b16 %v7745
        %v7847 = vunpack.c.l.b16 %v7746
        %v7848 = vunpack.c.h.b16 %v7746
        %v7849 = vunpack.c.l.b16 %v7747
        %v7850 = vunpack.c.h.b16 %v7747
        %v7851 = vunpack.c.l.b16 %v7748
        %v7852 = vunpack.c.h.b16 %v7748
        %v7853 = vunpack.c.l.b16 %v7749
        %v7854 = vunpack.c.h.b16 %v7749
        %v7855 = vunpack.c.l.b16 %v7750
        %v7856 = vunpack.c.h.b16 %v7750
        %v7857 = vunpack.c.l.b16 %v7751
        %v7858 = vunpack.c.h.b16 %v7751
        %v7859 = vunpack.c.l.b16 %v7752
        %v7860 = vunpack.c.h.b16 %v7752
        %v7861 = vunpack.c.l.b16 %v7753
        %v7862 = vunpack.c.h.b16 %v7753
        %v7863 = vunpack.c.l.b16 %v7754
        %v7864 = vunpack.c.h.b16 %v7754
        %v7865 = vunpack.c.l.b16 %v7755
        %v7866 = vunpack.c.h.b16 %v7755
        %v7867 = vunpack.c.l.b16 %v7756
        %v7868 = vunpack.c.h.b16 %v7756
        %v7869 = vunpack.c.l.b16 %v7757
        %v7870 = vunpack.c.h.b16 %v7757
        %v7871 = vunpack.c.l.b16 %v7758
        %v7872 = vunpack.c.h.b16 %v7758
        %v7873 = vunpack.c.l.b16 %v7759
        %v7874 = vunpack.c.h.b16 %v7759
        %v7875 = vunpack.c.l.b16 %v7760
        %v7876 = vunpack.c.h.b16 %v7760
        %v7877 = vunpack.c.l.b16 %v7761
        %v7878 = vunpack.c.h.b16 %v7761
        %v7879 = vunpack.c.l.b16 %v7762
        %v7880 = vunpack.c.h.b16 %v7762
        %v7881 = vunpack.c.l.b16 %v7763
        %v7882 = vunpack.c.h.b16 %v7763
        %v7883 = vunpack.c.l.b16 %v7764
        %v7884 = vunpack.c.h.b16 %v7764
        %v7885 = vunpack.c.l.b16 %v7765
        %v7886 = vunpack.c.h.b16 %v7765
        %v7887 = vunpack.c.l.b16 %v7766
        %v7888 = vunpack.c.h.b16 %v7766
        %v7889 = vunpack.c.l.b16 %v7767
        %v7890 = vunpack.c.h.b16 %v7767
        %v7891 = vunpack.c.l.b16 %v7768
        %v7892 = vunpack.c.h.b16 %v7768
        %v7893 = vunpack.c.l.b16 %v7769
        %v7894 = vunpack.c.h.b16 %v7769
        %v7895 = vunpack.c.l.b16 %v7770
        %v7896 = vunpack.c.h.b16 %v7770
        %v7897 = vunpack.c.l.b16 %v7771
        %v7898 = vunpack.c.h.b16 %v7771
        %v7899 = vunpack.c.l.b16 %v7772
        %v7900 = vunpack.c.h.b16 %v7772
        %v7901 = vunpack.c.l.b16 %v7773
        %v7902 = vunpack.c.h.b16 %v7773
        %v7903 = vunpack.c.l.b16 %v7774
        %v7904 = vunpack.c.h.b16 %v7774
        %v7905 = vunpack.c.l.b16 %v7775
        %v7906 = vunpack.c.h.b16 %v7775
        %v7907 = vunpack.c.l.b16 %v7776
        %v7908 = vunpack.c.h.b16 %v7776
        %v7909 = vunpack.c.l.b16 %v7777
        %v7910 = vunpack.c.h.b16 %v7777
        %v7911 = vunpack.c.l.b16 %v7778
        %v7912 = vunpack.c.h.b16 %v7778
        %v7913 = vunpack.c.l.b16 %v7779
        %v7914 = vunpack.c.h.b16 %v7779
        %v7915 = vunpack.c.l.b16 %v7780
        %v7916 = vunpack.c.h.b16 %v7780
        %v7917 = vunpack.c.l.b16 %v7781
        %v7918 = vunpack.c.h.b16 %v7781
        %v7919 = vunpack.c.l.b16 %v7782
        %v7920 = vunpack.c.h.b16 %v7782
        %v7921 = vunpack.c.l.b16 %v7783
        %v7922 = vunpack.c.h.b16 %v7783
        %v7923 = vunpack.c.l.b16 %v7784
        %v7924 = vunpack.c.h.b16 %v7784
        %v7925 = vunpack.c.l.b16 %v7785
        %v7926 = vunpack.c.h.b16 %v7785
        %v7927 = vunpack.c.l.b16 %v7786
        %v7928 = vunpack.c.h.b16 %v7786
        %v7929 = vunpack.c.l.b16 %v7787
        %v7930 = vunpack.c.h.b16 %v7787
        %v7931 = vunpack.c.l.b16 %v7788
        %v7932 = vunpack.c.h.b16 %v7788
        %v7933 = vpack.c.b16 %v7839, %v7837
        %v7934 = vpack.c.b16 %v7840, %v7838
        %v7935 = vpack.c.b16 %v7843, %v7841
        %v7936 = vpack.c.b16 %v7844, %v7842
        %v7937 = vpack.c.b16 %v7847, %v7845
        %v7938 = vpack.c.b16 %v7848, %v7846
        %v7939 = vpack.c.b16 %v7851, %v7849
        %v7940 = vpack.c.b16 %v7852, %v7850
        %v7941 = vpack.c.b16 %v7855, %v7853
        %v7942 = vpack.c.b16 %v7856, %v7854
        %v7943 = vpack.c.b16 %v7859, %v7857
        %v7944 = vpack.c.b16 %v7860, %v7858
        %v7945 = vpack.c.b16 %v7863, %v7861
        %v7946 = vpack.c.b16 %v7864, %v7862
        %v7947 = vpack.c.b16 %v7867, %v7865
        %v7948 = vpack.c.b16 %v7868, %v7866
        %v7949 = vpack.c.b16 %v7871, %v7869
        %v7950 = vpack.c.b16 %v7872, %v7870
        %v7951 = vpack.c.b16 %v7875, %v7873
        %v7952 = vpack.c.b16 %v7876, %v7874
        %v7953 = vpack.c.b16 %v7879, %v7877
        %v7954 = vpack.c.b16 %v7880, %v7878
        %v7955 = vpack.c.b16 %v7883, %v7881
        %v7956 = vpack.c.b16 %v7884, %v7882
        %v7957 = vpack.c.b16 %v7887, %v7885
        %v7958 = vpack.c.b16 %v7888, %v7886
        %v7959 = vpack.c.b16 %v7891, %v7889
        %v7960 = vpack.c.b16 %v7892, %v7890
        %v7961 = vpack.c.b16 %v7895, %v7893
        %v7962 = vpack.c.b16 %v7896, %v7894
        %v7963 = vpack.c.b16 %v7899, %v7897
        %v7964 = vpack.c.b16 %v7900, %v7898
        %v7965 = vpack.c.b16 %v7903, %v7901
        %v7966 = vpack.c.b16 %v7904, %v7902
        %v7967 = vpack.c.b16 %v7907, %v7905
        %v7968 = vpack.c.b16 %v7908, %v7906
        %v7969 = vpack.c.b16 %v7911, %v7909
        %v7970 = vpack.c.b16 %v7912, %v7910
        %v7971 = vpack.c.b16 %v7915, %v7913
        %v7972 = vpack.c.b16 %v7916, %v7914
        %v7973 = vpack.c.b16 %v7919, %v7917
        %v7974 = vpack.c.b16 %v7920, %v7918
        %v7975 = vpack.c.b16 %v7923, %v7921
        %v7976 = vpack.c.b16 %v7924, %v7922
        %v7977 = vpack.c.b16 %v7927, %v7925
        %v7978 = vpack.c.b16 %v7928, %v7926
        %v7979 = vpack.c.b16 %v7931, %v7929
        %v7980 = vpack.c.b16 %v7932, %v7930
        %8029 = vmatprep.subr.bf16.mxu0 %v7934
        %8030 = vmatpush1.bf16.msra.mxu0 %v7933
        %8031 = vmatprep.subr.bf16.mxu0 %v7936
        %8032 = vmatpush1.bf16.msra.mxu0 %v7935
        %8033 = vmatprep.subr.bf16.mxu0 %v7938
        %8034 = vmatpush1.bf16.msra.mxu0 %v7937
        %8035 = vmatprep.subr.bf16.mxu0 %v7940
        %8036 = vmatpush1.bf16.msra.mxu0 %v7939
        %8037 = vmatprep.subr.bf16.mxu0 %v7942
        %8038 = vmatpush1.bf16.msra.mxu0 %v7941
        %8039 = vmatprep.subr.bf16.mxu0 %v7944
        %8040 = vmatpush1.bf16.msra.mxu0 %v7943
        %8041 = vmatprep.subr.bf16.mxu0 %v7946
        %8042 = vmatpush1.bf16.msra.mxu0 %v7945
        %8043 = vmatprep.subr.bf16.mxu0 %v7948
        %8044 = vmatpush1.bf16.msra.mxu0 %v7947
        %8045 = vmatprep.subr.bf16.mxu0 %v7950
        %8046 = vmatpush1.bf16.msra.mxu0 %v7949
        %8047 = vmatprep.subr.bf16.mxu0 %v7952
        %8048 = vmatpush1.bf16.msra.mxu0 %v7951
        %8049 = vmatprep.subr.bf16.mxu0 %v7954
        %8050 = vmatpush1.bf16.msra.mxu0 %v7953
        %8051 = vmatprep.subr.bf16.mxu0 %v7956
        %8052 = vmatpush1.bf16.msra.mxu0 %v7955
        %8053 = vmatprep.subr.bf16.mxu0 %v7958
        %8054 = vmatpush1.bf16.msra.mxu0 %v7957
        %8055 = vmatprep.subr.bf16.mxu0 %v7960
        %8056 = vmatpush1.bf16.msra.mxu0 %v7959
        %8057 = vmatprep.subr.bf16.mxu0 %v7962
        %8058 = vmatpush1.bf16.msra.mxu0 %v7961
        %8059 = vmatprep.subr.bf16.mxu0 %v7964
        %8060 = vmatpush1.bf16.msra.mxu0 %v7963
        %8061 = vmatprep.mubr.bf16.mxu0 %v7729
        %8062 = vmatmul.mubr.bf16.gmra.mrb[0].mxu0 %v7728
        %v8063 = vpop.f32.mrb[0].mxu0
        %v8064 = vadd.f32 0.0, %v8063
        %v8065 = vpop.f32.mrb[0].mxu0
        %v8066 = vadd.f32 0.0, %v8065
        %v8067 = vpop.f32.mrb[0].mxu0
        %v8068 = vadd.f32 0.0, %v8067
        %v8069 = vpop.f32.mrb[0].mxu0
        %v8070 = vadd.f32 0.0, %v8069
        %8071 = vmatprep.mubr.bf16.mxu0 %v7732
        %8072 = vmatmul.mubr.bf16.gmra.mrb[0].mxu0 %v7731
        %v8073 = vpop.f32.mrb[0].mxu0
        %v8074 = vadd.f32 0.0, %v8073
        %v8075 = vpop.f32.mrb[0].mxu0
        %v8076 = vadd.f32 0.0, %v8075
        %v8077 = vpop.f32.mrb[0].mxu0
        %v8078 = vadd.f32 0.0, %v8077
        %v8079 = vpop.f32.mrb[0].mxu0
        %v8080 = vadd.f32 0.0, %v8079
        %8081 = vmatprep.mubr.bf16.mxu0 %v7735
        %8082 = vmatmul.mubr.bf16.gmra.mrb[0].mxu0 %v7734
        %v8083 = vpop.f32.mrb[0].mxu0
        %v8084 = vadd.f32 0.0, %v8083
        %v8085 = vpop.f32.mrb[0].mxu0
        %v8086 = vadd.f32 0.0, %v8085
        %v8087 = vpop.f32.mrb[0].mxu0
        %v8088 = vadd.f32 0.0, %v8087
        %v8089 = vpop.f32.mrb[0].mxu0
        %v8090 = vadd.f32 0.0, %v8089
        %8091 = vmatprep.mubr.bf16.mxu0 %v7738
        %8092 = vmatmul.mubr.bf16.gmra.mrb[0].mxu0 %v7737
        %v8093 = vpop.f32.mrb[0].mxu0
        %v8094 = vadd.f32 0.0, %v8093
        %v8095 = vpop.f32.mrb[0].mxu0
        %v8096 = vadd.f32 0.0, %v8095
        %v8097 = vpop.f32.mrb[0].mxu0
        %v8098 = vadd.f32 0.0, %v8097
        %v8099 = vpop.f32.mrb[0].mxu0
        %v8100 = vadd.f32 0.0, %v8099
        %8101 = vdwg.mxu0
        %8102 = vmatprep.subr.bf16.mxu0 %v7966
        %8103 = vmatpush1.bf16.msra.mxu0 %v7965
        %8104 = vmatprep.subr.bf16.mxu0 %v7968
        %8105 = vmatpush1.bf16.msra.mxu0 %v7967
        %8106 = vmatprep.subr.bf16.mxu0 %v7970
        %8107 = vmatpush1.bf16.msra.mxu0 %v7969
        %8108 = vmatprep.subr.bf16.mxu0 %v7972
        %8109 = vmatpush1.bf16.msra.mxu0 %v7971
        %8110 = vmatprep.subr.bf16.mxu0 %v7974
        %8111 = vmatpush1.bf16.msra.mxu0 %v7973
        %8112 = vmatprep.subr.bf16.mxu0 %v7976
        %8113 = vmatpush1.bf16.msra.mxu0 %v7975
        %8114 = vmatprep.subr.bf16.mxu0 %v7978
        %8115 = vmatpush1.bf16.msra.mxu0 %v7977
        %8116 = vmatprep.subr.bf16.mxu0 %v7980
        %8117 = vmatpush1.bf16.msra.mxu0 %v7979
        %8118 = vmatprep.subr.bf16.mxu0 0
        %8119 = vmatpush1.bf16.msra.mxu0 0
        %8120 = vmatprep.subr.bf16.mxu0 0
        %8121 = vmatpush1.bf16.msra.mxu0 0
        %8122 = vmatprep.subr.bf16.mxu0 0
        %8123 = vmatpush1.bf16.msra.mxu0 0
        %8124 = vmatprep.subr.bf16.mxu0 0
        %8125 = vmatpush1.bf16.msra.mxu0 0
        %8126 = vmatprep.subr.bf16.mxu0 0
        %8127 = vmatpush1.bf16.msra.mxu0 0
        %8128 = vmatprep.subr.bf16.mxu0 0
        %8129 = vmatpush1.bf16.msra.mxu0 0
        %8130 = vmatprep.subr.bf16.mxu0 0
        %8131 = vmatpush1.bf16.msra.mxu0 0
        %8132 = vmatprep.subr.bf16.mxu0 0
        %8133 = vmatpush1.bf16.msra.mxu0 0
        %8134 = vmatprep.mubr.bf16.mxu0 0
        %8135 = vmatmul.mubr.bf16.gmra.mrb[0].mxu0 %v7730
        %v8136 = vpop.f32.mrb[0].mxu0
        %v8137 = vadd.f32 %v8064, %v8136
        %v8138 = vpop.f32.mrb[0].mxu0
        %v8139 = vadd.f32 %v8066, %v8138
        %v8140 = vpop.f32.mrb[0].mxu0
        %v8141 = vadd.f32 %v8068, %v8140
        %v8142 = vpop.f32.mrb[0].mxu0
        %v8143 = vadd.f32 %v8070, %v8142
        %8144 = vmatprep.mubr.bf16.mxu0 0
        %8145 = vmatmul.mubr.bf16.gmra.mrb[0].mxu0 %v7733
        %v8146 = vpop.f32.mrb[0].mxu0
        %v8147 = vadd.f32 %v8074, %v8146
        %v8148 = vpop.f32.mrb[0].mxu0
        %v8149 = vadd.f32 %v8076, %v8148
        %v8150 = vpop.f32.mrb[0].mxu0
        %v8151 = vadd.f32 %v8078, %v8150
        %v8152 = vpop.f32.mrb[0].mxu0
        %v8153 = vadd.f32 %v8080, %v8152
        %8154 = vmatprep.mubr.bf16.mxu0 0
        %8155 = vmatmul.mubr.bf16.gmra.mrb[0].mxu0 %v7736
        %v8156 = vpop.f32.mrb[0].mxu0
        %v8157 = vadd.f32 %v8084, %v8156
        %v8158 = vpop.f32.mrb[0].mxu0
        %v8159 = vadd.f32 %v8086, %v8158
        %v8160 = vpop.f32.mrb[0].mxu0
        %v8161 = vadd.f32 %v8088, %v8160
        %v8162 = vpop.f32.mrb[0].mxu0
        %v8163 = vadd.f32 %v8090, %v8162
        %8164 = vmatprep.mubr.bf16.mxu0 0
        %8165 = vmatmul.mubr.bf16.gmra.mrb[0].mxu0 %v7739
        %v8166 = vpop.f32.mrb[0].mxu0
        %v8167 = vadd.f32 %v8094, %v8166
        %v8168 = vpop.f32.mrb[0].mxu0
        %v8169 = vadd.f32 %v8096, %v8168
        %v8170 = vpop.f32.mrb[0].mxu0
        %v8171 = vadd.f32 %v8098, %v8170
        %v8172 = vpop.f32.mrb[0].mxu0
        %v8173 = vadd.f32 %v8100, %v8172
        %8174 = vdwg.mxu0
        %v8175 = vadd.f32 %v7688, %v8137
        %v8176 = vadd.f32 %v7689, %v8139
        %v8177 = vadd.f32 %v7690, %v8141
        %v8178 = vadd.f32 %v7691, %v8143
        %v8179 = vadd.f32 %v7692, %v8147
        %v8180 = vadd.f32 %v7693, %v8149
        %v8181 = vadd.f32 %v7694, %v8151
        %v8182 = vadd.f32 %v7695, %v8153
        %v8183 = vadd.f32 %v7696, %v8157
        %v8184 = vadd.f32 %v7697, %v8159
        %v8185 = vadd.f32 %v7698, %v8161
        %v8186 = vadd.f32 %v7699, %v8163
        %v8187 = vadd.f32 %v7700, %v8167
        %v8188 = vadd.f32 %v7701, %v8169
        %v8189 = vadd.f32 %v7702, %v8171
        %v8190 = vadd.f32 %v7703, %v8173
        %v8191 = vld [vmem:[%s422] sm:$0xfe]
        %v8192 = vld [vmem:[%s422 + $0x8] sm:$0xfe]
        %v8193 = vld [vmem:[%s422 + $0x10] sm:$0xfe]
        %v8194 = vld [vmem:[%s422 + $0x18] sm:$0x1]
        %v8195 = vld [vmem:[%s422 + $0x20] sm:$0x1]
        %v8196 = vld [vmem:[%s422 + $0x28] sm:$0x1]
        %v8197 = vld [vmem:[%s422 + $0x30] sm:$0xfe]
        %v8198 = vld [vmem:[%s422 + $0x38] sm:$0xfe]
        %v8199 = vld [vmem:[%s422 + $0x40] sm:$0xfe]
        %v8200 = vld [vmem:[%s422 + $0x48] sm:$0x1]
        %v8201 = vld [vmem:[%s422 + $0x50] sm:$0x1]
        %v8202 = vld [vmem:[%s422 + $0x58] sm:$0x1]
        %v8203 = vld [vmem:[%s422 + $0x60] sm:$0xfe]
        %v8204 = vld [vmem:[%s422 + $0x68] sm:$0xfe]
        %v8205 = vld [vmem:[%s422 + $0x70] sm:$0xfe]
        %v8206 = vld [vmem:[%s422 + $0x78] sm:$0x1]
        %v8207 = vld [vmem:[%s422 + $0x80] sm:$0x1]
        %v8208 = vld [vmem:[%s422 + $0x88] sm:$0x1]
        %v8209 = vld [vmem:[%s422 + $0x90] sm:$0xfe]
        %v8210 = vld [vmem:[%s422 + $0x98] sm:$0xfe]
        %v8211 = vld [vmem:[%s422 + $0xa0] sm:$0xfe]
        %v8212 = vld [vmem:[%s422 + $0xa8] sm:$0x1]
        %v8213 = vld [vmem:[%s422 + $0xb0] sm:$0x1]
        %v8214 = vld [vmem:[%s422 + $0xb8] sm:$0x1]
        %v8215 = vld [vmem:[%s422 + $0xc0] sm:$0xfe]
        %v8216 = vld [vmem:[%s422 + $0xc8] sm:$0xfe]
        %v8217 = vld [vmem:[%s422 + $0xd0] sm:$0xfe]
        %v8218 = vld [vmem:[%s422 + $0xd8] sm:$0x1]
        %v8219 = vld [vmem:[%s422 + $0xe0] sm:$0x1]
        %v8220 = vld [vmem:[%s422 + $0xe8] sm:$0x1]
        %v8221 = vld [vmem:[%s422 + $0xf0] sm:$0xfe]
        %v8222 = vld [vmem:[%s422 + $0xf8] sm:$0xfe]
        %v8223 = vld [vmem:[%s422 + $0x100] sm:$0xfe]
        %v8224 = vld [vmem:[%s422 + $0x108] sm:$0x1]
        %v8225 = vld [vmem:[%s422 + $0x110] sm:$0x1]
        %v8226 = vld [vmem:[%s422 + $0x118] sm:$0x1]
        %v8227 = vld [vmem:[%s422 + $0x120] sm:$0xfe]
        %v8228 = vld [vmem:[%s422 + $0x128] sm:$0xfe]
        %v8229 = vld [vmem:[%s422 + $0x130] sm:$0xfe]
        %v8230 = vld [vmem:[%s422 + $0x138] sm:$0x1]
        %v8231 = vld [vmem:[%s422 + $0x140] sm:$0x1]
        %v8232 = vld [vmem:[%s422 + $0x148] sm:$0x1]
        %v8233 = vld [vmem:[%s422 + $0x150] sm:$0xfe]
        %v8234 = vld [vmem:[%s422 + $0x158] sm:$0xfe]
        %v8235 = vld [vmem:[%s422 + $0x160] sm:$0xfe]
        %v8236 = vld [vmem:[%s422 + $0x168] sm:$0x1]
        %v8237 = vld [vmem:[%s422 + $0x170] sm:$0x1]
        %v8238 = vld [vmem:[%s422 + $0x178] sm:$0x1]
        %v8287 = vrot.slane %v8191, 1
        %v8288 = vrot.slane %v8194, 1
        %v8289 = vsel %vm635, %v8287, %v8288
        %v8290 = vrot.slane %v8192, 1
        %v8291 = vrot.slane %v8195, 1
        %v8292 = vsel %vm635, %v8290, %v8291
        %v8293 = vrot.slane %v8193, 1
        %v8294 = vrot.slane %v8196, 1
        %v8295 = vsel %vm635, %v8293, %v8294
        %v8296 = vrot.slane %v8197, 1
        %v8297 = vrot.slane %v8200, 1
        %v8298 = vsel %vm635, %v8296, %v8297
        %v8299 = vrot.slane %v8198, 1
        %v8300 = vrot.slane %v8201, 1
        %v8301 = vsel %vm635, %v8299, %v8300
        %v8302 = vrot.slane %v8199, 1
        %v8303 = vrot.slane %v8202, 1
        %v8304 = vsel %vm635, %v8302, %v8303
        %v8305 = vrot.slane %v8203, 1
        %v8306 = vrot.slane %v8206, 1
        %v8307 = vsel %vm635, %v8305, %v8306
        %v8308 = vrot.slane %v8204, 1
        %v8309 = vrot.slane %v8207, 1
        %v8310 = vsel %vm635, %v8308, %v8309
        %v8311 = vrot.slane %v8205, 1
        %v8312 = vrot.slane %v8208, 1
        %v8313 = vsel %vm635, %v8311, %v8312
        %v8314 = vrot.slane %v8209, 1
        %v8315 = vrot.slane %v8212, 1
        %v8316 = vsel %vm635, %v8314, %v8315
        %v8317 = vrot.slane %v8210, 1
        %v8318 = vrot.slane %v8213, 1
        %v8319 = vsel %vm635, %v8317, %v8318
        %v8320 = vrot.slane %v8211, 1
        %v8321 = vrot.slane %v8214, 1
        %v8322 = vsel %vm635, %v8320, %v8321
        %v8323 = vrot.slane %v8215, 1
        %v8324 = vrot.slane %v8218, 1
        %v8325 = vsel %vm635, %v8323, %v8324
        %v8326 = vrot.slane %v8216, 1
        %v8327 = vrot.slane %v8219, 1
        %v8328 = vsel %vm635, %v8326, %v8327
        %v8329 = vrot.slane %v8217, 1
        %v8330 = vrot.slane %v8220, 1
        %v8331 = vsel %vm635, %v8329, %v8330
        %v8332 = vrot.slane %v8221, 1
        %v8333 = vrot.slane %v8224, 1
        %v8334 = vsel %vm635, %v8332, %v8333
        %v8335 = vrot.slane %v8222, 1
        %v8336 = vrot.slane %v8225, 1
        %v8337 = vsel %vm635, %v8335, %v8336
        %v8338 = vrot.slane %v8223, 1
        %v8339 = vrot.slane %v8226, 1
        %v8340 = vsel %vm635, %v8338, %v8339
        %v8341 = vrot.slane %v8227, 1
        %v8342 = vrot.slane %v8230, 1
        %v8343 = vsel %vm635, %v8341, %v8342
        %v8344 = vrot.slane %v8228, 1
        %v8345 = vrot.slane %v8231, 1
        %v8346 = vsel %vm635, %v8344, %v8345
        %v8347 = vrot.slane %v8229, 1
        %v8348 = vrot.slane %v8232, 1
        %v8349 = vsel %vm635, %v8347, %v8348
        %v8350 = vrot.slane %v8233, 1
        %v8351 = vrot.slane %v8236, 1
        %v8352 = vsel %vm635, %v8350, %v8351
        %v8353 = vrot.slane %v8234, 1
        %v8354 = vrot.slane %v8237, 1
        %v8355 = vsel %vm635, %v8353, %v8354
        %v8356 = vrot.slane %v8235, 1
        %v8357 = vrot.slane %v8238, 1
        %v8358 = vsel %vm635, %v8356, %v8357
        %v8383 = vpack.c.bf16 %v8298, %v8289
        %v8384 = vpack.c.bf16 %v8301, %v8292
        %v8385 = vpack.c.bf16 %v8304, %v8295
        %v8386 = vpack.c.bf16 %v8316, %v8307
        %v8387 = vpack.c.bf16 %v8319, %v8310
        %v8388 = vpack.c.bf16 %v8322, %v8313
        %v8389 = vpack.c.bf16 %v8334, %v8325
        %v8390 = vpack.c.bf16 %v8337, %v8328
        %v8391 = vpack.c.bf16 %v8340, %v8331
        %v8392 = vpack.c.bf16 %v8352, %v8343
        %v8393 = vpack.c.bf16 %v8355, %v8346
        %v8394 = vpack.c.bf16 %v8358, %v8349
        %s8395 = scalar_lea.vmem [#allocation9], 1536
        %v8396 = vld [vmem:[%s8395] sm:$0xff]
        %v8397 = vld [vmem:[%s8395 + $0x8] sm:$0xff]
        %v8398 = vld [vmem:[%s8395 + $0x10] sm:$0xff]
        %v8399 = vld [vmem:[%s8395 + $0x18] sm:$0xff]
        %v8400 = vld [vmem:[%s8395 + $0x20] sm:$0xff]
        %v8401 = vld [vmem:[%s8395 + $0x28] sm:$0xff]
        %v8402 = vld [vmem:[%s8395 + $0x30] sm:$0xff]
        %v8403 = vld [vmem:[%s8395 + $0x38] sm:$0xff]
        %v8404 = vld [vmem:[%s8395 + $0x40] sm:$0xff]
        %v8405 = vld [vmem:[%s8395 + $0x48] sm:$0xff]
        %v8406 = vld [vmem:[%s8395 + $0x50] sm:$0xff]
        %v8407 = vld [vmem:[%s8395 + $0x58] sm:$0xff]
        %v8408 = vld [vmem:[%s8395 + $0x60] sm:$0xff]
        %v8409 = vld [vmem:[%s8395 + $0x68] sm:$0xff]
        %v8410 = vld [vmem:[%s8395 + $0x70] sm:$0xff]
        %v8411 = vld [vmem:[%s8395 + $0x78] sm:$0xff]
        %v8412 = vld [vmem:[%s8395 + $0x80] sm:$0xff]
        %v8413 = vld [vmem:[%s8395 + $0x88] sm:$0xff]
        %v8414 = vld [vmem:[%s8395 + $0x90] sm:$0xff]
        %v8415 = vld [vmem:[%s8395 + $0x98] sm:$0xff]
        %v8416 = vld [vmem:[%s8395 + $0xa0] sm:$0xff]
        %v8417 = vld [vmem:[%s8395 + $0xa8] sm:$0xff]
        %v8418 = vld [vmem:[%s8395 + $0xb0] sm:$0xff]
        %v8419 = vld [vmem:[%s8395 + $0xb8] sm:$0xff]
        %v8420 = vld [vmem:[%s8395 + $0xc0] sm:$0xff]
        %v8421 = vld [vmem:[%s8395 + $0xc8] sm:$0xff]
        %v8422 = vld [vmem:[%s8395 + $0xd0] sm:$0xff]
        %v8423 = vld [vmem:[%s8395 + $0xd8] sm:$0xff]
        %v8424 = vld [vmem:[%s8395 + $0xe0] sm:$0xff]
        %v8425 = vld [vmem:[%s8395 + $0xe8] sm:$0xff]
        %v8426 = vld [vmem:[%s8395 + $0xf0] sm:$0xff]
        %v8427 = vld [vmem:[%s8395 + $0xf8] sm:$0xff]
        %v8428 = vld [vmem:[%s8395 + $0x100] sm:$0xff]
        %v8429 = vld [vmem:[%s8395 + $0x108] sm:$0xff]
        %v8430 = vld [vmem:[%s8395 + $0x110] sm:$0xff]
        %v8431 = vld [vmem:[%s8395 + $0x118] sm:$0xff]
        %v8432 = vld [vmem:[%s8395 + $0x120] sm:$0xff]
        %v8433 = vld [vmem:[%s8395 + $0x128] sm:$0xff]
        %v8434 = vld [vmem:[%s8395 + $0x130] sm:$0xff]
        %v8435 = vld [vmem:[%s8395 + $0x138] sm:$0xff]
        %v8436 = vld [vmem:[%s8395 + $0x140] sm:$0xff]
        %v8437 = vld [vmem:[%s8395 + $0x148] sm:$0xff]
        %v8438 = vld [vmem:[%s8395 + $0x150] sm:$0xff]
        %v8439 = vld [vmem:[%s8395 + $0x158] sm:$0xff]
        %v8440 = vld [vmem:[%s8395 + $0x160] sm:$0xff]
        %v8441 = vld [vmem:[%s8395 + $0x168] sm:$0xff]
        %v8442 = vld [vmem:[%s8395 + $0x170] sm:$0xff]
        %v8443 = vld [vmem:[%s8395 + $0x178] sm:$0xff]
        %v8492 = vunpack.c.l.b16 %v8396
        %v8493 = vunpack.c.h.b16 %v8396
        %v8494 = vunpack.c.l.b16 %v8397
        %v8495 = vunpack.c.h.b16 %v8397
        %v8496 = vunpack.c.l.b16 %v8398
        %v8497 = vunpack.c.h.b16 %v8398
        %v8498 = vunpack.c.l.b16 %v8399
        %v8499 = vunpack.c.h.b16 %v8399
        %v8500 = vunpack.c.l.b16 %v8400
        %v8501 = vunpack.c.h.b16 %v8400
        %v8502 = vunpack.c.l.b16 %v8401
        %v8503 = vunpack.c.h.b16 %v8401
        %v8504 = vunpack.c.l.b16 %v8402
        %v8505 = vunpack.c.h.b16 %v8402
        %v8506 = vunpack.c.l.b16 %v8403
        %v8507 = vunpack.c.h.b16 %v8403
        %v8508 = vunpack.c.l.b16 %v8404
        %v8509 = vunpack.c.h.b16 %v8404
        %v8510 = vunpack.c.l.b16 %v8405
        %v8511 = vunpack.c.h.b16 %v8405
        %v8512 = vunpack.c.l.b16 %v8406
        %v8513 = vunpack.c.h.b16 %v8406
        %v8514 = vunpack.c.l.b16 %v8407
        %v8515 = vunpack.c.h.b16 %v8407
        %v8516 = vunpack.c.l.b16 %v8408
        %v8517 = vunpack.c.h.b16 %v8408
        %v8518 = vunpack.c.l.b16 %v8409
        %v8519 = vunpack.c.h.b16 %v8409
        %v8520 = vunpack.c.l.b16 %v8410
        %v8521 = vunpack.c.h.b16 %v8410
        %v8522 = vunpack.c.l.b16 %v8411
        %v8523 = vunpack.c.h.b16 %v8411
        %v8524 = vunpack.c.l.b16 %v8412
        %v8525 = vunpack.c.h.b16 %v8412
        %v8526 = vunpack.c.l.b16 %v8413
        %v8527 = vunpack.c.h.b16 %v8413
        %v8528 = vunpack.c.l.b16 %v8414
        %v8529 = vunpack.c.h.b16 %v8414
        %v8530 = vunpack.c.l.b16 %v8415
        %v8531 = vunpack.c.h.b16 %v8415
        %v8532 = vunpack.c.l.b16 %v8416
        %v8533 = vunpack.c.h.b16 %v8416
        %v8534 = vunpack.c.l.b16 %v8417
        %v8535 = vunpack.c.h.b16 %v8417
        %v8536 = vunpack.c.l.b16 %v8418
        %v8537 = vunpack.c.h.b16 %v8418
        %v8538 = vunpack.c.l.b16 %v8419
        %v8539 = vunpack.c.h.b16 %v8419
        %v8540 = vunpack.c.l.b16 %v8420
        %v8541 = vunpack.c.h.b16 %v8420
        %v8542 = vunpack.c.l.b16 %v8421
        %v8543 = vunpack.c.h.b16 %v8421
        %v8544 = vunpack.c.l.b16 %v8422
        %v8545 = vunpack.c.h.b16 %v8422
        %v8546 = vunpack.c.l.b16 %v8423
        %v8547 = vunpack.c.h.b16 %v8423
        %v8548 = vunpack.c.l.b16 %v8424
        %v8549 = vunpack.c.h.b16 %v8424
        %v8550 = vunpack.c.l.b16 %v8425
        %v8551 = vunpack.c.h.b16 %v8425
        %v8552 = vunpack.c.l.b16 %v8426
        %v8553 = vunpack.c.h.b16 %v8426
        %v8554 = vunpack.c.l.b16 %v8427
        %v8555 = vunpack.c.h.b16 %v8427
        %v8556 = vunpack.c.l.b16 %v8428
        %v8557 = vunpack.c.h.b16 %v8428
        %v8558 = vunpack.c.l.b16 %v8429
        %v8559 = vunpack.c.h.b16 %v8429
        %v8560 = vunpack.c.l.b16 %v8430
        %v8561 = vunpack.c.h.b16 %v8430
        %v8562 = vunpack.c.l.b16 %v8431
        %v8563 = vunpack.c.h.b16 %v8431
        %v8564 = vunpack.c.l.b16 %v8432
        %v8565 = vunpack.c.h.b16 %v8432
        %v8566 = vunpack.c.l.b16 %v8433
        %v8567 = vunpack.c.h.b16 %v8433
        %v8568 = vunpack.c.l.b16 %v8434
        %v8569 = vunpack.c.h.b16 %v8434
        %v8570 = vunpack.c.l.b16 %v8435
        %v8571 = vunpack.c.h.b16 %v8435
        %v8572 = vunpack.c.l.b16 %v8436
        %v8573 = vunpack.c.h.b16 %v8436
        %v8574 = vunpack.c.l.b16 %v8437
        %v8575 = vunpack.c.h.b16 %v8437
        %v8576 = vunpack.c.l.b16 %v8438
        %v8577 = vunpack.c.h.b16 %v8438
        %v8578 = vunpack.c.l.b16 %v8439
        %v8579 = vunpack.c.h.b16 %v8439
        %v8580 = vunpack.c.l.b16 %v8440
        %v8581 = vunpack.c.h.b16 %v8440
        %v8582 = vunpack.c.l.b16 %v8441
        %v8583 = vunpack.c.h.b16 %v8441
        %v8584 = vunpack.c.l.b16 %v8442
        %v8585 = vunpack.c.h.b16 %v8442
        %v8586 = vunpack.c.l.b16 %v8443
        %v8587 = vunpack.c.h.b16 %v8443
        %v8588 = vpack.c.b16 %v8494, %v8492
        %v8589 = vpack.c.b16 %v8495, %v8493
        %v8590 = vpack.c.b16 %v8498, %v8496
        %v8591 = vpack.c.b16 %v8499, %v8497
        %v8592 = vpack.c.b16 %v8502, %v8500
        %v8593 = vpack.c.b16 %v8503, %v8501
        %v8594 = vpack.c.b16 %v8506, %v8504
        %v8595 = vpack.c.b16 %v8507, %v8505
        %v8596 = vpack.c.b16 %v8510, %v8508
        %v8597 = vpack.c.b16 %v8511, %v8509
        %v8598 = vpack.c.b16 %v8514, %v8512
        %v8599 = vpack.c.b16 %v8515, %v8513
        %v8600 = vpack.c.b16 %v8518, %v8516
        %v8601 = vpack.c.b16 %v8519, %v8517
        %v8602 = vpack.c.b16 %v8522, %v8520
        %v8603 = vpack.c.b16 %v8523, %v8521
        %v8604 = vpack.c.b16 %v8526, %v8524
        %v8605 = vpack.c.b16 %v8527, %v8525
        %v8606 = vpack.c.b16 %v8530, %v8528
        %v8607 = vpack.c.b16 %v8531, %v8529
        %v8608 = vpack.c.b16 %v8534, %v8532
        %v8609 = vpack.c.b16 %v8535, %v8533
        %v8610 = vpack.c.b16 %v8538, %v8536
        %v8611 = vpack.c.b16 %v8539, %v8537
        %v8612 = vpack.c.b16 %v8542, %v8540
        %v8613 = vpack.c.b16 %v8543, %v8541
        %v8614 = vpack.c.b16 %v8546, %v8544
        %v8615 = vpack.c.b16 %v8547, %v8545
        %v8616 = vpack.c.b16 %v8550, %v8548
        %v8617 = vpack.c.b16 %v8551, %v8549
        %v8618 = vpack.c.b16 %v8554, %v8552
        %v8619 = vpack.c.b16 %v8555, %v8553
        %v8620 = vpack.c.b16 %v8558, %v8556
        %v8621 = vpack.c.b16 %v8559, %v8557
        %v8622 = vpack.c.b16 %v8562, %v8560
        %v8623 = vpack.c.b16 %v8563, %v8561
        %v8624 = vpack.c.b16 %v8566, %v8564
        %v8625 = vpack.c.b16 %v8567, %v8565
        %v8626 = vpack.c.b16 %v8570, %v8568
        %v8627 = vpack.c.b16 %v8571, %v8569
        %v8628 = vpack.c.b16 %v8574, %v8572
        %v8629 = vpack.c.b16 %v8575, %v8573
        %v8630 = vpack.c.b16 %v8578, %v8576
        %v8631 = vpack.c.b16 %v8579, %v8577
        %v8632 = vpack.c.b16 %v8582, %v8580
        %v8633 = vpack.c.b16 %v8583, %v8581
        %v8634 = vpack.c.b16 %v8586, %v8584
        %v8635 = vpack.c.b16 %v8587, %v8585
        %8684 = vmatprep.subr.bf16.mxu0 %v8589
        %8685 = vmatpush1.bf16.msra.mxu0 %v8588
        %8686 = vmatprep.subr.bf16.mxu0 %v8591
        %8687 = vmatpush1.bf16.msra.mxu0 %v8590
        %8688 = vmatprep.subr.bf16.mxu0 %v8593
        %8689 = vmatpush1.bf16.msra.mxu0 %v8592
        %8690 = vmatprep.subr.bf16.mxu0 %v8595
        %8691 = vmatpush1.bf16.msra.mxu0 %v8594
        %8692 = vmatprep.subr.bf16.mxu0 %v8597
        %8693 = vmatpush1.bf16.msra.mxu0 %v8596
        %8694 = vmatprep.subr.bf16.mxu0 %v8599
        %8695 = vmatpush1.bf16.msra.mxu0 %v8598
        %8696 = vmatprep.subr.bf16.mxu0 %v8601
        %8697 = vmatpush1.bf16.msra.mxu0 %v8600
        %8698 = vmatprep.subr.bf16.mxu0 %v8603
        %8699 = vmatpush1.bf16.msra.mxu0 %v8602
        %8700 = vmatprep.subr.bf16.mxu0 %v8605
        %8701 = vmatpush1.bf16.msra.mxu0 %v8604
        %8702 = vmatprep.subr.bf16.mxu0 %v8607
        %8703 = vmatpush1.bf16.msra.mxu0 %v8606
        %8704 = vmatprep.subr.bf16.mxu0 %v8609
        %8705 = vmatpush1.bf16.msra.mxu0 %v8608
        %8706 = vmatprep.subr.bf16.mxu0 %v8611
        %8707 = vmatpush1.bf16.msra.mxu0 %v8610
        %8708 = vmatprep.subr.bf16.mxu0 %v8613
        %8709 = vmatpush1.bf16.msra.mxu0 %v8612
        %8710 = vmatprep.subr.bf16.mxu0 %v8615
        %8711 = vmatpush1.bf16.msra.mxu0 %v8614
        %8712 = vmatprep.subr.bf16.mxu0 %v8617
        %8713 = vmatpush1.bf16.msra.mxu0 %v8616
        %8714 = vmatprep.subr.bf16.mxu0 %v8619
        %8715 = vmatpush1.bf16.msra.mxu0 %v8618
        %8716 = vmatprep.mubr.bf16.mxu0 %v8384
        %8717 = vmatmul.mubr.bf16.gmra.mrb[0].mxu0 %v8383
        %v8718 = vpop.f32.mrb[0].mxu0
        %v8719 = vadd.f32 0.0, %v8718
        %v8720 = vpop.f32.mrb[0].mxu0
        %v8721 = vadd.f32 0.0, %v8720
        %v8722 = vpop.f32.mrb[0].mxu0
        %v8723 = vadd.f32 0.0, %v8722
        %v8724 = vpop.f32.mrb[0].mxu0
        %v8725 = vadd.f32 0.0, %v8724
        %8726 = vmatprep.mubr.bf16.mxu0 %v8387
        %8727 = vmatmul.mubr.bf16.gmra.mrb[0].mxu0 %v8386
        %v8728 = vpop.f32.mrb[0].mxu0
        %v8729 = vadd.f32 0.0, %v8728
        %v8730 = vpop.f32.mrb[0].mxu0
        %v8731 = vadd.f32 0.0, %v8730
        %v8732 = vpop.f32.mrb[0].mxu0
        %v8733 = vadd.f32 0.0, %v8732
        %v8734 = vpop.f32.mrb[0].mxu0
        %v8735 = vadd.f32 0.0, %v8734
        %8736 = vmatprep.mubr.bf16.mxu0 %v8390
        %8737 = vmatmul.mubr.bf16.gmra.mrb[0].mxu0 %v8389
        %v8738 = vpop.f32.mrb[0].mxu0
        %v8739 = vadd.f32 0.0, %v8738
        %v8740 = vpop.f32.mrb[0].mxu0
        %v8741 = vadd.f32 0.0, %v8740
        %v8742 = vpop.f32.mrb[0].mxu0
        %v8743 = vadd.f32 0.0, %v8742
        %v8744 = vpop.f32.mrb[0].mxu0
        %v8745 = vadd.f32 0.0, %v8744
        %8746 = vmatprep.mubr.bf16.mxu0 %v8393
        %8747 = vmatmul.mubr.bf16.gmra.mrb[0].mxu0 %v8392
        %v8748 = vpop.f32.mrb[0].mxu0
        %v8749 = vadd.f32 0.0, %v8748
        %v8750 = vpop.f32.mrb[0].mxu0
        %v8751 = vadd.f32 0.0, %v8750
        %v8752 = vpop.f32.mrb[0].mxu0
        %v8753 = vadd.f32 0.0, %v8752
        %v8754 = vpop.f32.mrb[0].mxu0
        %v8755 = vadd.f32 0.0, %v8754
        %8756 = vdwg.mxu0
        %8757 = vmatprep.subr.bf16.mxu0 %v8621
        %8758 = vmatpush1.bf16.msra.mxu0 %v8620
        %8759 = vmatprep.subr.bf16.mxu0 %v8623
        %8760 = vmatpush1.bf16.msra.mxu0 %v8622
        %8761 = vmatprep.subr.bf16.mxu0 %v8625
        %8762 = vmatpush1.bf16.msra.mxu0 %v8624
        %8763 = vmatprep.subr.bf16.mxu0 %v8627
        %8764 = vmatpush1.bf16.msra.mxu0 %v8626
        %8765 = vmatprep.subr.bf16.mxu0 %v8629
        %8766 = vmatpush1.bf16.msra.mxu0 %v8628
        %8767 = vmatprep.subr.bf16.mxu0 %v8631
        %8768 = vmatpush1.bf16.msra.mxu0 %v8630
        %8769 = vmatprep.subr.bf16.mxu0 %v8633
        %8770 = vmatpush1.bf16.msra.mxu0 %v8632
        %8771 = vmatprep.subr.bf16.mxu0 %v8635
        %8772 = vmatpush1.bf16.msra.mxu0 %v8634
        %8773 = vmatprep.subr.bf16.mxu0 0
        %8774 = vmatpush1.bf16.msra.mxu0 0
        %8775 = vmatprep.subr.bf16.mxu0 0
        %8776 = vmatpush1.bf16.msra.mxu0 0
        %8777 = vmatprep.subr.bf16.mxu0 0
        %8778 = vmatpush1.bf16.msra.mxu0 0
        %8779 = vmatprep.subr.bf16.mxu0 0
        %8780 = vmatpush1.bf16.msra.mxu0 0
        %8781 = vmatprep.subr.bf16.mxu0 0
        %8782 = vmatpush1.bf16.msra.mxu0 0
        %8783 = vmatprep.subr.bf16.mxu0 0
        %8784 = vmatpush1.bf16.msra.mxu0 0
        %8785 = vmatprep.subr.bf16.mxu0 0
        %8786 = vmatpush1.bf16.msra.mxu0 0
        %8787 = vmatprep.subr.bf16.mxu0 0
        %8788 = vmatpush1.bf16.msra.mxu0 0
        %8789 = vmatprep.mubr.bf16.mxu0 0
        %8790 = vmatmul.mubr.bf16.gmra.mrb[0].mxu0 %v8385
        %v8791 = vpop.f32.mrb[0].mxu0
        %v8792 = vadd.f32 %v8719, %v8791
        %v8793 = vpop.f32.mrb[0].mxu0
        %v8794 = vadd.f32 %v8721, %v8793
        %v8795 = vpop.f32.mrb[0].mxu0
        %v8796 = vadd.f32 %v8723, %v8795
        %v8797 = vpop.f32.mrb[0].mxu0
        %v8798 = vadd.f32 %v8725, %v8797
        %8799 = vmatprep.mubr.bf16.mxu0 0
        %8800 = vmatmul.mubr.bf16.gmra.mrb[0].mxu0 %v8388
        %v8801 = vpop.f32.mrb[0].mxu0
        %v8802 = vadd.f32 %v8729, %v8801
        %v8803 = vpop.f32.mrb[0].mxu0
        %v8804 = vadd.f32 %v8731, %v8803
        %v8805 = vpop.f32.mrb[0].mxu0
        %v8806 = vadd.f32 %v8733, %v8805
        %v8807 = vpop.f32.mrb[0].mxu0
        %v8808 = vadd.f32 %v8735, %v8807
        %8809 = vmatprep.mubr.bf16.mxu0 0
        %8810 = vmatmul.mubr.bf16.gmra.mrb[0].mxu0 %v8391
        %v8811 = vpop.f32.mrb[0].mxu0
        %v8812 = vadd.f32 %v8739, %v8811
        %v8813 = vpop.f32.mrb[0].mxu0
        %v8814 = vadd.f32 %v8741, %v8813
        %v8815 = vpop.f32.mrb[0].mxu0
        %v8816 = vadd.f32 %v8743, %v8815
        %v8817 = vpop.f32.mrb[0].mxu0
        %v8818 = vadd.f32 %v8745, %v8817
        %8819 = vmatprep.mubr.bf16.mxu0 0
        %8820 = vmatmul.mubr.bf16.gmra.mrb[0].mxu0 %v8394
        %v8821 = vpop.f32.mrb[0].mxu0
        %v8822 = vadd.f32 %v8749, %v8821
        %v8823 = vpop.f32.mrb[0].mxu0
        %v8824 = vadd.f32 %v8751, %v8823
        %v8825 = vpop.f32.mrb[0].mxu0
        %v8826 = vadd.f32 %v8753, %v8825
        %v8827 = vpop.f32.mrb[0].mxu0
        %v8828 = vadd.f32 %v8755, %v8827
        %8829 = vdwg.mxu0
        %v8830 = vadd.f32 %v8175, %v8792
        %v8831 = vadd.f32 %v8176, %v8794
        %v8832 = vadd.f32 %v8177, %v8796
        %v8833 = vadd.f32 %v8178, %v8798
        %v8834 = vadd.f32 %v8179, %v8802
        %v8835 = vadd.f32 %v8180, %v8804
        %v8836 = vadd.f32 %v8181, %v8806
        %v8837 = vadd.f32 %v8182, %v8808
        %v8838 = vadd.f32 %v8183, %v8812
        %v8839 = vadd.f32 %v8184, %v8814
        %v8840 = vadd.f32 %v8185, %v8816
        %v8841 = vadd.f32 %v8186, %v8818
        %v8842 = vadd.f32 %v8187, %v8822
        %v8843 = vadd.f32 %v8188, %v8824
        %v8844 = vadd.f32 %v8189, %v8826
        %v8845 = vadd.f32 %v8190, %v8828
        %v8846 = vld [vmem:[%s422] sm:$0xfc]
        %v8847 = vld [vmem:[%s422 + $0x8] sm:$0xfc]
        %v8848 = vld [vmem:[%s422 + $0x10] sm:$0xfc]
        %v8849 = vld [vmem:[%s422 + $0x18] sm:$0x3]
        %v8850 = vld [vmem:[%s422 + $0x20] sm:$0x3]
        %v8851 = vld [vmem:[%s422 + $0x28] sm:$0x3]
        %v8852 = vld [vmem:[%s422 + $0x30] sm:$0xfc]
        %v8853 = vld [vmem:[%s422 + $0x38] sm:$0xfc]
        %v8854 = vld [vmem:[%s422 + $0x40] sm:$0xfc]
        %v8855 = vld [vmem:[%s422 + $0x48] sm:$0x3]
        %v8856 = vld [vmem:[%s422 + $0x50] sm:$0x3]
        %v8857 = vld [vmem:[%s422 + $0x58] sm:$0x3]
        %v8858 = vld [vmem:[%s422 + $0x60] sm:$0xfc]
        %v8859 = vld [vmem:[%s422 + $0x68] sm:$0xfc]
        %v8860 = vld [vmem:[%s422 + $0x70] sm:$0xfc]
        %v8861 = vld [vmem:[%s422 + $0x78] sm:$0x3]
        %v8862 = vld [vmem:[%s422 + $0x80] sm:$0x3]
        %v8863 = vld [vmem:[%s422 + $0x88] sm:$0x3]
        %v8864 = vld [vmem:[%s422 + $0x90] sm:$0xfc]
        %v8865 = vld [vmem:[%s422 + $0x98] sm:$0xfc]
        %v8866 = vld [vmem:[%s422 + $0xa0] sm:$0xfc]
        %v8867 = vld [vmem:[%s422 + $0xa8] sm:$0x3]
        %v8868 = vld [vmem:[%s422 + $0xb0] sm:$0x3]
        %v8869 = vld [vmem:[%s422 + $0xb8] sm:$0x3]
        %v8870 = vld [vmem:[%s422 + $0xc0] sm:$0xfc]
        %v8871 = vld [vmem:[%s422 + $0xc8] sm:$0xfc]
        %v8872 = vld [vmem:[%s422 + $0xd0] sm:$0xfc]
        %v8873 = vld [vmem:[%s422 + $0xd8] sm:$0x3]
        %v8874 = vld [vmem:[%s422 + $0xe0] sm:$0x3]
        %v8875 = vld [vmem:[%s422 + $0xe8] sm:$0x3]
        %v8876 = vld [vmem:[%s422 + $0xf0] sm:$0xfc]
        %v8877 = vld [vmem:[%s422 + $0xf8] sm:$0xfc]
        %v8878 = vld [vmem:[%s422 + $0x100] sm:$0xfc]
        %v8879 = vld [vmem:[%s422 + $0x108] sm:$0x3]
        %v8880 = vld [vmem:[%s422 + $0x110] sm:$0x3]
        %v8881 = vld [vmem:[%s422 + $0x118] sm:$0x3]
        %v8882 = vld [vmem:[%s422 + $0x120] sm:$0xfc]
        %v8883 = vld [vmem:[%s422 + $0x128] sm:$0xfc]
        %v8884 = vld [vmem:[%s422 + $0x130] sm:$0xfc]
        %v8885 = vld [vmem:[%s422 + $0x138] sm:$0x3]
        %v8886 = vld [vmem:[%s422 + $0x140] sm:$0x3]
        %v8887 = vld [vmem:[%s422 + $0x148] sm:$0x3]
        %v8888 = vld [vmem:[%s422 + $0x150] sm:$0xfc]
        %v8889 = vld [vmem:[%s422 + $0x158] sm:$0xfc]
        %v8890 = vld [vmem:[%s422 + $0x160] sm:$0xfc]
        %v8891 = vld [vmem:[%s422 + $0x168] sm:$0x3]
        %v8892 = vld [vmem:[%s422 + $0x170] sm:$0x3]
        %v8893 = vld [vmem:[%s422 + $0x178] sm:$0x3]
        %v8942 = vrot.slane %v8846, 2
        %v8943 = vrot.slane %v8849, 2
        %v8944 = vsel %vm1661, %v8942, %v8943
        %v8945 = vrot.slane %v8847, 2
        %v8946 = vrot.slane %v8850, 2
        %v8947 = vsel %vm1661, %v8945, %v8946
        %v8948 = vrot.slane %v8848, 2
        %v8949 = vrot.slane %v8851, 2
        %v8950 = vsel %vm1661, %v8948, %v8949
        %v8951 = vrot.slane %v8852, 2
        %v8952 = vrot.slane %v8855, 2
        %v8953 = vsel %vm1661, %v8951, %v8952
        %v8954 = vrot.slane %v8853, 2
        %v8955 = vrot.slane %v8856, 2
        %v8956 = vsel %vm1661, %v8954, %v8955
        %v8957 = vrot.slane %v8854, 2
        %v8958 = vrot.slane %v8857, 2
        %v8959 = vsel %vm1661, %v8957, %v8958
        %v8960 = vrot.slane %v8858, 2
        %v8961 = vrot.slane %v8861, 2
        %v8962 = vsel %vm1661, %v8960, %v8961
        %v8963 = vrot.slane %v8859, 2
        %v8964 = vrot.slane %v8862, 2
        %v8965 = vsel %vm1661, %v8963, %v8964
        %v8966 = vrot.slane %v8860, 2
        %v8967 = vrot.slane %v8863, 2
        %v8968 = vsel %vm1661, %v8966, %v8967
        %v8969 = vrot.slane %v8864, 2
        %v8970 = vrot.slane %v8867, 2
        %v8971 = vsel %vm1661, %v8969, %v8970
        %v8972 = vrot.slane %v8865, 2
        %v8973 = vrot.slane %v8868, 2
        %v8974 = vsel %vm1661, %v8972, %v8973
        %v8975 = vrot.slane %v8866, 2
        %v8976 = vrot.slane %v8869, 2
        %v8977 = vsel %vm1661, %v8975, %v8976
        %v8978 = vrot.slane %v8870, 2
        %v8979 = vrot.slane %v8873, 2
        %v8980 = vsel %vm1661, %v8978, %v8979
        %v8981 = vrot.slane %v8871, 2
        %v8982 = vrot.slane %v8874, 2
        %v8983 = vsel %vm1661, %v8981, %v8982
        %v8984 = vrot.slane %v8872, 2
        %v8985 = vrot.slane %v8875, 2
        %v8986 = vsel %vm1661, %v8984, %v8985
        %v8987 = vrot.slane %v8876, 2
        %v8988 = vrot.slane %v8879, 2
        %v8989 = vsel %vm1661, %v8987, %v8988
        %v8990 = vrot.slane %v8877, 2
        %v8991 = vrot.slane %v8880, 2
        %v8992 = vsel %vm1661, %v8990, %v8991
        %v8993 = vrot.slane %v8878, 2
        %v8994 = vrot.slane %v8881, 2
        %v8995 = vsel %vm1661, %v8993, %v8994
        %v8996 = vrot.slane %v8882, 2
        %v8997 = vrot.slane %v8885, 2
        %v8998 = vsel %vm1661, %v8996, %v8997
        %v8999 = vrot.slane %v8883, 2
        %v9000 = vrot.slane %v8886, 2
        %v9001 = vsel %vm1661, %v8999, %v9000
        %v9002 = vrot.slane %v8884, 2
        %v9003 = vrot.slane %v8887, 2
        %v9004 = vsel %vm1661, %v9002, %v9003
        %v9005 = vrot.slane %v8888, 2
        %v9006 = vrot.slane %v8891, 2
        %v9007 = vsel %vm1661, %v9005, %v9006
        %v9008 = vrot.slane %v8889, 2
        %v9009 = vrot.slane %v8892, 2
        %v9010 = vsel %vm1661, %v9008, %v9009
        %v9011 = vrot.slane %v8890, 2
        %v9012 = vrot.slane %v8893, 2
        %v9013 = vsel %vm1661, %v9011, %v9012
        %v9038 = vpack.c.bf16 %v8953, %v8944
        %v9039 = vpack.c.bf16 %v8956, %v8947
        %v9040 = vpack.c.bf16 %v8959, %v8950
        %v9041 = vpack.c.bf16 %v8971, %v8962
        %v9042 = vpack.c.bf16 %v8974, %v8965
        %v9043 = vpack.c.bf16 %v8977, %v8968
        %v9044 = vpack.c.bf16 %v8989, %v8980
        %v9045 = vpack.c.bf16 %v8992, %v8983
        %v9046 = vpack.c.bf16 %v8995, %v8986
        %v9047 = vpack.c.bf16 %v9007, %v8998
        %v9048 = vpack.c.bf16 %v9010, %v9001
        %v9049 = vpack.c.bf16 %v9013, %v9004
        %s9050 = scalar_lea.vmem [#allocation9], 1920
        %v9051 = vld [vmem:[%s9050] sm:$0xff]
        %v9052 = vld [vmem:[%s9050 + $0x8] sm:$0xff]
        %v9053 = vld [vmem:[%s9050 + $0x10] sm:$0xff]
        %v9054 = vld [vmem:[%s9050 + $0x18] sm:$0xff]
        %v9055 = vld [vmem:[%s9050 + $0x20] sm:$0xff]
        %v9056 = vld [vmem:[%s9050 + $0x28] sm:$0xff]
        %v9057 = vld [vmem:[%s9050 + $0x30] sm:$0xff]
        %v9058 = vld [vmem:[%s9050 + $0x38] sm:$0xff]
        %v9059 = vld [vmem:[%s9050 + $0x40] sm:$0xff]
        %v9060 = vld [vmem:[%s9050 + $0x48] sm:$0xff]
        %v9061 = vld [vmem:[%s9050 + $0x50] sm:$0xff]
        %v9062 = vld [vmem:[%s9050 + $0x58] sm:$0xff]
        %v9063 = vld [vmem:[%s9050 + $0x60] sm:$0xff]
        %v9064 = vld [vmem:[%s9050 + $0x68] sm:$0xff]
        %v9065 = vld [vmem:[%s9050 + $0x70] sm:$0xff]
        %v9066 = vld [vmem:[%s9050 + $0x78] sm:$0xff]
        %v9067 = vld [vmem:[%s9050 + $0x80] sm:$0xff]
        %v9068 = vld [vmem:[%s9050 + $0x88] sm:$0xff]
        %v9069 = vld [vmem:[%s9050 + $0x90] sm:$0xff]
        %v9070 = vld [vmem:[%s9050 + $0x98] sm:$0xff]
        %v9071 = vld [vmem:[%s9050 + $0xa0] sm:$0xff]
        %v9072 = vld [vmem:[%s9050 + $0xa8] sm:$0xff]
        %v9073 = vld [vmem:[%s9050 + $0xb0] sm:$0xff]
        %v9074 = vld [vmem:[%s9050 + $0xb8] sm:$0xff]
        %v9075 = vld [vmem:[%s9050 + $0xc0] sm:$0xff]
        %v9076 = vld [vmem:[%s9050 + $0xc8] sm:$0xff]
        %v9077 = vld [vmem:[%s9050 + $0xd0] sm:$0xff]
        %v9078 = vld [vmem:[%s9050 + $0xd8] sm:$0xff]
        %v9079 = vld [vmem:[%s9050 + $0xe0] sm:$0xff]
        %v9080 = vld [vmem:[%s9050 + $0xe8] sm:$0xff]
        %v9081 = vld [vmem:[%s9050 + $0xf0] sm:$0xff]
        %v9082 = vld [vmem:[%s9050 + $0xf8] sm:$0xff]
        %v9083 = vld [vmem:[%s9050 + $0x100] sm:$0xff]
        %v9084 = vld [vmem:[%s9050 + $0x108] sm:$0xff]
        %v9085 = vld [vmem:[%s9050 + $0x110] sm:$0xff]
        %v9086 = vld [vmem:[%s9050 + $0x118] sm:$0xff]
        %v9087 = vld [vmem:[%s9050 + $0x120] sm:$0xff]
        %v9088 = vld [vmem:[%s9050 + $0x128] sm:$0xff]
        %v9089 = vld [vmem:[%s9050 + $0x130] sm:$0xff]
        %v9090 = vld [vmem:[%s9050 + $0x138] sm:$0xff]
        %v9091 = vld [vmem:[%s9050 + $0x140] sm:$0xff]
        %v9092 = vld [vmem:[%s9050 + $0x148] sm:$0xff]
        %v9093 = vld [vmem:[%s9050 + $0x150] sm:$0xff]
        %v9094 = vld [vmem:[%s9050 + $0x158] sm:$0xff]
        %v9095 = vld [vmem:[%s9050 + $0x160] sm:$0xff]
        %v9096 = vld [vmem:[%s9050 + $0x168] sm:$0xff]
        %v9097 = vld [vmem:[%s9050 + $0x170] sm:$0xff]
        %v9098 = vld [vmem:[%s9050 + $0x178] sm:$0xff]
        %v9147 = vunpack.c.l.b16 %v9051
        %v9148 = vunpack.c.h.b16 %v9051
        %v9149 = vunpack.c.l.b16 %v9052
        %v9150 = vunpack.c.h.b16 %v9052
        %v9151 = vunpack.c.l.b16 %v9053
        %v9152 = vunpack.c.h.b16 %v9053
        %v9153 = vunpack.c.l.b16 %v9054
        %v9154 = vunpack.c.h.b16 %v9054
        %v9155 = vunpack.c.l.b16 %v9055
        %v9156 = vunpack.c.h.b16 %v9055
        %v9157 = vunpack.c.l.b16 %v9056
        %v9158 = vunpack.c.h.b16 %v9056
        %v9159 = vunpack.c.l.b16 %v9057
        %v9160 = vunpack.c.h.b16 %v9057
        %v9161 = vunpack.c.l.b16 %v9058
        %v9162 = vunpack.c.h.b16 %v9058
        %v9163 = vunpack.c.l.b16 %v9059
        %v9164 = vunpack.c.h.b16 %v9059
        %v9165 = vunpack.c.l.b16 %v9060
        %v9166 = vunpack.c.h.b16 %v9060
        %v9167 = vunpack.c.l.b16 %v9061
        %v9168 = vunpack.c.h.b16 %v9061
        %v9169 = vunpack.c.l.b16 %v9062
        %v9170 = vunpack.c.h.b16 %v9062
        %v9171 = vunpack.c.l.b16 %v9063
        %v9172 = vunpack.c.h.b16 %v9063
        %v9173 = vunpack.c.l.b16 %v9064
        %v9174 = vunpack.c.h.b16 %v9064
        %v9175 = vunpack.c.l.b16 %v9065
        %v9176 = vunpack.c.h.b16 %v9065
        %v9177 = vunpack.c.l.b16 %v9066
        %v9178 = vunpack.c.h.b16 %v9066
        %v9179 = vunpack.c.l.b16 %v9067
        %v9180 = vunpack.c.h.b16 %v9067
        %v9181 = vunpack.c.l.b16 %v9068
        %v9182 = vunpack.c.h.b16 %v9068
        %v9183 = vunpack.c.l.b16 %v9069
        %v9184 = vunpack.c.h.b16 %v9069
        %v9185 = vunpack.c.l.b16 %v9070
        %v9186 = vunpack.c.h.b16 %v9070
        %v9187 = vunpack.c.l.b16 %v9071
        %v9188 = vunpack.c.h.b16 %v9071
        %v9189 = vunpack.c.l.b16 %v9072
        %v9190 = vunpack.c.h.b16 %v9072
        %v9191 = vunpack.c.l.b16 %v9073
        %v9192 = vunpack.c.h.b16 %v9073
        %v9193 = vunpack.c.l.b16 %v9074
        %v9194 = vunpack.c.h.b16 %v9074
        %v9195 = vunpack.c.l.b16 %v9075
        %v9196 = vunpack.c.h.b16 %v9075
        %v9197 = vunpack.c.l.b16 %v9076
        %v9198 = vunpack.c.h.b16 %v9076
        %v9199 = vunpack.c.l.b16 %v9077
        %v9200 = vunpack.c.h.b16 %v9077
        %v9201 = vunpack.c.l.b16 %v9078
        %v9202 = vunpack.c.h.b16 %v9078
        %v9203 = vunpack.c.l.b16 %v9079
        %v9204 = vunpack.c.h.b16 %v9079
        %v9205 = vunpack.c.l.b16 %v9080
        %v9206 = vunpack.c.h.b16 %v9080
        %v9207 = vunpack.c.l.b16 %v9081
        %v9208 = vunpack.c.h.b16 %v9081
        %v9209 = vunpack.c.l.b16 %v9082
        %v9210 = vunpack.c.h.b16 %v9082
        %v9211 = vunpack.c.l.b16 %v9083
        %v9212 = vunpack.c.h.b16 %v9083
        %v9213 = vunpack.c.l.b16 %v9084
        %v9214 = vunpack.c.h.b16 %v9084
        %v9215 = vunpack.c.l.b16 %v9085
        %v9216 = vunpack.c.h.b16 %v9085
        %v9217 = vunpack.c.l.b16 %v9086
        %v9218 = vunpack.c.h.b16 %v9086
        %v9219 = vunpack.c.l.b16 %v9087
        %v9220 = vunpack.c.h.b16 %v9087
        %v9221 = vunpack.c.l.b16 %v9088
        %v9222 = vunpack.c.h.b16 %v9088
        %v9223 = vunpack.c.l.b16 %v9089
        %v9224 = vunpack.c.h.b16 %v9089
        %v9225 = vunpack.c.l.b16 %v9090
        %v9226 = vunpack.c.h.b16 %v9090
        %v9227 = vunpack.c.l.b16 %v9091
        %v9228 = vunpack.c.h.b16 %v9091
        %v9229 = vunpack.c.l.b16 %v9092
        %v9230 = vunpack.c.h.b16 %v9092
        %v9231 = vunpack.c.l.b16 %v9093
        %v9232 = vunpack.c.h.b16 %v9093
        %v9233 = vunpack.c.l.b16 %v9094
        %v9234 = vunpack.c.h.b16 %v9094
        %v9235 = vunpack.c.l.b16 %v9095
        %v9236 = vunpack.c.h.b16 %v9095
        %v9237 = vunpack.c.l.b16 %v9096
        %v9238 = vunpack.c.h.b16 %v9096
        %v9239 = vunpack.c.l.b16 %v9097
        %v9240 = vunpack.c.h.b16 %v9097
        %v9241 = vunpack.c.l.b16 %v9098
        %v9242 = vunpack.c.h.b16 %v9098
        %v9243 = vpack.c.b16 %v9149, %v9147
        %v9244 = vpack.c.b16 %v9150, %v9148
        %v9245 = vpack.c.b16 %v9153, %v9151
        %v9246 = vpack.c.b16 %v9154, %v9152
        %v9247 = vpack.c.b16 %v9157, %v9155
        %v9248 = vpack.c.b16 %v9158, %v9156
        %v9249 = vpack.c.b16 %v9161, %v9159
        %v9250 = vpack.c.b16 %v9162, %v9160
        %v9251 = vpack.c.b16 %v9165, %v9163
        %v9252 = vpack.c.b16 %v9166, %v9164
        %v9253 = vpack.c.b16 %v9169, %v9167
        %v9254 = vpack.c.b16 %v9170, %v9168
        %v9255 = vpack.c.b16 %v9173, %v9171
        %v9256 = vpack.c.b16 %v9174, %v9172
        %v9257 = vpack.c.b16 %v9177, %v9175
        %v9258 = vpack.c.b16 %v9178, %v9176
        %v9259 = vpack.c.b16 %v9181, %v9179
        %v9260 = vpack.c.b16 %v9182, %v9180
        %v9261 = vpack.c.b16 %v9185, %v9183
        %v9262 = vpack.c.b16 %v9186, %v9184
        %v9263 = vpack.c.b16 %v9189, %v9187
        %v9264 = vpack.c.b16 %v9190, %v9188
        %v9265 = vpack.c.b16 %v9193, %v9191
        %v9266 = vpack.c.b16 %v9194, %v9192
        %v9267 = vpack.c.b16 %v9197, %v9195
        %v9268 = vpack.c.b16 %v9198, %v9196
        %v9269 = vpack.c.b16 %v9201, %v9199
        %v9270 = vpack.c.b16 %v9202, %v9200
        %v9271 = vpack.c.b16 %v9205, %v9203
        %v9272 = vpack.c.b16 %v9206, %v9204
        %v9273 = vpack.c.b16 %v9209, %v9207
        %v9274 = vpack.c.b16 %v9210, %v9208
        %v9275 = vpack.c.b16 %v9213, %v9211
        %v9276 = vpack.c.b16 %v9214, %v9212
        %v9277 = vpack.c.b16 %v9217, %v9215
        %v9278 = vpack.c.b16 %v9218, %v9216
        %v9279 = vpack.c.b16 %v9221, %v9219
        %v9280 = vpack.c.b16 %v9222, %v9220
        %v9281 = vpack.c.b16 %v9225, %v9223
        %v9282 = vpack.c.b16 %v9226, %v9224
        %v9283 = vpack.c.b16 %v9229, %v9227
        %v9284 = vpack.c.b16 %v9230, %v9228
        %v9285 = vpack.c.b16 %v9233, %v9231
        %v9286 = vpack.c.b16 %v9234, %v9232
        %v9287 = vpack.c.b16 %v9237, %v9235
        %v9288 = vpack.c.b16 %v9238, %v9236
        %v9289 = vpack.c.b16 %v9241, %v9239
        %v9290 = vpack.c.b16 %v9242, %v9240
        %9339 = vmatprep.subr.bf16.mxu0 %v9244
        %9340 = vmatpush1.bf16.msra.mxu0 %v9243
        %9341 = vmatprep.subr.bf16.mxu0 %v9246
        %9342 = vmatpush1.bf16.msra.mxu0 %v9245
        %9343 = vmatprep.subr.bf16.mxu0 %v9248
        %9344 = vmatpush1.bf16.msra.mxu0 %v9247
        %9345 = vmatprep.subr.bf16.mxu0 %v9250
        %9346 = vmatpush1.bf16.msra.mxu0 %v9249
        %9347 = vmatprep.subr.bf16.mxu0 %v9252
        %9348 = vmatpush1.bf16.msra.mxu0 %v9251
        %9349 = vmatprep.subr.bf16.mxu0 %v9254
        %9350 = vmatpush1.bf16.msra.mxu0 %v9253
        %9351 = vmatprep.subr.bf16.mxu0 %v9256
        %9352 = vmatpush1.bf16.msra.mxu0 %v9255
        %9353 = vmatprep.subr.bf16.mxu0 %v9258
        %9354 = vmatpush1.bf16.msra.mxu0 %v9257
        %9355 = vmatprep.subr.bf16.mxu0 %v9260
        %9356 = vmatpush1.bf16.msra.mxu0 %v9259
        %9357 = vmatprep.subr.bf16.mxu0 %v9262
        %9358 = vmatpush1.bf16.msra.mxu0 %v9261
        %9359 = vmatprep.subr.bf16.mxu0 %v9264
        %9360 = vmatpush1.bf16.msra.mxu0 %v9263
        %9361 = vmatprep.subr.bf16.mxu0 %v9266
        %9362 = vmatpush1.bf16.msra.mxu0 %v9265
        %9363 = vmatprep.subr.bf16.mxu0 %v9268
        %9364 = vmatpush1.bf16.msra.mxu0 %v9267
        %9365 = vmatprep.subr.bf16.mxu0 %v9270
        %9366 = vmatpush1.bf16.msra.mxu0 %v9269
        %9367 = vmatprep.subr.bf16.mxu0 %v9272
        %9368 = vmatpush1.bf16.msra.mxu0 %v9271
        %9369 = vmatprep.subr.bf16.mxu0 %v9274
        %9370 = vmatpush1.bf16.msra.mxu0 %v9273
        %9371 = vmatprep.mubr.bf16.mxu0 %v9039
        %9372 = vmatmul.mubr.bf16.gmra.mrb[0].mxu0 %v9038
        %v9373 = vpop.f32.mrb[0].mxu0
        %v9374 = vadd.f32 0.0, %v9373
        %v9375 = vpop.f32.mrb[0].mxu0
        %v9376 = vadd.f32 0.0, %v9375
        %v9377 = vpop.f32.mrb[0].mxu0
        %v9378 = vadd.f32 0.0, %v9377
        %v9379 = vpop.f32.mrb[0].mxu0
        %v9380 = vadd.f32 0.0, %v9379
        %9381 = vmatprep.mubr.bf16.mxu0 %v9042
        %9382 = vmatmul.mubr.bf16.gmra.mrb[0].mxu0 %v9041
        %v9383 = vpop.f32.mrb[0].mxu0
        %v9384 = vadd.f32 0.0, %v9383
        %v9385 = vpop.f32.mrb[0].mxu0
        %v9386 = vadd.f32 0.0, %v9385
        %v9387 = vpop.f32.mrb[0].mxu0
        %v9388 = vadd.f32 0.0, %v9387
        %v9389 = vpop.f32.mrb[0].mxu0
        %v9390 = vadd.f32 0.0, %v9389
        %9391 = vmatprep.mubr.bf16.mxu0 %v9045
        %9392 = vmatmul.mubr.bf16.gmra.mrb[0].mxu0 %v9044
        %v9393 = vpop.f32.mrb[0].mxu0
        %v9394 = vadd.f32 0.0, %v9393
        %v9395 = vpop.f32.mrb[0].mxu0
        %v9396 = vadd.f32 0.0, %v9395
        %v9397 = vpop.f32.mrb[0].mxu0
        %v9398 = vadd.f32 0.0, %v9397
        %v9399 = vpop.f32.mrb[0].mxu0
        %v9400 = vadd.f32 0.0, %v9399
        %9401 = vmatprep.mubr.bf16.mxu0 %v9048
        %9402 = vmatmul.mubr.bf16.gmra.mrb[0].mxu0 %v9047
        %v9403 = vpop.f32.mrb[0].mxu0
        %v9404 = vadd.f32 0.0, %v9403
        %v9405 = vpop.f32.mrb[0].mxu0
        %v9406 = vadd.f32 0.0, %v9405
        %v9407 = vpop.f32.mrb[0].mxu0
        %v9408 = vadd.f32 0.0, %v9407
        %v9409 = vpop.f32.mrb[0].mxu0
        %v9410 = vadd.f32 0.0, %v9409
        %9411 = vdwg.mxu0
        %9412 = vmatprep.subr.bf16.mxu0 %v9276
        %9413 = vmatpush1.bf16.msra.mxu0 %v9275
        %9414 = vmatprep.subr.bf16.mxu0 %v9278
        %9415 = vmatpush1.bf16.msra.mxu0 %v9277
        %9416 = vmatprep.subr.bf16.mxu0 %v9280
        %9417 = vmatpush1.bf16.msra.mxu0 %v9279
        %9418 = vmatprep.subr.bf16.mxu0 %v9282
        %9419 = vmatpush1.bf16.msra.mxu0 %v9281
        %9420 = vmatprep.subr.bf16.mxu0 %v9284
        %9421 = vmatpush1.bf16.msra.mxu0 %v9283
        %9422 = vmatprep.subr.bf16.mxu0 %v9286
        %9423 = vmatpush1.bf16.msra.mxu0 %v9285
        %9424 = vmatprep.subr.bf16.mxu0 %v9288
        %9425 = vmatpush1.bf16.msra.mxu0 %v9287
        %9426 = vmatprep.subr.bf16.mxu0 %v9290
        %9427 = vmatpush1.bf16.msra.mxu0 %v9289
        %9428 = vmatprep.subr.bf16.mxu0 0
        %9429 = vmatpush1.bf16.msra.mxu0 0
        %9430 = vmatprep.subr.bf16.mxu0 0
        %9431 = vmatpush1.bf16.msra.mxu0 0
        %9432 = vmatprep.subr.bf16.mxu0 0
        %9433 = vmatpush1.bf16.msra.mxu0 0
        %9434 = vmatprep.subr.bf16.mxu0 0
        %9435 = vmatpush1.bf16.msra.mxu0 0
        %9436 = vmatprep.subr.bf16.mxu0 0
        %9437 = vmatpush1.bf16.msra.mxu0 0
        %9438 = vmatprep.subr.bf16.mxu0 0
        %9439 = vmatpush1.bf16.msra.mxu0 0
        %9440 = vmatprep.subr.bf16.mxu0 0
        %9441 = vmatpush1.bf16.msra.mxu0 0
        %9442 = vmatprep.subr.bf16.mxu0 0
        %9443 = vmatpush1.bf16.msra.mxu0 0
        %9444 = vmatprep.mubr.bf16.mxu0 0
        %9445 = vmatmul.mubr.bf16.gmra.mrb[0].mxu0 %v9040
        %v9446 = vpop.f32.mrb[0].mxu0
        %v9447 = vadd.f32 %v9374, %v9446
        %v9448 = vpop.f32.mrb[0].mxu0
        %v9449 = vadd.f32 %v9376, %v9448
        %v9450 = vpop.f32.mrb[0].mxu0
        %v9451 = vadd.f32 %v9378, %v9450
        %v9452 = vpop.f32.mrb[0].mxu0
        %v9453 = vadd.f32 %v9380, %v9452
        %9454 = vmatprep.mubr.bf16.mxu0 0
        %9455 = vmatmul.mubr.bf16.gmra.mrb[0].mxu0 %v9043
        %v9456 = vpop.f32.mrb[0].mxu0
        %v9457 = vadd.f32 %v9384, %v9456
        %v9458 = vpop.f32.mrb[0].mxu0
        %v9459 = vadd.f32 %v9386, %v9458
        %v9460 = vpop.f32.mrb[0].mxu0
        %v9461 = vadd.f32 %v9388, %v9460
        %v9462 = vpop.f32.mrb[0].mxu0
        %v9463 = vadd.f32 %v9390, %v9462
        %9464 = vmatprep.mubr.bf16.mxu0 0
        %9465 = vmatmul.mubr.bf16.gmra.mrb[0].mxu0 %v9046
        %v9466 = vpop.f32.mrb[0].mxu0
        %v9467 = vadd.f32 %v9394, %v9466
        %v9468 = vpop.f32.mrb[0].mxu0
        %v9469 = vadd.f32 %v9396, %v9468
        %v9470 = vpop.f32.mrb[0].mxu0
        %v9471 = vadd.f32 %v9398, %v9470
        %v9472 = vpop.f32.mrb[0].mxu0
        %v9473 = vadd.f32 %v9400, %v9472
        %9474 = vmatprep.mubr.bf16.mxu0 0
        %9475 = vmatmul.mubr.bf16.gmra.mrb[0].mxu0 %v9049
        %v9476 = vpop.f32.mrb[0].mxu0
        %v9477 = vadd.f32 %v9404, %v9476
        %v9478 = vpop.f32.mrb[0].mxu0
        %v9479 = vadd.f32 %v9406, %v9478
        %v9480 = vpop.f32.mrb[0].mxu0
        %v9481 = vadd.f32 %v9408, %v9480
        %v9482 = vpop.f32.mrb[0].mxu0
        %v9483 = vadd.f32 %v9410, %v9482
        %9484 = vdwg.mxu0
        %v9485 = vadd.f32 %v8830, %v9447
        %v9486 = vadd.f32 %v8831, %v9449
        %v9487 = vadd.f32 %v8832, %v9451
        %v9488 = vadd.f32 %v8833, %v9453
        %v9489 = vadd.f32 %v8834, %v9457
        %v9490 = vadd.f32 %v8835, %v9459
        %v9491 = vadd.f32 %v8836, %v9461
        %v9492 = vadd.f32 %v8837, %v9463
        %v9493 = vadd.f32 %v8838, %v9467
        %v9494 = vadd.f32 %v8839, %v9469
        %v9495 = vadd.f32 %v8840, %v9471
        %v9496 = vadd.f32 %v8841, %v9473
        %v9497 = vadd.f32 %v8842, %v9477
        %v9498 = vadd.f32 %v8843, %v9479
        %v9499 = vadd.f32 %v8844, %v9481
        %v9500 = vadd.f32 %v8845, %v9483
        %v9501 = vld [vmem:[%s4018] sm:$0xff]
        %v9502 = vld [vmem:[%s4018 + $0x8] sm:$0xff]
        %v9503 = vld [vmem:[%s4018 + $0x10] sm:$0xff]
        %v9504 = vld [vmem:[%s4018 + $0x30] sm:$0xff]
        %v9505 = vld [vmem:[%s4018 + $0x38] sm:$0xff]
        %v9506 = vld [vmem:[%s4018 + $0x40] sm:$0xff]
        %v9507 = vld [vmem:[%s4018 + $0x60] sm:$0xff]
        %v9508 = vld [vmem:[%s4018 + $0x68] sm:$0xff]
        %v9509 = vld [vmem:[%s4018 + $0x70] sm:$0xff]
        %v9510 = vld [vmem:[%s4018 + $0x90] sm:$0xff]
        %v9511 = vld [vmem:[%s4018 + $0x98] sm:$0xff]
        %v9512 = vld [vmem:[%s4018 + $0xa0] sm:$0xff]
        %v9513 = vld [vmem:[%s4018 + $0xc0] sm:$0xff]
        %v9514 = vld [vmem:[%s4018 + $0xc8] sm:$0xff]
        %v9515 = vld [vmem:[%s4018 + $0xd0] sm:$0xff]
        %v9516 = vld [vmem:[%s4018 + $0xf0] sm:$0xff]
        %v9517 = vld [vmem:[%s4018 + $0xf8] sm:$0xff]
        %v9518 = vld [vmem:[%s4018 + $0x100] sm:$0xff]
        %v9519 = vld [vmem:[%s4018 + $0x120] sm:$0xff]
        %v9520 = vld [vmem:[%s4018 + $0x128] sm:$0xff]
        %v9521 = vld [vmem:[%s4018 + $0x130] sm:$0xff]
        %v9522 = vld [vmem:[%s4018 + $0x150] sm:$0xff]
        %v9523 = vld [vmem:[%s4018 + $0x158] sm:$0xff]
        %v9524 = vld [vmem:[%s4018 + $0x160] sm:$0xff]
        %v9525 = vpack.c.bf16 %v9504, %v9501
        %v9526 = vpack.c.bf16 %v9505, %v9502
        %v9527 = vpack.c.bf16 %v9506, %v9503
        %v9528 = vpack.c.bf16 %v9510, %v9507
        %v9529 = vpack.c.bf16 %v9511, %v9508
        %v9530 = vpack.c.bf16 %v9512, %v9509
        %v9531 = vpack.c.bf16 %v9516, %v9513
        %v9532 = vpack.c.bf16 %v9517, %v9514
        %v9533 = vpack.c.bf16 %v9518, %v9515
        %v9534 = vpack.c.bf16 %v9522, %v9519
        %v9535 = vpack.c.bf16 %v9523, %v9520
        %v9536 = vpack.c.bf16 %v9524, %v9521
        %s9537 = scalar_lea.vmem [#allocation9], 2304
        %v9538 = vld [vmem:[%s9537] sm:$0xff]
        %v9539 = vld [vmem:[%s9537 + $0x8] sm:$0xff]
        %v9540 = vld [vmem:[%s9537 + $0x10] sm:$0xff]
        %v9541 = vld [vmem:[%s9537 + $0x18] sm:$0xff]
        %v9542 = vld [vmem:[%s9537 + $0x20] sm:$0xff]
        %v9543 = vld [vmem:[%s9537 + $0x28] sm:$0xff]
        %v9544 = vld [vmem:[%s9537 + $0x30] sm:$0xff]
        %v9545 = vld [vmem:[%s9537 + $0x38] sm:$0xff]
        %v9546 = vld [vmem:[%s9537 + $0x40] sm:$0xff]
        %v9547 = vld [vmem:[%s9537 + $0x48] sm:$0xff]
        %v9548 = vld [vmem:[%s9537 + $0x50] sm:$0xff]
        %v9549 = vld [vmem:[%s9537 + $0x58] sm:$0xff]
        %v9550 = vld [vmem:[%s9537 + $0x60] sm:$0xff]
        %v9551 = vld [vmem:[%s9537 + $0x68] sm:$0xff]
        %v9552 = vld [vmem:[%s9537 + $0x70] sm:$0xff]
        %v9553 = vld [vmem:[%s9537 + $0x78] sm:$0xff]
        %v9554 = vld [vmem:[%s9537 + $0x80] sm:$0xff]
        %v9555 = vld [vmem:[%s9537 + $0x88] sm:$0xff]
        %v9556 = vld [vmem:[%s9537 + $0x90] sm:$0xff]
        %v9557 = vld [vmem:[%s9537 + $0x98] sm:$0xff]
        %v9558 = vld [vmem:[%s9537 + $0xa0] sm:$0xff]
        %v9559 = vld [vmem:[%s9537 + $0xa8] sm:$0xff]
        %v9560 = vld [vmem:[%s9537 + $0xb0] sm:$0xff]
        %v9561 = vld [vmem:[%s9537 + $0xb8] sm:$0xff]
        %v9562 = vld [vmem:[%s9537 + $0xc0] sm:$0xff]
        %v9563 = vld [vmem:[%s9537 + $0xc8] sm:$0xff]
        %v9564 = vld [vmem:[%s9537 + $0xd0] sm:$0xff]
        %v9565 = vld [vmem:[%s9537 + $0xd8] sm:$0xff]
        %v9566 = vld [vmem:[%s9537 + $0xe0] sm:$0xff]
        %v9567 = vld [vmem:[%s9537 + $0xe8] sm:$0xff]
        %v9568 = vld [vmem:[%s9537 + $0xf0] sm:$0xff]
        %v9569 = vld [vmem:[%s9537 + $0xf8] sm:$0xff]
        %v9570 = vld [vmem:[%s9537 + $0x100] sm:$0xff]
        %v9571 = vld [vmem:[%s9537 + $0x108] sm:$0xff]
        %v9572 = vld [vmem:[%s9537 + $0x110] sm:$0xff]
        %v9573 = vld [vmem:[%s9537 + $0x118] sm:$0xff]
        %v9574 = vld [vmem:[%s9537 + $0x120] sm:$0xff]
        %v9575 = vld [vmem:[%s9537 + $0x128] sm:$0xff]
        %v9576 = vld [vmem:[%s9537 + $0x130] sm:$0xff]
        %v9577 = vld [vmem:[%s9537 + $0x138] sm:$0xff]
        %v9578 = vld [vmem:[%s9537 + $0x140] sm:$0xff]
        %v9579 = vld [vmem:[%s9537 + $0x148] sm:$0xff]
        %v9580 = vld [vmem:[%s9537 + $0x150] sm:$0xff]
        %v9581 = vld [vmem:[%s9537 + $0x158] sm:$0xff]
        %v9582 = vld [vmem:[%s9537 + $0x160] sm:$0xff]
        %v9583 = vld [vmem:[%s9537 + $0x168] sm:$0xff]
        %v9584 = vld [vmem:[%s9537 + $0x170] sm:$0xff]
        %v9585 = vld [vmem:[%s9537 + $0x178] sm:$0xff]
        %v9634 = vunpack.c.l.b16 %v9538
        %v9635 = vunpack.c.h.b16 %v9538
        %v9636 = vunpack.c.l.b16 %v9539
        %v9637 = vunpack.c.h.b16 %v9539
        %v9638 = vunpack.c.l.b16 %v9540
        %v9639 = vunpack.c.h.b16 %v9540
        %v9640 = vunpack.c.l.b16 %v9541
        %v9641 = vunpack.c.h.b16 %v9541
        %v9642 = vunpack.c.l.b16 %v9542
        %v9643 = vunpack.c.h.b16 %v9542
        %v9644 = vunpack.c.l.b16 %v9543
        %v9645 = vunpack.c.h.b16 %v9543
        %v9646 = vunpack.c.l.b16 %v9544
        %v9647 = vunpack.c.h.b16 %v9544
        %v9648 = vunpack.c.l.b16 %v9545
        %v9649 = vunpack.c.h.b16 %v9545
        %v9650 = vunpack.c.l.b16 %v9546
        %v9651 = vunpack.c.h.b16 %v9546
        %v9652 = vunpack.c.l.b16 %v9547
        %v9653 = vunpack.c.h.b16 %v9547
        %v9654 = vunpack.c.l.b16 %v9548
        %v9655 = vunpack.c.h.b16 %v9548
        %v9656 = vunpack.c.l.b16 %v9549
        %v9657 = vunpack.c.h.b16 %v9549
        %v9658 = vunpack.c.l.b16 %v9550
        %v9659 = vunpack.c.h.b16 %v9550
        %v9660 = vunpack.c.l.b16 %v9551
        %v9661 = vunpack.c.h.b16 %v9551
        %v9662 = vunpack.c.l.b16 %v9552
        %v9663 = vunpack.c.h.b16 %v9552
        %v9664 = vunpack.c.l.b16 %v9553
        %v9665 = vunpack.c.h.b16 %v9553
        %v9666 = vunpack.c.l.b16 %v9554
        %v9667 = vunpack.c.h.b16 %v9554
        %v9668 = vunpack.c.l.b16 %v9555
        %v9669 = vunpack.c.h.b16 %v9555
        %v9670 = vunpack.c.l.b16 %v9556
        %v9671 = vunpack.c.h.b16 %v9556
        %v9672 = vunpack.c.l.b16 %v9557
        %v9673 = vunpack.c.h.b16 %v9557
        %v9674 = vunpack.c.l.b16 %v9558
        %v9675 = vunpack.c.h.b16 %v9558
        %v9676 = vunpack.c.l.b16 %v9559
        %v9677 = vunpack.c.h.b16 %v9559
        %v9678 = vunpack.c.l.b16 %v9560
        %v9679 = vunpack.c.h.b16 %v9560
        %v9680 = vunpack.c.l.b16 %v9561
        %v9681 = vunpack.c.h.b16 %v9561
        %v9682 = vunpack.c.l.b16 %v9562
        %v9683 = vunpack.c.h.b16 %v9562
        %v9684 = vunpack.c.l.b16 %v9563
        %v9685 = vunpack.c.h.b16 %v9563
        %v9686 = vunpack.c.l.b16 %v9564
        %v9687 = vunpack.c.h.b16 %v9564
        %v9688 = vunpack.c.l.b16 %v9565
        %v9689 = vunpack.c.h.b16 %v9565
        %v9690 = vunpack.c.l.b16 %v9566
        %v9691 = vunpack.c.h.b16 %v9566
        %v9692 = vunpack.c.l.b16 %v9567
        %v9693 = vunpack.c.h.b16 %v9567
        %v9694 = vunpack.c.l.b16 %v9568
        %v9695 = vunpack.c.h.b16 %v9568
        %v9696 = vunpack.c.l.b16 %v9569
        %v9697 = vunpack.c.h.b16 %v9569
        %v9698 = vunpack.c.l.b16 %v9570
        %v9699 = vunpack.c.h.b16 %v9570
        %v9700 = vunpack.c.l.b16 %v9571
        %v9701 = vunpack.c.h.b16 %v9571
        %v9702 = vunpack.c.l.b16 %v9572
        %v9703 = vunpack.c.h.b16 %v9572
        %v9704 = vunpack.c.l.b16 %v9573
        %v9705 = vunpack.c.h.b16 %v9573
        %v9706 = vunpack.c.l.b16 %v9574
        %v9707 = vunpack.c.h.b16 %v9574
        %v9708 = vunpack.c.l.b16 %v9575
        %v9709 = vunpack.c.h.b16 %v9575
        %v9710 = vunpack.c.l.b16 %v9576
        %v9711 = vunpack.c.h.b16 %v9576
        %v9712 = vunpack.c.l.b16 %v9577
        %v9713 = vunpack.c.h.b16 %v9577
        %v9714 = vunpack.c.l.b16 %v9578
        %v9715 = vunpack.c.h.b16 %v9578
        %v9716 = vunpack.c.l.b16 %v9579
        %v9717 = vunpack.c.h.b16 %v9579
        %v9718 = vunpack.c.l.b16 %v9580
        %v9719 = vunpack.c.h.b16 %v9580
        %v9720 = vunpack.c.l.b16 %v9581
        %v9721 = vunpack.c.h.b16 %v9581
        %v9722 = vunpack.c.l.b16 %v9582
        %v9723 = vunpack.c.h.b16 %v9582
        %v9724 = vunpack.c.l.b16 %v9583
        %v9725 = vunpack.c.h.b16 %v9583
        %v9726 = vunpack.c.l.b16 %v9584
        %v9727 = vunpack.c.h.b16 %v9584
        %v9728 = vunpack.c.l.b16 %v9585
        %v9729 = vunpack.c.h.b16 %v9585
        %v9730 = vpack.c.b16 %v9636, %v9634
        %v9731 = vpack.c.b16 %v9637, %v9635
        %v9732 = vpack.c.b16 %v9640, %v9638
        %v9733 = vpack.c.b16 %v9641, %v9639
        %v9734 = vpack.c.b16 %v9644, %v9642
        %v9735 = vpack.c.b16 %v9645, %v9643
        %v9736 = vpack.c.b16 %v9648, %v9646
        %v9737 = vpack.c.b16 %v9649, %v9647
        %v9738 = vpack.c.b16 %v9652, %v9650
        %v9739 = vpack.c.b16 %v9653, %v9651
        %v9740 = vpack.c.b16 %v9656, %v9654
        %v9741 = vpack.c.b16 %v9657, %v9655
        %v9742 = vpack.c.b16 %v9660, %v9658
        %v9743 = vpack.c.b16 %v9661, %v9659
        %v9744 = vpack.c.b16 %v9664, %v9662
        %v9745 = vpack.c.b16 %v9665, %v9663
        %v9746 = vpack.c.b16 %v9668, %v9666
        %v9747 = vpack.c.b16 %v9669, %v9667
        %v9748 = vpack.c.b16 %v9672, %v9670
        %v9749 = vpack.c.b16 %v9673, %v9671
        %v9750 = vpack.c.b16 %v9676, %v9674
        %v9751 = vpack.c.b16 %v9677, %v9675
        %v9752 = vpack.c.b16 %v9680, %v9678
        %v9753 = vpack.c.b16 %v9681, %v9679
        %v9754 = vpack.c.b16 %v9684, %v9682
        %v9755 = vpack.c.b16 %v9685, %v9683
        %v9756 = vpack.c.b16 %v9688, %v9686
        %v9757 = vpack.c.b16 %v9689, %v9687
        %v9758 = vpack.c.b16 %v9692, %v9690
        %v9759 = vpack.c.b16 %v9693, %v9691
        %v9760 = vpack.c.b16 %v9696, %v9694
        %v9761 = vpack.c.b16 %v9697, %v9695
        %v9762 = vpack.c.b16 %v9700, %v9698
        %v9763 = vpack.c.b16 %v9701, %v9699
        %v9764 = vpack.c.b16 %v9704, %v9702
        %v9765 = vpack.c.b16 %v9705, %v9703
        %v9766 = vpack.c.b16 %v9708, %v9706
        %v9767 = vpack.c.b16 %v9709, %v9707
        %v9768 = vpack.c.b16 %v9712, %v9710
        %v9769 = vpack.c.b16 %v9713, %v9711
        %v9770 = vpack.c.b16 %v9716, %v9714
        %v9771 = vpack.c.b16 %v9717, %v9715
        %v9772 = vpack.c.b16 %v9720, %v9718
        %v9773 = vpack.c.b16 %v9721, %v9719
        %v9774 = vpack.c.b16 %v9724, %v9722
        %v9775 = vpack.c.b16 %v9725, %v9723
        %v9776 = vpack.c.b16 %v9728, %v9726
        %v9777 = vpack.c.b16 %v9729, %v9727
        %9826 = vmatprep.subr.bf16.mxu0 %v9731
        %9827 = vmatpush1.bf16.msra.mxu0 %v9730
        %9828 = vmatprep.subr.bf16.mxu0 %v9733
        %9829 = vmatpush1.bf16.msra.mxu0 %v9732
        %9830 = vmatprep.subr.bf16.mxu0 %v9735
        %9831 = vmatpush1.bf16.msra.mxu0 %v9734
        %9832 = vmatprep.subr.bf16.mxu0 %v9737
        %9833 = vmatpush1.bf16.msra.mxu0 %v9736
        %9834 = vmatprep.subr.bf16.mxu0 %v9739
        %9835 = vmatpush1.bf16.msra.mxu0 %v9738
        %9836 = vmatprep.subr.bf16.mxu0 %v9741
        %9837 = vmatpush1.bf16.msra.mxu0 %v9740
        %9838 = vmatprep.subr.bf16.mxu0 %v9743
        %9839 = vmatpush1.bf16.msra.mxu0 %v9742
        %9840 = vmatprep.subr.bf16.mxu0 %v9745
        %9841 = vmatpush1.bf16.msra.mxu0 %v9744
        %9842 = vmatprep.subr.bf16.mxu0 %v9747
        %9843 = vmatpush1.bf16.msra.mxu0 %v9746
        %9844 = vmatprep.subr.bf16.mxu0 %v9749
        %9845 = vmatpush1.bf16.msra.mxu0 %v9748
        %9846 = vmatprep.subr.bf16.mxu0 %v9751
        %9847 = vmatpush1.bf16.msra.mxu0 %v9750
        %9848 = vmatprep.subr.bf16.mxu0 %v9753
        %9849 = vmatpush1.bf16.msra.mxu0 %v9752
        %9850 = vmatprep.subr.bf16.mxu0 %v9755
        %9851 = vmatpush1.bf16.msra.mxu0 %v9754
        %9852 = vmatprep.subr.bf16.mxu0 %v9757
        %9853 = vmatpush1.bf16.msra.mxu0 %v9756
        %9854 = vmatprep.subr.bf16.mxu0 %v9759
        %9855 = vmatpush1.bf16.msra.mxu0 %v9758
        %9856 = vmatprep.subr.bf16.mxu0 %v9761
        %9857 = vmatpush1.bf16.msra.mxu0 %v9760
        %9858 = vmatprep.mubr.bf16.mxu0 %v9526
        %9859 = vmatmul.mubr.bf16.gmra.mrb[0].mxu0 %v9525
        %v9860 = vpop.f32.mrb[0].mxu0
        %v9861 = vadd.f32 0.0, %v9860
        %v9862 = vpop.f32.mrb[0].mxu0
        %v9863 = vadd.f32 0.0, %v9862
        %v9864 = vpop.f32.mrb[0].mxu0
        %v9865 = vadd.f32 0.0, %v9864
        %v9866 = vpop.f32.mrb[0].mxu0
        %v9867 = vadd.f32 0.0, %v9866
        %9868 = vmatprep.mubr.bf16.mxu0 %v9529
        %9869 = vmatmul.mubr.bf16.gmra.mrb[0].mxu0 %v9528
        %v9870 = vpop.f32.mrb[0].mxu0
        %v9871 = vadd.f32 0.0, %v9870
        %v9872 = vpop.f32.mrb[0].mxu0
        %v9873 = vadd.f32 0.0, %v9872
        %v9874 = vpop.f32.mrb[0].mxu0
        %v9875 = vadd.f32 0.0, %v9874
        %v9876 = vpop.f32.mrb[0].mxu0
        %v9877 = vadd.f32 0.0, %v9876
        %9878 = vmatprep.mubr.bf16.mxu0 %v9532
        %9879 = vmatmul.mubr.bf16.gmra.mrb[0].mxu0 %v9531
        %v9880 = vpop.f32.mrb[0].mxu0
        %v9881 = vadd.f32 0.0, %v9880
        %v9882 = vpop.f32.mrb[0].mxu0
        %v9883 = vadd.f32 0.0, %v9882
        %v9884 = vpop.f32.mrb[0].mxu0
        %v9885 = vadd.f32 0.0, %v9884
        %v9886 = vpop.f32.mrb[0].mxu0
        %v9887 = vadd.f32 0.0, %v9886
        %9888 = vmatprep.mubr.bf16.mxu0 %v9535
        %9889 = vmatmul.mubr.bf16.gmra.mrb[0].mxu0 %v9534
        %v9890 = vpop.f32.mrb[0].mxu0
        %v9891 = vadd.f32 0.0, %v9890
        %v9892 = vpop.f32.mrb[0].mxu0
        %v9893 = vadd.f32 0.0, %v9892
        %v9894 = vpop.f32.mrb[0].mxu0
        %v9895 = vadd.f32 0.0, %v9894
        %v9896 = vpop.f32.mrb[0].mxu0
        %v9897 = vadd.f32 0.0, %v9896
        %9898 = vdwg.mxu0
        %9899 = vmatprep.subr.bf16.mxu0 %v9763
        %9900 = vmatpush1.bf16.msra.mxu0 %v9762
        %9901 = vmatprep.subr.bf16.mxu0 %v9765
        %9902 = vmatpush1.bf16.msra.mxu0 %v9764
        %9903 = vmatprep.subr.bf16.mxu0 %v9767
        %9904 = vmatpush1.bf16.msra.mxu0 %v9766
        %9905 = vmatprep.subr.bf16.mxu0 %v9769
        %9906 = vmatpush1.bf16.msra.mxu0 %v9768
        %9907 = vmatprep.subr.bf16.mxu0 %v9771
        %9908 = vmatpush1.bf16.msra.mxu0 %v9770
        %9909 = vmatprep.subr.bf16.mxu0 %v9773
        %9910 = vmatpush1.bf16.msra.mxu0 %v9772
        %9911 = vmatprep.subr.bf16.mxu0 %v9775
        %9912 = vmatpush1.bf16.msra.mxu0 %v9774
        %9913 = vmatprep.subr.bf16.mxu0 %v9777
        %9914 = vmatpush1.bf16.msra.mxu0 %v9776
        %9915 = vmatprep.subr.bf16.mxu0 0
        %9916 = vmatpush1.bf16.msra.mxu0 0
        %9917 = vmatprep.subr.bf16.mxu0 0
        %9918 = vmatpush1.bf16.msra.mxu0 0
        %9919 = vmatprep.subr.bf16.mxu0 0
        %9920 = vmatpush1.bf16.msra.mxu0 0
        %9921 = vmatprep.subr.bf16.mxu0 0
        %9922 = vmatpush1.bf16.msra.mxu0 0
        %9923 = vmatprep.subr.bf16.mxu0 0
        %9924 = vmatpush1.bf16.msra.mxu0 0
        %9925 = vmatprep.subr.bf16.mxu0 0
        %9926 = vmatpush1.bf16.msra.mxu0 0
        %9927 = vmatprep.subr.bf16.mxu0 0
        %9928 = vmatpush1.bf16.msra.mxu0 0
        %9929 = vmatprep.subr.bf16.mxu0 0
        %9930 = vmatpush1.bf16.msra.mxu0 0
        %9931 = vmatprep.mubr.bf16.mxu0 0
        %9932 = vmatmul.mubr.bf16.gmra.mrb[0].mxu0 %v9527
        %v9933 = vpop.f32.mrb[0].mxu0
        %v9934 = vadd.f32 %v9861, %v9933
        %v9935 = vpop.f32.mrb[0].mxu0
        %v9936 = vadd.f32 %v9863, %v9935
        %v9937 = vpop.f32.mrb[0].mxu0
        %v9938 = vadd.f32 %v9865, %v9937
        %v9939 = vpop.f32.mrb[0].mxu0
        %v9940 = vadd.f32 %v9867, %v9939
        %9941 = vmatprep.mubr.bf16.mxu0 0
        %9942 = vmatmul.mubr.bf16.gmra.mrb[0].mxu0 %v9530
        %v9943 = vpop.f32.mrb[0].mxu0
        %v9944 = vadd.f32 %v9871, %v9943
        %v9945 = vpop.f32.mrb[0].mxu0
        %v9946 = vadd.f32 %v9873, %v9945
        %v9947 = vpop.f32.mrb[0].mxu0
        %v9948 = vadd.f32 %v9875, %v9947
        %v9949 = vpop.f32.mrb[0].mxu0
        %v9950 = vadd.f32 %v9877, %v9949
        %9951 = vmatprep.mubr.bf16.mxu0 0
        %9952 = vmatmul.mubr.bf16.gmra.mrb[0].mxu0 %v9533
        %v9953 = vpop.f32.mrb[0].mxu0
        %v9954 = vadd.f32 %v9881, %v9953
        %v9955 = vpop.f32.mrb[0].mxu0
        %v9956 = vadd.f32 %v9883, %v9955
        %v9957 = vpop.f32.mrb[0].mxu0
        %v9958 = vadd.f32 %v9885, %v9957
        %v9959 = vpop.f32.mrb[0].mxu0
        %v9960 = vadd.f32 %v9887, %v9959
        %9961 = vmatprep.mubr.bf16.mxu0 0
        %9962 = vmatmul.mubr.bf16.gmra.mrb[0].mxu0 %v9536
        %v9963 = vpop.f32.mrb[0].mxu0
        %v9964 = vadd.f32 %v9891, %v9963
        %v9965 = vpop.f32.mrb[0].mxu0
        %v9966 = vadd.f32 %v9893, %v9965
        %v9967 = vpop.f32.mrb[0].mxu0
        %v9968 = vadd.f32 %v9895, %v9967
        %v9969 = vpop.f32.mrb[0].mxu0
        %v9970 = vadd.f32 %v9897, %v9969
        %9971 = vdwg.mxu0
        %v9972 = vadd.f32 %v9485, %v9934
        %v9973 = vadd.f32 %v9486, %v9936
        %v9974 = vadd.f32 %v9487, %v9938
        %v9975 = vadd.f32 %v9488, %v9940
        %v9976 = vadd.f32 %v9489, %v9944
        %v9977 = vadd.f32 %v9490, %v9946
        %v9978 = vadd.f32 %v9491, %v9948
        %v9979 = vadd.f32 %v9492, %v9950
        %v9980 = vadd.f32 %v9493, %v9954
        %v9981 = vadd.f32 %v9494, %v9956
        %v9982 = vadd.f32 %v9495, %v9958
        %v9983 = vadd.f32 %v9496, %v9960
        %v9984 = vadd.f32 %v9497, %v9964
        %v9985 = vadd.f32 %v9498, %v9966
        %v9986 = vadd.f32 %v9499, %v9968
        %v9987 = vadd.f32 %v9500, %v9970
        %v9988 = vld [vmem:[%s4018] sm:$0xfe]
        %v9989 = vld [vmem:[%s4018 + $0x8] sm:$0xfe]
        %v9990 = vld [vmem:[%s4018 + $0x10] sm:$0xfe]
        %v9991 = vld [vmem:[%s4018 + $0x18] sm:$0x1]
        %v9992 = vld [vmem:[%s4018 + $0x20] sm:$0x1]
        %v9993 = vld [vmem:[%s4018 + $0x28] sm:$0x1]
        %v9994 = vld [vmem:[%s4018 + $0x30] sm:$0xfe]
        %v9995 = vld [vmem:[%s4018 + $0x38] sm:$0xfe]
        %v9996 = vld [vmem:[%s4018 + $0x40] sm:$0xfe]
        %v9997 = vld [vmem:[%s4018 + $0x48] sm:$0x1]
        %v9998 = vld [vmem:[%s4018 + $0x50] sm:$0x1]
        %v9999 = vld [vmem:[%s4018 + $0x58] sm:$0x1]
        %v10000 = vld [vmem:[%s4018 + $0x60] sm:$0xfe]
        %v10001 = vld [vmem:[%s4018 + $0x68] sm:$0xfe]
        %v10002 = vld [vmem:[%s4018 + $0x70] sm:$0xfe]
        %v10003 = vld [vmem:[%s4018 + $0x78] sm:$0x1]
        %v10004 = vld [vmem:[%s4018 + $0x80] sm:$0x1]
        %v10005 = vld [vmem:[%s4018 + $0x88] sm:$0x1]
        %v10006 = vld [vmem:[%s4018 + $0x90] sm:$0xfe]
        %v10007 = vld [vmem:[%s4018 + $0x98] sm:$0xfe]
        %v10008 = vld [vmem:[%s4018 + $0xa0] sm:$0xfe]
        %v10009 = vld [vmem:[%s4018 + $0xa8] sm:$0x1]
        %v10010 = vld [vmem:[%s4018 + $0xb0] sm:$0x1]
        %v10011 = vld [vmem:[%s4018 + $0xb8] sm:$0x1]
        %v10012 = vld [vmem:[%s4018 + $0xc0] sm:$0xfe]
        %v10013 = vld [vmem:[%s4018 + $0xc8] sm:$0xfe]
        %v10014 = vld [vmem:[%s4018 + $0xd0] sm:$0xfe]
        %v10015 = vld [vmem:[%s4018 + $0xd8] sm:$0x1]
        %v10016 = vld [vmem:[%s4018 + $0xe0] sm:$0x1]
        %v10017 = vld [vmem:[%s4018 + $0xe8] sm:$0x1]
        %v10018 = vld [vmem:[%s4018 + $0xf0] sm:$0xfe]
        %v10019 = vld [vmem:[%s4018 + $0xf8] sm:$0xfe]
        %v10020 = vld [vmem:[%s4018 + $0x100] sm:$0xfe]
        %v10021 = vld [vmem:[%s4018 + $0x108] sm:$0x1]
        %v10022 = vld [vmem:[%s4018 + $0x110] sm:$0x1]
        %v10023 = vld [vmem:[%s4018 + $0x118] sm:$0x1]
        %v10024 = vld [vmem:[%s4018 + $0x120] sm:$0xfe]
        %v10025 = vld [vmem:[%s4018 + $0x128] sm:$0xfe]
        %v10026 = vld [vmem:[%s4018 + $0x130] sm:$0xfe]
        %v10027 = vld [vmem:[%s4018 + $0x138] sm:$0x1]
        %v10028 = vld [vmem:[%s4018 + $0x140] sm:$0x1]
        %v10029 = vld [vmem:[%s4018 + $0x148] sm:$0x1]
        %v10030 = vld [vmem:[%s4018 + $0x150] sm:$0xfe]
        %v10031 = vld [vmem:[%s4018 + $0x158] sm:$0xfe]
        %v10032 = vld [vmem:[%s4018 + $0x160] sm:$0xfe]
        %v10033 = vld [vmem:[%s4018 + $0x168] sm:$0x1]
        %v10034 = vld [vmem:[%s4018 + $0x170] sm:$0x1]
        %v10035 = vld [vmem:[%s4018 + $0x178] sm:$0x1]
        %v10084 = vrot.slane %v9988, 1
        %v10085 = vrot.slane %v9991, 1
        %v10086 = vsel %vm635, %v10084, %v10085
        %v10087 = vrot.slane %v9989, 1
        %v10088 = vrot.slane %v9992, 1
        %v10089 = vsel %vm635, %v10087, %v10088
        %v10090 = vrot.slane %v9990, 1
        %v10091 = vrot.slane %v9993, 1
        %v10092 = vsel %vm635, %v10090, %v10091
        %v10093 = vrot.slane %v9994, 1
        %v10094 = vrot.slane %v9997, 1
        %v10095 = vsel %vm635, %v10093, %v10094
        %v10096 = vrot.slane %v9995, 1
        %v10097 = vrot.slane %v9998, 1
        %v10098 = vsel %vm635, %v10096, %v10097
        %v10099 = vrot.slane %v9996, 1
        %v10100 = vrot.slane %v9999, 1
        %v10101 = vsel %vm635, %v10099, %v10100
        %v10102 = vrot.slane %v10000, 1
        %v10103 = vrot.slane %v10003, 1
        %v10104 = vsel %vm635, %v10102, %v10103
        %v10105 = vrot.slane %v10001, 1
        %v10106 = vrot.slane %v10004, 1
        %v10107 = vsel %vm635, %v10105, %v10106
        %v10108 = vrot.slane %v10002, 1
        %v10109 = vrot.slane %v10005, 1
        %v10110 = vsel %vm635, %v10108, %v10109
        %v10111 = vrot.slane %v10006, 1
        %v10112 = vrot.slane %v10009, 1
        %v10113 = vsel %vm635, %v10111, %v10112
        %v10114 = vrot.slane %v10007, 1
        %v10115 = vrot.slane %v10010, 1
        %v10116 = vsel %vm635, %v10114, %v10115
        %v10117 = vrot.slane %v10008, 1
        %v10118 = vrot.slane %v10011, 1
        %v10119 = vsel %vm635, %v10117, %v10118
        %v10120 = vrot.slane %v10012, 1
        %v10121 = vrot.slane %v10015, 1
        %v10122 = vsel %vm635, %v10120, %v10121
        %v10123 = vrot.slane %v10013, 1
        %v10124 = vrot.slane %v10016, 1
        %v10125 = vsel %vm635, %v10123, %v10124
        %v10126 = vrot.slane %v10014, 1
        %v10127 = vrot.slane %v10017, 1
        %v10128 = vsel %vm635, %v10126, %v10127
        %v10129 = vrot.slane %v10018, 1
        %v10130 = vrot.slane %v10021, 1
        %v10131 = vsel %vm635, %v10129, %v10130
        %v10132 = vrot.slane %v10019, 1
        %v10133 = vrot.slane %v10022, 1
        %v10134 = vsel %vm635, %v10132, %v10133
        %v10135 = vrot.slane %v10020, 1
        %v10136 = vrot.slane %v10023, 1
        %v10137 = vsel %vm635, %v10135, %v10136
        %v10138 = vrot.slane %v10024, 1
        %v10139 = vrot.slane %v10027, 1
        %v10140 = vsel %vm635, %v10138, %v10139
        %v10141 = vrot.slane %v10025, 1
        %v10142 = vrot.slane %v10028, 1
        %v10143 = vsel %vm635, %v10141, %v10142
        %v10144 = vrot.slane %v10026, 1
        %v10145 = vrot.slane %v10029, 1
        %v10146 = vsel %vm635, %v10144, %v10145
        %v10147 = vrot.slane %v10030, 1
        %v10148 = vrot.slane %v10033, 1
        %v10149 = vsel %vm635, %v10147, %v10148
        %v10150 = vrot.slane %v10031, 1
        %v10151 = vrot.slane %v10034, 1
        %v10152 = vsel %vm635, %v10150, %v10151
        %v10153 = vrot.slane %v10032, 1
        %v10154 = vrot.slane %v10035, 1
        %v10155 = vsel %vm635, %v10153, %v10154
        %v10180 = vpack.c.bf16 %v10095, %v10086
        %v10181 = vpack.c.bf16 %v10098, %v10089
        %v10182 = vpack.c.bf16 %v10101, %v10092
        %v10183 = vpack.c.bf16 %v10113, %v10104
        %v10184 = vpack.c.bf16 %v10116, %v10107
        %v10185 = vpack.c.bf16 %v10119, %v10110
        %v10186 = vpack.c.bf16 %v10131, %v10122
        %v10187 = vpack.c.bf16 %v10134, %v10125
        %v10188 = vpack.c.bf16 %v10137, %v10128
        %v10189 = vpack.c.bf16 %v10149, %v10140
        %v10190 = vpack.c.bf16 %v10152, %v10143
        %v10191 = vpack.c.bf16 %v10155, %v10146
        %s10192 = scalar_lea.vmem [#allocation9], 2688
        %v10193 = vld [vmem:[%s10192] sm:$0xff]
        %v10194 = vld [vmem:[%s10192 + $0x8] sm:$0xff]
        %v10195 = vld [vmem:[%s10192 + $0x10] sm:$0xff]
        %v10196 = vld [vmem:[%s10192 + $0x18] sm:$0xff]
        %v10197 = vld [vmem:[%s10192 + $0x20] sm:$0xff]
        %v10198 = vld [vmem:[%s10192 + $0x28] sm:$0xff]
        %v10199 = vld [vmem:[%s10192 + $0x30] sm:$0xff]
        %v10200 = vld [vmem:[%s10192 + $0x38] sm:$0xff]
        %v10201 = vld [vmem:[%s10192 + $0x40] sm:$0xff]
        %v10202 = vld [vmem:[%s10192 + $0x48] sm:$0xff]
        %v10203 = vld [vmem:[%s10192 + $0x50] sm:$0xff]
        %v10204 = vld [vmem:[%s10192 + $0x58] sm:$0xff]
        %v10205 = vld [vmem:[%s10192 + $0x60] sm:$0xff]
        %v10206 = vld [vmem:[%s10192 + $0x68] sm:$0xff]
        %v10207 = vld [vmem:[%s10192 + $0x70] sm:$0xff]
        %v10208 = vld [vmem:[%s10192 + $0x78] sm:$0xff]
        %v10209 = vld [vmem:[%s10192 + $0x80] sm:$0xff]
        %v10210 = vld [vmem:[%s10192 + $0x88] sm:$0xff]
        %v10211 = vld [vmem:[%s10192 + $0x90] sm:$0xff]
        %v10212 = vld [vmem:[%s10192 + $0x98] sm:$0xff]
        %v10213 = vld [vmem:[%s10192 + $0xa0] sm:$0xff]
        %v10214 = vld [vmem:[%s10192 + $0xa8] sm:$0xff]
        %v10215 = vld [vmem:[%s10192 + $0xb0] sm:$0xff]
        %v10216 = vld [vmem:[%s10192 + $0xb8] sm:$0xff]
        %v10217 = vld [vmem:[%s10192 + $0xc0] sm:$0xff]
        %v10218 = vld [vmem:[%s10192 + $0xc8] sm:$0xff]
        %v10219 = vld [vmem:[%s10192 + $0xd0] sm:$0xff]
        %v10220 = vld [vmem:[%s10192 + $0xd8] sm:$0xff]
        %v10221 = vld [vmem:[%s10192 + $0xe0] sm:$0xff]
        %v10222 = vld [vmem:[%s10192 + $0xe8] sm:$0xff]
        %v10223 = vld [vmem:[%s10192 + $0xf0] sm:$0xff]
        %v10224 = vld [vmem:[%s10192 + $0xf8] sm:$0xff]
        %v10225 = vld [vmem:[%s10192 + $0x100] sm:$0xff]
        %v10226 = vld [vmem:[%s10192 + $0x108] sm:$0xff]
        %v10227 = vld [vmem:[%s10192 + $0x110] sm:$0xff]
        %v10228 = vld [vmem:[%s10192 + $0x118] sm:$0xff]
        %v10229 = vld [vmem:[%s10192 + $0x120] sm:$0xff]
        %v10230 = vld [vmem:[%s10192 + $0x128] sm:$0xff]
        %v10231 = vld [vmem:[%s10192 + $0x130] sm:$0xff]
        %v10232 = vld [vmem:[%s10192 + $0x138] sm:$0xff]
        %v10233 = vld [vmem:[%s10192 + $0x140] sm:$0xff]
        %v10234 = vld [vmem:[%s10192 + $0x148] sm:$0xff]
        %v10235 = vld [vmem:[%s10192 + $0x150] sm:$0xff]
        %v10236 = vld [vmem:[%s10192 + $0x158] sm:$0xff]
        %v10237 = vld [vmem:[%s10192 + $0x160] sm:$0xff]
        %v10238 = vld [vmem:[%s10192 + $0x168] sm:$0xff]
        %v10239 = vld [vmem:[%s10192 + $0x170] sm:$0xff]
        %v10240 = vld [vmem:[%s10192 + $0x178] sm:$0xff]
        %v10289 = vunpack.c.l.b16 %v10193
        %v10290 = vunpack.c.h.b16 %v10193
        %v10291 = vunpack.c.l.b16 %v10194
        %v10292 = vunpack.c.h.b16 %v10194
        %v10293 = vunpack.c.l.b16 %v10195
        %v10294 = vunpack.c.h.b16 %v10195
        %v10295 = vunpack.c.l.b16 %v10196
        %v10296 = vunpack.c.h.b16 %v10196
        %v10297 = vunpack.c.l.b16 %v10197
        %v10298 = vunpack.c.h.b16 %v10197
        %v10299 = vunpack.c.l.b16 %v10198
        %v10300 = vunpack.c.h.b16 %v10198
        %v10301 = vunpack.c.l.b16 %v10199
        %v10302 = vunpack.c.h.b16 %v10199
        %v10303 = vunpack.c.l.b16 %v10200
        %v10304 = vunpack.c.h.b16 %v10200
        %v10305 = vunpack.c.l.b16 %v10201
        %v10306 = vunpack.c.h.b16 %v10201
        %v10307 = vunpack.c.l.b16 %v10202
        %v10308 = vunpack.c.h.b16 %v10202
        %v10309 = vunpack.c.l.b16 %v10203
        %v10310 = vunpack.c.h.b16 %v10203
        %v10311 = vunpack.c.l.b16 %v10204
        %v10312 = vunpack.c.h.b16 %v10204
        %v10313 = vunpack.c.l.b16 %v10205
        %v10314 = vunpack.c.h.b16 %v10205
        %v10315 = vunpack.c.l.b16 %v10206
        %v10316 = vunpack.c.h.b16 %v10206
        %v10317 = vunpack.c.l.b16 %v10207
        %v10318 = vunpack.c.h.b16 %v10207
        %v10319 = vunpack.c.l.b16 %v10208
        %v10320 = vunpack.c.h.b16 %v10208
        %v10321 = vunpack.c.l.b16 %v10209
        %v10322 = vunpack.c.h.b16 %v10209
        %v10323 = vunpack.c.l.b16 %v10210
        %v10324 = vunpack.c.h.b16 %v10210
        %v10325 = vunpack.c.l.b16 %v10211
        %v10326 = vunpack.c.h.b16 %v10211
        %v10327 = vunpack.c.l.b16 %v10212
        %v10328 = vunpack.c.h.b16 %v10212
        %v10329 = vunpack.c.l.b16 %v10213
        %v10330 = vunpack.c.h.b16 %v10213
        %v10331 = vunpack.c.l.b16 %v10214
        %v10332 = vunpack.c.h.b16 %v10214
        %v10333 = vunpack.c.l.b16 %v10215
        %v10334 = vunpack.c.h.b16 %v10215
        %v10335 = vunpack.c.l.b16 %v10216
        %v10336 = vunpack.c.h.b16 %v10216
        %v10337 = vunpack.c.l.b16 %v10217
        %v10338 = vunpack.c.h.b16 %v10217
        %v10339 = vunpack.c.l.b16 %v10218
        %v10340 = vunpack.c.h.b16 %v10218
        %v10341 = vunpack.c.l.b16 %v10219
        %v10342 = vunpack.c.h.b16 %v10219
        %v10343 = vunpack.c.l.b16 %v10220
        %v10344 = vunpack.c.h.b16 %v10220
        %v10345 = vunpack.c.l.b16 %v10221
        %v10346 = vunpack.c.h.b16 %v10221
        %v10347 = vunpack.c.l.b16 %v10222
        %v10348 = vunpack.c.h.b16 %v10222
        %v10349 = vunpack.c.l.b16 %v10223
        %v10350 = vunpack.c.h.b16 %v10223
        %v10351 = vunpack.c.l.b16 %v10224
        %v10352 = vunpack.c.h.b16 %v10224
        %v10353 = vunpack.c.l.b16 %v10225
        %v10354 = vunpack.c.h.b16 %v10225
        %v10355 = vunpack.c.l.b16 %v10226
        %v10356 = vunpack.c.h.b16 %v10226
        %v10357 = vunpack.c.l.b16 %v10227
        %v10358 = vunpack.c.h.b16 %v10227
        %v10359 = vunpack.c.l.b16 %v10228
        %v10360 = vunpack.c.h.b16 %v10228
        %v10361 = vunpack.c.l.b16 %v10229
        %v10362 = vunpack.c.h.b16 %v10229
        %v10363 = vunpack.c.l.b16 %v10230
        %v10364 = vunpack.c.h.b16 %v10230
        %v10365 = vunpack.c.l.b16 %v10231
        %v10366 = vunpack.c.h.b16 %v10231
        %v10367 = vunpack.c.l.b16 %v10232
        %v10368 = vunpack.c.h.b16 %v10232
        %v10369 = vunpack.c.l.b16 %v10233
        %v10370 = vunpack.c.h.b16 %v10233
        %v10371 = vunpack.c.l.b16 %v10234
        %v10372 = vunpack.c.h.b16 %v10234
        %v10373 = vunpack.c.l.b16 %v10235
        %v10374 = vunpack.c.h.b16 %v10235
        %v10375 = vunpack.c.l.b16 %v10236
        %v10376 = vunpack.c.h.b16 %v10236
        %v10377 = vunpack.c.l.b16 %v10237
        %v10378 = vunpack.c.h.b16 %v10237
        %v10379 = vunpack.c.l.b16 %v10238
        %v10380 = vunpack.c.h.b16 %v10238
        %v10381 = vunpack.c.l.b16 %v10239
        %v10382 = vunpack.c.h.b16 %v10239
        %v10383 = vunpack.c.l.b16 %v10240
        %v10384 = vunpack.c.h.b16 %v10240
        %v10385 = vpack.c.b16 %v10291, %v10289
        %v10386 = vpack.c.b16 %v10292, %v10290
        %v10387 = vpack.c.b16 %v10295, %v10293
        %v10388 = vpack.c.b16 %v10296, %v10294
        %v10389 = vpack.c.b16 %v10299, %v10297
        %v10390 = vpack.c.b16 %v10300, %v10298
        %v10391 = vpack.c.b16 %v10303, %v10301
        %v10392 = vpack.c.b16 %v10304, %v10302
        %v10393 = vpack.c.b16 %v10307, %v10305
        %v10394 = vpack.c.b16 %v10308, %v10306
        %v10395 = vpack.c.b16 %v10311, %v10309
        %v10396 = vpack.c.b16 %v10312, %v10310
        %v10397 = vpack.c.b16 %v10315, %v10313
        %v10398 = vpack.c.b16 %v10316, %v10314
        %v10399 = vpack.c.b16 %v10319, %v10317
        %v10400 = vpack.c.b16 %v10320, %v10318
        %v10401 = vpack.c.b16 %v10323, %v10321
        %v10402 = vpack.c.b16 %v10324, %v10322
        %v10403 = vpack.c.b16 %v10327, %v10325
        %v10404 = vpack.c.b16 %v10328, %v10326
        %v10405 = vpack.c.b16 %v10331, %v10329
        %v10406 = vpack.c.b16 %v10332, %v10330
        %v10407 = vpack.c.b16 %v10335, %v10333
        %v10408 = vpack.c.b16 %v10336, %v10334
        %v10409 = vpack.c.b16 %v10339, %v10337
        %v10410 = vpack.c.b16 %v10340, %v10338
        %v10411 = vpack.c.b16 %v10343, %v10341
        %v10412 = vpack.c.b16 %v10344, %v10342
        %v10413 = vpack.c.b16 %v10347, %v10345
        %v10414 = vpack.c.b16 %v10348, %v10346
        %v10415 = vpack.c.b16 %v10351, %v10349
        %v10416 = vpack.c.b16 %v10352, %v10350
        %v10417 = vpack.c.b16 %v10355, %v10353
        %v10418 = vpack.c.b16 %v10356, %v10354
        %v10419 = vpack.c.b16 %v10359, %v10357
        %v10420 = vpack.c.b16 %v10360, %v10358
        %v10421 = vpack.c.b16 %v10363, %v10361
        %v10422 = vpack.c.b16 %v10364, %v10362
        %v10423 = vpack.c.b16 %v10367, %v10365
        %v10424 = vpack.c.b16 %v10368, %v10366
        %v10425 = vpack.c.b16 %v10371, %v10369
        %v10426 = vpack.c.b16 %v10372, %v10370
        %v10427 = vpack.c.b16 %v10375, %v10373
        %v10428 = vpack.c.b16 %v10376, %v10374
        %v10429 = vpack.c.b16 %v10379, %v10377
        %v10430 = vpack.c.b16 %v10380, %v10378
        %v10431 = vpack.c.b16 %v10383, %v10381
        %v10432 = vpack.c.b16 %v10384, %v10382
        %10481 = vmatprep.subr.bf16.mxu0 %v10386
        %10482 = vmatpush1.bf16.msra.mxu0 %v10385
        %10483 = vmatprep.subr.bf16.mxu0 %v10388
        %10484 = vmatpush1.bf16.msra.mxu0 %v10387
        %10485 = vmatprep.subr.bf16.mxu0 %v10390
        %10486 = vmatpush1.bf16.msra.mxu0 %v10389
        %10487 = vmatprep.subr.bf16.mxu0 %v10392
        %10488 = vmatpush1.bf16.msra.mxu0 %v10391
        %10489 = vmatprep.subr.bf16.mxu0 %v10394
        %10490 = vmatpush1.bf16.msra.mxu0 %v10393
        %10491 = vmatprep.subr.bf16.mxu0 %v10396
        %10492 = vmatpush1.bf16.msra.mxu0 %v10395
        %10493 = vmatprep.subr.bf16.mxu0 %v10398
        %10494 = vmatpush1.bf16.msra.mxu0 %v10397
        %10495 = vmatprep.subr.bf16.mxu0 %v10400
        %10496 = vmatpush1.bf16.msra.mxu0 %v10399
        %10497 = vmatprep.subr.bf16.mxu0 %v10402
        %10498 = vmatpush1.bf16.msra.mxu0 %v10401
        %10499 = vmatprep.subr.bf16.mxu0 %v10404
        %10500 = vmatpush1.bf16.msra.mxu0 %v10403
        %10501 = vmatprep.subr.bf16.mxu0 %v10406
        %10502 = vmatpush1.bf16.msra.mxu0 %v10405
        %10503 = vmatprep.subr.bf16.mxu0 %v10408
        %10504 = vmatpush1.bf16.msra.mxu0 %v10407
        %10505 = vmatprep.subr.bf16.mxu0 %v10410
        %10506 = vmatpush1.bf16.msra.mxu0 %v10409
        %10507 = vmatprep.subr.bf16.mxu0 %v10412
        %10508 = vmatpush1.bf16.msra.mxu0 %v10411
        %10509 = vmatprep.subr.bf16.mxu0 %v10414
        %10510 = vmatpush1.bf16.msra.mxu0 %v10413
        %10511 = vmatprep.subr.bf16.mxu0 %v10416
        %10512 = vmatpush1.bf16.msra.mxu0 %v10415
        %10513 = vmatprep.mubr.bf16.mxu0 %v10181
        %10514 = vmatmul.mubr.bf16.gmra.mrb[0].mxu0 %v10180
        %v10515 = vpop.f32.mrb[0].mxu0
        %v10516 = vadd.f32 0.0, %v10515
        %v10517 = vpop.f32.mrb[0].mxu0
        %v10518 = vadd.f32 0.0, %v10517
        %v10519 = vpop.f32.mrb[0].mxu0
        %v10520 = vadd.f32 0.0, %v10519
        %v10521 = vpop.f32.mrb[0].mxu0
        %v10522 = vadd.f32 0.0, %v10521
        %10523 = vmatprep.mubr.bf16.mxu0 %v10184
        %10524 = vmatmul.mubr.bf16.gmra.mrb[0].mxu0 %v10183
        %v10525 = vpop.f32.mrb[0].mxu0
        %v10526 = vadd.f32 0.0, %v10525
        %v10527 = vpop.f32.mrb[0].mxu0
        %v10528 = vadd.f32 0.0, %v10527
        %v10529 = vpop.f32.mrb[0].mxu0
        %v10530 = vadd.f32 0.0, %v10529
        %v10531 = vpop.f32.mrb[0].mxu0
        %v10532 = vadd.f32 0.0, %v10531
        %10533 = vmatprep.mubr.bf16.mxu0 %v10187
        %10534 = vmatmul.mubr.bf16.gmra.mrb[0].mxu0 %v10186
        %v10535 = vpop.f32.mrb[0].mxu0
        %v10536 = vadd.f32 0.0, %v10535
        %v10537 = vpop.f32.mrb[0].mxu0
        %v10538 = vadd.f32 0.0, %v10537
        %v10539 = vpop.f32.mrb[0].mxu0
        %v10540 = vadd.f32 0.0, %v10539
        %v10541 = vpop.f32.mrb[0].mxu0
        %v10542 = vadd.f32 0.0, %v10541
        %10543 = vmatprep.mubr.bf16.mxu0 %v10190
        %10544 = vmatmul.mubr.bf16.gmra.mrb[0].mxu0 %v10189
        %v10545 = vpop.f32.mrb[0].mxu0
        %v10546 = vadd.f32 0.0, %v10545
        %v10547 = vpop.f32.mrb[0].mxu0
        %v10548 = vadd.f32 0.0, %v10547
        %v10549 = vpop.f32.mrb[0].mxu0
        %v10550 = vadd.f32 0.0, %v10549
        %v10551 = vpop.f32.mrb[0].mxu0
        %v10552 = vadd.f32 0.0, %v10551
        %10553 = vdwg.mxu0
        %10554 = vmatprep.subr.bf16.mxu0 %v10418
        %10555 = vmatpush1.bf16.msra.mxu0 %v10417
        %10556 = vmatprep.subr.bf16.mxu0 %v10420
        %10557 = vmatpush1.bf16.msra.mxu0 %v10419
        %10558 = vmatprep.subr.bf16.mxu0 %v10422
        %10559 = vmatpush1.bf16.msra.mxu0 %v10421
        %10560 = vmatprep.subr.bf16.mxu0 %v10424
        %10561 = vmatpush1.bf16.msra.mxu0 %v10423
        %10562 = vmatprep.subr.bf16.mxu0 %v10426
        %10563 = vmatpush1.bf16.msra.mxu0 %v10425
        %10564 = vmatprep.subr.bf16.mxu0 %v10428
        %10565 = vmatpush1.bf16.msra.mxu0 %v10427
        %10566 = vmatprep.subr.bf16.mxu0 %v10430
        %10567 = vmatpush1.bf16.msra.mxu0 %v10429
        %10568 = vmatprep.subr.bf16.mxu0 %v10432
        %10569 = vmatpush1.bf16.msra.mxu0 %v10431
        %10570 = vmatprep.subr.bf16.mxu0 0
        %10571 = vmatpush1.bf16.msra.mxu0 0
        %10572 = vmatprep.subr.bf16.mxu0 0
        %10573 = vmatpush1.bf16.msra.mxu0 0
        %10574 = vmatprep.subr.bf16.mxu0 0
        %10575 = vmatpush1.bf16.msra.mxu0 0
        %10576 = vmatprep.subr.bf16.mxu0 0
        %10577 = vmatpush1.bf16.msra.mxu0 0
        %10578 = vmatprep.subr.bf16.mxu0 0
        %10579 = vmatpush1.bf16.msra.mxu0 0
        %10580 = vmatprep.subr.bf16.mxu0 0
        %10581 = vmatpush1.bf16.msra.mxu0 0
        %10582 = vmatprep.subr.bf16.mxu0 0
        %10583 = vmatpush1.bf16.msra.mxu0 0
        %10584 = vmatprep.subr.bf16.mxu0 0
        %10585 = vmatpush1.bf16.msra.mxu0 0
        %10586 = vmatprep.mubr.bf16.mxu0 0
        %10587 = vmatmul.mubr.bf16.gmra.mrb[0].mxu0 %v10182
        %v10588 = vpop.f32.mrb[0].mxu0
        %v10589 = vadd.f32 %v10516, %v10588
        %v10590 = vpop.f32.mrb[0].mxu0
        %v10591 = vadd.f32 %v10518, %v10590
        %v10592 = vpop.f32.mrb[0].mxu0
        %v10593 = vadd.f32 %v10520, %v10592
        %v10594 = vpop.f32.mrb[0].mxu0
        %v10595 = vadd.f32 %v10522, %v10594
        %10596 = vmatprep.mubr.bf16.mxu0 0
        %10597 = vmatmul.mubr.bf16.gmra.mrb[0].mxu0 %v10185
        %v10598 = vpop.f32.mrb[0].mxu0
        %v10599 = vadd.f32 %v10526, %v10598
        %v10600 = vpop.f32.mrb[0].mxu0
        %v10601 = vadd.f32 %v10528, %v10600
        %v10602 = vpop.f32.mrb[0].mxu0
        %v10603 = vadd.f32 %v10530, %v10602
        %v10604 = vpop.f32.mrb[0].mxu0
        %v10605 = vadd.f32 %v10532, %v10604
        %10606 = vmatprep.mubr.bf16.mxu0 0
        %10607 = vmatmul.mubr.bf16.gmra.mrb[0].mxu0 %v10188
        %v10608 = vpop.f32.mrb[0].mxu0
        %v10609 = vadd.f32 %v10536, %v10608
        %v10610 = vpop.f32.mrb[0].mxu0
        %v10611 = vadd.f32 %v10538, %v10610
        %v10612 = vpop.f32.mrb[0].mxu0
        %v10613 = vadd.f32 %v10540, %v10612
        %v10614 = vpop.f32.mrb[0].mxu0
        %v10615 = vadd.f32 %v10542, %v10614
        %10616 = vmatprep.mubr.bf16.mxu0 0
        %10617 = vmatmul.mubr.bf16.gmra.mrb[0].mxu0 %v10191
        %v10618 = vpop.f32.mrb[0].mxu0
        %v10619 = vadd.f32 %v10546, %v10618
        %v10620 = vpop.f32.mrb[0].mxu0
        %v10621 = vadd.f32 %v10548, %v10620
        %v10622 = vpop.f32.mrb[0].mxu0
        %v10623 = vadd.f32 %v10550, %v10622
        %v10624 = vpop.f32.mrb[0].mxu0
        %v10625 = vadd.f32 %v10552, %v10624
        %10626 = vdwg.mxu0
        %v10627 = vadd.f32 %v9972, %v10589
        %v10628 = vadd.f32 %v9973, %v10591
        %v10629 = vadd.f32 %v9974, %v10593
        %v10630 = vadd.f32 %v9975, %v10595
        %v10631 = vadd.f32 %v9976, %v10599
        %v10632 = vadd.f32 %v9977, %v10601
        %v10633 = vadd.f32 %v9978, %v10603
        %v10634 = vadd.f32 %v9979, %v10605
        %v10635 = vadd.f32 %v9980, %v10609
        %v10636 = vadd.f32 %v9981, %v10611
        %v10637 = vadd.f32 %v9982, %v10613
        %v10638 = vadd.f32 %v9983, %v10615
        %v10639 = vadd.f32 %v9984, %v10619
        %v10640 = vadd.f32 %v9985, %v10621
        %v10641 = vadd.f32 %v9986, %v10623
        %v10642 = vadd.f32 %v9987, %v10625
        %v10643 = vld [vmem:[%s4018] sm:$0xfc]
        %v10644 = vld [vmem:[%s4018 + $0x8] sm:$0xfc]
        %v10645 = vld [vmem:[%s4018 + $0x10] sm:$0xfc]
        %v10646 = vld [vmem:[%s4018 + $0x18] sm:$0x3]
        %v10647 = vld [vmem:[%s4018 + $0x20] sm:$0x3]
        %v10648 = vld [vmem:[%s4018 + $0x28] sm:$0x3]
        %v10649 = vld [vmem:[%s4018 + $0x30] sm:$0xfc]
        %v10650 = vld [vmem:[%s4018 + $0x38] sm:$0xfc]
        %v10651 = vld [vmem:[%s4018 + $0x40] sm:$0xfc]
        %v10652 = vld [vmem:[%s4018 + $0x48] sm:$0x3]
        %v10653 = vld [vmem:[%s4018 + $0x50] sm:$0x3]
        %v10654 = vld [vmem:[%s4018 + $0x58] sm:$0x3]
        %v10655 = vld [vmem:[%s4018 + $0x60] sm:$0xfc]
        %v10656 = vld [vmem:[%s4018 + $0x68] sm:$0xfc]
        %v10657 = vld [vmem:[%s4018 + $0x70] sm:$0xfc]
        %v10658 = vld [vmem:[%s4018 + $0x78] sm:$0x3]
        %v10659 = vld [vmem:[%s4018 + $0x80] sm:$0x3]
        %v10660 = vld [vmem:[%s4018 + $0x88] sm:$0x3]
        %v10661 = vld [vmem:[%s4018 + $0x90] sm:$0xfc]
        %v10662 = vld [vmem:[%s4018 + $0x98] sm:$0xfc]
        %v10663 = vld [vmem:[%s4018 + $0xa0] sm:$0xfc]
        %v10664 = vld [vmem:[%s4018 + $0xa8] sm:$0x3]
        %v10665 = vld [vmem:[%s4018 + $0xb0] sm:$0x3]
        %v10666 = vld [vmem:[%s4018 + $0xb8] sm:$0x3]
        %v10667 = vld [vmem:[%s4018 + $0xc0] sm:$0xfc]
        %v10668 = vld [vmem:[%s4018 + $0xc8] sm:$0xfc]
        %v10669 = vld [vmem:[%s4018 + $0xd0] sm:$0xfc]
        %v10670 = vld [vmem:[%s4018 + $0xd8] sm:$0x3]
        %v10671 = vld [vmem:[%s4018 + $0xe0] sm:$0x3]
        %v10672 = vld [vmem:[%s4018 + $0xe8] sm:$0x3]
        %v10673 = vld [vmem:[%s4018 + $0xf0] sm:$0xfc]
        %v10674 = vld [vmem:[%s4018 + $0xf8] sm:$0xfc]
        %v10675 = vld [vmem:[%s4018 + $0x100] sm:$0xfc]
        %v10676 = vld [vmem:[%s4018 + $0x108] sm:$0x3]
        %v10677 = vld [vmem:[%s4018 + $0x110] sm:$0x3]
        %v10678 = vld [vmem:[%s4018 + $0x118] sm:$0x3]
        %v10679 = vld [vmem:[%s4018 + $0x120] sm:$0xfc]
        %v10680 = vld [vmem:[%s4018 + $0x128] sm:$0xfc]
        %v10681 = vld [vmem:[%s4018 + $0x130] sm:$0xfc]
        %v10682 = vld [vmem:[%s4018 + $0x138] sm:$0x3]
        %v10683 = vld [vmem:[%s4018 + $0x140] sm:$0x3]
        %v10684 = vld [vmem:[%s4018 + $0x148] sm:$0x3]
        %v10685 = vld [vmem:[%s4018 + $0x150] sm:$0xfc]
        %v10686 = vld [vmem:[%s4018 + $0x158] sm:$0xfc]
        %v10687 = vld [vmem:[%s4018 + $0x160] sm:$0xfc]
        %v10688 = vld [vmem:[%s4018 + $0x168] sm:$0x3]
        %v10689 = vld [vmem:[%s4018 + $0x170] sm:$0x3]
        %v10690 = vld [vmem:[%s4018 + $0x178] sm:$0x3]
        %v10739 = vrot.slane %v10643, 2
        %v10740 = vrot.slane %v10646, 2
        %v10741 = vsel %vm1661, %v10739, %v10740
        %v10742 = vrot.slane %v10644, 2
        %v10743 = vrot.slane %v10647, 2
        %v10744 = vsel %vm1661, %v10742, %v10743
        %v10745 = vrot.slane %v10645, 2
        %v10746 = vrot.slane %v10648, 2
        %v10747 = vsel %vm1661, %v10745, %v10746
        %v10748 = vrot.slane %v10649, 2
        %v10749 = vrot.slane %v10652, 2
        %v10750 = vsel %vm1661, %v10748, %v10749
        %v10751 = vrot.slane %v10650, 2
        %v10752 = vrot.slane %v10653, 2
        %v10753 = vsel %vm1661, %v10751, %v10752
        %v10754 = vrot.slane %v10651, 2
        %v10755 = vrot.slane %v10654, 2
        %v10756 = vsel %vm1661, %v10754, %v10755
        %v10757 = vrot.slane %v10655, 2
        %v10758 = vrot.slane %v10658, 2
        %v10759 = vsel %vm1661, %v10757, %v10758
        %v10760 = vrot.slane %v10656, 2
        %v10761 = vrot.slane %v10659, 2
        %v10762 = vsel %vm1661, %v10760, %v10761
        %v10763 = vrot.slane %v10657, 2
        %v10764 = vrot.slane %v10660, 2
        %v10765 = vsel %vm1661, %v10763, %v10764
        %v10766 = vrot.slane %v10661, 2
        %v10767 = vrot.slane %v10664, 2
        %v10768 = vsel %vm1661, %v10766, %v10767
        %v10769 = vrot.slane %v10662, 2
        %v10770 = vrot.slane %v10665, 2
        %v10771 = vsel %vm1661, %v10769, %v10770
        %v10772 = vrot.slane %v10663, 2
        %v10773 = vrot.slane %v10666, 2
        %v10774 = vsel %vm1661, %v10772, %v10773
        %v10775 = vrot.slane %v10667, 2
        %v10776 = vrot.slane %v10670, 2
        %v10777 = vsel %vm1661, %v10775, %v10776
        %v10778 = vrot.slane %v10668, 2
        %v10779 = vrot.slane %v10671, 2
        %v10780 = vsel %vm1661, %v10778, %v10779
        %v10781 = vrot.slane %v10669, 2
        %v10782 = vrot.slane %v10672, 2
        %v10783 = vsel %vm1661, %v10781, %v10782
        %v10784 = vrot.slane %v10673, 2
        %v10785 = vrot.slane %v10676, 2
        %v10786 = vsel %vm1661, %v10784, %v10785
        %v10787 = vrot.slane %v10674, 2
        %v10788 = vrot.slane %v10677, 2
        %v10789 = vsel %vm1661, %v10787, %v10788
        %v10790 = vrot.slane %v10675, 2
        %v10791 = vrot.slane %v10678, 2
        %v10792 = vsel %vm1661, %v10790, %v10791
        %v10793 = vrot.slane %v10679, 2
        %v10794 = vrot.slane %v10682, 2
        %v10795 = vsel %vm1661, %v10793, %v10794
        %v10796 = vrot.slane %v10680, 2
        %v10797 = vrot.slane %v10683, 2
        %v10798 = vsel %vm1661, %v10796, %v10797
        %v10799 = vrot.slane %v10681, 2
        %v10800 = vrot.slane %v10684, 2
        %v10801 = vsel %vm1661, %v10799, %v10800
        %v10802 = vrot.slane %v10685, 2
        %v10803 = vrot.slane %v10688, 2
        %v10804 = vsel %vm1661, %v10802, %v10803
        %v10805 = vrot.slane %v10686, 2
        %v10806 = vrot.slane %v10689, 2
        %v10807 = vsel %vm1661, %v10805, %v10806
        %v10808 = vrot.slane %v10687, 2
        %v10809 = vrot.slane %v10690, 2
        %v10810 = vsel %vm1661, %v10808, %v10809
        %v10835 = vpack.c.bf16 %v10750, %v10741
        %v10836 = vpack.c.bf16 %v10753, %v10744
        %v10837 = vpack.c.bf16 %v10756, %v10747
        %v10838 = vpack.c.bf16 %v10768, %v10759
        %v10839 = vpack.c.bf16 %v10771, %v10762
        %v10840 = vpack.c.bf16 %v10774, %v10765
        %v10841 = vpack.c.bf16 %v10786, %v10777
        %v10842 = vpack.c.bf16 %v10789, %v10780
        %v10843 = vpack.c.bf16 %v10792, %v10783
        %v10844 = vpack.c.bf16 %v10804, %v10795
        %v10845 = vpack.c.bf16 %v10807, %v10798
        %v10846 = vpack.c.bf16 %v10810, %v10801
        %s10847 = scalar_lea.vmem [#allocation9], 3072
        %v10848 = vld [vmem:[%s10847] sm:$0xff]
        %v10849 = vld [vmem:[%s10847 + $0x8] sm:$0xff]
        %v10850 = vld [vmem:[%s10847 + $0x10] sm:$0xff]
        %v10851 = vld [vmem:[%s10847 + $0x18] sm:$0xff]
        %v10852 = vld [vmem:[%s10847 + $0x20] sm:$0xff]
        %v10853 = vld [vmem:[%s10847 + $0x28] sm:$0xff]
        %v10854 = vld [vmem:[%s10847 + $0x30] sm:$0xff]
        %v10855 = vld [vmem:[%s10847 + $0x38] sm:$0xff]
        %v10856 = vld [vmem:[%s10847 + $0x40] sm:$0xff]
        %v10857 = vld [vmem:[%s10847 + $0x48] sm:$0xff]
        %v10858 = vld [vmem:[%s10847 + $0x50] sm:$0xff]
        %v10859 = vld [vmem:[%s10847 + $0x58] sm:$0xff]
        %v10860 = vld [vmem:[%s10847 + $0x60] sm:$0xff]
        %v10861 = vld [vmem:[%s10847 + $0x68] sm:$0xff]
        %v10862 = vld [vmem:[%s10847 + $0x70] sm:$0xff]
        %v10863 = vld [vmem:[%s10847 + $0x78] sm:$0xff]
        %v10864 = vld [vmem:[%s10847 + $0x80] sm:$0xff]
        %v10865 = vld [vmem:[%s10847 + $0x88] sm:$0xff]
        %v10866 = vld [vmem:[%s10847 + $0x90] sm:$0xff]
        %v10867 = vld [vmem:[%s10847 + $0x98] sm:$0xff]
        %v10868 = vld [vmem:[%s10847 + $0xa0] sm:$0xff]
        %v10869 = vld [vmem:[%s10847 + $0xa8] sm:$0xff]
        %v10870 = vld [vmem:[%s10847 + $0xb0] sm:$0xff]
        %v10871 = vld [vmem:[%s10847 + $0xb8] sm:$0xff]
        %v10872 = vld [vmem:[%s10847 + $0xc0] sm:$0xff]
        %v10873 = vld [vmem:[%s10847 + $0xc8] sm:$0xff]
        %v10874 = vld [vmem:[%s10847 + $0xd0] sm:$0xff]
        %v10875 = vld [vmem:[%s10847 + $0xd8] sm:$0xff]
        %v10876 = vld [vmem:[%s10847 + $0xe0] sm:$0xff]
        %v10877 = vld [vmem:[%s10847 + $0xe8] sm:$0xff]
        %v10878 = vld [vmem:[%s10847 + $0xf0] sm:$0xff]
        %v10879 = vld [vmem:[%s10847 + $0xf8] sm:$0xff]
        %v10880 = vld [vmem:[%s10847 + $0x100] sm:$0xff]
        %v10881 = vld [vmem:[%s10847 + $0x108] sm:$0xff]
        %v10882 = vld [vmem:[%s10847 + $0x110] sm:$0xff]
        %v10883 = vld [vmem:[%s10847 + $0x118] sm:$0xff]
        %v10884 = vld [vmem:[%s10847 + $0x120] sm:$0xff]
        %v10885 = vld [vmem:[%s10847 + $0x128] sm:$0xff]
        %v10886 = vld [vmem:[%s10847 + $0x130] sm:$0xff]
        %v10887 = vld [vmem:[%s10847 + $0x138] sm:$0xff]
        %v10888 = vld [vmem:[%s10847 + $0x140] sm:$0xff]
        %v10889 = vld [vmem:[%s10847 + $0x148] sm:$0xff]
        %v10890 = vld [vmem:[%s10847 + $0x150] sm:$0xff]
        %v10891 = vld [vmem:[%s10847 + $0x158] sm:$0xff]
        %v10892 = vld [vmem:[%s10847 + $0x160] sm:$0xff]
        %v10893 = vld [vmem:[%s10847 + $0x168] sm:$0xff]
        %v10894 = vld [vmem:[%s10847 + $0x170] sm:$0xff]
        %v10895 = vld [vmem:[%s10847 + $0x178] sm:$0xff]
        %v10944 = vunpack.c.l.b16 %v10848
        %v10945 = vunpack.c.h.b16 %v10848
        %v10946 = vunpack.c.l.b16 %v10849
        %v10947 = vunpack.c.h.b16 %v10849
        %v10948 = vunpack.c.l.b16 %v10850
        %v10949 = vunpack.c.h.b16 %v10850
        %v10950 = vunpack.c.l.b16 %v10851
        %v10951 = vunpack.c.h.b16 %v10851
        %v10952 = vunpack.c.l.b16 %v10852
        %v10953 = vunpack.c.h.b16 %v10852
        %v10954 = vunpack.c.l.b16 %v10853
        %v10955 = vunpack.c.h.b16 %v10853
        %v10956 = vunpack.c.l.b16 %v10854
        %v10957 = vunpack.c.h.b16 %v10854
        %v10958 = vunpack.c.l.b16 %v10855
        %v10959 = vunpack.c.h.b16 %v10855
        %v10960 = vunpack.c.l.b16 %v10856
        %v10961 = vunpack.c.h.b16 %v10856
        %v10962 = vunpack.c.l.b16 %v10857
        %v10963 = vunpack.c.h.b16 %v10857
        %v10964 = vunpack.c.l.b16 %v10858
        %v10965 = vunpack.c.h.b16 %v10858
        %v10966 = vunpack.c.l.b16 %v10859
        %v10967 = vunpack.c.h.b16 %v10859
        %v10968 = vunpack.c.l.b16 %v10860
        %v10969 = vunpack.c.h.b16 %v10860
        %v10970 = vunpack.c.l.b16 %v10861
        %v10971 = vunpack.c.h.b16 %v10861
        %v10972 = vunpack.c.l.b16 %v10862
        %v10973 = vunpack.c.h.b16 %v10862
        %v10974 = vunpack.c.l.b16 %v10863
        %v10975 = vunpack.c.h.b16 %v10863
        %v10976 = vunpack.c.l.b16 %v10864
        %v10977 = vunpack.c.h.b16 %v10864
        %v10978 = vunpack.c.l.b16 %v10865
        %v10979 = vunpack.c.h.b16 %v10865
        %v10980 = vunpack.c.l.b16 %v10866
        %v10981 = vunpack.c.h.b16 %v10866
        %v10982 = vunpack.c.l.b16 %v10867
        %v10983 = vunpack.c.h.b16 %v10867
        %v10984 = vunpack.c.l.b16 %v10868
        %v10985 = vunpack.c.h.b16 %v10868
        %v10986 = vunpack.c.l.b16 %v10869
        %v10987 = vunpack.c.h.b16 %v10869
        %v10988 = vunpack.c.l.b16 %v10870
        %v10989 = vunpack.c.h.b16 %v10870
        %v10990 = vunpack.c.l.b16 %v10871
        %v10991 = vunpack.c.h.b16 %v10871
        %v10992 = vunpack.c.l.b16 %v10872
        %v10993 = vunpack.c.h.b16 %v10872
        %v10994 = vunpack.c.l.b16 %v10873
        %v10995 = vunpack.c.h.b16 %v10873
        %v10996 = vunpack.c.l.b16 %v10874
        %v10997 = vunpack.c.h.b16 %v10874
        %v10998 = vunpack.c.l.b16 %v10875
        %v10999 = vunpack.c.h.b16 %v10875
        %v11000 = vunpack.c.l.b16 %v10876
        %v11001 = vunpack.c.h.b16 %v10876
        %v11002 = vunpack.c.l.b16 %v10877
        %v11003 = vunpack.c.h.b16 %v10877
        %v11004 = vunpack.c.l.b16 %v10878
        %v11005 = vunpack.c.h.b16 %v10878
        %v11006 = vunpack.c.l.b16 %v10879
        %v11007 = vunpack.c.h.b16 %v10879
        %v11008 = vunpack.c.l.b16 %v10880
        %v11009 = vunpack.c.h.b16 %v10880
        %v11010 = vunpack.c.l.b16 %v10881
        %v11011 = vunpack.c.h.b16 %v10881
        %v11012 = vunpack.c.l.b16 %v10882
        %v11013 = vunpack.c.h.b16 %v10882
        %v11014 = vunpack.c.l.b16 %v10883
        %v11015 = vunpack.c.h.b16 %v10883
        %v11016 = vunpack.c.l.b16 %v10884
        %v11017 = vunpack.c.h.b16 %v10884
        %v11018 = vunpack.c.l.b16 %v10885
        %v11019 = vunpack.c.h.b16 %v10885
        %v11020 = vunpack.c.l.b16 %v10886
        %v11021 = vunpack.c.h.b16 %v10886
        %v11022 = vunpack.c.l.b16 %v10887
        %v11023 = vunpack.c.h.b16 %v10887
        %v11024 = vunpack.c.l.b16 %v10888
        %v11025 = vunpack.c.h.b16 %v10888
        %v11026 = vunpack.c.l.b16 %v10889
        %v11027 = vunpack.c.h.b16 %v10889
        %v11028 = vunpack.c.l.b16 %v10890
        %v11029 = vunpack.c.h.b16 %v10890
        %v11030 = vunpack.c.l.b16 %v10891
        %v11031 = vunpack.c.h.b16 %v10891
        %v11032 = vunpack.c.l.b16 %v10892
        %v11033 = vunpack.c.h.b16 %v10892
        %v11034 = vunpack.c.l.b16 %v10893
        %v11035 = vunpack.c.h.b16 %v10893
        %v11036 = vunpack.c.l.b16 %v10894
        %v11037 = vunpack.c.h.b16 %v10894
        %v11038 = vunpack.c.l.b16 %v10895
        %v11039 = vunpack.c.h.b16 %v10895
        %v11040 = vpack.c.b16 %v10946, %v10944
        %v11041 = vpack.c.b16 %v10947, %v10945
        %v11042 = vpack.c.b16 %v10950, %v10948
        %v11043 = vpack.c.b16 %v10951, %v10949
        %v11044 = vpack.c.b16 %v10954, %v10952
        %v11045 = vpack.c.b16 %v10955, %v10953
        %v11046 = vpack.c.b16 %v10958, %v10956
        %v11047 = vpack.c.b16 %v10959, %v10957
        %v11048 = vpack.c.b16 %v10962, %v10960
        %v11049 = vpack.c.b16 %v10963, %v10961
        %v11050 = vpack.c.b16 %v10966, %v10964
        %v11051 = vpack.c.b16 %v10967, %v10965
        %v11052 = vpack.c.b16 %v10970, %v10968
        %v11053 = vpack.c.b16 %v10971, %v10969
        %v11054 = vpack.c.b16 %v10974, %v10972
        %v11055 = vpack.c.b16 %v10975, %v10973
        %v11056 = vpack.c.b16 %v10978, %v10976
        %v11057 = vpack.c.b16 %v10979, %v10977
        %v11058 = vpack.c.b16 %v10982, %v10980
        %v11059 = vpack.c.b16 %v10983, %v10981
        %v11060 = vpack.c.b16 %v10986, %v10984
        %v11061 = vpack.c.b16 %v10987, %v10985
        %v11062 = vpack.c.b16 %v10990, %v10988
        %v11063 = vpack.c.b16 %v10991, %v10989
        %v11064 = vpack.c.b16 %v10994, %v10992
        %v11065 = vpack.c.b16 %v10995, %v10993
        %v11066 = vpack.c.b16 %v10998, %v10996
        %v11067 = vpack.c.b16 %v10999, %v10997
        %v11068 = vpack.c.b16 %v11002, %v11000
        %v11069 = vpack.c.b16 %v11003, %v11001
        %v11070 = vpack.c.b16 %v11006, %v11004
        %v11071 = vpack.c.b16 %v11007, %v11005
        %v11072 = vpack.c.b16 %v11010, %v11008
        %v11073 = vpack.c.b16 %v11011, %v11009
        %v11074 = vpack.c.b16 %v11014, %v11012
        %v11075 = vpack.c.b16 %v11015, %v11013
        %v11076 = vpack.c.b16 %v11018, %v11016
        %v11077 = vpack.c.b16 %v11019, %v11017
        %v11078 = vpack.c.b16 %v11022, %v11020
        %v11079 = vpack.c.b16 %v11023, %v11021
        %v11080 = vpack.c.b16 %v11026, %v11024
        %v11081 = vpack.c.b16 %v11027, %v11025
        %v11082 = vpack.c.b16 %v11030, %v11028
        %v11083 = vpack.c.b16 %v11031, %v11029
        %v11084 = vpack.c.b16 %v11034, %v11032
        %v11085 = vpack.c.b16 %v11035, %v11033
        %v11086 = vpack.c.b16 %v11038, %v11036
        %v11087 = vpack.c.b16 %v11039, %v11037
        %11136 = vmatprep.subr.bf16.mxu0 %v11041
        %11137 = vmatpush1.bf16.msra.mxu0 %v11040
        %11138 = vmatprep.subr.bf16.mxu0 %v11043
        %11139 = vmatpush1.bf16.msra.mxu0 %v11042
        %11140 = vmatprep.subr.bf16.mxu0 %v11045
        %11141 = vmatpush1.bf16.msra.mxu0 %v11044
        %11142 = vmatprep.subr.bf16.mxu0 %v11047
        %11143 = vmatpush1.bf16.msra.mxu0 %v11046
        %11144 = vmatprep.subr.bf16.mxu0 %v11049
        %11145 = vmatpush1.bf16.msra.mxu0 %v11048
        %11146 = vmatprep.subr.bf16.mxu0 %v11051
        %11147 = vmatpush1.bf16.msra.mxu0 %v11050
        %11148 = vmatprep.subr.bf16.mxu0 %v11053
        %11149 = vmatpush1.bf16.msra.mxu0 %v11052
        %11150 = vmatprep.subr.bf16.mxu0 %v11055
        %11151 = vmatpush1.bf16.msra.mxu0 %v11054
        %11152 = vmatprep.subr.bf16.mxu0 %v11057
        %11153 = vmatpush1.bf16.msra.mxu0 %v11056
        %11154 = vmatprep.subr.bf16.mxu0 %v11059
        %11155 = vmatpush1.bf16.msra.mxu0 %v11058
        %11156 = vmatprep.subr.bf16.mxu0 %v11061
        %11157 = vmatpush1.bf16.msra.mxu0 %v11060
        %11158 = vmatprep.subr.bf16.mxu0 %v11063
        %11159 = vmatpush1.bf16.msra.mxu0 %v11062
        %11160 = vmatprep.subr.bf16.mxu0 %v11065
        %11161 = vmatpush1.bf16.msra.mxu0 %v11064
        %11162 = vmatprep.subr.bf16.mxu0 %v11067
        %11163 = vmatpush1.bf16.msra.mxu0 %v11066
        %11164 = vmatprep.subr.bf16.mxu0 %v11069
        %11165 = vmatpush1.bf16.msra.mxu0 %v11068
        %11166 = vmatprep.subr.bf16.mxu0 %v11071
        %11167 = vmatpush1.bf16.msra.mxu0 %v11070
        %11168 = vmatprep.mubr.bf16.mxu0 %v10836
        %11169 = vmatmul.mubr.bf16.gmra.mrb[0].mxu0 %v10835
        %v11170 = vpop.f32.mrb[0].mxu0
        %v11171 = vadd.f32 0.0, %v11170
        %v11172 = vpop.f32.mrb[0].mxu0
        %v11173 = vadd.f32 0.0, %v11172
        %v11174 = vpop.f32.mrb[0].mxu0
        %v11175 = vadd.f32 0.0, %v11174
        %v11176 = vpop.f32.mrb[0].mxu0
        %v11177 = vadd.f32 0.0, %v11176
        %11178 = vmatprep.mubr.bf16.mxu0 %v10839
        %11179 = vmatmul.mubr.bf16.gmra.mrb[0].mxu0 %v10838
        %v11180 = vpop.f32.mrb[0].mxu0
        %v11181 = vadd.f32 0.0, %v11180
        %v11182 = vpop.f32.mrb[0].mxu0
        %v11183 = vadd.f32 0.0, %v11182
        %v11184 = vpop.f32.mrb[0].mxu0
        %v11185 = vadd.f32 0.0, %v11184
        %v11186 = vpop.f32.mrb[0].mxu0
        %v11187 = vadd.f32 0.0, %v11186
        %11188 = vmatprep.mubr.bf16.mxu0 %v10842
        %11189 = vmatmul.mubr.bf16.gmra.mrb[0].mxu0 %v10841
        %v11190 = vpop.f32.mrb[0].mxu0
        %v11191 = vadd.f32 0.0, %v11190
        %v11192 = vpop.f32.mrb[0].mxu0
        %v11193 = vadd.f32 0.0, %v11192
        %v11194 = vpop.f32.mrb[0].mxu0
        %v11195 = vadd.f32 0.0, %v11194
        %v11196 = vpop.f32.mrb[0].mxu0
        %v11197 = vadd.f32 0.0, %v11196
        %11198 = vmatprep.mubr.bf16.mxu0 %v10845
        %11199 = vmatmul.mubr.bf16.gmra.mrb[0].mxu0 %v10844
        %v11200 = vpop.f32.mrb[0].mxu0
        %v11201 = vadd.f32 0.0, %v11200
        %v11202 = vpop.f32.mrb[0].mxu0
        %v11203 = vadd.f32 0.0, %v11202
        %v11204 = vpop.f32.mrb[0].mxu0
        %v11205 = vadd.f32 0.0, %v11204
        %v11206 = vpop.f32.mrb[0].mxu0
        %v11207 = vadd.f32 0.0, %v11206
        %11208 = vdwg.mxu0
        %11209 = vmatprep.subr.bf16.mxu0 %v11073
        %11210 = vmatpush1.bf16.msra.mxu0 %v11072
        %11211 = vmatprep.subr.bf16.mxu0 %v11075
        %11212 = vmatpush1.bf16.msra.mxu0 %v11074
        %11213 = vmatprep.subr.bf16.mxu0 %v11077
        %11214 = vmatpush1.bf16.msra.mxu0 %v11076
        %11215 = vmatprep.subr.bf16.mxu0 %v11079
        %11216 = vmatpush1.bf16.msra.mxu0 %v11078
        %11217 = vmatprep.subr.bf16.mxu0 %v11081
        %11218 = vmatpush1.bf16.msra.mxu0 %v11080
        %11219 = vmatprep.subr.bf16.mxu0 %v11083
        %11220 = vmatpush1.bf16.msra.mxu0 %v11082
        %11221 = vmatprep.subr.bf16.mxu0 %v11085
        %11222 = vmatpush1.bf16.msra.mxu0 %v11084
        %11223 = vmatprep.subr.bf16.mxu0 %v11087
        %11224 = vmatpush1.bf16.msra.mxu0 %v11086
        %11225 = vmatprep.subr.bf16.mxu0 0
        %11226 = vmatpush1.bf16.msra.mxu0 0
        %11227 = vmatprep.subr.bf16.mxu0 0
        %11228 = vmatpush1.bf16.msra.mxu0 0
        %11229 = vmatprep.subr.bf16.mxu0 0
        %11230 = vmatpush1.bf16.msra.mxu0 0
        %11231 = vmatprep.subr.bf16.mxu0 0
        %11232 = vmatpush1.bf16.msra.mxu0 0
        %11233 = vmatprep.subr.bf16.mxu0 0
        %11234 = vmatpush1.bf16.msra.mxu0 0
        %11235 = vmatprep.subr.bf16.mxu0 0
        %11236 = vmatpush1.bf16.msra.mxu0 0
        %11237 = vmatprep.subr.bf16.mxu0 0
        %11238 = vmatpush1.bf16.msra.mxu0 0
        %11239 = vmatprep.subr.bf16.mxu0 0
        %11240 = vmatpush1.bf16.msra.mxu0 0
        %11241 = vmatprep.mubr.bf16.mxu0 0
        %11242 = vmatmul.mubr.bf16.gmra.mrb[0].mxu0 %v10837
        %v11243 = vpop.f32.mrb[0].mxu0
        %v11244 = vadd.f32 %v11171, %v11243
        %v11245 = vpop.f32.mrb[0].mxu0
        %v11246 = vadd.f32 %v11173, %v11245
        %v11247 = vpop.f32.mrb[0].mxu0
        %v11248 = vadd.f32 %v11175, %v11247
        %v11249 = vpop.f32.mrb[0].mxu0
        %v11250 = vadd.f32 %v11177, %v11249
        %11251 = vmatprep.mubr.bf16.mxu0 0
        %11252 = vmatmul.mubr.bf16.gmra.mrb[0].mxu0 %v10840
        %v11253 = vpop.f32.mrb[0].mxu0
        %v11254 = vadd.f32 %v11181, %v11253
        %v11255 = vpop.f32.mrb[0].mxu0
        %v11256 = vadd.f32 %v11183, %v11255
        %v11257 = vpop.f32.mrb[0].mxu0
        %v11258 = vadd.f32 %v11185, %v11257
        %v11259 = vpop.f32.mrb[0].mxu0
        %v11260 = vadd.f32 %v11187, %v11259
        %11261 = vmatprep.mubr.bf16.mxu0 0
        %11262 = vmatmul.mubr.bf16.gmra.mrb[0].mxu0 %v10843
        %v11263 = vpop.f32.mrb[0].mxu0
        %v11264 = vadd.f32 %v11191, %v11263
        %v11265 = vpop.f32.mrb[0].mxu0
        %v11266 = vadd.f32 %v11193, %v11265
        %v11267 = vpop.f32.mrb[0].mxu0
        %v11268 = vadd.f32 %v11195, %v11267
        %v11269 = vpop.f32.mrb[0].mxu0
        %v11270 = vadd.f32 %v11197, %v11269
        %11271 = vmatprep.mubr.bf16.mxu0 0
        %11272 = vmatmul.mubr.bf16.gmra.mrb[0].mxu0 %v10846
        %v11273 = vpop.f32.mrb[0].mxu0
        %v11274 = vadd.f32 %v11201, %v11273
        %v11275 = vpop.f32.mrb[0].mxu0
        %v11276 = vadd.f32 %v11203, %v11275
        %v11277 = vpop.f32.mrb[0].mxu0
        %v11278 = vadd.f32 %v11205, %v11277
        %v11279 = vpop.f32.mrb[0].mxu0
        %v11280 = vadd.f32 %v11207, %v11279
        %11281 = vdwg.mxu0
        %v11282 = vadd.f32 %v10627, %v11244
        %v11283 = vadd.f32 %v10628, %v11246
        %v11284 = vadd.f32 %v10629, %v11248
        %v11285 = vadd.f32 %v10630, %v11250
        %v11286 = vadd.f32 %v10631, %v11254
        %v11287 = vadd.f32 %v10632, %v11256
        %v11288 = vadd.f32 %v10633, %v11258
        %v11289 = vadd.f32 %v10634, %v11260
        %v11290 = vadd.f32 %v10635, %v11264
        %v11291 = vadd.f32 %v10636, %v11266
        %v11292 = vadd.f32 %v10637, %v11268
        %v11293 = vadd.f32 %v10638, %v11270
        %v11294 = vadd.f32 %v10639, %v11274
        %v11295 = vadd.f32 %v10640, %v11276
        %v11296 = vadd.f32 %v10641, %v11278
        %v11297 = vadd.f32 %v10642, %v11280
        %v11298 = vld [vmem:[#allocation11] sm:$0x3]
        %v11300 = vlaneseq
        %v11301 = vshrl.u32 %v11300, 7
        %v11302 = vsub.s32 0, %v11301
        %v11303 = vrot.slane %v11298, %v11302
        %v11304 = vlaneseq
        %v11305 = vshrl.u32 %v11304, 7
        %v11306 = vsub.s32 1, %v11305
        %v11307 = vrot.slane %v11298, %v11306
        %v11310 = vadd.f32 %v11282, %v11303
        %v11311 = vadd.f32 %v11283, %v11307
        %v11312 = vadd.f32 %v11284, %v11303
        %v11313 = vadd.f32 %v11285, %v11307
        %v11314 = vadd.f32 %v11286, %v11303
        %v11315 = vadd.f32 %v11287, %v11307
        %v11316 = vadd.f32 %v11288, %v11303
        %v11317 = vadd.f32 %v11289, %v11307
        %v11318 = vadd.f32 %v11290, %v11303
        %v11319 = vadd.f32 %v11291, %v11307
        %v11320 = vadd.f32 %v11292, %v11303
        %v11321 = vadd.f32 %v11293, %v11307
        %v11322 = vadd.f32 %v11294, %v11303
        %v11323 = vadd.f32 %v11295, %v11307
        %v11324 = vadd.f32 %v11296, %v11303
        %v11325 = vadd.f32 %v11297, %v11307
        %v11326 = vadd.f32 %v11310, %v358
        %v11327 = vadd.f32 %v11311, %v359
        %v11328 = vadd.f32 %v11312, %v360
        %v11329 = vadd.f32 %v11313, %v361
        %v11330 = vadd.f32 %v11314, %v362
        %v11331 = vadd.f32 %v11315, %v363
        %v11332 = vadd.f32 %v11316, %v364
        %v11333 = vadd.f32 %v11317, %v365
        %v11334 = vadd.f32 %v11318, %v366
        %v11335 = vadd.f32 %v11319, %v367
        %v11336 = vadd.f32 %v11320, %v368
        %v11337 = vadd.f32 %v11321, %v369
        %v11338 = vadd.f32 %v11322, %v370
        %v11339 = vadd.f32 %v11323, %v371
        %v11340 = vadd.f32 %v11324, %v372
        %v11341 = vadd.f32 %v11325, %v373
        %v11342 = vmax.f32 %v11326, 0.0
        %v11343 = vmax.f32 %v11327, 0.0
        %v11344 = vmax.f32 %v11328, 0.0
        %v11345 = vmax.f32 %v11329, 0.0
        %v11346 = vmax.f32 %v11330, 0.0
        %v11347 = vmax.f32 %v11331, 0.0
        %v11348 = vmax.f32 %v11332, 0.0
        %v11349 = vmax.f32 %v11333, 0.0
        %v11350 = vmax.f32 %v11334, 0.0
        %v11351 = vmax.f32 %v11335, 0.0
        %v11352 = vmax.f32 %v11336, 0.0
        %v11353 = vmax.f32 %v11337, 0.0
        %v11354 = vmax.f32 %v11338, 0.0
        %v11355 = vmax.f32 %v11339, 0.0
        %v11356 = vmax.f32 %v11340, 0.0
        %v11357 = vmax.f32 %v11341, 0.0
        %11358 = vst [vmem:[%s296] sm:$0xff] %v11342
        %11359 = vst [vmem:[%s296 + $0x8] sm:$0xff] %v11343
        %11360 = vst [vmem:[%s296 + $0x10] sm:$0xff] %v11344
        %11361 = vst [vmem:[%s296 + $0x18] sm:$0xff] %v11345
        %11362 = vst [vmem:[%s296 + $0x20] sm:$0xff] %v11346
        %11363 = vst [vmem:[%s296 + $0x28] sm:$0xff] %v11347
        %11364 = vst [vmem:[%s296 + $0x30] sm:$0xff] %v11348
        %11365 = vst [vmem:[%s296 + $0x38] sm:$0xff] %v11349
        %11366 = vst [vmem:[%s296 + $0x40] sm:$0xff] %v11350
        %11367 = vst [vmem:[%s296 + $0x48] sm:$0xff] %v11351
        %11368 = vst [vmem:[%s296 + $0x50] sm:$0xff] %v11352
        %11369 = vst [vmem:[%s296 + $0x58] sm:$0xff] %v11353
        %11370 = vst [vmem:[%s296 + $0x60] sm:$0xff] %v11354
        %11371 = vst [vmem:[%s296 + $0x68] sm:$0xff] %v11355
        %11372 = vst [vmem:[%s296 + $0x70] sm:$0xff] %v11356
        %11373 = vst [vmem:[%s296 + $0x78] sm:$0xff] %v11357
        %s11374 = sand.u32 %s142, 1
        %s11375 = scalar_lea.sflag [#allocation5], %s11374
        %s11376 = sand.u32 %s142, 1
        %s11377 = smul.addr %s11376, 128
        %s11378 = scalar_lea.vmem [#allocation12], %s11377
        // Predicated region
        $region61: #{tpu_custom_call.1} parent=39 // pred_check
          %p11379 = pneg %p152
        $region62: #{tpu_custom_call.1} parent=39 // pred_check_branch
          %11381 = sbr.rel (%p11379) target = $region64
        $region63: #{tpu_custom_call.1} parent=39 // pred_region
          %s11383 = ssub.s32 2048, 2048
          %11384 = vsyncadd %s11375, %s11383
          %s11385 = smul.addr %s24, 16
          %s11386 = smul.addr %s11385, 128
          %s11387 = scalar_lea.hbm %s5, %s11386
          %s11388 = sshll.u32 %s11378, 4
          %s11389 = int_to_ptr.vmem [resolvable:$true] %s11388
          %11394 = dma.vmem_to_hbm [thread:$0]  %s11389, 2048, %s11387, %s11375, 256, 256, 16
        $region64: #{tpu_custom_call.1} parent=39 // pred_fallthru
          _
      $region40: #{tpu_custom_call.1} parent=5 // pred_fallthru
        _
      %p11395 = scmp.le.s32.totalorder 2, %s19
      // Predicated region
      $region65: #{tpu_custom_call.1} parent=5 // pred_check
        %p11396 = pneg %p11395
      $region66: #{tpu_custom_call.1} parent=5 // pred_check_branch
        %11398 = sbr.rel (%p11396) target = $region68
      $region67: #{tpu_custom_call.1} parent=5 // pred_region
        %s11399 = ssub.s32 %s19, 2
        // Predicated region
        $region69: #{tpu_custom_call.1} parent=67 // pred_check
          %p11400 = pneg %p158
        $region70: #{tpu_custom_call.1} parent=67 // pred_check_branch
          %11402 = sbr.rel (%p11400) target = $region72
        $region71: #{tpu_custom_call.1} parent=67 // pred_region
          %s11403 = sand.u32 %s143, 1
          %s11404 = scalar_lea.sflag [#allocation5], %s11403
          %s11405 = sand.u32 %s143, 1
          %s11406 = smul.addr %s11405, 128
          %s11407 = scalar_lea.vmem [#allocation12], %s11406
          %11408 = dma.done %s11404, 2048
        $region72: #{tpu_custom_call.1} parent=67 // pred_fallthru
          _
      $region68: #{tpu_custom_call.1} parent=5 // pred_fallthru
        _
    $region6: #{tpu_custom_call.1} parent=1 // loop_footer
      %s23 = sadd.s32 1, %s19
    $region7: #{tpu_custom_call.1} parent=1 // loop_footer_branch
      %18 = sbr.rel target = $region3
    $region8: #{tpu_custom_call.1} parent=1 // loop_exit
      _
    %11409 = vsyncpa [#allocation4], 1
    %s11410 = scalar_lea.sflag [#allocation4], 1
    %11411 = vsyncpa %s11410, 1
    %11412 = vsyncpa [#allocation7], 1
    %11413 = vsyncpa [#allocation10], 1
    %11414 = vsyncpa [#allocation5], 1
    %s11415 = scalar_lea.sflag [#allocation5], 1
    %11416 = vsyncpa %s11415, 1

</llo_original>
